<compile_context>
chip_gen: v7x
topology: tpu7x:2x2x1
jax: 0.10.0
libtpu: 0.0.40
codegen_flags: <defaults>
</compile_context>

<pallas_src>
import numpy as np

import jax
import jax.numpy as jnp
from jax.experimental import pallas as pl
from jax.experimental.pallas import tpu as pltpu


# ----------------------------------------------------------------------------
# Host-side (one-time) repack of the PyTorch-layout parameters.
# ----------------------------------------------------------------------------
def _row_select(k, out_rows, in_rows, stride):
    """0/1 matrix S with S[r, stride*r + k] = 1 (rows whose target is OOB stay 0)."""
    s = np.zeros((out_rows, in_rows), np.float32)
    for r in range(out_rows):
        c = stride * r + k
        if 0 <= c < in_rows:
            s[r, c] = 1.0
    return s


def prep_params(params):
    """Build the lane-dense matrices consumed by the fused kernel (runs once)."""
    c1 = np.asarray(params["conv1_w"], np.float32)   # (10, 3, 5, 5)  OC,IC,KH,KW
    c2 = np.asarray(params["conv2_w"], np.float32)   # (20, 10, 5, 5)
    c3 = np.asarray(params["conv3_w"], np.float32)   # (20, 20, 5, 5)
    f1 = np.asarray(params["fc1_w"], np.float32)     # (50, 500)
    f2 = np.asarray(params["fc2_w"], np.float32)     # (10, 50)

    # conv1 (valid, 32->28) fused with the 2x2-pool COLUMN parity dx:
    # W1[2*i+dx] maps an input row (lanes = w*3 + ic) to a pooled output row
    # (lanes = x'*10 + oc) for kernel row i.
    W1 = np.zeros((10, 32 * 3, 14 * 10), np.float32)
    for i in range(5):
        for dx in range(2):
            for xp in range(14):
                for j in range(5):
                    xin = 2 * xp + dx + j                       # 0..31
                    W1[2 * i + dx,
                       xin * 3:(xin + 1) * 3,
                       xp * 10:(xp + 1) * 10] += c1[:, :, i, j].T

    # conv2 ("same", pad=2, 14->14): W padding folded in by skipping OOB input
    # columns; H padding handled by the SEL2 shift matrices below.
    W2 = np.zeros((5, 14 * 10, 14 * 20), np.float32)
    for i in range(5):
        for x in range(14):
            for j in range(5):
                xin = x + j - 2
                if 0 <= xin < 14:
                    W2[i,
                       xin * 10:(xin + 1) * 10,
                       x * 20:(x + 1) * 20] += c2[:, :, i, j].T

    # conv3 (valid, 14->10) fused with the 2x2-pool COLUMN parity dx.
    W3 = np.zeros((10, 14 * 20, 5 * 20), np.float32)
    for i in range(5):
        for dx in range(2):
            for xp in range(5):
                for j in range(5):
                    xin = 2 * xp + dx + j                       # 0..13
                    W3[2 * i + dx,
                       xin * 20:(xin + 1) * 20,
                       xp * 20:(xp + 1) * 20] += c3[:, :, i, j].T

    # fc1: fold the torch NCHW .view(-1, 500) permutation into the weight:
    # Wf1[h][w*20 + c, o] = fc1_w[o, c*25 + h*5 + w].
    f1r = f1.reshape(50, 20, 5, 5)                              # (o, c, h, w)
    Wf1 = np.transpose(f1r, (2, 3, 1, 0)).reshape(5, 100, 50)

    # 0/1 row-selection / row-shift matrices (row gathers done on the MXU).
    SEL1 = np.stack([_row_select(k, 14, 32, 2) for k in range(6)])      # pool1 row parity
    SEL2 = np.stack([_row_select(i - 2, 14, 14, 1) for i in range(5)])  # conv2 H padding
    SEL3 = np.stack([_row_select(k, 5, 14, 2) for k in range(6)])       # pool2 row parity
    SEL4 = np.stack([_row_select(h, 1, 5, 1) for h in range(5)])        # fc1 row gather

    bf16 = jnp.bfloat16
    return {
        "W1": jnp.asarray(W1, bf16), "W2": jnp.asarray(W2, bf16),
        "W3": jnp.asarray(W3, bf16), "Wf1": jnp.asarray(Wf1, bf16),
        "Wf2": jnp.asarray(f2.T, bf16),                                  # (50, 10)
        "SEL1": jnp.asarray(SEL1, bf16), "SEL2": jnp.asarray(SEL2, bf16),
        "SEL3": jnp.asarray(SEL3, bf16), "SEL4": jnp.asarray(SEL4, bf16),
        "b1": jnp.asarray(np.tile(np.asarray(params["conv1_b"], np.float32), 14)[None, :]),
        "b2": jnp.asarray(np.tile(np.asarray(params["conv2_b"], np.float32), 14)[None, :]),
        "b3": jnp.asarray(np.tile(np.asarray(params["conv3_b"], np.float32), 5)[None, :]),
        "bf1": jnp.asarray(np.asarray(params["fc1_b"], np.float32)[None, :]),
        "bf2": jnp.asarray(np.asarray(params["fc2_b"], np.float32)[None, :]),
    }


# ----------------------------------------------------------------------------
# The fused Pallas kernel (one image per grid step).
# ----------------------------------------------------------------------------
def _net2_fused_kernel(x_ref, sel1_ref, sel2_ref, sel3_ref, sel4_ref,
                       w1_ref, b1_ref, w2_ref, b2_ref, w3_ref, b3_ref,
                       wf1_ref, bf1_ref, wf2_ref, bf2_ref, o_ref):
    f32, bf16 = jnp.float32, jnp.bfloat16

    def sel_dot(sel, a):
        # 0/1 row selection / shift, done as a matmul (exact; MXU is idle).
        return jnp.dot(sel, a, preferred_element_type=f32).astype(bf16)

    # ---- conv1 (3->10, k=5, valid) fused with 2x2 max-pool + ReLU ----------
    # x layout: rows = H (32), lanes = W*C (96).
    x = x_ref[...].astype(bf16)
    xs = [sel_dot(sel1_ref[k], x) for k in range(6)]      # rows k, k+2, ... -> (14, 96)

    def conv1_quadrant(dy, dx):
        acc = jnp.zeros((14, 140), f32)
        for i in range(5):
            acc = acc + jnp.dot(xs[dy + i], w1_ref[2 * i + dx],
                                preferred_element_type=f32)
        return acc

    pool1 = jnp.maximum(jnp.maximum(conv1_quadrant(0, 0), conv1_quadrant(0, 1)),
                        jnp.maximum(conv1_quadrant(1, 0), conv1_quadrant(1, 1)))
    pool1 = jnp.maximum(pool1 + b1_ref[...], 0.0).astype(bf16)        # (14, 140)

    # ---- conv2 (10->20, k=5, pad=2) + ReLU ----------------------------------
    acc2 = jnp.zeros((14, 280), f32)
    for i in range(5):
        shifted = sel_dot(sel2_ref[i], pool1)                          # H-padded shift
        acc2 = acc2 + jnp.dot(shifted, w2_ref[i], preferred_element_type=f32)
    act2 = jnp.maximum(acc2 + b2_ref[...], 0.0).astype(bf16)           # (14, 280)

    # ---- conv3 (20->20, k=5, valid) fused with 2x2 max-pool + ReLU ----------
    p2s = [sel_dot(sel3_ref[k], act2) for k in range(6)]               # each (5, 280)

    def conv3_quadrant(dy, dx):
        acc = jnp.zeros((5, 100), f32)
        for i in range(5):
            acc = acc + jnp.dot(p2s[dy + i], w3_ref[2 * i + dx],
                                preferred_element_type=f32)
        return acc

    pool2 = jnp.maximum(jnp.maximum(conv3_quadrant(0, 0), conv3_quadrant(0, 1)),
                        jnp.maximum(conv3_quadrant(1, 0), conv3_quadrant(1, 1)))
    pool2 = jnp.maximum(pool2 + b3_ref[...], 0.0).astype(bf16)         # (5, 100)

    # ---- fc1 (500->50) + ReLU (NCHW .view(-1,500) folded into Wf1) ----------
    acc_fc1 = jnp.zeros((1, 50), f32)
    for h in range(5):
        row = sel_dot(sel4_ref[h], pool2)                              # (1, 100)
        acc_fc1 = acc_fc1 + jnp.dot(row, wf1_ref[h], preferred_element_type=f32)
    h1 = jnp.maximum(acc_fc1 + bf1_ref[...], 0.0).astype(bf16)         # (1, 50)

    # ---- fc2 (50->10) + log_softmax -----------------------------------------
    logits = jnp.dot(h1, wf2_ref[...], preferred_element_type=f32) + bf2_ref[...]
    m = jnp.max(logits, axis=-1, keepdims=True)
    shifted = logits - m
    lse = jnp.log(jnp.sum(jnp.exp(shifted), axis=-1, keepdims=True))
    o_ref[...] = (shifted - lse).astype(o_ref.dtype)


# ----------------------------------------------------------------------------
# Forward wrapper.
# ----------------------------------------------------------------------------
def net2_forward(prepped, x_nchw):
    N, C, H, W = x_nchw.shape
    assert (C, H, W) == (3, 32, 32), "Net2's .view(-1, 500) implies 3x32x32 input"
    # The only per-call XLA data movement: lay the input out as (H, W*C).
    x = jnp.transpose(x_nchw.astype(jnp.float32), (0, 2, 3, 1)).reshape(N, 32, 96)

    const3 = lambda n: (0, 0, 0)
    const2 = lambda n: (0, 0)
    p = prepped
    out = pl.pallas_call(
        _net2_fused_kernel,
        out_shape=jax.ShapeDtypeStruct((N, 1, 10), jnp.float32),
        grid=(N,),
        in_specs=[
            pl.BlockSpec((None, 32, 96), lambda n: (n, 0, 0)),   # one image / step
            pl.BlockSpec(p["SEL1"].shape, const3),
            pl.BlockSpec(p["SEL2"].shape, const3),
            pl.BlockSpec(p["SEL3"].shape, const3),
            pl.BlockSpec(p["SEL4"].shape, const3),
            pl.BlockSpec(p["W1"].shape, const3),
            pl.BlockSpec(p["b1"].shape, const2),
            pl.BlockSpec(p["W2"].shape, const3),
            pl.BlockSpec(p["b2"].shape, const2),
            pl.BlockSpec(p["W3"].shape, const3),
            pl.BlockSpec(p["b3"].shape, const2),
            pl.BlockSpec(p["Wf1"].shape, const3),
            pl.BlockSpec(p["bf1"].shape, const2),
            pl.BlockSpec(p["Wf2"].shape, const2),
            pl.BlockSpec(p["bf2"].shape, const2),
        ],
        out_specs=pl.BlockSpec((None, 1, 10), lambda n: (n, 0, 0)),
        compiler_params=pltpu.CompilerParams(
            dimension_semantics=("parallel",)),
    )(x, p["SEL1"], p["SEL2"], p["SEL3"], p["SEL4"],
      p["W1"], p["b1"], p["W2"], p["b2"], p["W3"], p["b3"],
      p["Wf1"], p["bf1"], p["Wf2"], p["bf2"])
    return out.reshape(N, 10)


# ----------------------------------------------------------------------------
# Deterministic PyTorch-style init (U(-1/sqrt(fan_in), +1/sqrt(fan_in))).
# ----------------------------------------------------------------------------
def init_params(key):
    def uni(k, shape, fan_in):
        bound = 1.0 / float(fan_in) ** 0.5
        return jax.random.uniform(k, shape, jnp.float32, -bound, bound)

    ks = jax.random.split(key, 10)
    return {
        "conv1_w": uni(ks[0], (10, 3, 5, 5), 3 * 25),
        "conv1_b": uni(ks[1], (10,), 3 * 25),
        "conv2_w": uni(ks[2], (20, 10, 5, 5), 10 * 25),
        "conv2_b": uni(ks[3], (20,), 10 * 25),
        "conv3_w": uni(ks[4], (20, 20, 5, 5), 20 * 25),
        "conv3_b": uni(ks[5], (20,), 20 * 25),
        "fc1_w": uni(ks[6], (50, 500), 500),   # torch Linear stores (out, in)
        "fc1_b": uni(ks[7], (50,), 500),
        "fc2_w": uni(ks[8], (10, 50), 50),
        "fc2_b": uni(ks[9], (10,), 50),
    }


# ----------------------------------------------------------------------------
# Pure-JAX f32 reference (self-check of the Pallas path).
# ----------------------------------------------------------------------------
def net2_reference(params, x_nchw):
    hp = jax.lax.Precision.HIGHEST

    def conv(x, w, b, pad):
        y = jax.lax.conv_general_dilated(
            x, w, window_strides=(1, 1),
            padding=[(pad, pad), (pad, pad)],
            dimension_numbers=("NCHW", "OIHW", "NCHW"),
            precision=hp)
        return y + b[None, :, None, None]

    def pool(x):
        return jax.lax.reduce_window(x, -jnp.inf, jax.lax.max,
                                     (1, 1, 2, 2), (1, 1, 2, 2), "VALID")

    x = x_nchw.astype(jnp.float32)
    x = jax.nn.relu(pool(conv(x, params["conv1_w"], params["conv1_b"], 0)))
    x = jax.nn.relu(conv(x, params["conv2_w"], params["conv2_b"], 2))
    x = jax.nn.relu(pool(conv(x, params["conv3_w"], params["conv3_b"], 0)))
    x = x.reshape(-1, 500)
    x = jax.nn.relu(jnp.dot(x, params["fc1_w"].T, precision=hp) + params["fc1_b"])
    x = jnp.dot(x, params["fc2_w"].T, precision=hp) + params["fc2_b"]
    return jax.nn.log_softmax(x, axis=1)


if __name__ == "__main__":
    key = jax.random.PRNGKey(0)
    k_param, k_x = jax.random.split(key)
    params = init_params(k_param)
    prepped = prep_params(params)
    # CIFAR-style input: the .view(-1, 500) implies 3x32x32 spatial input.
    x = jax.random.normal(k_x, (2, 3, 32, 32), jnp.float32)

    fwd = jax.jit(net2_forward)
    out = jax.block_until_ready(fwd(prepped, x))

    assert out.shape == (2, 10), out.shape
    assert bool(jnp.all(jnp.isfinite(out)))

    ref = net2_reference(params, x)
    max_err = float(jnp.max(jnp.abs(out - ref)))
    # bf16 matmul operands with f32 accumulation: small, bounded mismatch.
    assert bool(jnp.allclose(out, ref, rtol=2e-2, atol=2e-2)), max_err

    print("KERNEL_OK")
</pallas_src>

<mosaic_0001>
module attributes {stable_mosaic.version = 11 : i64} {
  func.func @_net2_fused_kernel(%arg0: i32, %arg1: memref<1x32x96xf32, #tpu.memory_space<vmem>>, %arg2: memref<6x14x32xbf16, #tpu.memory_space<vmem>>, %arg3: memref<5x14x14xbf16, #tpu.memory_space<vmem>>, %arg4: memref<6x5x14xbf16, #tpu.memory_space<vmem>>, %arg5: memref<5x1x5xbf16, #tpu.memory_space<vmem>>, %arg6: memref<10x96x140xbf16, #tpu.memory_space<vmem>>, %arg7: memref<1x140xf32, #tpu.memory_space<vmem>>, %arg8: memref<5x140x280xbf16, #tpu.memory_space<vmem>>, %arg9: memref<1x280xf32, #tpu.memory_space<vmem>>, %arg10: memref<10x280x100xbf16, #tpu.memory_space<vmem>>, %arg11: memref<1x100xf32, #tpu.memory_space<vmem>>, %arg12: memref<5x100x50xbf16, #tpu.memory_space<vmem>>, %arg13: memref<1x50xf32, #tpu.memory_space<vmem>>, %arg14: memref<50x10xbf16, #tpu.memory_space<vmem>>, %arg15: memref<1x10xf32, #tpu.memory_space<vmem>>, %arg16: memref<1x1x10xf32, #tpu.memory_space<vmem>>) attributes {dimension_semantics = [#tpu.dimension_semantics<parallel>], iteration_bounds = array<i64: 2>, scalar_prefetch = 0 : i64, scratch_operands = 0 : i64, tpu.core_type = #tpu.core_type<tc>, window_params = [{transform_indices = @transform_0, window_bounds = array<i64: 1, 32, 96>}, {pipeline_mode = #tpu.pipeline_mode<synchronous>, transform_indices = @transform_1, window_bounds = array<i64: 6, 14, 32>}, {pipeline_mode = #tpu.pipeline_mode<synchronous>, transform_indices = @transform_2, window_bounds = array<i64: 5, 14, 14>}, {pipeline_mode = #tpu.pipeline_mode<synchronous>, transform_indices = @transform_3, window_bounds = array<i64: 6, 5, 14>}, {pipeline_mode = #tpu.pipeline_mode<synchronous>, transform_indices = @transform_4, window_bounds = array<i64: 5, 1, 5>}, {pipeline_mode = #tpu.pipeline_mode<synchronous>, transform_indices = @transform_5, window_bounds = array<i64: 10, 96, 140>}, {pipeline_mode = #tpu.pipeline_mode<synchronous>, transform_indices = @transform_6, window_bounds = array<i64: 1, 140>}, {pipeline_mode = #tpu.pipeline_mode<synchronous>, transform_indices = @transform_7, window_bounds = array<i64: 5, 140, 280>}, {pipeline_mode = #tpu.pipeline_mode<synchronous>, transform_indices = @transform_8, window_bounds = array<i64: 1, 280>}, {pipeline_mode = #tpu.pipeline_mode<synchronous>, transform_indices = @transform_9, window_bounds = array<i64: 10, 280, 100>}, {pipeline_mode = #tpu.pipeline_mode<synchronous>, transform_indices = @transform_10, window_bounds = array<i64: 1, 100>}, {pipeline_mode = #tpu.pipeline_mode<synchronous>, transform_indices = @transform_11, window_bounds = array<i64: 5, 100, 50>}, {pipeline_mode = #tpu.pipeline_mode<synchronous>, transform_indices = @transform_12, window_bounds = array<i64: 1, 50>}, {pipeline_mode = #tpu.pipeline_mode<synchronous>, transform_indices = @transform_13, window_bounds = array<i64: 50, 10>}, {pipeline_mode = #tpu.pipeline_mode<synchronous>, transform_indices = @transform_14, window_bounds = array<i64: 1, 10>}, {transform_indices = @transform_15, window_bounds = array<i64: 1, 1, 10>}]} {
    %c0 = arith.constant 0 : index
    %c0_0 = arith.constant 0 : index
    %c0_1 = arith.constant 0 : index
    %0 = vector.load %arg1[%c0, %c0_0, %c0_1] : memref<1x32x96xf32, #tpu.memory_space<vmem>>, vector<1x32x96xf32>
    %1 = vector.shape_cast %0 : vector<1x32x96xf32> to vector<32x96xf32>
    %2 = arith.truncf %1 : vector<32x96xf32> to vector<32x96xbf16>
    %c0_2 = arith.constant 0 : index
    %c0_3 = arith.constant 0 : index
    %c0_4 = arith.constant 0 : index
    %3 = vector.load %arg2[%c0_2, %c0_3, %c0_4] : memref<6x14x32xbf16, #tpu.memory_space<vmem>>, vector<1x14x32xbf16>
    %4 = vector.shape_cast %3 : vector<1x14x32xbf16> to vector<14x32xbf16>
    %cst = arith.constant dense<0.000000e+00> : vector<14x96xf32>
    %5 = tpu.matmul %4, %2, %cst {dimension_numbers = #tpu.dot_dimension_numbers<[1], [0], [0], [1], [0, 0, 1, 1], [], []>} : vector<14x32xbf16>, vector<32x96xbf16>, vector<14x96xf32> -> vector<14x96xf32>
    %6 = arith.truncf %5 : vector<14x96xf32> to vector<14x96xbf16>
    %c1 = arith.constant 1 : index
    %c0_5 = arith.constant 0 : index
    %c0_6 = arith.constant 0 : index
    %7 = vector.load %arg2[%c1, %c0_5, %c0_6] : memref<6x14x32xbf16, #tpu.memory_space<vmem>>, vector<1x14x32xbf16>
    %8 = vector.shape_cast %7 : vector<1x14x32xbf16> to vector<14x32xbf16>
    %cst_7 = arith.constant dense<0.000000e+00> : vector<14x96xf32>
    %9 = tpu.matmul %8, %2, %cst_7 {dimension_numbers = #tpu.dot_dimension_numbers<[1], [0], [0], [1], [0, 0, 1, 1], [], []>} : vector<14x32xbf16>, vector<32x96xbf16>, vector<14x96xf32> -> vector<14x96xf32>
    %10 = arith.truncf %9 : vector<14x96xf32> to vector<14x96xbf16>
    %c2 = arith.constant 2 : index
    %c0_8 = arith.constant 0 : index
    %c0_9 = arith.constant 0 : index
    %11 = vector.load %arg2[%c2, %c0_8, %c0_9] : memref<6x14x32xbf16, #tpu.memory_space<vmem>>, vector<1x14x32xbf16>
    %12 = vector.shape_cast %11 : vector<1x14x32xbf16> to vector<14x32xbf16>
    %cst_10 = arith.constant dense<0.000000e+00> : vector<14x96xf32>
    %13 = tpu.matmul %12, %2, %cst_10 {dimension_numbers = #tpu.dot_dimension_numbers<[1], [0], [0], [1], [0, 0, 1, 1], [], []>} : vector<14x32xbf16>, vector<32x96xbf16>, vector<14x96xf32> -> vector<14x96xf32>
    %14 = arith.truncf %13 : vector<14x96xf32> to vector<14x96xbf16>
    %c3 = arith.constant 3 : index
    %c0_11 = arith.constant 0 : index
    %c0_12 = arith.constant 0 : index
    %15 = vector.load %arg2[%c3, %c0_11, %c0_12] : memref<6x14x32xbf16, #tpu.memory_space<vmem>>, vector<1x14x32xbf16>
    %16 = vector.shape_cast %15 : vector<1x14x32xbf16> to vector<14x32xbf16>
    %cst_13 = arith.constant dense<0.000000e+00> : vector<14x96xf32>
    %17 = tpu.matmul %16, %2, %cst_13 {dimension_numbers = #tpu.dot_dimension_numbers<[1], [0], [0], [1], [0, 0, 1, 1], [], []>} : vector<14x32xbf16>, vector<32x96xbf16>, vector<14x96xf32> -> vector<14x96xf32>
    %18 = arith.truncf %17 : vector<14x96xf32> to vector<14x96xbf16>
    %c4 = arith.constant 4 : index
    %c0_14 = arith.constant 0 : index
    %c0_15 = arith.constant 0 : index
    %19 = vector.load %arg2[%c4, %c0_14, %c0_15] : memref<6x14x32xbf16, #tpu.memory_space<vmem>>, vector<1x14x32xbf16>
    %20 = vector.shape_cast %19 : vector<1x14x32xbf16> to vector<14x32xbf16>
    %cst_16 = arith.constant dense<0.000000e+00> : vector<14x96xf32>
    %21 = tpu.matmul %20, %2, %cst_16 {dimension_numbers = #tpu.dot_dimension_numbers<[1], [0], [0], [1], [0, 0, 1, 1], [], []>} : vector<14x32xbf16>, vector<32x96xbf16>, vector<14x96xf32> -> vector<14x96xf32>
    %22 = arith.truncf %21 : vector<14x96xf32> to vector<14x96xbf16>
    %c5 = arith.constant 5 : index
    %c0_17 = arith.constant 0 : index
    %c0_18 = arith.constant 0 : index
    %23 = vector.load %arg2[%c5, %c0_17, %c0_18] : memref<6x14x32xbf16, #tpu.memory_space<vmem>>, vector<1x14x32xbf16>
    %24 = vector.shape_cast %23 : vector<1x14x32xbf16> to vector<14x32xbf16>
    %cst_19 = arith.constant dense<0.000000e+00> : vector<14x96xf32>
    %25 = tpu.matmul %24, %2, %cst_19 {dimension_numbers = #tpu.dot_dimension_numbers<[1], [0], [0], [1], [0, 0, 1, 1], [], []>} : vector<14x32xbf16>, vector<32x96xbf16>, vector<14x96xf32> -> vector<14x96xf32>
    %26 = arith.truncf %25 : vector<14x96xf32> to vector<14x96xbf16>
    %cst_20 = arith.constant 0.000000e+00 : f32
    %27 = vector.broadcast %cst_20 : f32 to vector<14x140xf32>
    %c0_21 = arith.constant 0 : index
    %c0_22 = arith.constant 0 : index
    %c0_23 = arith.constant 0 : index
    %28 = vector.load %arg6[%c0_21, %c0_22, %c0_23] : memref<10x96x140xbf16, #tpu.memory_space<vmem>>, vector<1x96x140xbf16>
    %29 = vector.shape_cast %28 : vector<1x96x140xbf16> to vector<96x140xbf16>
    %cst_24 = arith.constant dense<0.000000e+00> : vector<14x140xf32>
    %30 = tpu.matmul %6, %29, %cst_24 {dimension_numbers = #tpu.dot_dimension_numbers<[1], [0], [0], [1], [0, 0, 1, 1], [], []>} : vector<14x96xbf16>, vector<96x140xbf16>, vector<14x140xf32> -> vector<14x140xf32>
    %31 = arith.addf %27, %30 : vector<14x140xf32>
    %c2_25 = arith.constant 2 : index
    %c0_26 = arith.constant 0 : index
    %c0_27 = arith.constant 0 : index
    %32 = vector.load %arg6[%c2_25, %c0_26, %c0_27] : memref<10x96x140xbf16, #tpu.memory_space<vmem>>, vector<1x96x140xbf16>
    %33 = vector.shape_cast %32 : vector<1x96x140xbf16> to vector<96x140xbf16>
    %cst_28 = arith.constant dense<0.000000e+00> : vector<14x140xf32>
    %34 = tpu.matmul %10, %33, %cst_28 {dimension_numbers = #tpu.dot_dimension_numbers<[1], [0], [0], [1], [0, 0, 1, 1], [], []>} : vector<14x96xbf16>, vector<96x140xbf16>, vector<14x140xf32> -> vector<14x140xf32>
    %35 = arith.addf %31, %34 : vector<14x140xf32>
    %c4_29 = arith.constant 4 : index
    %c0_30 = arith.constant 0 : index
    %c0_31 = arith.constant 0 : index
    %36 = vector.load %arg6[%c4_29, %c0_30, %c0_31] : memref<10x96x140xbf16, #tpu.memory_space<vmem>>, vector<1x96x140xbf16>
    %37 = vector.shape_cast %36 : vector<1x96x140xbf16> to vector<96x140xbf16>
    %cst_32 = arith.constant dense<0.000000e+00> : vector<14x140xf32>
    %38 = tpu.matmul %14, %37, %cst_32 {dimension_numbers = #tpu.dot_dimension_numbers<[1], [0], [0], [1], [0, 0, 1, 1], [], []>} : vector<14x96xbf16>, vector<96x140xbf16>, vector<14x140xf32> -> vector<14x140xf32>
    %39 = arith.addf %35, %38 : vector<14x140xf32>
    %c6 = arith.constant 6 : index
    %c0_33 = arith.constant 0 : index
    %c0_34 = arith.constant 0 : index
    %40 = vector.load %arg6[%c6, %c0_33, %c0_34] : memref<10x96x140xbf16, #tpu.memory_space<vmem>>, vector<1x96x140xbf16>
    %41 = vector.shape_cast %40 : vector<1x96x140xbf16> to vector<96x140xbf16>
    %cst_35 = arith.constant dense<0.000000e+00> : vector<14x140xf32>
    %42 = tpu.matmul %18, %41, %cst_35 {dimension_numbers = #tpu.dot_dimension_numbers<[1], [0], [0], [1], [0, 0, 1, 1], [], []>} : vector<14x96xbf16>, vector<96x140xbf16>, vector<14x140xf32> -> vector<14x140xf32>
    %43 = arith.addf %39, %42 : vector<14x140xf32>
    %c8 = arith.constant 8 : index
    %c0_36 = arith.constant 0 : index
    %c0_37 = arith.constant 0 : index
    %44 = vector.load %arg6[%c8, %c0_36, %c0_37] : memref<10x96x140xbf16, #tpu.memory_space<vmem>>, vector<1x96x140xbf16>
    %45 = vector.shape_cast %44 : vector<1x96x140xbf16> to vector<96x140xbf16>
    %cst_38 = arith.constant dense<0.000000e+00> : vector<14x140xf32>
    %46 = tpu.matmul %22, %45, %cst_38 {dimension_numbers = #tpu.dot_dimension_numbers<[1], [0], [0], [1], [0, 0, 1, 1], [], []>} : vector<14x96xbf16>, vector<96x140xbf16>, vector<14x140xf32> -> vector<14x140xf32>
    %47 = arith.addf %43, %46 : vector<14x140xf32>
    %cst_39 = arith.constant 0.000000e+00 : f32
    %48 = vector.broadcast %cst_39 : f32 to vector<14x140xf32>
    %c1_40 = arith.constant 1 : index
    %c0_41 = arith.constant 0 : index
    %c0_42 = arith.constant 0 : index
    %49 = vector.load %arg6[%c1_40, %c0_41, %c0_42] : memref<10x96x140xbf16, #tpu.memory_space<vmem>>, vector<1x96x140xbf16>
    %50 = vector.shape_cast %49 : vector<1x96x140xbf16> to vector<96x140xbf16>
    %cst_43 = arith.constant dense<0.000000e+00> : vector<14x140xf32>
    %51 = tpu.matmul %6, %50, %cst_43 {dimension_numbers = #tpu.dot_dimension_numbers<[1], [0], [0], [1], [0, 0, 1, 1], [], []>} : vector<14x96xbf16>, vector<96x140xbf16>, vector<14x140xf32> -> vector<14x140xf32>
    %52 = arith.addf %48, %51 : vector<14x140xf32>
    %c3_44 = arith.constant 3 : index
    %c0_45 = arith.constant 0 : index
    %c0_46 = arith.constant 0 : index
    %53 = vector.load %arg6[%c3_44, %c0_45, %c0_46] : memref<10x96x140xbf16, #tpu.memory_space<vmem>>, vector<1x96x140xbf16>
    %54 = vector.shape_cast %53 : vector<1x96x140xbf16> to vector<96x140xbf16>
    %cst_47 = arith.constant dense<0.000000e+00> : vector<14x140xf32>
    %55 = tpu.matmul %10, %54, %cst_47 {dimension_numbers = #tpu.dot_dimension_numbers<[1], [0], [0], [1], [0, 0, 1, 1], [], []>} : vector<14x96xbf16>, vector<96x140xbf16>, vector<14x140xf32> -> vector<14x140xf32>
    %56 = arith.addf %52, %55 : vector<14x140xf32>
    %c5_48 = arith.constant 5 : index
    %c0_49 = arith.constant 0 : index
    %c0_50 = arith.constant 0 : index
    %57 = vector.load %arg6[%c5_48, %c0_49, %c0_50] : memref<10x96x140xbf16, #tpu.memory_space<vmem>>, vector<1x96x140xbf16>
    %58 = vector.shape_cast %57 : vector<1x96x140xbf16> to vector<96x140xbf16>
    %cst_51 = arith.constant dense<0.000000e+00> : vector<14x140xf32>
    %59 = tpu.matmul %14, %58, %cst_51 {dimension_numbers = #tpu.dot_dimension_numbers<[1], [0], [0], [1], [0, 0, 1, 1], [], []>} : vector<14x96xbf16>, vector<96x140xbf16>, vector<14x140xf32> -> vector<14x140xf32>
    %60 = arith.addf %56, %59 : vector<14x140xf32>
    %c7 = arith.constant 7 : index
    %c0_52 = arith.constant 0 : index
    %c0_53 = arith.constant 0 : index
    %61 = vector.load %arg6[%c7, %c0_52, %c0_53] : memref<10x96x140xbf16, #tpu.memory_space<vmem>>, vector<1x96x140xbf16>
    %62 = vector.shape_cast %61 : vector<1x96x140xbf16> to vector<96x140xbf16>
    %cst_54 = arith.constant dense<0.000000e+00> : vector<14x140xf32>
    %63 = tpu.matmul %18, %62, %cst_54 {dimension_numbers = #tpu.dot_dimension_numbers<[1], [0], [0], [1], [0, 0, 1, 1], [], []>} : vector<14x96xbf16>, vector<96x140xbf16>, vector<14x140xf32> -> vector<14x140xf32>
    %64 = arith.addf %60, %63 : vector<14x140xf32>
    %c9 = arith.constant 9 : index
    %c0_55 = arith.constant 0 : index
    %c0_56 = arith.constant 0 : index
    %65 = vector.load %arg6[%c9, %c0_55, %c0_56] : memref<10x96x140xbf16, #tpu.memory_space<vmem>>, vector<1x96x140xbf16>
    %66 = vector.shape_cast %65 : vector<1x96x140xbf16> to vector<96x140xbf16>
    %cst_57 = arith.constant dense<0.000000e+00> : vector<14x140xf32>
    %67 = tpu.matmul %22, %66, %cst_57 {dimension_numbers = #tpu.dot_dimension_numbers<[1], [0], [0], [1], [0, 0, 1, 1], [], []>} : vector<14x96xbf16>, vector<96x140xbf16>, vector<14x140xf32> -> vector<14x140xf32>
    %68 = arith.addf %64, %67 : vector<14x140xf32>
    %69 = arith.maximumf %47, %68 : vector<14x140xf32>
    %cst_58 = arith.constant 0.000000e+00 : f32
    %70 = vector.broadcast %cst_58 : f32 to vector<14x140xf32>
    %c0_59 = arith.constant 0 : index
    %c0_60 = arith.constant 0 : index
    %c0_61 = arith.constant 0 : index
    %71 = vector.load %arg6[%c0_59, %c0_60, %c0_61] : memref<10x96x140xbf16, #tpu.memory_space<vmem>>, vector<1x96x140xbf16>
    %72 = vector.shape_cast %71 : vector<1x96x140xbf16> to vector<96x140xbf16>
    %cst_62 = arith.constant dense<0.000000e+00> : vector<14x140xf32>
    %73 = tpu.matmul %10, %72, %cst_62 {dimension_numbers = #tpu.dot_dimension_numbers<[1], [0], [0], [1], [0, 0, 1, 1], [], []>} : vector<14x96xbf16>, vector<96x140xbf16>, vector<14x140xf32> -> vector<14x140xf32>
    %74 = arith.addf %70, %73 : vector<14x140xf32>
    %c2_63 = arith.constant 2 : index
    %c0_64 = arith.constant 0 : index
    %c0_65 = arith.constant 0 : index
    %75 = vector.load %arg6[%c2_63, %c0_64, %c0_65] : memref<10x96x140xbf16, #tpu.memory_space<vmem>>, vector<1x96x140xbf16>
    %76 = vector.shape_cast %75 : vector<1x96x140xbf16> to vector<96x140xbf16>
    %cst_66 = arith.constant dense<0.000000e+00> : vector<14x140xf32>
    %77 = tpu.matmul %14, %76, %cst_66 {dimension_numbers = #tpu.dot_dimension_numbers<[1], [0], [0], [1], [0, 0, 1, 1], [], []>} : vector<14x96xbf16>, vector<96x140xbf16>, vector<14x140xf32> -> vector<14x140xf32>
    %78 = arith.addf %74, %77 : vector<14x140xf32>
    %c4_67 = arith.constant 4 : index
    %c0_68 = arith.constant 0 : index
    %c0_69 = arith.constant 0 : index
    %79 = vector.load %arg6[%c4_67, %c0_68, %c0_69] : memref<10x96x140xbf16, #tpu.memory_space<vmem>>, vector<1x96x140xbf16>
    %80 = vector.shape_cast %79 : vector<1x96x140xbf16> to vector<96x140xbf16>
    %cst_70 = arith.constant dense<0.000000e+00> : vector<14x140xf32>
    %81 = tpu.matmul %18, %80, %cst_70 {dimension_numbers = #tpu.dot_dimension_numbers<[1], [0], [0], [1], [0, 0, 1, 1], [], []>} : vector<14x96xbf16>, vector<96x140xbf16>, vector<14x140xf32> -> vector<14x140xf32>
    %82 = arith.addf %78, %81 : vector<14x140xf32>
    %c6_71 = arith.constant 6 : index
    %c0_72 = arith.constant 0 : index
    %c0_73 = arith.constant 0 : index
    %83 = vector.load %arg6[%c6_71, %c0_72, %c0_73] : memref<10x96x140xbf16, #tpu.memory_space<vmem>>, vector<1x96x140xbf16>
    %84 = vector.shape_cast %83 : vector<1x96x140xbf16> to vector<96x140xbf16>
    %cst_74 = arith.constant dense<0.000000e+00> : vector<14x140xf32>
    %85 = tpu.matmul %22, %84, %cst_74 {dimension_numbers = #tpu.dot_dimension_numbers<[1], [0], [0], [1], [0, 0, 1, 1], [], []>} : vector<14x96xbf16>, vector<96x140xbf16>, vector<14x140xf32> -> vector<14x140xf32>
    %86 = arith.addf %82, %85 : vector<14x140xf32>
    %c8_75 = arith.constant 8 : index
    %c0_76 = arith.constant 0 : index
    %c0_77 = arith.constant 0 : index
    %87 = vector.load %arg6[%c8_75, %c0_76, %c0_77] : memref<10x96x140xbf16, #tpu.memory_space<vmem>>, vector<1x96x140xbf16>
    %88 = vector.shape_cast %87 : vector<1x96x140xbf16> to vector<96x140xbf16>
    %cst_78 = arith.constant dense<0.000000e+00> : vector<14x140xf32>
    %89 = tpu.matmul %26, %88, %cst_78 {dimension_numbers = #tpu.dot_dimension_numbers<[1], [0], [0], [1], [0, 0, 1, 1], [], []>} : vector<14x96xbf16>, vector<96x140xbf16>, vector<14x140xf32> -> vector<14x140xf32>
    %90 = arith.addf %86, %89 : vector<14x140xf32>
    %cst_79 = arith.constant 0.000000e+00 : f32
    %91 = vector.broadcast %cst_79 : f32 to vector<14x140xf32>
    %c1_80 = arith.constant 1 : index
    %c0_81 = arith.constant 0 : index
    %c0_82 = arith.constant 0 : index
    %92 = vector.load %arg6[%c1_80, %c0_81, %c0_82] : memref<10x96x140xbf16, #tpu.memory_space<vmem>>, vector<1x96x140xbf16>
    %93 = vector.shape_cast %92 : vector<1x96x140xbf16> to vector<96x140xbf16>
    %cst_83 = arith.constant dense<0.000000e+00> : vector<14x140xf32>
    %94 = tpu.matmul %10, %93, %cst_83 {dimension_numbers = #tpu.dot_dimension_numbers<[1], [0], [0], [1], [0, 0, 1, 1], [], []>} : vector<14x96xbf16>, vector<96x140xbf16>, vector<14x140xf32> -> vector<14x140xf32>
    %95 = arith.addf %91, %94 : vector<14x140xf32>
    %c3_84 = arith.constant 3 : index
    %c0_85 = arith.constant 0 : index
    %c0_86 = arith.constant 0 : index
    %96 = vector.load %arg6[%c3_84, %c0_85, %c0_86] : memref<10x96x140xbf16, #tpu.memory_space<vmem>>, vector<1x96x140xbf16>
    %97 = vector.shape_cast %96 : vector<1x96x140xbf16> to vector<96x140xbf16>
    %cst_87 = arith.constant dense<0.000000e+00> : vector<14x140xf32>
    %98 = tpu.matmul %14, %97, %cst_87 {dimension_numbers = #tpu.dot_dimension_numbers<[1], [0], [0], [1], [0, 0, 1, 1], [], []>} : vector<14x96xbf16>, vector<96x140xbf16>, vector<14x140xf32> -> vector<14x140xf32>
    %99 = arith.addf %95, %98 : vector<14x140xf32>
    %c5_88 = arith.constant 5 : index
    %c0_89 = arith.constant 0 : index
    %c0_90 = arith.constant 0 : index
    %100 = vector.load %arg6[%c5_88, %c0_89, %c0_90] : memref<10x96x140xbf16, #tpu.memory_space<vmem>>, vector<1x96x140xbf16>
    %101 = vector.shape_cast %100 : vector<1x96x140xbf16> to vector<96x140xbf16>
    %cst_91 = arith.constant dense<0.000000e+00> : vector<14x140xf32>
    %102 = tpu.matmul %18, %101, %cst_91 {dimension_numbers = #tpu.dot_dimension_numbers<[1], [0], [0], [1], [0, 0, 1, 1], [], []>} : vector<14x96xbf16>, vector<96x140xbf16>, vector<14x140xf32> -> vector<14x140xf32>
    %103 = arith.addf %99, %102 : vector<14x140xf32>
    %c7_92 = arith.constant 7 : index
    %c0_93 = arith.constant 0 : index
    %c0_94 = arith.constant 0 : index
    %104 = vector.load %arg6[%c7_92, %c0_93, %c0_94] : memref<10x96x140xbf16, #tpu.memory_space<vmem>>, vector<1x96x140xbf16>
    %105 = vector.shape_cast %104 : vector<1x96x140xbf16> to vector<96x140xbf16>
    %cst_95 = arith.constant dense<0.000000e+00> : vector<14x140xf32>
    %106 = tpu.matmul %22, %105, %cst_95 {dimension_numbers = #tpu.dot_dimension_numbers<[1], [0], [0], [1], [0, 0, 1, 1], [], []>} : vector<14x96xbf16>, vector<96x140xbf16>, vector<14x140xf32> -> vector<14x140xf32>
    %107 = arith.addf %103, %106 : vector<14x140xf32>
    %c9_96 = arith.constant 9 : index
    %c0_97 = arith.constant 0 : index
    %c0_98 = arith.constant 0 : index
    %108 = vector.load %arg6[%c9_96, %c0_97, %c0_98] : memref<10x96x140xbf16, #tpu.memory_space<vmem>>, vector<1x96x140xbf16>
    %109 = vector.shape_cast %108 : vector<1x96x140xbf16> to vector<96x140xbf16>
    %cst_99 = arith.constant dense<0.000000e+00> : vector<14x140xf32>
    %110 = tpu.matmul %26, %109, %cst_99 {dimension_numbers = #tpu.dot_dimension_numbers<[1], [0], [0], [1], [0, 0, 1, 1], [], []>} : vector<14x96xbf16>, vector<96x140xbf16>, vector<14x140xf32> -> vector<14x140xf32>
    %111 = arith.addf %107, %110 : vector<14x140xf32>
    %112 = arith.maximumf %90, %111 : vector<14x140xf32>
    %113 = arith.maximumf %69, %112 : vector<14x140xf32>
    %c0_100 = arith.constant 0 : index
    %c0_101 = arith.constant 0 : index
    %114 = vector.load %arg7[%c0_100, %c0_101] : memref<1x140xf32, #tpu.memory_space<vmem>>, vector<1x140xf32>
    %115 = vector.broadcast %114 : vector<1x140xf32> to vector<14x140xf32>
    %116 = arith.addf %113, %115 : vector<14x140xf32>
    %cst_102 = arith.constant 0.000000e+00 : f32
    %117 = vector.broadcast %cst_102 : f32 to vector<14x140xf32>
    %118 = arith.maximumf %116, %117 : vector<14x140xf32>
    %119 = arith.truncf %118 : vector<14x140xf32> to vector<14x140xbf16>
    %cst_103 = arith.constant 0.000000e+00 : f32
    %120 = vector.broadcast %cst_103 : f32 to vector<14x280xf32>
    %c0_104 = arith.constant 0 : index
    %c0_105 = arith.constant 0 : index
    %c0_106 = arith.constant 0 : index
    %121 = vector.load %arg3[%c0_104, %c0_105, %c0_106] : memref<5x14x14xbf16, #tpu.memory_space<vmem>>, vector<1x14x14xbf16>
    %122 = vector.shape_cast %121 : vector<1x14x14xbf16> to vector<14x14xbf16>
    %cst_107 = arith.constant dense<0.000000e+00> : vector<14x140xf32>
    %123 = tpu.matmul %122, %119, %cst_107 {dimension_numbers = #tpu.dot_dimension_numbers<[1], [0], [0], [1], [0, 0, 1, 1], [], []>} : vector<14x14xbf16>, vector<14x140xbf16>, vector<14x140xf32> -> vector<14x140xf32>
    %124 = arith.truncf %123 : vector<14x140xf32> to vector<14x140xbf16>
    %c0_108 = arith.constant 0 : index
    %c0_109 = arith.constant 0 : index
    %c0_110 = arith.constant 0 : index
    %125 = vector.load %arg8[%c0_108, %c0_109, %c0_110] : memref<5x140x280xbf16, #tpu.memory_space<vmem>>, vector<1x140x280xbf16>
    %126 = vector.shape_cast %125 : vector<1x140x280xbf16> to vector<140x280xbf16>
    %cst_111 = arith.constant dense<0.000000e+00> : vector<14x280xf32>
    %127 = tpu.matmul %124, %126, %cst_111 {dimension_numbers = #tpu.dot_dimension_numbers<[1], [0], [0], [1], [0, 0, 1, 1], [], []>} : vector<14x140xbf16>, vector<140x280xbf16>, vector<14x280xf32> -> vector<14x280xf32>
    %128 = arith.addf %120, %127 : vector<14x280xf32>
    %c1_112 = arith.constant 1 : index
    %c0_113 = arith.constant 0 : index
    %c0_114 = arith.constant 0 : index
    %129 = vector.load %arg3[%c1_112, %c0_113, %c0_114] : memref<5x14x14xbf16, #tpu.memory_space<vmem>>, vector<1x14x14xbf16>
    %130 = vector.shape_cast %129 : vector<1x14x14xbf16> to vector<14x14xbf16>
    %cst_115 = arith.constant dense<0.000000e+00> : vector<14x140xf32>
    %131 = tpu.matmul %130, %119, %cst_115 {dimension_numbers = #tpu.dot_dimension_numbers<[1], [0], [0], [1], [0, 0, 1, 1], [], []>} : vector<14x14xbf16>, vector<14x140xbf16>, vector<14x140xf32> -> vector<14x140xf32>
    %132 = arith.truncf %131 : vector<14x140xf32> to vector<14x140xbf16>
    %c1_116 = arith.constant 1 : index
    %c0_117 = arith.constant 0 : index
    %c0_118 = arith.constant 0 : index
    %133 = vector.load %arg8[%c1_116, %c0_117, %c0_118] : memref<5x140x280xbf16, #tpu.memory_space<vmem>>, vector<1x140x280xbf16>
    %134 = vector.shape_cast %133 : vector<1x140x280xbf16> to vector<140x280xbf16>
    %cst_119 = arith.constant dense<0.000000e+00> : vector<14x280xf32>
    %135 = tpu.matmul %132, %134, %cst_119 {dimension_numbers = #tpu.dot_dimension_numbers<[1], [0], [0], [1], [0, 0, 1, 1], [], []>} : vector<14x140xbf16>, vector<140x280xbf16>, vector<14x280xf32> -> vector<14x280xf32>
    %136 = arith.addf %128, %135 : vector<14x280xf32>
    %c2_120 = arith.constant 2 : index
    %c0_121 = arith.constant 0 : index
    %c0_122 = arith.constant 0 : index
    %137 = vector.load %arg3[%c2_120, %c0_121, %c0_122] : memref<5x14x14xbf16, #tpu.memory_space<vmem>>, vector<1x14x14xbf16>
    %138 = vector.shape_cast %137 : vector<1x14x14xbf16> to vector<14x14xbf16>
    %cst_123 = arith.constant dense<0.000000e+00> : vector<14x140xf32>
    %139 = tpu.matmul %138, %119, %cst_123 {dimension_numbers = #tpu.dot_dimension_numbers<[1], [0], [0], [1], [0, 0, 1, 1], [], []>} : vector<14x14xbf16>, vector<14x140xbf16>, vector<14x140xf32> -> vector<14x140xf32>
    %140 = arith.truncf %139 : vector<14x140xf32> to vector<14x140xbf16>
    %c2_124 = arith.constant 2 : index
    %c0_125 = arith.constant 0 : index
    %c0_126 = arith.constant 0 : index
    %141 = vector.load %arg8[%c2_124, %c0_125, %c0_126] : memref<5x140x280xbf16, #tpu.memory_space<vmem>>, vector<1x140x280xbf16>
    %142 = vector.shape_cast %141 : vector<1x140x280xbf16> to vector<140x280xbf16>
    %cst_127 = arith.constant dense<0.000000e+00> : vector<14x280xf32>
    %143 = tpu.matmul %140, %142, %cst_127 {dimension_numbers = #tpu.dot_dimension_numbers<[1], [0], [0], [1], [0, 0, 1, 1], [], []>} : vector<14x140xbf16>, vector<140x280xbf16>, vector<14x280xf32> -> vector<14x280xf32>
    %144 = arith.addf %136, %143 : vector<14x280xf32>
    %c3_128 = arith.constant 3 : index
    %c0_129 = arith.constant 0 : index
    %c0_130 = arith.constant 0 : index
    %145 = vector.load %arg3[%c3_128, %c0_129, %c0_130] : memref<5x14x14xbf16, #tpu.memory_space<vmem>>, vector<1x14x14xbf16>
    %146 = vector.shape_cast %145 : vector<1x14x14xbf16> to vector<14x14xbf16>
    %cst_131 = arith.constant dense<0.000000e+00> : vector<14x140xf32>
    %147 = tpu.matmul %146, %119, %cst_131 {dimension_numbers = #tpu.dot_dimension_numbers<[1], [0], [0], [1], [0, 0, 1, 1], [], []>} : vector<14x14xbf16>, vector<14x140xbf16>, vector<14x140xf32> -> vector<14x140xf32>
    %148 = arith.truncf %147 : vector<14x140xf32> to vector<14x140xbf16>
    %c3_132 = arith.constant 3 : index
    %c0_133 = arith.constant 0 : index
    %c0_134 = arith.constant 0 : index
    %149 = vector.load %arg8[%c3_132, %c0_133, %c0_134] : memref<5x140x280xbf16, #tpu.memory_space<vmem>>, vector<1x140x280xbf16>
    %150 = vector.shape_cast %149 : vector<1x140x280xbf16> to vector<140x280xbf16>
    %cst_135 = arith.constant dense<0.000000e+00> : vector<14x280xf32>
    %151 = tpu.matmul %148, %150, %cst_135 {dimension_numbers = #tpu.dot_dimension_numbers<[1], [0], [0], [1], [0, 0, 1, 1], [], []>} : vector<14x140xbf16>, vector<140x280xbf16>, vector<14x280xf32> -> vector<14x280xf32>
    %152 = arith.addf %144, %151 : vector<14x280xf32>
    %c4_136 = arith.constant 4 : index
    %c0_137 = arith.constant 0 : index
    %c0_138 = arith.constant 0 : index
    %153 = vector.load %arg3[%c4_136, %c0_137, %c0_138] : memref<5x14x14xbf16, #tpu.memory_space<vmem>>, vector<1x14x14xbf16>
    %154 = vector.shape_cast %153 : vector<1x14x14xbf16> to vector<14x14xbf16>
    %cst_139 = arith.constant dense<0.000000e+00> : vector<14x140xf32>
    %155 = tpu.matmul %154, %119, %cst_139 {dimension_numbers = #tpu.dot_dimension_numbers<[1], [0], [0], [1], [0, 0, 1, 1], [], []>} : vector<14x14xbf16>, vector<14x140xbf16>, vector<14x140xf32> -> vector<14x140xf32>
    %156 = arith.truncf %155 : vector<14x140xf32> to vector<14x140xbf16>
    %c4_140 = arith.constant 4 : index
    %c0_141 = arith.constant 0 : index
    %c0_142 = arith.constant 0 : index
    %157 = vector.load %arg8[%c4_140, %c0_141, %c0_142] : memref<5x140x280xbf16, #tpu.memory_space<vmem>>, vector<1x140x280xbf16>
    %158 = vector.shape_cast %157 : vector<1x140x280xbf16> to vector<140x280xbf16>
    %cst_143 = arith.constant dense<0.000000e+00> : vector<14x280xf32>
    %159 = tpu.matmul %156, %158, %cst_143 {dimension_numbers = #tpu.dot_dimension_numbers<[1], [0], [0], [1], [0, 0, 1, 1], [], []>} : vector<14x140xbf16>, vector<140x280xbf16>, vector<14x280xf32> -> vector<14x280xf32>
    %160 = arith.addf %152, %159 : vector<14x280xf32>
    %c0_144 = arith.constant 0 : index
    %c0_145 = arith.constant 0 : index
    %161 = vector.load %arg9[%c0_144, %c0_145] : memref<1x280xf32, #tpu.memory_space<vmem>>, vector<1x280xf32>
    %162 = vector.broadcast %161 : vector<1x280xf32> to vector<14x280xf32>
    %163 = arith.addf %160, %162 : vector<14x280xf32>
    %cst_146 = arith.constant 0.000000e+00 : f32
    %164 = vector.broadcast %cst_146 : f32 to vector<14x280xf32>
    %165 = arith.maximumf %163, %164 : vector<14x280xf32>
    %166 = arith.truncf %165 : vector<14x280xf32> to vector<14x280xbf16>
    %c0_147 = arith.constant 0 : index
    %c0_148 = arith.constant 0 : index
    %c0_149 = arith.constant 0 : index
    %167 = vector.load %arg4[%c0_147, %c0_148, %c0_149] : memref<6x5x14xbf16, #tpu.memory_space<vmem>>, vector<1x5x14xbf16>
    %168 = vector.shape_cast %167 : vector<1x5x14xbf16> to vector<5x14xbf16>
    %cst_150 = arith.constant dense<0.000000e+00> : vector<5x280xf32>
    %169 = tpu.matmul %168, %166, %cst_150 {dimension_numbers = #tpu.dot_dimension_numbers<[1], [0], [0], [1], [0, 0, 1, 1], [], []>} : vector<5x14xbf16>, vector<14x280xbf16>, vector<5x280xf32> -> vector<5x280xf32>
    %170 = arith.truncf %169 : vector<5x280xf32> to vector<5x280xbf16>
    %c1_151 = arith.constant 1 : index
    %c0_152 = arith.constant 0 : index
    %c0_153 = arith.constant 0 : index
    %171 = vector.load %arg4[%c1_151, %c0_152, %c0_153] : memref<6x5x14xbf16, #tpu.memory_space<vmem>>, vector<1x5x14xbf16>
    %172 = vector.shape_cast %171 : vector<1x5x14xbf16> to vector<5x14xbf16>
    %cst_154 = arith.constant dense<0.000000e+00> : vector<5x280xf32>
    %173 = tpu.matmul %172, %166, %cst_154 {dimension_numbers = #tpu.dot_dimension_numbers<[1], [0], [0], [1], [0, 0, 1, 1], [], []>} : vector<5x14xbf16>, vector<14x280xbf16>, vector<5x280xf32> -> vector<5x280xf32>
    %174 = arith.truncf %173 : vector<5x280xf32> to vector<5x280xbf16>
    %c2_155 = arith.constant 2 : index
    %c0_156 = arith.constant 0 : index
    %c0_157 = arith.constant 0 : index
    %175 = vector.load %arg4[%c2_155, %c0_156, %c0_157] : memref<6x5x14xbf16, #tpu.memory_space<vmem>>, vector<1x5x14xbf16>
    %176 = vector.shape_cast %175 : vector<1x5x14xbf16> to vector<5x14xbf16>
    %cst_158 = arith.constant dense<0.000000e+00> : vector<5x280xf32>
    %177 = tpu.matmul %176, %166, %cst_158 {dimension_numbers = #tpu.dot_dimension_numbers<[1], [0], [0], [1], [0, 0, 1, 1], [], []>} : vector<5x14xbf16>, vector<14x280xbf16>, vector<5x280xf32> -> vector<5x280xf32>
    %178 = arith.truncf %177 : vector<5x280xf32> to vector<5x280xbf16>
    %c3_159 = arith.constant 3 : index
    %c0_160 = arith.constant 0 : index
    %c0_161 = arith.constant 0 : index
    %179 = vector.load %arg4[%c3_159, %c0_160, %c0_161] : memref<6x5x14xbf16, #tpu.memory_space<vmem>>, vector<1x5x14xbf16>
    %180 = vector.shape_cast %179 : vector<1x5x14xbf16> to vector<5x14xbf16>
    %cst_162 = arith.constant dense<0.000000e+00> : vector<5x280xf32>
    %181 = tpu.matmul %180, %166, %cst_162 {dimension_numbers = #tpu.dot_dimension_numbers<[1], [0], [0], [1], [0, 0, 1, 1], [], []>} : vector<5x14xbf16>, vector<14x280xbf16>, vector<5x280xf32> -> vector<5x280xf32>
    %182 = arith.truncf %181 : vector<5x280xf32> to vector<5x280xbf16>
    %c4_163 = arith.constant 4 : index
    %c0_164 = arith.constant 0 : index
    %c0_165 = arith.constant 0 : index
    %183 = vector.load %arg4[%c4_163, %c0_164, %c0_165] : memref<6x5x14xbf16, #tpu.memory_space<vmem>>, vector<1x5x14xbf16>
    %184 = vector.shape_cast %183 : vector<1x5x14xbf16> to vector<5x14xbf16>
    %cst_166 = arith.constant dense<0.000000e+00> : vector<5x280xf32>
    %185 = tpu.matmul %184, %166, %cst_166 {dimension_numbers = #tpu.dot_dimension_numbers<[1], [0], [0], [1], [0, 0, 1, 1], [], []>} : vector<5x14xbf16>, vector<14x280xbf16>, vector<5x280xf32> -> vector<5x280xf32>
    %186 = arith.truncf %185 : vector<5x280xf32> to vector<5x280xbf16>
    %c5_167 = arith.constant 5 : index
    %c0_168 = arith.constant 0 : index
    %c0_169 = arith.constant 0 : index
    %187 = vector.load %arg4[%c5_167, %c0_168, %c0_169] : memref<6x5x14xbf16, #tpu.memory_space<vmem>>, vector<1x5x14xbf16>
    %188 = vector.shape_cast %187 : vector<1x5x14xbf16> to vector<5x14xbf16>
    %cst_170 = arith.constant dense<0.000000e+00> : vector<5x280xf32>
    %189 = tpu.matmul %188, %166, %cst_170 {dimension_numbers = #tpu.dot_dimension_numbers<[1], [0], [0], [1], [0, 0, 1, 1], [], []>} : vector<5x14xbf16>, vector<14x280xbf16>, vector<5x280xf32> -> vector<5x280xf32>
    %190 = arith.truncf %189 : vector<5x280xf32> to vector<5x280xbf16>
    %cst_171 = arith.constant 0.000000e+00 : f32
    %191 = vector.broadcast %cst_171 : f32 to vector<5x100xf32>
    %c0_172 = arith.constant 0 : index
    %c0_173 = arith.constant 0 : index
    %c0_174 = arith.constant 0 : index
    %192 = vector.load %arg10[%c0_172, %c0_173, %c0_174] : memref<10x280x100xbf16, #tpu.memory_space<vmem>>, vector<1x280x100xbf16>
    %193 = vector.shape_cast %192 : vector<1x280x100xbf16> to vector<280x100xbf16>
    %cst_175 = arith.constant dense<0.000000e+00> : vector<5x100xf32>
    %194 = tpu.matmul %170, %193, %cst_175 {dimension_numbers = #tpu.dot_dimension_numbers<[1], [0], [0], [1], [0, 0, 1, 1], [], []>} : vector<5x280xbf16>, vector<280x100xbf16>, vector<5x100xf32> -> vector<5x100xf32>
    %195 = arith.addf %191, %194 : vector<5x100xf32>
    %c2_176 = arith.constant 2 : index
    %c0_177 = arith.constant 0 : index
    %c0_178 = arith.constant 0 : index
    %196 = vector.load %arg10[%c2_176, %c0_177, %c0_178] : memref<10x280x100xbf16, #tpu.memory_space<vmem>>, vector<1x280x100xbf16>
    %197 = vector.shape_cast %196 : vector<1x280x100xbf16> to vector<280x100xbf16>
    %cst_179 = arith.constant dense<0.000000e+00> : vector<5x100xf32>
    %198 = tpu.matmul %174, %197, %cst_179 {dimension_numbers = #tpu.dot_dimension_numbers<[1], [0], [0], [1], [0, 0, 1, 1], [], []>} : vector<5x280xbf16>, vector<280x100xbf16>, vector<5x100xf32> -> vector<5x100xf32>
    %199 = arith.addf %195, %198 : vector<5x100xf32>
    %c4_180 = arith.constant 4 : index
    %c0_181 = arith.constant 0 : index
    %c0_182 = arith.constant 0 : index
    %200 = vector.load %arg10[%c4_180, %c0_181, %c0_182] : memref<10x280x100xbf16, #tpu.memory_space<vmem>>, vector<1x280x100xbf16>
    %201 = vector.shape_cast %200 : vector<1x280x100xbf16> to vector<280x100xbf16>
    %cst_183 = arith.constant dense<0.000000e+00> : vector<5x100xf32>
    %202 = tpu.matmul %178, %201, %cst_183 {dimension_numbers = #tpu.dot_dimension_numbers<[1], [0], [0], [1], [0, 0, 1, 1], [], []>} : vector<5x280xbf16>, vector<280x100xbf16>, vector<5x100xf32> -> vector<5x100xf32>
    %203 = arith.addf %199, %202 : vector<5x100xf32>
    %c6_184 = arith.constant 6 : index
    %c0_185 = arith.constant 0 : index
    %c0_186 = arith.constant 0 : index
    %204 = vector.load %arg10[%c6_184, %c0_185, %c0_186] : memref<10x280x100xbf16, #tpu.memory_space<vmem>>, vector<1x280x100xbf16>
    %205 = vector.shape_cast %204 : vector<1x280x100xbf16> to vector<280x100xbf16>
    %cst_187 = arith.constant dense<0.000000e+00> : vector<5x100xf32>
    %206 = tpu.matmul %182, %205, %cst_187 {dimension_numbers = #tpu.dot_dimension_numbers<[1], [0], [0], [1], [0, 0, 1, 1], [], []>} : vector<5x280xbf16>, vector<280x100xbf16>, vector<5x100xf32> -> vector<5x100xf32>
    %207 = arith.addf %203, %206 : vector<5x100xf32>
    %c8_188 = arith.constant 8 : index
    %c0_189 = arith.constant 0 : index
    %c0_190 = arith.constant 0 : index
    %208 = vector.load %arg10[%c8_188, %c0_189, %c0_190] : memref<10x280x100xbf16, #tpu.memory_space<vmem>>, vector<1x280x100xbf16>
    %209 = vector.shape_cast %208 : vector<1x280x100xbf16> to vector<280x100xbf16>
    %cst_191 = arith.constant dense<0.000000e+00> : vector<5x100xf32>
    %210 = tpu.matmul %186, %209, %cst_191 {dimension_numbers = #tpu.dot_dimension_numbers<[1], [0], [0], [1], [0, 0, 1, 1], [], []>} : vector<5x280xbf16>, vector<280x100xbf16>, vector<5x100xf32> -> vector<5x100xf32>
    %211 = arith.addf %207, %210 : vector<5x100xf32>
    %cst_192 = arith.constant 0.000000e+00 : f32
    %212 = vector.broadcast %cst_192 : f32 to vector<5x100xf32>
    %c1_193 = arith.constant 1 : index
    %c0_194 = arith.constant 0 : index
    %c0_195 = arith.constant 0 : index
    %213 = vector.load %arg10[%c1_193, %c0_194, %c0_195] : memref<10x280x100xbf16, #tpu.memory_space<vmem>>, vector<1x280x100xbf16>
    %214 = vector.shape_cast %213 : vector<1x280x100xbf16> to vector<280x100xbf16>
    %cst_196 = arith.constant dense<0.000000e+00> : vector<5x100xf32>
    %215 = tpu.matmul %170, %214, %cst_196 {dimension_numbers = #tpu.dot_dimension_numbers<[1], [0], [0], [1], [0, 0, 1, 1], [], []>} : vector<5x280xbf16>, vector<280x100xbf16>, vector<5x100xf32> -> vector<5x100xf32>
    %216 = arith.addf %212, %215 : vector<5x100xf32>
    %c3_197 = arith.constant 3 : index
    %c0_198 = arith.constant 0 : index
    %c0_199 = arith.constant 0 : index
    %217 = vector.load %arg10[%c3_197, %c0_198, %c0_199] : memref<10x280x100xbf16, #tpu.memory_space<vmem>>, vector<1x280x100xbf16>
    %218 = vector.shape_cast %217 : vector<1x280x100xbf16> to vector<280x100xbf16>
    %cst_200 = arith.constant dense<0.000000e+00> : vector<5x100xf32>
    %219 = tpu.matmul %174, %218, %cst_200 {dimension_numbers = #tpu.dot_dimension_numbers<[1], [0], [0], [1], [0, 0, 1, 1], [], []>} : vector<5x280xbf16>, vector<280x100xbf16>, vector<5x100xf32> -> vector<5x100xf32>
    %220 = arith.addf %216, %219 : vector<5x100xf32>
    %c5_201 = arith.constant 5 : index
    %c0_202 = arith.constant 0 : index
    %c0_203 = arith.constant 0 : index
    %221 = vector.load %arg10[%c5_201, %c0_202, %c0_203] : memref<10x280x100xbf16, #tpu.memory_space<vmem>>, vector<1x280x100xbf16>
    %222 = vector.shape_cast %221 : vector<1x280x100xbf16> to vector<280x100xbf16>
    %cst_204 = arith.constant dense<0.000000e+00> : vector<5x100xf32>
    %223 = tpu.matmul %178, %222, %cst_204 {dimension_numbers = #tpu.dot_dimension_numbers<[1], [0], [0], [1], [0, 0, 1, 1], [], []>} : vector<5x280xbf16>, vector<280x100xbf16>, vector<5x100xf32> -> vector<5x100xf32>
    %224 = arith.addf %220, %223 : vector<5x100xf32>
    %c7_205 = arith.constant 7 : index
    %c0_206 = arith.constant 0 : index
    %c0_207 = arith.constant 0 : index
    %225 = vector.load %arg10[%c7_205, %c0_206, %c0_207] : memref<10x280x100xbf16, #tpu.memory_space<vmem>>, vector<1x280x100xbf16>
    %226 = vector.shape_cast %225 : vector<1x280x100xbf16> to vector<280x100xbf16>
    %cst_208 = arith.constant dense<0.000000e+00> : vector<5x100xf32>
    %227 = tpu.matmul %182, %226, %cst_208 {dimension_numbers = #tpu.dot_dimension_numbers<[1], [0], [0], [1], [0, 0, 1, 1], [], []>} : vector<5x280xbf16>, vector<280x100xbf16>, vector<5x100xf32> -> vector<5x100xf32>
    %228 = arith.addf %224, %227 : vector<5x100xf32>
    %c9_209 = arith.constant 9 : index
    %c0_210 = arith.constant 0 : index
    %c0_211 = arith.constant 0 : index
    %229 = vector.load %arg10[%c9_209, %c0_210, %c0_211] : memref<10x280x100xbf16, #tpu.memory_space<vmem>>, vector<1x280x100xbf16>
    %230 = vector.shape_cast %229 : vector<1x280x100xbf16> to vector<280x100xbf16>
    %cst_212 = arith.constant dense<0.000000e+00> : vector<5x100xf32>
    %231 = tpu.matmul %186, %230, %cst_212 {dimension_numbers = #tpu.dot_dimension_numbers<[1], [0], [0], [1], [0, 0, 1, 1], [], []>} : vector<5x280xbf16>, vector<280x100xbf16>, vector<5x100xf32> -> vector<5x100xf32>
    %232 = arith.addf %228, %231 : vector<5x100xf32>
    %233 = arith.maximumf %211, %232 : vector<5x100xf32>
    %cst_213 = arith.constant 0.000000e+00 : f32
    %234 = vector.broadcast %cst_213 : f32 to vector<5x100xf32>
    %c0_214 = arith.constant 0 : index
    %c0_215 = arith.constant 0 : index
    %c0_216 = arith.constant 0 : index
    %235 = vector.load %arg10[%c0_214, %c0_215, %c0_216] : memref<10x280x100xbf16, #tpu.memory_space<vmem>>, vector<1x280x100xbf16>
    %236 = vector.shape_cast %235 : vector<1x280x100xbf16> to vector<280x100xbf16>
    %cst_217 = arith.constant dense<0.000000e+00> : vector<5x100xf32>
    %237 = tpu.matmul %174, %236, %cst_217 {dimension_numbers = #tpu.dot_dimension_numbers<[1], [0], [0], [1], [0, 0, 1, 1], [], []>} : vector<5x280xbf16>, vector<280x100xbf16>, vector<5x100xf32> -> vector<5x100xf32>
    %238 = arith.addf %234, %237 : vector<5x100xf32>
    %c2_218 = arith.constant 2 : index
    %c0_219 = arith.constant 0 : index
    %c0_220 = arith.constant 0 : index
    %239 = vector.load %arg10[%c2_218, %c0_219, %c0_220] : memref<10x280x100xbf16, #tpu.memory_space<vmem>>, vector<1x280x100xbf16>
    %240 = vector.shape_cast %239 : vector<1x280x100xbf16> to vector<280x100xbf16>
    %cst_221 = arith.constant dense<0.000000e+00> : vector<5x100xf32>
    %241 = tpu.matmul %178, %240, %cst_221 {dimension_numbers = #tpu.dot_dimension_numbers<[1], [0], [0], [1], [0, 0, 1, 1], [], []>} : vector<5x280xbf16>, vector<280x100xbf16>, vector<5x100xf32> -> vector<5x100xf32>
    %242 = arith.addf %238, %241 : vector<5x100xf32>
    %c4_222 = arith.constant 4 : index
    %c0_223 = arith.constant 0 : index
    %c0_224 = arith.constant 0 : index
    %243 = vector.load %arg10[%c4_222, %c0_223, %c0_224] : memref<10x280x100xbf16, #tpu.memory_space<vmem>>, vector<1x280x100xbf16>
    %244 = vector.shape_cast %243 : vector<1x280x100xbf16> to vector<280x100xbf16>
    %cst_225 = arith.constant dense<0.000000e+00> : vector<5x100xf32>
    %245 = tpu.matmul %182, %244, %cst_225 {dimension_numbers = #tpu.dot_dimension_numbers<[1], [0], [0], [1], [0, 0, 1, 1], [], []>} : vector<5x280xbf16>, vector<280x100xbf16>, vector<5x100xf32> -> vector<5x100xf32>
    %246 = arith.addf %242, %245 : vector<5x100xf32>
    %c6_226 = arith.constant 6 : index
    %c0_227 = arith.constant 0 : index
    %c0_228 = arith.constant 0 : index
    %247 = vector.load %arg10[%c6_226, %c0_227, %c0_228] : memref<10x280x100xbf16, #tpu.memory_space<vmem>>, vector<1x280x100xbf16>
    %248 = vector.shape_cast %247 : vector<1x280x100xbf16> to vector<280x100xbf16>
    %cst_229 = arith.constant dense<0.000000e+00> : vector<5x100xf32>
    %249 = tpu.matmul %186, %248, %cst_229 {dimension_numbers = #tpu.dot_dimension_numbers<[1], [0], [0], [1], [0, 0, 1, 1], [], []>} : vector<5x280xbf16>, vector<280x100xbf16>, vector<5x100xf32> -> vector<5x100xf32>
    %250 = arith.addf %246, %249 : vector<5x100xf32>
    %c8_230 = arith.constant 8 : index
    %c0_231 = arith.constant 0 : index
    %c0_232 = arith.constant 0 : index
    %251 = vector.load %arg10[%c8_230, %c0_231, %c0_232] : memref<10x280x100xbf16, #tpu.memory_space<vmem>>, vector<1x280x100xbf16>
    %252 = vector.shape_cast %251 : vector<1x280x100xbf16> to vector<280x100xbf16>
    %cst_233 = arith.constant dense<0.000000e+00> : vector<5x100xf32>
    %253 = tpu.matmul %190, %252, %cst_233 {dimension_numbers = #tpu.dot_dimension_numbers<[1], [0], [0], [1], [0, 0, 1, 1], [], []>} : vector<5x280xbf16>, vector<280x100xbf16>, vector<5x100xf32> -> vector<5x100xf32>
    %254 = arith.addf %250, %253 : vector<5x100xf32>
    %cst_234 = arith.constant 0.000000e+00 : f32
    %255 = vector.broadcast %cst_234 : f32 to vector<5x100xf32>
    %c1_235 = arith.constant 1 : index
    %c0_236 = arith.constant 0 : index
    %c0_237 = arith.constant 0 : index
    %256 = vector.load %arg10[%c1_235, %c0_236, %c0_237] : memref<10x280x100xbf16, #tpu.memory_space<vmem>>, vector<1x280x100xbf16>
    %257 = vector.shape_cast %256 : vector<1x280x100xbf16> to vector<280x100xbf16>
    %cst_238 = arith.constant dense<0.000000e+00> : vector<5x100xf32>
    %258 = tpu.matmul %174, %257, %cst_238 {dimension_numbers = #tpu.dot_dimension_numbers<[1], [0], [0], [1], [0, 0, 1, 1], [], []>} : vector<5x280xbf16>, vector<280x100xbf16>, vector<5x100xf32> -> vector<5x100xf32>
    %259 = arith.addf %255, %258 : vector<5x100xf32>
    %c3_239 = arith.constant 3 : index
    %c0_240 = arith.constant 0 : index
    %c0_241 = arith.constant 0 : index
    %260 = vector.load %arg10[%c3_239, %c0_240, %c0_241] : memref<10x280x100xbf16, #tpu.memory_space<vmem>>, vector<1x280x100xbf16>
    %261 = vector.shape_cast %260 : vector<1x280x100xbf16> to vector<280x100xbf16>
    %cst_242 = arith.constant dense<0.000000e+00> : vector<5x100xf32>
    %262 = tpu.matmul %178, %261, %cst_242 {dimension_numbers = #tpu.dot_dimension_numbers<[1], [0], [0], [1], [0, 0, 1, 1], [], []>} : vector<5x280xbf16>, vector<280x100xbf16>, vector<5x100xf32> -> vector<5x100xf32>
    %263 = arith.addf %259, %262 : vector<5x100xf32>
    %c5_243 = arith.constant 5 : index
    %c0_244 = arith.constant 0 : index
    %c0_245 = arith.constant 0 : index
    %264 = vector.load %arg10[%c5_243, %c0_244, %c0_245] : memref<10x280x100xbf16, #tpu.memory_space<vmem>>, vector<1x280x100xbf16>
    %265 = vector.shape_cast %264 : vector<1x280x100xbf16> to vector<280x100xbf16>
    %cst_246 = arith.constant dense<0.000000e+00> : vector<5x100xf32>
    %266 = tpu.matmul %182, %265, %cst_246 {dimension_numbers = #tpu.dot_dimension_numbers<[1], [0], [0], [1], [0, 0, 1, 1], [], []>} : vector<5x280xbf16>, vector<280x100xbf16>, vector<5x100xf32> -> vector<5x100xf32>
    %267 = arith.addf %263, %266 : vector<5x100xf32>
    %c7_247 = arith.constant 7 : index
    %c0_248 = arith.constant 0 : index
    %c0_249 = arith.constant 0 : index
    %268 = vector.load %arg10[%c7_247, %c0_248, %c0_249] : memref<10x280x100xbf16, #tpu.memory_space<vmem>>, vector<1x280x100xbf16>
    %269 = vector.shape_cast %268 : vector<1x280x100xbf16> to vector<280x100xbf16>
    %cst_250 = arith.constant dense<0.000000e+00> : vector<5x100xf32>
    %270 = tpu.matmul %186, %269, %cst_250 {dimension_numbers = #tpu.dot_dimension_numbers<[1], [0], [0], [1], [0, 0, 1, 1], [], []>} : vector<5x280xbf16>, vector<280x100xbf16>, vector<5x100xf32> -> vector<5x100xf32>
    %271 = arith.addf %267, %270 : vector<5x100xf32>
    %c9_251 = arith.constant 9 : index
    %c0_252 = arith.constant 0 : index
    %c0_253 = arith.constant 0 : index
    %272 = vector.load %arg10[%c9_251, %c0_252, %c0_253] : memref<10x280x100xbf16, #tpu.memory_space<vmem>>, vector<1x280x100xbf16>
    %273 = vector.shape_cast %272 : vector<1x280x100xbf16> to vector<280x100xbf16>
    %cst_254 = arith.constant dense<0.000000e+00> : vector<5x100xf32>
    %274 = tpu.matmul %190, %273, %cst_254 {dimension_numbers = #tpu.dot_dimension_numbers<[1], [0], [0], [1], [0, 0, 1, 1], [], []>} : vector<5x280xbf16>, vector<280x100xbf16>, vector<5x100xf32> -> vector<5x100xf32>
    %275 = arith.addf %271, %274 : vector<5x100xf32>
    %276 = arith.maximumf %254, %275 : vector<5x100xf32>
    %277 = arith.maximumf %233, %276 : vector<5x100xf32>
    %c0_255 = arith.constant 0 : index
    %c0_256 = arith.constant 0 : index
    %278 = vector.load %arg11[%c0_255, %c0_256] : memref<1x100xf32, #tpu.memory_space<vmem>>, vector<1x100xf32>
    %279 = vector.broadcast %278 : vector<1x100xf32> to vector<5x100xf32>
    %280 = arith.addf %277, %279 : vector<5x100xf32>
    %cst_257 = arith.constant 0.000000e+00 : f32
    %281 = vector.broadcast %cst_257 : f32 to vector<5x100xf32>
    %282 = arith.maximumf %280, %281 : vector<5x100xf32>
    %283 = arith.truncf %282 : vector<5x100xf32> to vector<5x100xbf16>
    %cst_258 = arith.constant 0.000000e+00 : f32
    %284 = vector.broadcast %cst_258 : f32 to vector<1x50xf32>
    %c0_259 = arith.constant 0 : index
    %c0_260 = arith.constant 0 : index
    %c0_261 = arith.constant 0 : index
    %285 = vector.load %arg5[%c0_259, %c0_260, %c0_261] : memref<5x1x5xbf16, #tpu.memory_space<vmem>>, vector<1x1x5xbf16>
    %286 = vector.shape_cast %285 : vector<1x1x5xbf16> to vector<1x5xbf16>
    %cst_262 = arith.constant dense<0.000000e+00> : vector<1x100xf32>
    %287 = tpu.matmul %286, %283, %cst_262 {dimension_numbers = #tpu.dot_dimension_numbers<[1], [0], [0], [1], [0, 0, 1, 1], [], []>} : vector<1x5xbf16>, vector<5x100xbf16>, vector<1x100xf32> -> vector<1x100xf32>
    %288 = arith.truncf %287 : vector<1x100xf32> to vector<1x100xbf16>
    %c0_263 = arith.constant 0 : index
    %c0_264 = arith.constant 0 : index
    %c0_265 = arith.constant 0 : index
    %289 = vector.load %arg12[%c0_263, %c0_264, %c0_265] : memref<5x100x50xbf16, #tpu.memory_space<vmem>>, vector<1x100x50xbf16>
    %290 = vector.shape_cast %289 : vector<1x100x50xbf16> to vector<100x50xbf16>
    %cst_266 = arith.constant dense<0.000000e+00> : vector<1x50xf32>
    %291 = tpu.matmul %288, %290, %cst_266 {dimension_numbers = #tpu.dot_dimension_numbers<[1], [0], [0], [1], [0, 0, 1, 1], [], []>} : vector<1x100xbf16>, vector<100x50xbf16>, vector<1x50xf32> -> vector<1x50xf32>
    %292 = arith.addf %284, %291 : vector<1x50xf32>
    %c1_267 = arith.constant 1 : index
    %c0_268 = arith.constant 0 : index
    %c0_269 = arith.constant 0 : index
    %293 = vector.load %arg5[%c1_267, %c0_268, %c0_269] : memref<5x1x5xbf16, #tpu.memory_space<vmem>>, vector<1x1x5xbf16>
    %294 = vector.shape_cast %293 : vector<1x1x5xbf16> to vector<1x5xbf16>
    %cst_270 = arith.constant dense<0.000000e+00> : vector<1x100xf32>
    %295 = tpu.matmul %294, %283, %cst_270 {dimension_numbers = #tpu.dot_dimension_numbers<[1], [0], [0], [1], [0, 0, 1, 1], [], []>} : vector<1x5xbf16>, vector<5x100xbf16>, vector<1x100xf32> -> vector<1x100xf32>
    %296 = arith.truncf %295 : vector<1x100xf32> to vector<1x100xbf16>
    %c1_271 = arith.constant 1 : index
    %c0_272 = arith.constant 0 : index
    %c0_273 = arith.constant 0 : index
    %297 = vector.load %arg12[%c1_271, %c0_272, %c0_273] : memref<5x100x50xbf16, #tpu.memory_space<vmem>>, vector<1x100x50xbf16>
    %298 = vector.shape_cast %297 : vector<1x100x50xbf16> to vector<100x50xbf16>
    %cst_274 = arith.constant dense<0.000000e+00> : vector<1x50xf32>
    %299 = tpu.matmul %296, %298, %cst_274 {dimension_numbers = #tpu.dot_dimension_numbers<[1], [0], [0], [1], [0, 0, 1, 1], [], []>} : vector<1x100xbf16>, vector<100x50xbf16>, vector<1x50xf32> -> vector<1x50xf32>
    %300 = arith.addf %292, %299 : vector<1x50xf32>
    %c2_275 = arith.constant 2 : index
    %c0_276 = arith.constant 0 : index
    %c0_277 = arith.constant 0 : index
    %301 = vector.load %arg5[%c2_275, %c0_276, %c0_277] : memref<5x1x5xbf16, #tpu.memory_space<vmem>>, vector<1x1x5xbf16>
    %302 = vector.shape_cast %301 : vector<1x1x5xbf16> to vector<1x5xbf16>
    %cst_278 = arith.constant dense<0.000000e+00> : vector<1x100xf32>
    %303 = tpu.matmul %302, %283, %cst_278 {dimension_numbers = #tpu.dot_dimension_numbers<[1], [0], [0], [1], [0, 0, 1, 1], [], []>} : vector<1x5xbf16>, vector<5x100xbf16>, vector<1x100xf32> -> vector<1x100xf32>
    %304 = arith.truncf %303 : vector<1x100xf32> to vector<1x100xbf16>
    %c2_279 = arith.constant 2 : index
    %c0_280 = arith.constant 0 : index
    %c0_281 = arith.constant 0 : index
    %305 = vector.load %arg12[%c2_279, %c0_280, %c0_281] : memref<5x100x50xbf16, #tpu.memory_space<vmem>>, vector<1x100x50xbf16>
    %306 = vector.shape_cast %305 : vector<1x100x50xbf16> to vector<100x50xbf16>
    %cst_282 = arith.constant dense<0.000000e+00> : vector<1x50xf32>
    %307 = tpu.matmul %304, %306, %cst_282 {dimension_numbers = #tpu.dot_dimension_numbers<[1], [0], [0], [1], [0, 0, 1, 1], [], []>} : vector<1x100xbf16>, vector<100x50xbf16>, vector<1x50xf32> -> vector<1x50xf32>
    %308 = arith.addf %300, %307 : vector<1x50xf32>
    %c3_283 = arith.constant 3 : index
    %c0_284 = arith.constant 0 : index
    %c0_285 = arith.constant 0 : index
    %309 = vector.load %arg5[%c3_283, %c0_284, %c0_285] : memref<5x1x5xbf16, #tpu.memory_space<vmem>>, vector<1x1x5xbf16>
    %310 = vector.shape_cast %309 : vector<1x1x5xbf16> to vector<1x5xbf16>
    %cst_286 = arith.constant dense<0.000000e+00> : vector<1x100xf32>
    %311 = tpu.matmul %310, %283, %cst_286 {dimension_numbers = #tpu.dot_dimension_numbers<[1], [0], [0], [1], [0, 0, 1, 1], [], []>} : vector<1x5xbf16>, vector<5x100xbf16>, vector<1x100xf32> -> vector<1x100xf32>
    %312 = arith.truncf %311 : vector<1x100xf32> to vector<1x100xbf16>
    %c3_287 = arith.constant 3 : index
    %c0_288 = arith.constant 0 : index
    %c0_289 = arith.constant 0 : index
    %313 = vector.load %arg12[%c3_287, %c0_288, %c0_289] : memref<5x100x50xbf16, #tpu.memory_space<vmem>>, vector<1x100x50xbf16>
    %314 = vector.shape_cast %313 : vector<1x100x50xbf16> to vector<100x50xbf16>
    %cst_290 = arith.constant dense<0.000000e+00> : vector<1x50xf32>
    %315 = tpu.matmul %312, %314, %cst_290 {dimension_numbers = #tpu.dot_dimension_numbers<[1], [0], [0], [1], [0, 0, 1, 1], [], []>} : vector<1x100xbf16>, vector<100x50xbf16>, vector<1x50xf32> -> vector<1x50xf32>
    %316 = arith.addf %308, %315 : vector<1x50xf32>
    %c4_291 = arith.constant 4 : index
    %c0_292 = arith.constant 0 : index
    %c0_293 = arith.constant 0 : index
    %317 = vector.load %arg5[%c4_291, %c0_292, %c0_293] : memref<5x1x5xbf16, #tpu.memory_space<vmem>>, vector<1x1x5xbf16>
    %318 = vector.shape_cast %317 : vector<1x1x5xbf16> to vector<1x5xbf16>
    %cst_294 = arith.constant dense<0.000000e+00> : vector<1x100xf32>
    %319 = tpu.matmul %318, %283, %cst_294 {dimension_numbers = #tpu.dot_dimension_numbers<[1], [0], [0], [1], [0, 0, 1, 1], [], []>} : vector<1x5xbf16>, vector<5x100xbf16>, vector<1x100xf32> -> vector<1x100xf32>
    %320 = arith.truncf %319 : vector<1x100xf32> to vector<1x100xbf16>
    %c4_295 = arith.constant 4 : index
    %c0_296 = arith.constant 0 : index
    %c0_297 = arith.constant 0 : index
    %321 = vector.load %arg12[%c4_295, %c0_296, %c0_297] : memref<5x100x50xbf16, #tpu.memory_space<vmem>>, vector<1x100x50xbf16>
    %322 = vector.shape_cast %321 : vector<1x100x50xbf16> to vector<100x50xbf16>
    %cst_298 = arith.constant dense<0.000000e+00> : vector<1x50xf32>
    %323 = tpu.matmul %320, %322, %cst_298 {dimension_numbers = #tpu.dot_dimension_numbers<[1], [0], [0], [1], [0, 0, 1, 1], [], []>} : vector<1x100xbf16>, vector<100x50xbf16>, vector<1x50xf32> -> vector<1x50xf32>
    %324 = arith.addf %316, %323 : vector<1x50xf32>
    %c0_299 = arith.constant 0 : index
    %c0_300 = arith.constant 0 : index
    %325 = vector.load %arg13[%c0_299, %c0_300] : memref<1x50xf32, #tpu.memory_space<vmem>>, vector<1x50xf32>
    %326 = arith.addf %324, %325 : vector<1x50xf32>
    %cst_301 = arith.constant 0.000000e+00 : f32
    %327 = vector.broadcast %cst_301 : f32 to vector<1x50xf32>
    %328 = arith.maximumf %326, %327 : vector<1x50xf32>
    %329 = arith.truncf %328 : vector<1x50xf32> to vector<1x50xbf16>
    %c0_302 = arith.constant 0 : index
    %c0_303 = arith.constant 0 : index
    %330 = vector.load %arg14[%c0_302, %c0_303] : memref<50x10xbf16, #tpu.memory_space<vmem>>, vector<50x10xbf16>
    %cst_304 = arith.constant dense<0.000000e+00> : vector<1x10xf32>
    %331 = tpu.matmul %329, %330, %cst_304 {dimension_numbers = #tpu.dot_dimension_numbers<[1], [0], [0], [1], [0, 0, 1, 1], [], []>} : vector<1x50xbf16>, vector<50x10xbf16>, vector<1x10xf32> -> vector<1x10xf32>
    %c0_305 = arith.constant 0 : index
    %c0_306 = arith.constant 0 : index
    %332 = vector.load %arg15[%c0_305, %c0_306] : memref<1x10xf32, #tpu.memory_space<vmem>>, vector<1x10xf32>
    %333 = arith.addf %331, %332 : vector<1x10xf32>
    %cst_307 = arith.constant dense<0xFF800000> : vector<1xf32>
    %334 = vector.multi_reduction <maximumf>, %333, %cst_307 [1] : vector<1x10xf32> to vector<1xf32>
    %335 = vector.shape_cast %334 : vector<1xf32> to vector<1x1xf32>
    %336 = vector.broadcast %335 : vector<1x1xf32> to vector<1x10xf32>
    %337 = arith.subf %333, %336 : vector<1x10xf32>
    %338 = math.exp %337 : vector<1x10xf32>
    %cst_308 = arith.constant dense<0.000000e+00> : vector<1xf32>
    %339 = vector.multi_reduction <add>, %338, %cst_308 [1] : vector<1x10xf32> to vector<1xf32>
    %340 = vector.shape_cast %339 : vector<1xf32> to vector<1x1xf32>
    %341 = math.log %340 : vector<1x1xf32>
    %342 = vector.broadcast %341 : vector<1x1xf32> to vector<1x10xf32>
    %343 = arith.subf %337, %342 : vector<1x10xf32>
    %c0_309 = arith.constant 0 : index
    %c0_310 = arith.constant 0 : index
    %c0_311 = arith.constant 0 : index
    %344 = vector.load %arg16[%c0_309, %c0_310, %c0_311] : memref<1x1x10xf32, #tpu.memory_space<vmem>>, vector<1x1x10xf32>
    %345 = vector.shape_cast %344 : vector<1x1x10xf32> to vector<1x10xf32>
    %346 = vector.shape_cast %343 : vector<1x10xf32> to vector<1x1x10xf32>
    tpu.vector_store %arg16[%c0_309, %c0_310, %c0_311], %346 {strides = array<i32>} : memref<1x1x10xf32, #tpu.memory_space<vmem>>, vector<1x1x10xf32>,
    return
  }
  func.func @transform_0(%arg0: i32) -> (i32, i32, i32) {
    %c0_i32 = arith.constant 0 : i32
    %c0_i32_0 = arith.constant 0 : i32
    %c0_i32_1 = arith.constant 0 : i32
    return %arg0, %c0_i32, %c0_i32_0 : i32, i32, i32
  }
  func.func @transform_1(%arg0: i32) -> (i32, i32, i32) {
    %c0_i32 = arith.constant 0 : i32
    %c0_i32_0 = arith.constant 0 : i32
    %c0_i32_1 = arith.constant 0 : i32
    %c0_i32_2 = arith.constant 0 : i32
    return %c0_i32, %c0_i32_0, %c0_i32_1 : i32, i32, i32
  }
  func.func @transform_2(%arg0: i32) -> (i32, i32, i32) {
    %c0_i32 = arith.constant 0 : i32
    %c0_i32_0 = arith.constant 0 : i32
    %c0_i32_1 = arith.constant 0 : i32
    %c0_i32_2 = arith.constant 0 : i32
    return %c0_i32, %c0_i32_0, %c0_i32_1 : i32, i32, i32
  }
  func.func @transform_3(%arg0: i32) -> (i32, i32, i32) {
    %c0_i32 = arith.constant 0 : i32
    %c0_i32_0 = arith.constant 0 : i32
    %c0_i32_1 = arith.constant 0 : i32
    %c0_i32_2 = arith.constant 0 : i32
    return %c0_i32, %c0_i32_0, %c0_i32_1 : i32, i32, i32
  }
  func.func @transform_4(%arg0: i32) -> (i32, i32, i32) {
    %c0_i32 = arith.constant 0 : i32
    %c0_i32_0 = arith.constant 0 : i32
    %c0_i32_1 = arith.constant 0 : i32
    %c0_i32_2 = arith.constant 0 : i32
    return %c0_i32, %c0_i32_0, %c0_i32_1 : i32, i32, i32
  }
  func.func @transform_5(%arg0: i32) -> (i32, i32, i32) {
    %c0_i32 = arith.constant 0 : i32
    %c0_i32_0 = arith.constant 0 : i32
    %c0_i32_1 = arith.constant 0 : i32
    %c0_i32_2 = arith.constant 0 : i32
    return %c0_i32, %c0_i32_0, %c0_i32_1 : i32, i32, i32
  }
  func.func @transform_6(%arg0: i32) -> (i32, i32) {
    %c0_i32 = arith.constant 0 : i32
    %c0_i32_0 = arith.constant 0 : i32
    %c0_i32_1 = arith.constant 0 : i32
    return %c0_i32, %c0_i32_0 : i32, i32
  }
  func.func @transform_7(%arg0: i32) -> (i32, i32, i32) {
    %c0_i32 = arith.constant 0 : i32
    %c0_i32_0 = arith.constant 0 : i32
    %c0_i32_1 = arith.constant 0 : i32
    %c0_i32_2 = arith.constant 0 : i32
    return %c0_i32, %c0_i32_0, %c0_i32_1 : i32, i32, i32
  }
  func.func @transform_8(%arg0: i32) -> (i32, i32) {
    %c0_i32 = arith.constant 0 : i32
    %c0_i32_0 = arith.constant 0 : i32
    %c0_i32_1 = arith.constant 0 : i32
    return %c0_i32, %c0_i32_0 : i32, i32
  }
  func.func @transform_9(%arg0: i32) -> (i32, i32, i32) {
    %c0_i32 = arith.constant 0 : i32
    %c0_i32_0 = arith.constant 0 : i32
    %c0_i32_1 = arith.constant 0 : i32
    %c0_i32_2 = arith.constant 0 : i32
    return %c0_i32, %c0_i32_0, %c0_i32_1 : i32, i32, i32
  }
  func.func @transform_10(%arg0: i32) -> (i32, i32) {
    %c0_i32 = arith.constant 0 : i32
    %c0_i32_0 = arith.constant 0 : i32
    %c0_i32_1 = arith.constant 0 : i32
    return %c0_i32, %c0_i32_0 : i32, i32
  }
  func.func @transform_11(%arg0: i32) -> (i32, i32, i32) {
    %c0_i32 = arith.constant 0 : i32
    %c0_i32_0 = arith.constant 0 : i32
    %c0_i32_1 = arith.constant 0 : i32
    %c0_i32_2 = arith.constant 0 : i32
    return %c0_i32, %c0_i32_0, %c0_i32_1 : i32, i32, i32
  }
  func.func @transform_12(%arg0: i32) -> (i32, i32) {
    %c0_i32 = arith.constant 0 : i32
    %c0_i32_0 = arith.constant 0 : i32
    %c0_i32_1 = arith.constant 0 : i32
    return %c0_i32, %c0_i32_0 : i32, i32
  }
  func.func @transform_13(%arg0: i32) -> (i32, i32) {
    %c0_i32 = arith.constant 0 : i32
    %c0_i32_0 = arith.constant 0 : i32
    %c0_i32_1 = arith.constant 0 : i32
    return %c0_i32, %c0_i32_0 : i32, i32
  }
  func.func @transform_14(%arg0: i32) -> (i32, i32) {
    %c0_i32 = arith.constant 0 : i32
    %c0_i32_0 = arith.constant 0 : i32
    %c0_i32_1 = arith.constant 0 : i32
    return %c0_i32, %c0_i32_0 : i32, i32
  }
  func.func @transform_15(%arg0: i32) -> (i32, i32, i32) {
    %c0_i32 = arith.constant 0 : i32
    %c0_i32_0 = arith.constant 0 : i32
    %c0_i32_1 = arith.constant 0 : i32
    return %arg0, %c0_i32, %c0_i32_0 : i32, i32, i32
  }
}

</mosaic_0001>

<llo_original>
// kernel: net2_forward.1
$region0: #{net2_forward.1}
  #allocation0 [shape = 'u32[]', space=smem, size = 0x4, offset = 0x4, fixed_abs, tag = 'smem constant byte address 0x4 - core index']
  #allocation1 [shape = 'u32[144,128]{1,0:T(1,128)}', space=vmem, size = 0x12000, scoped, tag = 'internal scratch']
  %s0 = inlined_call_operand.vmem [shape: f32[2,32,96], index: 0, kind: input, shape index: {}]
  %s1 = inlined_call_operand.vmem [shape: bf16[6,14,32], index: 1, kind: input, shape index: {}]
  %s2 = inlined_call_operand.vmem [shape: bf16[5,14,14], index: 2, kind: input, shape index: {}]
  %s3 = inlined_call_operand.vmem [shape: bf16[6,5,14], index: 3, kind: input, shape index: {}]
  %s4 = inlined_call_operand.vmem [shape: bf16[5,1,5], index: 4, kind: input, shape index: {}]
  %s5 = inlined_call_operand.vmem [shape: bf16[10,96,140], index: 5, kind: input, shape index: {}]
  %s6 = inlined_call_operand.vmem [shape: f32[1,140], index: 6, kind: input, shape index: {}]
  %s7 = inlined_call_operand.vmem [shape: bf16[5,140,280], index: 7, kind: input, shape index: {}]
  %s8 = inlined_call_operand.vmem [shape: f32[1,280], index: 8, kind: input, shape index: {}]
  %s9 = inlined_call_operand.vmem [shape: bf16[10,280,100], index: 9, kind: input, shape index: {}]
  %s10 = inlined_call_operand.vmem [shape: f32[1,100], index: 10, kind: input, shape index: {}]
  %s11 = inlined_call_operand.vmem [shape: bf16[5,100,50], index: 11, kind: input, shape index: {}]
  %s12 = inlined_call_operand.vmem [shape: f32[1,50], index: 12, kind: input, shape index: {}]
  %s13 = inlined_call_operand.vmem [shape: bf16[50,10], index: 13, kind: input, shape index: {}]
  %s14 = inlined_call_operand.vmem [shape: f32[1,10], index: 14, kind: input, shape index: {}]
  %s15 = inlined_call_operand.hbm [shape: f32[2,1,10], index: 15, kind: output, shape index: {}]
  %s16 = sld [smem:[#allocation0]]
  $region93: #{net2_forward.1} parent=0
    _
  %s18 = ssub.s32 1, %s16
  %s19 = scalar_select 0, %s18, %s16
  $region1: #{net2_forward.1} parent=0
    #allocation2 [shape = 'u8[1024]{0}', space=vmem, size = 0x400, scoped, tag = 'output window, operand 0']
    #allocation3 [shape = 's32[2]{0}', space=sflag, size = 0x8, scoped, tag = 'scoped memory for net2_forward.1']
    %20 = vsyncpa [#allocation3], 0
    %s21 = scalar_lea.sflag [#allocation3], 1
    %22 = vsyncpa %s21, 0
    loop: start=0, step=1, limit=4
    $region2: #{net2_forward.1} parent=1 // loop_pre_header
      _
    $region3: #{net2_forward.1} parent=1 // loop_header
      %s24 = sphi 0, %s28
      %p25 = scmp.ge.s32.totalorder %s24, 4
      %s34 = sphi 0, %s36
      %s37 = sphi 0, %s34
      %s38 = sphi 0, %s37
      %s54 = sphi 0, %s38
      %s58 = sphi 0, %s58
      %s60 = sphi 0, %s58
      %s61 = sphi 0, %s60
      %s75 = sphi 0, %s61
      %s79 = sphi 0, %s79
      %s81 = sphi 0, %s79
      %s82 = sphi 0, %s81
      %s96 = sphi 0, %s82
      %s100 = sphi 0, %s100
      %s102 = sphi 0, %s100
      %s103 = sphi 0, %s102
      %s117 = sphi 0, %s103
      %s121 = sphi 0, %s121
      %s123 = sphi 0, %s121
      %s124 = sphi 0, %s123
      %s138 = sphi 0, %s124
      %s142 = sphi 0, %s142
      %s144 = sphi 0, %s142
      %s145 = sphi 0, %s144
      %s159 = sphi 0, %s145
      %s163 = sphi 0, %s163
      %s165 = sphi 0, %s163
      %s166 = sphi 0, %s165
      %s180 = sphi 0, %s166
      %s184 = sphi 0, %s184
      %s186 = sphi 0, %s184
      %s187 = sphi 0, %s186
      %s201 = sphi 0, %s187
      %s205 = sphi 0, %s205
      %s207 = sphi 0, %s205
      %s208 = sphi 0, %s207
      %s222 = sphi 0, %s208
      %s226 = sphi 0, %s226
      %s228 = sphi 0, %s226
      %s229 = sphi 0, %s228
      %s243 = sphi 0, %s229
      %s247 = sphi 0, %s247
      %s249 = sphi 0, %s247
      %s250 = sphi 0, %s249
      %s264 = sphi 0, %s250
      %s268 = sphi 0, %s268
      %s270 = sphi 0, %s268
      %s271 = sphi 0, %s270
      %s285 = sphi 0, %s271
      %s289 = sphi 0, %s289
      %s291 = sphi 0, %s289
      %s292 = sphi 0, %s291
      %s306 = sphi 0, %s292
      %s310 = sphi 0, %s310
      %s312 = sphi 0, %s310
      %s313 = sphi 0, %s312
      %s327 = sphi 0, %s313
      %s331 = sphi 0, %s331
      %s333 = sphi 0, %s331
      %s334 = sphi 0, %s333
      %s348 = sphi 0, %s334
      %s354 = sphi 0, %s356
      %s357 = sphi 0, %s354
      %s358 = sphi 0, %s357
      %s374 = sphi 0, %s358
    $region4: #{net2_forward.1} parent=1 // loop_header_branch
      %27 = sbr.rel (%p25) target = $region8
    $region5: #{net2_forward.1} parent=1 // loop_body
      %s29 = ssub.s32 %s24, 1
      %s30 = ssub.s32 %s24, 2
      %s31 = sadd.s32 %s24, 1
      %s32 = ssub.s32 %s24, %s31
      %p33 = scmp.eq.s32.totalorder %s32, 0
      %s35 = sadd.s32 %s34, 1
      %s36 = scalar_select %p33, %s34, %s35
      %p39 = pneg %p33
      %p40 = scmp.eq.s32.totalorder %s24, 1
      %p41 = por %p39, %p40
      %p42 = scmp.ne.s32.totalorder %s34, %s37
      %p43 = scmp.eq.s32.totalorder %s24, 0
      %p44 = por %p42, %p43
      %p45 = scmp.ne.s32.totalorder %s34, %s37
      %p46 = scmp.eq.s32.totalorder %s29, 1
      %p47 = por %p45, %p46
      %p48 = scmp.ne.s32.totalorder %s37, %s38
      %p49 = scmp.eq.s32.totalorder %s29, 0
      %p50 = por %p48, %p49
      %p51 = scmp.ne.s32.totalorder %s37, %s38
      %p52 = scmp.eq.s32.totalorder %s30, 1
      %p53 = por %p51, %p52
      %p55 = scmp.ne.s32.totalorder %s38, %s54
      %p56 = scmp.eq.s32.totalorder %s30, 0
      %p57 = por %p55, %p56
      %s59 = sadd.s32 %s58, 1
      %p62 = scmp.eq.s32.totalorder %s24, 1
      %p63 = scmp.ne.s32.totalorder %s58, %s60
      %p64 = scmp.eq.s32.totalorder %s24, 0
      %p65 = por %p63, %p64
      %p66 = scmp.ne.s32.totalorder %s58, %s60
      %p67 = scmp.eq.s32.totalorder %s29, 1
      %p68 = por %p66, %p67
      %p69 = scmp.ne.s32.totalorder %s60, %s61
      %p70 = scmp.eq.s32.totalorder %s29, 0
      %p71 = por %p69, %p70
      %p72 = scmp.ne.s32.totalorder %s60, %s61
      %p73 = scmp.eq.s32.totalorder %s30, 1
      %p74 = por %p72, %p73
      %p76 = scmp.ne.s32.totalorder %s61, %s75
      %p77 = scmp.eq.s32.totalorder %s30, 0
      %p78 = por %p76, %p77
      %s80 = sadd.s32 %s79, 1
      %p83 = scmp.eq.s32.totalorder %s24, 1
      %p84 = scmp.ne.s32.totalorder %s79, %s81
      %p85 = scmp.eq.s32.totalorder %s24, 0
      %p86 = por %p84, %p85
      %p87 = scmp.ne.s32.totalorder %s79, %s81
      %p88 = scmp.eq.s32.totalorder %s29, 1
      %p89 = por %p87, %p88
      %p90 = scmp.ne.s32.totalorder %s81, %s82
      %p91 = scmp.eq.s32.totalorder %s29, 0
      %p92 = por %p90, %p91
      %p93 = scmp.ne.s32.totalorder %s81, %s82
      %p94 = scmp.eq.s32.totalorder %s30, 1
      %p95 = por %p93, %p94
      %p97 = scmp.ne.s32.totalorder %s82, %s96
      %p98 = scmp.eq.s32.totalorder %s30, 0
      %p99 = por %p97, %p98
      %s101 = sadd.s32 %s100, 1
      %p104 = scmp.eq.s32.totalorder %s24, 1
      %p105 = scmp.ne.s32.totalorder %s100, %s102
      %p106 = scmp.eq.s32.totalorder %s24, 0
      %p107 = por %p105, %p106
      %p108 = scmp.ne.s32.totalorder %s100, %s102
      %p109 = scmp.eq.s32.totalorder %s29, 1
      %p110 = por %p108, %p109
      %p111 = scmp.ne.s32.totalorder %s102, %s103
      %p112 = scmp.eq.s32.totalorder %s29, 0
      %p113 = por %p111, %p112
      %p114 = scmp.ne.s32.totalorder %s102, %s103
      %p115 = scmp.eq.s32.totalorder %s30, 1
      %p116 = por %p114, %p115
      %p118 = scmp.ne.s32.totalorder %s103, %s117
      %p119 = scmp.eq.s32.totalorder %s30, 0
      %p120 = por %p118, %p119
      %s122 = sadd.s32 %s121, 1
      %p125 = scmp.eq.s32.totalorder %s24, 1
      %p126 = scmp.ne.s32.totalorder %s121, %s123
      %p127 = scmp.eq.s32.totalorder %s24, 0
      %p128 = por %p126, %p127
      %p129 = scmp.ne.s32.totalorder %s121, %s123
      %p130 = scmp.eq.s32.totalorder %s29, 1
      %p131 = por %p129, %p130
      %p132 = scmp.ne.s32.totalorder %s123, %s124
      %p133 = scmp.eq.s32.totalorder %s29, 0
      %p134 = por %p132, %p133
      %p135 = scmp.ne.s32.totalorder %s123, %s124
      %p136 = scmp.eq.s32.totalorder %s30, 1
      %p137 = por %p135, %p136
      %p139 = scmp.ne.s32.totalorder %s124, %s138
      %p140 = scmp.eq.s32.totalorder %s30, 0
      %p141 = por %p139, %p140
      %s143 = sadd.s32 %s142, 1
      %p146 = scmp.eq.s32.totalorder %s24, 1
      %p147 = scmp.ne.s32.totalorder %s142, %s144
      %p148 = scmp.eq.s32.totalorder %s24, 0
      %p149 = por %p147, %p148
      %p150 = scmp.ne.s32.totalorder %s142, %s144
      %p151 = scmp.eq.s32.totalorder %s29, 1
      %p152 = por %p150, %p151
      %p153 = scmp.ne.s32.totalorder %s144, %s145
      %p154 = scmp.eq.s32.totalorder %s29, 0
      %p155 = por %p153, %p154
      %p156 = scmp.ne.s32.totalorder %s144, %s145
      %p157 = scmp.eq.s32.totalorder %s30, 1
      %p158 = por %p156, %p157
      %p160 = scmp.ne.s32.totalorder %s145, %s159
      %p161 = scmp.eq.s32.totalorder %s30, 0
      %p162 = por %p160, %p161
      %s164 = sadd.s32 %s163, 1
      %p167 = scmp.eq.s32.totalorder %s24, 1
      %p168 = scmp.ne.s32.totalorder %s163, %s165
      %p169 = scmp.eq.s32.totalorder %s24, 0
      %p170 = por %p168, %p169
      %p171 = scmp.ne.s32.totalorder %s163, %s165
      %p172 = scmp.eq.s32.totalorder %s29, 1
      %p173 = por %p171, %p172
      %p174 = scmp.ne.s32.totalorder %s165, %s166
      %p175 = scmp.eq.s32.totalorder %s29, 0
      %p176 = por %p174, %p175
      %p177 = scmp.ne.s32.totalorder %s165, %s166
      %p178 = scmp.eq.s32.totalorder %s30, 1
      %p179 = por %p177, %p178
      %p181 = scmp.ne.s32.totalorder %s166, %s180
      %p182 = scmp.eq.s32.totalorder %s30, 0
      %p183 = por %p181, %p182
      %s185 = sadd.s32 %s184, 1
      %p188 = scmp.eq.s32.totalorder %s24, 1
      %p189 = scmp.ne.s32.totalorder %s184, %s186
      %p190 = scmp.eq.s32.totalorder %s24, 0
      %p191 = por %p189, %p190
      %p192 = scmp.ne.s32.totalorder %s184, %s186
      %p193 = scmp.eq.s32.totalorder %s29, 1
      %p194 = por %p192, %p193
      %p195 = scmp.ne.s32.totalorder %s186, %s187
      %p196 = scmp.eq.s32.totalorder %s29, 0
      %p197 = por %p195, %p196
      %p198 = scmp.ne.s32.totalorder %s186, %s187
      %p199 = scmp.eq.s32.totalorder %s30, 1
      %p200 = por %p198, %p199
      %p202 = scmp.ne.s32.totalorder %s187, %s201
      %p203 = scmp.eq.s32.totalorder %s30, 0
      %p204 = por %p202, %p203
      %s206 = sadd.s32 %s205, 1
      %p209 = scmp.eq.s32.totalorder %s24, 1
      %p210 = scmp.ne.s32.totalorder %s205, %s207
      %p211 = scmp.eq.s32.totalorder %s24, 0
      %p212 = por %p210, %p211
      %p213 = scmp.ne.s32.totalorder %s205, %s207
      %p214 = scmp.eq.s32.totalorder %s29, 1
      %p215 = por %p213, %p214
      %p216 = scmp.ne.s32.totalorder %s207, %s208
      %p217 = scmp.eq.s32.totalorder %s29, 0
      %p218 = por %p216, %p217
      %p219 = scmp.ne.s32.totalorder %s207, %s208
      %p220 = scmp.eq.s32.totalorder %s30, 1
      %p221 = por %p219, %p220
      %p223 = scmp.ne.s32.totalorder %s208, %s222
      %p224 = scmp.eq.s32.totalorder %s30, 0
      %p225 = por %p223, %p224
      %s227 = sadd.s32 %s226, 1
      %p230 = scmp.eq.s32.totalorder %s24, 1
      %p231 = scmp.ne.s32.totalorder %s226, %s228
      %p232 = scmp.eq.s32.totalorder %s24, 0
      %p233 = por %p231, %p232
      %p234 = scmp.ne.s32.totalorder %s226, %s228
      %p235 = scmp.eq.s32.totalorder %s29, 1
      %p236 = por %p234, %p235
      %p237 = scmp.ne.s32.totalorder %s228, %s229
      %p238 = scmp.eq.s32.totalorder %s29, 0
      %p239 = por %p237, %p238
      %p240 = scmp.ne.s32.totalorder %s228, %s229
      %p241 = scmp.eq.s32.totalorder %s30, 1
      %p242 = por %p240, %p241
      %p244 = scmp.ne.s32.totalorder %s229, %s243
      %p245 = scmp.eq.s32.totalorder %s30, 0
      %p246 = por %p244, %p245
      %s248 = sadd.s32 %s247, 1
      %p251 = scmp.eq.s32.totalorder %s24, 1
      %p252 = scmp.ne.s32.totalorder %s247, %s249
      %p253 = scmp.eq.s32.totalorder %s24, 0
      %p254 = por %p252, %p253
      %p255 = scmp.ne.s32.totalorder %s247, %s249
      %p256 = scmp.eq.s32.totalorder %s29, 1
      %p257 = por %p255, %p256
      %p258 = scmp.ne.s32.totalorder %s249, %s250
      %p259 = scmp.eq.s32.totalorder %s29, 0
      %p260 = por %p258, %p259
      %p261 = scmp.ne.s32.totalorder %s249, %s250
      %p262 = scmp.eq.s32.totalorder %s30, 1
      %p263 = por %p261, %p262
      %p265 = scmp.ne.s32.totalorder %s250, %s264
      %p266 = scmp.eq.s32.totalorder %s30, 0
      %p267 = por %p265, %p266
      %s269 = sadd.s32 %s268, 1
      %p272 = scmp.eq.s32.totalorder %s24, 1
      %p273 = scmp.ne.s32.totalorder %s268, %s270
      %p274 = scmp.eq.s32.totalorder %s24, 0
      %p275 = por %p273, %p274
      %p276 = scmp.ne.s32.totalorder %s268, %s270
      %p277 = scmp.eq.s32.totalorder %s29, 1
      %p278 = por %p276, %p277
      %p279 = scmp.ne.s32.totalorder %s270, %s271
      %p280 = scmp.eq.s32.totalorder %s29, 0
      %p281 = por %p279, %p280
      %p282 = scmp.ne.s32.totalorder %s270, %s271
      %p283 = scmp.eq.s32.totalorder %s30, 1
      %p284 = por %p282, %p283
      %p286 = scmp.ne.s32.totalorder %s271, %s285
      %p287 = scmp.eq.s32.totalorder %s30, 0
      %p288 = por %p286, %p287
      %s290 = sadd.s32 %s289, 1
      %p293 = scmp.eq.s32.totalorder %s24, 1
      %p294 = scmp.ne.s32.totalorder %s289, %s291
      %p295 = scmp.eq.s32.totalorder %s24, 0
      %p296 = por %p294, %p295
      %p297 = scmp.ne.s32.totalorder %s289, %s291
      %p298 = scmp.eq.s32.totalorder %s29, 1
      %p299 = por %p297, %p298
      %p300 = scmp.ne.s32.totalorder %s291, %s292
      %p301 = scmp.eq.s32.totalorder %s29, 0
      %p302 = por %p300, %p301
      %p303 = scmp.ne.s32.totalorder %s291, %s292
      %p304 = scmp.eq.s32.totalorder %s30, 1
      %p305 = por %p303, %p304
      %p307 = scmp.ne.s32.totalorder %s292, %s306
      %p308 = scmp.eq.s32.totalorder %s30, 0
      %p309 = por %p307, %p308
      %s311 = sadd.s32 %s310, 1
      %p314 = scmp.eq.s32.totalorder %s24, 1
      %p315 = scmp.ne.s32.totalorder %s310, %s312
      %p316 = scmp.eq.s32.totalorder %s24, 0
      %p317 = por %p315, %p316
      %p318 = scmp.ne.s32.totalorder %s310, %s312
      %p319 = scmp.eq.s32.totalorder %s29, 1
      %p320 = por %p318, %p319
      %p321 = scmp.ne.s32.totalorder %s312, %s313
      %p322 = scmp.eq.s32.totalorder %s29, 0
      %p323 = por %p321, %p322
      %p324 = scmp.ne.s32.totalorder %s312, %s313
      %p325 = scmp.eq.s32.totalorder %s30, 1
      %p326 = por %p324, %p325
      %p328 = scmp.ne.s32.totalorder %s313, %s327
      %p329 = scmp.eq.s32.totalorder %s30, 0
      %p330 = por %p328, %p329
      %s332 = sadd.s32 %s331, 1
      %p335 = scmp.eq.s32.totalorder %s24, 1
      %p336 = scmp.ne.s32.totalorder %s331, %s333
      %p337 = scmp.eq.s32.totalorder %s24, 0
      %p338 = por %p336, %p337
      %p339 = scmp.ne.s32.totalorder %s331, %s333
      %p340 = scmp.eq.s32.totalorder %s29, 1
      %p341 = por %p339, %p340
      %p342 = scmp.ne.s32.totalorder %s333, %s334
      %p343 = scmp.eq.s32.totalorder %s29, 0
      %p344 = por %p342, %p343
      %p345 = scmp.ne.s32.totalorder %s333, %s334
      %p346 = scmp.eq.s32.totalorder %s30, 1
      %p347 = por %p345, %p346
      %p349 = scmp.ne.s32.totalorder %s334, %s348
      %p350 = scmp.eq.s32.totalorder %s30, 0
      %p351 = por %p349, %p350
      %s352 = ssub.s32 %s24, %s31
      %p353 = scmp.eq.s32.totalorder %s352, 0
      %s355 = sadd.s32 %s354, 1
      %s356 = scalar_select %p353, %s354, %s355
      %p359 = pneg %p353
      %p360 = scmp.eq.s32.totalorder %s24, 1
      %p361 = por %p359, %p360
      %p362 = scmp.ne.s32.totalorder %s354, %s357
      %p363 = scmp.eq.s32.totalorder %s24, 0
      %p364 = por %p362, %p363
      %p365 = scmp.ne.s32.totalorder %s354, %s357
      %p366 = scmp.eq.s32.totalorder %s29, 1
      %p367 = por %p365, %p366
      %p368 = scmp.ne.s32.totalorder %s357, %s358
      %p369 = scmp.eq.s32.totalorder %s29, 0
      %p370 = por %p368, %p369
      %p371 = scmp.ne.s32.totalorder %s357, %s358
      %p372 = scmp.eq.s32.totalorder %s30, 1
      %p373 = por %p371, %p372
      %p375 = scmp.ne.s32.totalorder %s358, %s374
      %p376 = scmp.eq.s32.totalorder %s30, 0
      %p377 = por %p375, %p376
      %p378 = scmp.le.s32.totalorder 1, %s24
      %p379 = scmp.lt.s32.totalorder %s24, 3
      %p380 = pnand %p378, %p379
      %p381 = pneg %p380
      // Predicated region
      $region9: #{net2_forward.1} parent=5 // pred_check
        _
      $region10: #{net2_forward.1} parent=5 // pred_check_branch
        %383 = sbr.rel (%p380) target = $region12
      $region11: #{net2_forward.1} parent=5 // pred_region
        %s384 = ssub.s32 %s24, 1
        // Predicated region
        $region13: #{net2_forward.1} parent=11 // pred_check
          %p385 = pneg %p71
        $region14: #{net2_forward.1} parent=11 // pred_check_branch
          %387 = sbr.rel (%p385) target = $region16
        $region15: #{net2_forward.1} parent=11 // pred_region
          _
        $region16: #{net2_forward.1} parent=11 // pred_fallthru
          _
        // Predicated region
        $region17: #{net2_forward.1} parent=11 // pred_check
          %p388 = pneg %p92
        $region18: #{net2_forward.1} parent=11 // pred_check_branch
          %390 = sbr.rel (%p388) target = $region20
        $region19: #{net2_forward.1} parent=11 // pred_region
          _
        $region20: #{net2_forward.1} parent=11 // pred_fallthru
          _
        // Predicated region
        $region21: #{net2_forward.1} parent=11 // pred_check
          %p391 = pneg %p113
        $region22: #{net2_forward.1} parent=11 // pred_check_branch
          %393 = sbr.rel (%p391) target = $region24
        $region23: #{net2_forward.1} parent=11 // pred_region
          _
        $region24: #{net2_forward.1} parent=11 // pred_fallthru
          _
        // Predicated region
        $region25: #{net2_forward.1} parent=11 // pred_check
          %p394 = pneg %p134
        $region26: #{net2_forward.1} parent=11 // pred_check_branch
          %396 = sbr.rel (%p394) target = $region28
        $region27: #{net2_forward.1} parent=11 // pred_region
          _
        $region28: #{net2_forward.1} parent=11 // pred_fallthru
          _
        // Predicated region
        $region29: #{net2_forward.1} parent=11 // pred_check
          %p397 = pneg %p155
        $region30: #{net2_forward.1} parent=11 // pred_check_branch
          %399 = sbr.rel (%p397) target = $region32
        $region31: #{net2_forward.1} parent=11 // pred_region
          _
        $region32: #{net2_forward.1} parent=11 // pred_fallthru
          _
        // Predicated region
        $region33: #{net2_forward.1} parent=11 // pred_check
          %p400 = pneg %p176
        $region34: #{net2_forward.1} parent=11 // pred_check_branch
          %402 = sbr.rel (%p400) target = $region36
        $region35: #{net2_forward.1} parent=11 // pred_region
          _
        $region36: #{net2_forward.1} parent=11 // pred_fallthru
          _
        // Predicated region
        $region37: #{net2_forward.1} parent=11 // pred_check
          %p403 = pneg %p197
        $region38: #{net2_forward.1} parent=11 // pred_check_branch
          %405 = sbr.rel (%p403) target = $region40
        $region39: #{net2_forward.1} parent=11 // pred_region
          _
        $region40: #{net2_forward.1} parent=11 // pred_fallthru
          _
        // Predicated region
        $region41: #{net2_forward.1} parent=11 // pred_check
          %p406 = pneg %p218
        $region42: #{net2_forward.1} parent=11 // pred_check_branch
          %408 = sbr.rel (%p406) target = $region44
        $region43: #{net2_forward.1} parent=11 // pred_region
          _
        $region44: #{net2_forward.1} parent=11 // pred_fallthru
          _
        // Predicated region
        $region45: #{net2_forward.1} parent=11 // pred_check
          %p409 = pneg %p239
        $region46: #{net2_forward.1} parent=11 // pred_check_branch
          %411 = sbr.rel (%p409) target = $region48
        $region47: #{net2_forward.1} parent=11 // pred_region
          _
        $region48: #{net2_forward.1} parent=11 // pred_fallthru
          _
        // Predicated region
        $region49: #{net2_forward.1} parent=11 // pred_check
          %p412 = pneg %p260
        $region50: #{net2_forward.1} parent=11 // pred_check_branch
          %414 = sbr.rel (%p412) target = $region52
        $region51: #{net2_forward.1} parent=11 // pred_region
          _
        $region52: #{net2_forward.1} parent=11 // pred_fallthru
          _
        // Predicated region
        $region53: #{net2_forward.1} parent=11 // pred_check
          %p415 = pneg %p281
        $region54: #{net2_forward.1} parent=11 // pred_check_branch
          %417 = sbr.rel (%p415) target = $region56
        $region55: #{net2_forward.1} parent=11 // pred_region
          _
        $region56: #{net2_forward.1} parent=11 // pred_fallthru
          _
        // Predicated region
        $region57: #{net2_forward.1} parent=11 // pred_check
          %p418 = pneg %p302
        $region58: #{net2_forward.1} parent=11 // pred_check_branch
          %420 = sbr.rel (%p418) target = $region60
        $region59: #{net2_forward.1} parent=11 // pred_region
          _
        $region60: #{net2_forward.1} parent=11 // pred_fallthru
          _
        // Predicated region
        $region61: #{net2_forward.1} parent=11 // pred_check
          %p421 = pneg %p323
        $region62: #{net2_forward.1} parent=11 // pred_check_branch
          %423 = sbr.rel (%p421) target = $region64
        $region63: #{net2_forward.1} parent=11 // pred_region
          _
        $region64: #{net2_forward.1} parent=11 // pred_fallthru
          _
        // Predicated region
        $region65: #{net2_forward.1} parent=11 // pred_check
          %p424 = pneg %p344
        $region66: #{net2_forward.1} parent=11 // pred_check_branch
          %426 = sbr.rel (%p424) target = $region68
        $region67: #{net2_forward.1} parent=11 // pred_region
          _
        $region68: #{net2_forward.1} parent=11 // pred_fallthru
          _
      $region12: #{net2_forward.1} parent=5 // pred_fallthru
        _
      %p427 = scmp.lt.s32.totalorder %s24, 2
      // Predicated region
      $region69: #{net2_forward.1} parent=5 // pred_check
        %p428 = pneg %p427
      $region70: #{net2_forward.1} parent=5 // pred_check_branch
        %430 = sbr.rel (%p428) target = $region72
      $region71: #{net2_forward.1} parent=5 // pred_region
        // Predicated region
        $region73: #{net2_forward.1} parent=71 // pred_check
          %p431 = pneg %p44
        $region74: #{net2_forward.1} parent=71 // pred_check_branch
          %433 = sbr.rel (%p431) target = $region76
        $region75: #{net2_forward.1} parent=71 // pred_region
          %p434 = scmp.lt.s32.totalorder %s24, 1
          %s435 = scalar_select %p434, %s24, 1
          %s436 = smul.addr %s435, 4
          %s437 = smul.addr %s436, 8
          %s438 = scalar_lea.vmem %s0, %s437
        $region76: #{net2_forward.1} parent=71 // pred_fallthru
          _
      $region72: #{net2_forward.1} parent=5 // pred_fallthru
        _
      %p439 = scmp.le.s32.totalorder 1, %s24
      %p440 = scmp.lt.s32.totalorder %s24, 3
      %p441 = pnand %p439, %p440
      %p442 = pneg %p441
      // Predicated region
      $region77: #{net2_forward.1} parent=5 // pred_check
        _
      $region78: #{net2_forward.1} parent=5 // pred_check_branch
        %444 = sbr.rel (%p441) target = $region80
      $region79: #{net2_forward.1} parent=5 // pred_region
        %s445 = ssub.s32 %s24, 1
        %p446 = scmp.lt.s32.totalorder %s29, 1
        %s447 = scalar_select %p446, %s29, 1
        %s448 = smul.addr %s447, 4
        %s449 = smul.addr %s448, 8
        %s450 = scalar_lea.vmem %s0, %s449
        %p451 = pneg %p50
        %p452 = pneg %p47
        %p453 = pneg %p71
        %p454 = pneg %p68
        %p455 = pneg %p92
        %p456 = pneg %p89
        %p457 = pneg %p113
        %p458 = pneg %p110
        %p459 = pneg %p134
        %p460 = pneg %p131
        %p461 = pneg %p155
        %p462 = pneg %p152
        %p463 = pneg %p176
        %p464 = pneg %p173
        %p465 = pneg %p197
        %p466 = pneg %p194
        %p467 = pneg %p218
        %p468 = pneg %p215
        %p469 = pneg %p239
        %p470 = pneg %p236
        %p471 = pneg %p260
        %p472 = pneg %p257
        %p473 = pneg %p281
        %p474 = pneg %p278
        %p475 = pneg %p302
        %p476 = pneg %p299
        %p477 = pneg %p323
        %p478 = pneg %p320
        %p479 = pneg %p344
        %p480 = pneg %p341
        %p481 = pneg %p370
        %p482 = pneg %p367
        %s483 = sand.u32 %s357, 1
        %s484 = scalar_lea.sflag [#allocation3], %s483
        %s485 = sand.u32 %s357, 1
        %s486 = scalar_lea.vmem [#allocation2], %s485
        %p487 = scmp.lt.s32.totalorder %s29, 1
        %s488 = scalar_select %p487, %s29, 1
        %s489 = smul.addr %s488, 4
        %s490 = smul.addr %s489, 8
        %s491 = scalar_lea.vmem %s0, %s490
        %v493 = vld [vmem:[%s491] sm:$0xff]
        %v494 = vld [vmem:[%s491 + $0x8] sm:$0xff]
        %v495 = vld [vmem:[%s491 + $0x10] sm:$0xff]
        %v496 = vld [vmem:[%s491 + $0x18] sm:$0xff]
        %v497 = vpack.c.bf16 %v494, %v493
        %v498 = vpack.c.bf16 %v496, %v495
        %v499 = vld [vmem:[%s1] sm:$0xf]
        %v500 = vld [vmem:[%s1 + $0x4] sm:$0x7]
        %v503 = vunpack.c.l.b16 %v499
        %v504 = vunpack.c.l.b16 %v500
        %v505 = vpack.c.b16 %v504, %v503
        %vm506 = vcmask 261120
        %v508 = vsel %vm506, %v505, 0
        %510 = vmatprep.subr.bf16.mxu0 0
        %511 = vmatpush1.bf16.msra.mxu0 %v497
        %512 = vmatprep.subr.bf16.mxu0 0
        %513 = vmatpush1.bf16.msra.mxu0 %v498
        %514 = vmatprep.subr.bf16.mxu0 0
        %515 = vmatpush1.bf16.msra.mxu0 0
        %516 = vmatprep.subr.bf16.mxu0 0
        %517 = vmatpush1.bf16.msra.mxu0 0
        %518 = vmatprep.subr.bf16.mxu0 0
        %519 = vmatpush1.bf16.msra.mxu0 0
        %520 = vmatprep.subr.bf16.mxu0 0
        %521 = vmatpush1.bf16.msra.mxu0 0
        %522 = vmatprep.subr.bf16.mxu0 0
        %523 = vmatpush1.bf16.msra.mxu0 0
        %524 = vmatprep.subr.bf16.mxu0 0
        %525 = vmatpush1.bf16.msra.mxu0 0
        %526 = vmatprep.subr.bf16.mxu0 0
        %527 = vmatpush1.bf16.msra.mxu0 0
        %528 = vmatprep.subr.bf16.mxu0 0
        %529 = vmatpush1.bf16.msra.mxu0 0
        %530 = vmatprep.subr.bf16.mxu0 0
        %531 = vmatpush1.bf16.msra.mxu0 0
        %532 = vmatprep.subr.bf16.mxu0 0
        %533 = vmatpush1.bf16.msra.mxu0 0
        %534 = vmatprep.subr.bf16.mxu0 0
        %535 = vmatpush1.bf16.msra.mxu0 0
        %536 = vmatprep.subr.bf16.mxu0 0
        %537 = vmatpush1.bf16.msra.mxu0 0
        %538 = vmatprep.subr.bf16.mxu0 0
        %539 = vmatpush1.bf16.msra.mxu0 0
        %540 = vmatprep.subr.bf16.mxu0 0
        %541 = vmatpush1.bf16.msra.mxu0 0
        %542 = vmatprep.mubr.bf16.mxu0 0
        %543 = vmatmul.mubr.bf16.gmra.mrb[0].mxu0 %v508
        %v544 = vpop.f32.mrb[0].mxu0
        %v545 = vadd.f32 0.0, %v544
        %v546 = vpop.f32.mrb[0].mxu0
        %v547 = vpop.f32.mrb[0].mxu0
        %v548 = vadd.f32 0.0, %v547
        %v549 = vpop.f32.mrb[0].mxu0
        %550 = vdwg.mxu0
        %v551 = vpack.c.bf16 %v548, %v545
        %s552 = scalar_lea.vmem %s1, 8
        %v553 = vld [vmem:[%s552] sm:$0xf]
        %v554 = vld [vmem:[%s552 + $0x4] sm:$0x7]
        %v557 = vunpack.c.l.b16 %v553
        %v558 = vunpack.c.l.b16 %v554
        %v559 = vpack.c.b16 %v558, %v557
        %v561 = vsel %vm506, %v559, 0
        %563 = vmatprep.subr.bf16.mxu0 0
        %564 = vmatpush1.bf16.msra.mxu0 %v497
        %565 = vmatprep.subr.bf16.mxu0 0
        %566 = vmatpush1.bf16.msra.mxu0 %v498
        %567 = vmatprep.subr.bf16.mxu0 0
        %568 = vmatpush1.bf16.msra.mxu0 0
        %569 = vmatprep.subr.bf16.mxu0 0
        %570 = vmatpush1.bf16.msra.mxu0 0
        %571 = vmatprep.subr.bf16.mxu0 0
        %572 = vmatpush1.bf16.msra.mxu0 0
        %573 = vmatprep.subr.bf16.mxu0 0
        %574 = vmatpush1.bf16.msra.mxu0 0
        %575 = vmatprep.subr.bf16.mxu0 0
        %576 = vmatpush1.bf16.msra.mxu0 0
        %577 = vmatprep.subr.bf16.mxu0 0
        %578 = vmatpush1.bf16.msra.mxu0 0
        %579 = vmatprep.subr.bf16.mxu0 0
        %580 = vmatpush1.bf16.msra.mxu0 0
        %581 = vmatprep.subr.bf16.mxu0 0
        %582 = vmatpush1.bf16.msra.mxu0 0
        %583 = vmatprep.subr.bf16.mxu0 0
        %584 = vmatpush1.bf16.msra.mxu0 0
        %585 = vmatprep.subr.bf16.mxu0 0
        %586 = vmatpush1.bf16.msra.mxu0 0
        %587 = vmatprep.subr.bf16.mxu0 0
        %588 = vmatpush1.bf16.msra.mxu0 0
        %589 = vmatprep.subr.bf16.mxu0 0
        %590 = vmatpush1.bf16.msra.mxu0 0
        %591 = vmatprep.subr.bf16.mxu0 0
        %592 = vmatpush1.bf16.msra.mxu0 0
        %593 = vmatprep.subr.bf16.mxu0 0
        %594 = vmatpush1.bf16.msra.mxu0 0
        %595 = vmatprep.mubr.bf16.mxu0 0
        %596 = vmatmul.mubr.bf16.gmra.mrb[0].mxu0 %v561
        %v597 = vpop.f32.mrb[0].mxu0
        %v598 = vadd.f32 0.0, %v597
        %v599 = vpop.f32.mrb[0].mxu0
        %v600 = vpop.f32.mrb[0].mxu0
        %v601 = vadd.f32 0.0, %v600
        %v602 = vpop.f32.mrb[0].mxu0
        %603 = vdwg.mxu0
        %v604 = vpack.c.bf16 %v601, %v598
        %s605 = scalar_lea.vmem %s1, 16
        %v606 = vld [vmem:[%s605] sm:$0xf]
        %v607 = vld [vmem:[%s605 + $0x4] sm:$0x7]
        %v610 = vunpack.c.l.b16 %v606
        %v611 = vunpack.c.l.b16 %v607
        %v612 = vpack.c.b16 %v611, %v610
        %v614 = vsel %vm506, %v612, 0
        %616 = vmatprep.subr.bf16.mxu0 0
        %617 = vmatpush1.bf16.msra.mxu0 %v497
        %618 = vmatprep.subr.bf16.mxu0 0
        %619 = vmatpush1.bf16.msra.mxu0 %v498
        %620 = vmatprep.subr.bf16.mxu0 0
        %621 = vmatpush1.bf16.msra.mxu0 0
        %622 = vmatprep.subr.bf16.mxu0 0
        %623 = vmatpush1.bf16.msra.mxu0 0
        %624 = vmatprep.subr.bf16.mxu0 0
        %625 = vmatpush1.bf16.msra.mxu0 0
        %626 = vmatprep.subr.bf16.mxu0 0
        %627 = vmatpush1.bf16.msra.mxu0 0
        %628 = vmatprep.subr.bf16.mxu0 0
        %629 = vmatpush1.bf16.msra.mxu0 0
        %630 = vmatprep.subr.bf16.mxu0 0
        %631 = vmatpush1.bf16.msra.mxu0 0
        %632 = vmatprep.subr.bf16.mxu0 0
        %633 = vmatpush1.bf16.msra.mxu0 0
        %634 = vmatprep.subr.bf16.mxu0 0
        %635 = vmatpush1.bf16.msra.mxu0 0
        %636 = vmatprep.subr.bf16.mxu0 0
        %637 = vmatpush1.bf16.msra.mxu0 0
        %638 = vmatprep.subr.bf16.mxu0 0
        %639 = vmatpush1.bf16.msra.mxu0 0
        %640 = vmatprep.subr.bf16.mxu0 0
        %641 = vmatpush1.bf16.msra.mxu0 0
        %642 = vmatprep.subr.bf16.mxu0 0
        %643 = vmatpush1.bf16.msra.mxu0 0
        %644 = vmatprep.subr.bf16.mxu0 0
        %645 = vmatpush1.bf16.msra.mxu0 0
        %646 = vmatprep.subr.bf16.mxu0 0
        %647 = vmatpush1.bf16.msra.mxu0 0
        %648 = vmatprep.mubr.bf16.mxu0 0
        %649 = vmatmul.mubr.bf16.gmra.mrb[0].mxu0 %v614
        %v650 = vpop.f32.mrb[0].mxu0
        %v651 = vadd.f32 0.0, %v650
        %v652 = vpop.f32.mrb[0].mxu0
        %v653 = vpop.f32.mrb[0].mxu0
        %v654 = vadd.f32 0.0, %v653
        %v655 = vpop.f32.mrb[0].mxu0
        %656 = vdwg.mxu0
        %v657 = vpack.c.bf16 %v654, %v651
        %s658 = scalar_lea.vmem %s1, 24
        %v659 = vld [vmem:[%s658] sm:$0xf]
        %v660 = vld [vmem:[%s658 + $0x4] sm:$0x7]
        %v663 = vunpack.c.l.b16 %v659
        %v664 = vunpack.c.l.b16 %v660
        %v665 = vpack.c.b16 %v664, %v663
        %v667 = vsel %vm506, %v665, 0
        %669 = vmatprep.subr.bf16.mxu0 0
        %670 = vmatpush1.bf16.msra.mxu0 %v497
        %671 = vmatprep.subr.bf16.mxu0 0
        %672 = vmatpush1.bf16.msra.mxu0 %v498
        %673 = vmatprep.subr.bf16.mxu0 0
        %674 = vmatpush1.bf16.msra.mxu0 0
        %675 = vmatprep.subr.bf16.mxu0 0
        %676 = vmatpush1.bf16.msra.mxu0 0
        %677 = vmatprep.subr.bf16.mxu0 0
        %678 = vmatpush1.bf16.msra.mxu0 0
        %679 = vmatprep.subr.bf16.mxu0 0
        %680 = vmatpush1.bf16.msra.mxu0 0
        %681 = vmatprep.subr.bf16.mxu0 0
        %682 = vmatpush1.bf16.msra.mxu0 0
        %683 = vmatprep.subr.bf16.mxu0 0
        %684 = vmatpush1.bf16.msra.mxu0 0
        %685 = vmatprep.subr.bf16.mxu0 0
        %686 = vmatpush1.bf16.msra.mxu0 0
        %687 = vmatprep.subr.bf16.mxu0 0
        %688 = vmatpush1.bf16.msra.mxu0 0
        %689 = vmatprep.subr.bf16.mxu0 0
        %690 = vmatpush1.bf16.msra.mxu0 0
        %691 = vmatprep.subr.bf16.mxu0 0
        %692 = vmatpush1.bf16.msra.mxu0 0
        %693 = vmatprep.subr.bf16.mxu0 0
        %694 = vmatpush1.bf16.msra.mxu0 0
        %695 = vmatprep.subr.bf16.mxu0 0
        %696 = vmatpush1.bf16.msra.mxu0 0
        %697 = vmatprep.subr.bf16.mxu0 0
        %698 = vmatpush1.bf16.msra.mxu0 0
        %699 = vmatprep.subr.bf16.mxu0 0
        %700 = vmatpush1.bf16.msra.mxu0 0
        %701 = vmatprep.mubr.bf16.mxu0 0
        %702 = vmatmul.mubr.bf16.gmra.mrb[0].mxu0 %v667
        %v703 = vpop.f32.mrb[0].mxu0
        %v704 = vadd.f32 0.0, %v703
        %v705 = vpop.f32.mrb[0].mxu0
        %v706 = vpop.f32.mrb[0].mxu0
        %v707 = vadd.f32 0.0, %v706
        %v708 = vpop.f32.mrb[0].mxu0
        %709 = vdwg.mxu0
        %v710 = vpack.c.bf16 %v707, %v704
        %s711 = scalar_lea.vmem %s1, 32
        %v712 = vld [vmem:[%s711] sm:$0xf]
        %v713 = vld [vmem:[%s711 + $0x4] sm:$0x7]
        %v716 = vunpack.c.l.b16 %v712
        %v717 = vunpack.c.l.b16 %v713
        %v718 = vpack.c.b16 %v717, %v716
        %v720 = vsel %vm506, %v718, 0
        %722 = vmatprep.subr.bf16.mxu0 0
        %723 = vmatpush1.bf16.msra.mxu0 %v497
        %724 = vmatprep.subr.bf16.mxu0 0
        %725 = vmatpush1.bf16.msra.mxu0 %v498
        %726 = vmatprep.subr.bf16.mxu0 0
        %727 = vmatpush1.bf16.msra.mxu0 0
        %728 = vmatprep.subr.bf16.mxu0 0
        %729 = vmatpush1.bf16.msra.mxu0 0
        %730 = vmatprep.subr.bf16.mxu0 0
        %731 = vmatpush1.bf16.msra.mxu0 0
        %732 = vmatprep.subr.bf16.mxu0 0
        %733 = vmatpush1.bf16.msra.mxu0 0
        %734 = vmatprep.subr.bf16.mxu0 0
        %735 = vmatpush1.bf16.msra.mxu0 0
        %736 = vmatprep.subr.bf16.mxu0 0
        %737 = vmatpush1.bf16.msra.mxu0 0
        %738 = vmatprep.subr.bf16.mxu0 0
        %739 = vmatpush1.bf16.msra.mxu0 0
        %740 = vmatprep.subr.bf16.mxu0 0
        %741 = vmatpush1.bf16.msra.mxu0 0
        %742 = vmatprep.subr.bf16.mxu0 0
        %743 = vmatpush1.bf16.msra.mxu0 0
        %744 = vmatprep.subr.bf16.mxu0 0
        %745 = vmatpush1.bf16.msra.mxu0 0
        %746 = vmatprep.subr.bf16.mxu0 0
        %747 = vmatpush1.bf16.msra.mxu0 0
        %748 = vmatprep.subr.bf16.mxu0 0
        %749 = vmatpush1.bf16.msra.mxu0 0
        %750 = vmatprep.subr.bf16.mxu0 0
        %751 = vmatpush1.bf16.msra.mxu0 0
        %752 = vmatprep.subr.bf16.mxu0 0
        %753 = vmatpush1.bf16.msra.mxu0 0
        %754 = vmatprep.mubr.bf16.mxu0 0
        %755 = vmatmul.mubr.bf16.gmra.mrb[0].mxu0 %v720
        %v756 = vpop.f32.mrb[0].mxu0
        %v757 = vadd.f32 0.0, %v756
        %v758 = vpop.f32.mrb[0].mxu0
        %v759 = vpop.f32.mrb[0].mxu0
        %v760 = vadd.f32 0.0, %v759
        %v761 = vpop.f32.mrb[0].mxu0
        %762 = vdwg.mxu0
        %v763 = vpack.c.bf16 %v760, %v757
        %s764 = scalar_lea.vmem %s1, 40
        %v765 = vld [vmem:[%s764] sm:$0xf]
        %v766 = vld [vmem:[%s764 + $0x4] sm:$0x7]
        %v769 = vunpack.c.l.b16 %v765
        %v770 = vunpack.c.l.b16 %v766
        %v771 = vpack.c.b16 %v770, %v769
        %v773 = vsel %vm506, %v771, 0
        %775 = vmatprep.subr.bf16.mxu0 0
        %776 = vmatpush1.bf16.msra.mxu0 %v497
        %777 = vmatprep.subr.bf16.mxu0 0
        %778 = vmatpush1.bf16.msra.mxu0 %v498
        %779 = vmatprep.subr.bf16.mxu0 0
        %780 = vmatpush1.bf16.msra.mxu0 0
        %781 = vmatprep.subr.bf16.mxu0 0
        %782 = vmatpush1.bf16.msra.mxu0 0
        %783 = vmatprep.subr.bf16.mxu0 0
        %784 = vmatpush1.bf16.msra.mxu0 0
        %785 = vmatprep.subr.bf16.mxu0 0
        %786 = vmatpush1.bf16.msra.mxu0 0
        %787 = vmatprep.subr.bf16.mxu0 0
        %788 = vmatpush1.bf16.msra.mxu0 0
        %789 = vmatprep.subr.bf16.mxu0 0
        %790 = vmatpush1.bf16.msra.mxu0 0
        %791 = vmatprep.subr.bf16.mxu0 0
        %792 = vmatpush1.bf16.msra.mxu0 0
        %793 = vmatprep.subr.bf16.mxu0 0
        %794 = vmatpush1.bf16.msra.mxu0 0
        %795 = vmatprep.subr.bf16.mxu0 0
        %796 = vmatpush1.bf16.msra.mxu0 0
        %797 = vmatprep.subr.bf16.mxu0 0
        %798 = vmatpush1.bf16.msra.mxu0 0
        %799 = vmatprep.subr.bf16.mxu0 0
        %800 = vmatpush1.bf16.msra.mxu0 0
        %801 = vmatprep.subr.bf16.mxu0 0
        %802 = vmatpush1.bf16.msra.mxu0 0
        %803 = vmatprep.subr.bf16.mxu0 0
        %804 = vmatpush1.bf16.msra.mxu0 0
        %805 = vmatprep.subr.bf16.mxu0 0
        %806 = vmatpush1.bf16.msra.mxu0 0
        %807 = vmatprep.mubr.bf16.mxu0 0
        %808 = vmatmul.mubr.bf16.gmra.mrb[0].mxu0 %v773
        %v809 = vpop.f32.mrb[0].mxu0
        %v810 = vadd.f32 0.0, %v809
        %v811 = vpop.f32.mrb[0].mxu0
        %v812 = vpop.f32.mrb[0].mxu0
        %v813 = vadd.f32 0.0, %v812
        %v814 = vpop.f32.mrb[0].mxu0
        %815 = vdwg.mxu0
        %v816 = vpack.c.bf16 %v813, %v810
        %v817 = vld [vmem:[%s5] sm:$0xff]
        %v818 = vld [vmem:[%s5 + $0x8] sm:$0xff]
        %v819 = vld [vmem:[%s5 + $0x10] sm:$0xff]
        %v820 = vld [vmem:[%s5 + $0x18] sm:$0xff]
        %v821 = vld [vmem:[%s5 + $0x20] sm:$0xff]
        %v822 = vld [vmem:[%s5 + $0x28] sm:$0xff]
        %v823 = vld [vmem:[%s5 + $0x30] sm:$0xff]
        %v824 = vld [vmem:[%s5 + $0x38] sm:$0xff]
        %v825 = vld [vmem:[%s5 + $0x40] sm:$0xff]
        %v826 = vld [vmem:[%s5 + $0x48] sm:$0xff]
        %v827 = vld [vmem:[%s5 + $0x50] sm:$0xff]
        %v828 = vld [vmem:[%s5 + $0x58] sm:$0xff]
        %s829 = scalar_lea.vmem %s5, 192
        %v830 = vld [vmem:[%s829] sm:$0xff]
        %v831 = vld [vmem:[%s829 + $0x8] sm:$0xff]
        %v832 = vld [vmem:[%s829 + $0x10] sm:$0xff]
        %v833 = vld [vmem:[%s829 + $0x18] sm:$0xff]
        %v834 = vld [vmem:[%s829 + $0x20] sm:$0xff]
        %v835 = vld [vmem:[%s829 + $0x28] sm:$0xff]
        %v836 = vld [vmem:[%s829 + $0x30] sm:$0xff]
        %v837 = vld [vmem:[%s829 + $0x38] sm:$0xff]
        %v838 = vld [vmem:[%s829 + $0x40] sm:$0xff]
        %v839 = vld [vmem:[%s829 + $0x48] sm:$0xff]
        %v840 = vld [vmem:[%s829 + $0x50] sm:$0xff]
        %v841 = vld [vmem:[%s829 + $0x58] sm:$0xff]
        %v854 = vunpack.c.l.b16 %v830
        %v855 = vunpack.c.h.b16 %v830
        %v856 = vunpack.c.l.b16 %v831
        %v857 = vunpack.c.h.b16 %v831
        %v858 = vunpack.c.l.b16 %v832
        %v859 = vunpack.c.h.b16 %v832
        %v860 = vunpack.c.l.b16 %v833
        %v861 = vunpack.c.h.b16 %v833
        %v862 = vunpack.c.l.b16 %v834
        %v863 = vunpack.c.h.b16 %v834
        %v864 = vunpack.c.l.b16 %v835
        %v865 = vunpack.c.h.b16 %v835
        %v866 = vunpack.c.l.b16 %v836
        %v867 = vunpack.c.h.b16 %v836
        %v868 = vunpack.c.l.b16 %v837
        %v869 = vunpack.c.h.b16 %v837
        %v870 = vunpack.c.l.b16 %v838
        %v871 = vunpack.c.h.b16 %v838
        %v872 = vunpack.c.l.b16 %v839
        %v873 = vunpack.c.h.b16 %v839
        %v874 = vunpack.c.l.b16 %v840
        %v875 = vunpack.c.h.b16 %v840
        %v876 = vunpack.c.l.b16 %v841
        %v877 = vunpack.c.h.b16 %v841
        %v878 = vpack.c.b16 %v856, %v854
        %v879 = vpack.c.b16 %v857, %v855
        %v880 = vpack.c.b16 %v860, %v858
        %v881 = vpack.c.b16 %v861, %v859
        %v882 = vpack.c.b16 %v864, %v862
        %v883 = vpack.c.b16 %v865, %v863
        %v884 = vpack.c.b16 %v868, %v866
        %v885 = vpack.c.b16 %v869, %v867
        %v886 = vpack.c.b16 %v872, %v870
        %v887 = vpack.c.b16 %v873, %v871
        %v888 = vpack.c.b16 %v876, %v874
        %v889 = vpack.c.b16 %v877, %v875
        %vm902 = vcmask 785408
        %v904 = vsel %vm902, %v604, 0
        %906 = vmatprep.subr.bf16.mxu0 %v879
        %907 = vmatpush1.bf16.msra.mxu0 %v878
        %908 = vmatprep.subr.bf16.mxu0 %v881
        %909 = vmatpush1.bf16.msra.mxu0 %v880
        %910 = vmatprep.subr.bf16.mxu0 %v883
        %911 = vmatpush1.bf16.msra.mxu0 %v882
        %912 = vmatprep.subr.bf16.mxu0 %v885
        %913 = vmatpush1.bf16.msra.mxu0 %v884
        %914 = vmatprep.subr.bf16.mxu0 %v887
        %915 = vmatpush1.bf16.msra.mxu0 %v886
        %916 = vmatprep.subr.bf16.mxu0 %v889
        %917 = vmatpush1.bf16.msra.mxu0 %v888
        %918 = vmatprep.subr.bf16.mxu0 0
        %919 = vmatpush1.bf16.msra.mxu0 0
        %920 = vmatprep.subr.bf16.mxu0 0
        %921 = vmatpush1.bf16.msra.mxu0 0
        %922 = vmatprep.subr.bf16.mxu0 0
        %923 = vmatpush1.bf16.msra.mxu0 0
        %924 = vmatprep.subr.bf16.mxu0 0
        %925 = vmatpush1.bf16.msra.mxu0 0
        %926 = vmatprep.subr.bf16.mxu0 0
        %927 = vmatpush1.bf16.msra.mxu0 0
        %928 = vmatprep.subr.bf16.mxu0 0
        %929 = vmatpush1.bf16.msra.mxu0 0
        %930 = vmatprep.subr.bf16.mxu0 0
        %931 = vmatpush1.bf16.msra.mxu0 0
        %932 = vmatprep.subr.bf16.mxu0 0
        %933 = vmatpush1.bf16.msra.mxu0 0
        %934 = vmatprep.subr.bf16.mxu0 0
        %935 = vmatpush1.bf16.msra.mxu0 0
        %936 = vmatprep.subr.bf16.mxu0 0
        %937 = vmatpush1.bf16.msra.mxu0 0
        %938 = vmatprep.mubr.bf16.mxu0 0
        %939 = vmatmul.mubr.bf16.gmra.mrb[0].mxu0 %v904
        %v940 = vpop.f32.mrb[0].mxu0
        %v941 = vadd.f32 0.0, %v940
        %v942 = vpop.f32.mrb[0].mxu0
        %v943 = vadd.f32 0.0, %v942
        %v944 = vpop.f32.mrb[0].mxu0
        %v945 = vadd.f32 0.0, %v944
        %v946 = vpop.f32.mrb[0].mxu0
        %v947 = vadd.f32 0.0, %v946
        %948 = vdwg.mxu0
        %v961 = vunpack.c.l.b16 %v817
        %v962 = vunpack.c.h.b16 %v817
        %v963 = vunpack.c.l.b16 %v818
        %v964 = vunpack.c.h.b16 %v818
        %v965 = vunpack.c.l.b16 %v819
        %v966 = vunpack.c.h.b16 %v819
        %v967 = vunpack.c.l.b16 %v820
        %v968 = vunpack.c.h.b16 %v820
        %v969 = vunpack.c.l.b16 %v821
        %v970 = vunpack.c.h.b16 %v821
        %v971 = vunpack.c.l.b16 %v822
        %v972 = vunpack.c.h.b16 %v822
        %v973 = vunpack.c.l.b16 %v823
        %v974 = vunpack.c.h.b16 %v823
        %v975 = vunpack.c.l.b16 %v824
        %v976 = vunpack.c.h.b16 %v824
        %v977 = vunpack.c.l.b16 %v825
        %v978 = vunpack.c.h.b16 %v825
        %v979 = vunpack.c.l.b16 %v826
        %v980 = vunpack.c.h.b16 %v826
        %v981 = vunpack.c.l.b16 %v827
        %v982 = vunpack.c.h.b16 %v827
        %v983 = vunpack.c.l.b16 %v828
        %v984 = vunpack.c.h.b16 %v828
        %v985 = vpack.c.b16 %v963, %v961
        %v986 = vpack.c.b16 %v964, %v962
        %v987 = vpack.c.b16 %v967, %v965
        %v988 = vpack.c.b16 %v968, %v966
        %v989 = vpack.c.b16 %v971, %v969
        %v990 = vpack.c.b16 %v972, %v970
        %v991 = vpack.c.b16 %v975, %v973
        %v992 = vpack.c.b16 %v976, %v974
        %v993 = vpack.c.b16 %v979, %v977
        %v994 = vpack.c.b16 %v980, %v978
        %v995 = vpack.c.b16 %v983, %v981
        %v996 = vpack.c.b16 %v984, %v982
        %v1010 = vsel %vm902, %v551, 0
        %1012 = vmatprep.subr.bf16.mxu0 %v986
        %1013 = vmatpush1.bf16.msra.mxu0 %v985
        %1014 = vmatprep.subr.bf16.mxu0 %v988
        %1015 = vmatpush1.bf16.msra.mxu0 %v987
        %1016 = vmatprep.subr.bf16.mxu0 %v990
        %1017 = vmatpush1.bf16.msra.mxu0 %v989
        %1018 = vmatprep.subr.bf16.mxu0 %v992
        %1019 = vmatpush1.bf16.msra.mxu0 %v991
        %1020 = vmatprep.subr.bf16.mxu0 %v994
        %1021 = vmatpush1.bf16.msra.mxu0 %v993
        %1022 = vmatprep.subr.bf16.mxu0 %v996
        %1023 = vmatpush1.bf16.msra.mxu0 %v995
        %1024 = vmatprep.subr.bf16.mxu0 0
        %1025 = vmatpush1.bf16.msra.mxu0 0
        %1026 = vmatprep.subr.bf16.mxu0 0
        %1027 = vmatpush1.bf16.msra.mxu0 0
        %1028 = vmatprep.subr.bf16.mxu0 0
        %1029 = vmatpush1.bf16.msra.mxu0 0
        %1030 = vmatprep.subr.bf16.mxu0 0
        %1031 = vmatpush1.bf16.msra.mxu0 0
        %1032 = vmatprep.subr.bf16.mxu0 0
        %1033 = vmatpush1.bf16.msra.mxu0 0
        %1034 = vmatprep.subr.bf16.mxu0 0
        %1035 = vmatpush1.bf16.msra.mxu0 0
        %1036 = vmatprep.subr.bf16.mxu0 0
        %1037 = vmatpush1.bf16.msra.mxu0 0
        %1038 = vmatprep.subr.bf16.mxu0 0
        %1039 = vmatpush1.bf16.msra.mxu0 0
        %1040 = vmatprep.subr.bf16.mxu0 0
        %1041 = vmatpush1.bf16.msra.mxu0 0
        %1042 = vmatprep.subr.bf16.mxu0 0
        %1043 = vmatpush1.bf16.msra.mxu0 0
        %1044 = vmatprep.mubr.bf16.mxu0 0
        %1045 = vmatmul.mubr.bf16.gmra.mrb[0].mxu0 %v1010
        %v1046 = vpop.f32.mrb[0].mxu0
        %v1047 = vadd.f32 %v941, %v1046
        %v1048 = vpop.f32.mrb[0].mxu0
        %v1049 = vadd.f32 %v943, %v1048
        %v1050 = vpop.f32.mrb[0].mxu0
        %v1051 = vadd.f32 %v945, %v1050
        %v1052 = vpop.f32.mrb[0].mxu0
        %v1053 = vadd.f32 %v947, %v1052
        %1054 = vdwg.mxu0
        %s1055 = scalar_lea.vmem %s5, 384
        %v1056 = vld [vmem:[%s1055] sm:$0xff]
        %v1057 = vld [vmem:[%s1055 + $0x8] sm:$0xff]
        %v1058 = vld [vmem:[%s1055 + $0x10] sm:$0xff]
        %v1059 = vld [vmem:[%s1055 + $0x18] sm:$0xff]
        %v1060 = vld [vmem:[%s1055 + $0x20] sm:$0xff]
        %v1061 = vld [vmem:[%s1055 + $0x28] sm:$0xff]
        %v1062 = vld [vmem:[%s1055 + $0x30] sm:$0xff]
        %v1063 = vld [vmem:[%s1055 + $0x38] sm:$0xff]
        %v1064 = vld [vmem:[%s1055 + $0x40] sm:$0xff]
        %v1065 = vld [vmem:[%s1055 + $0x48] sm:$0xff]
        %v1066 = vld [vmem:[%s1055 + $0x50] sm:$0xff]
        %v1067 = vld [vmem:[%s1055 + $0x58] sm:$0xff]
        %v1080 = vunpack.c.l.b16 %v1056
        %v1081 = vunpack.c.h.b16 %v1056
        %v1082 = vunpack.c.l.b16 %v1057
        %v1083 = vunpack.c.h.b16 %v1057
        %v1084 = vunpack.c.l.b16 %v1058
        %v1085 = vunpack.c.h.b16 %v1058
        %v1086 = vunpack.c.l.b16 %v1059
        %v1087 = vunpack.c.h.b16 %v1059
        %v1088 = vunpack.c.l.b16 %v1060
        %v1089 = vunpack.c.h.b16 %v1060
        %v1090 = vunpack.c.l.b16 %v1061
        %v1091 = vunpack.c.h.b16 %v1061
        %v1092 = vunpack.c.l.b16 %v1062
        %v1093 = vunpack.c.h.b16 %v1062
        %v1094 = vunpack.c.l.b16 %v1063
        %v1095 = vunpack.c.h.b16 %v1063
        %v1096 = vunpack.c.l.b16 %v1064
        %v1097 = vunpack.c.h.b16 %v1064
        %v1098 = vunpack.c.l.b16 %v1065
        %v1099 = vunpack.c.h.b16 %v1065
        %v1100 = vunpack.c.l.b16 %v1066
        %v1101 = vunpack.c.h.b16 %v1066
        %v1102 = vunpack.c.l.b16 %v1067
        %v1103 = vunpack.c.h.b16 %v1067
        %v1104 = vpack.c.b16 %v1082, %v1080
        %v1105 = vpack.c.b16 %v1083, %v1081
        %v1106 = vpack.c.b16 %v1086, %v1084
        %v1107 = vpack.c.b16 %v1087, %v1085
        %v1108 = vpack.c.b16 %v1090, %v1088
        %v1109 = vpack.c.b16 %v1091, %v1089
        %v1110 = vpack.c.b16 %v1094, %v1092
        %v1111 = vpack.c.b16 %v1095, %v1093
        %v1112 = vpack.c.b16 %v1098, %v1096
        %v1113 = vpack.c.b16 %v1099, %v1097
        %v1114 = vpack.c.b16 %v1102, %v1100
        %v1115 = vpack.c.b16 %v1103, %v1101
        %v1129 = vsel %vm902, %v657, 0
        %1131 = vmatprep.subr.bf16.mxu0 %v1105
        %1132 = vmatpush1.bf16.msra.mxu0 %v1104
        %1133 = vmatprep.subr.bf16.mxu0 %v1107
        %1134 = vmatpush1.bf16.msra.mxu0 %v1106
        %1135 = vmatprep.subr.bf16.mxu0 %v1109
        %1136 = vmatpush1.bf16.msra.mxu0 %v1108
        %1137 = vmatprep.subr.bf16.mxu0 %v1111
        %1138 = vmatpush1.bf16.msra.mxu0 %v1110
        %1139 = vmatprep.subr.bf16.mxu0 %v1113
        %1140 = vmatpush1.bf16.msra.mxu0 %v1112
        %1141 = vmatprep.subr.bf16.mxu0 %v1115
        %1142 = vmatpush1.bf16.msra.mxu0 %v1114
        %1143 = vmatprep.subr.bf16.mxu0 0
        %1144 = vmatpush1.bf16.msra.mxu0 0
        %1145 = vmatprep.subr.bf16.mxu0 0
        %1146 = vmatpush1.bf16.msra.mxu0 0
        %1147 = vmatprep.subr.bf16.mxu0 0
        %1148 = vmatpush1.bf16.msra.mxu0 0
        %1149 = vmatprep.subr.bf16.mxu0 0
        %1150 = vmatpush1.bf16.msra.mxu0 0
        %1151 = vmatprep.subr.bf16.mxu0 0
        %1152 = vmatpush1.bf16.msra.mxu0 0
        %1153 = vmatprep.subr.bf16.mxu0 0
        %1154 = vmatpush1.bf16.msra.mxu0 0
        %1155 = vmatprep.subr.bf16.mxu0 0
        %1156 = vmatpush1.bf16.msra.mxu0 0
        %1157 = vmatprep.subr.bf16.mxu0 0
        %1158 = vmatpush1.bf16.msra.mxu0 0
        %1159 = vmatprep.subr.bf16.mxu0 0
        %1160 = vmatpush1.bf16.msra.mxu0 0
        %1161 = vmatprep.subr.bf16.mxu0 0
        %1162 = vmatpush1.bf16.msra.mxu0 0
        %1163 = vmatprep.mubr.bf16.mxu0 0
        %1164 = vmatmul.mubr.bf16.gmra.mrb[0].mxu0 %v1129
        %v1165 = vpop.f32.mrb[0].mxu0
        %v1166 = vadd.f32 0.0, %v1165
        %v1167 = vpop.f32.mrb[0].mxu0
        %v1168 = vadd.f32 0.0, %v1167
        %v1169 = vpop.f32.mrb[0].mxu0
        %v1170 = vadd.f32 0.0, %v1169
        %v1171 = vpop.f32.mrb[0].mxu0
        %v1172 = vadd.f32 0.0, %v1171
        %1173 = vdwg.mxu0
        %v1174 = vadd.f32 %v1047, %v1166
        %v1175 = vadd.f32 %v1049, %v1168
        %v1176 = vadd.f32 %v1051, %v1170
        %v1177 = vadd.f32 %v1053, %v1172
        %s1178 = scalar_lea.vmem %s5, 576
        %v1179 = vld [vmem:[%s1178] sm:$0xff]
        %v1180 = vld [vmem:[%s1178 + $0x8] sm:$0xff]
        %v1181 = vld [vmem:[%s1178 + $0x10] sm:$0xff]
        %v1182 = vld [vmem:[%s1178 + $0x18] sm:$0xff]
        %v1183 = vld [vmem:[%s1178 + $0x20] sm:$0xff]
        %v1184 = vld [vmem:[%s1178 + $0x28] sm:$0xff]
        %v1185 = vld [vmem:[%s1178 + $0x30] sm:$0xff]
        %v1186 = vld [vmem:[%s1178 + $0x38] sm:$0xff]
        %v1187 = vld [vmem:[%s1178 + $0x40] sm:$0xff]
        %v1188 = vld [vmem:[%s1178 + $0x48] sm:$0xff]
        %v1189 = vld [vmem:[%s1178 + $0x50] sm:$0xff]
        %v1190 = vld [vmem:[%s1178 + $0x58] sm:$0xff]
        %v1203 = vunpack.c.l.b16 %v1179
        %v1204 = vunpack.c.h.b16 %v1179
        %v1205 = vunpack.c.l.b16 %v1180
        %v1206 = vunpack.c.h.b16 %v1180
        %v1207 = vunpack.c.l.b16 %v1181
        %v1208 = vunpack.c.h.b16 %v1181
        %v1209 = vunpack.c.l.b16 %v1182
        %v1210 = vunpack.c.h.b16 %v1182
        %v1211 = vunpack.c.l.b16 %v1183
        %v1212 = vunpack.c.h.b16 %v1183
        %v1213 = vunpack.c.l.b16 %v1184
        %v1214 = vunpack.c.h.b16 %v1184
        %v1215 = vunpack.c.l.b16 %v1185
        %v1216 = vunpack.c.h.b16 %v1185
        %v1217 = vunpack.c.l.b16 %v1186
        %v1218 = vunpack.c.h.b16 %v1186
        %v1219 = vunpack.c.l.b16 %v1187
        %v1220 = vunpack.c.h.b16 %v1187
        %v1221 = vunpack.c.l.b16 %v1188
        %v1222 = vunpack.c.h.b16 %v1188
        %v1223 = vunpack.c.l.b16 %v1189
        %v1224 = vunpack.c.h.b16 %v1189
        %v1225 = vunpack.c.l.b16 %v1190
        %v1226 = vunpack.c.h.b16 %v1190
        %v1227 = vpack.c.b16 %v1205, %v1203
        %v1228 = vpack.c.b16 %v1206, %v1204
        %v1229 = vpack.c.b16 %v1209, %v1207
        %v1230 = vpack.c.b16 %v1210, %v1208
        %v1231 = vpack.c.b16 %v1213, %v1211
        %v1232 = vpack.c.b16 %v1214, %v1212
        %v1233 = vpack.c.b16 %v1217, %v1215
        %v1234 = vpack.c.b16 %v1218, %v1216
        %v1235 = vpack.c.b16 %v1221, %v1219
        %v1236 = vpack.c.b16 %v1222, %v1220
        %v1237 = vpack.c.b16 %v1225, %v1223
        %v1238 = vpack.c.b16 %v1226, %v1224
        %v1252 = vsel %vm902, %v710, 0
        %1254 = vmatprep.subr.bf16.mxu0 %v1228
        %1255 = vmatpush1.bf16.msra.mxu0 %v1227
        %1256 = vmatprep.subr.bf16.mxu0 %v1230
        %1257 = vmatpush1.bf16.msra.mxu0 %v1229
        %1258 = vmatprep.subr.bf16.mxu0 %v1232
        %1259 = vmatpush1.bf16.msra.mxu0 %v1231
        %1260 = vmatprep.subr.bf16.mxu0 %v1234
        %1261 = vmatpush1.bf16.msra.mxu0 %v1233
        %1262 = vmatprep.subr.bf16.mxu0 %v1236
        %1263 = vmatpush1.bf16.msra.mxu0 %v1235
        %1264 = vmatprep.subr.bf16.mxu0 %v1238
        %1265 = vmatpush1.bf16.msra.mxu0 %v1237
        %1266 = vmatprep.subr.bf16.mxu0 0
        %1267 = vmatpush1.bf16.msra.mxu0 0
        %1268 = vmatprep.subr.bf16.mxu0 0
        %1269 = vmatpush1.bf16.msra.mxu0 0
        %1270 = vmatprep.subr.bf16.mxu0 0
        %1271 = vmatpush1.bf16.msra.mxu0 0
        %1272 = vmatprep.subr.bf16.mxu0 0
        %1273 = vmatpush1.bf16.msra.mxu0 0
        %1274 = vmatprep.subr.bf16.mxu0 0
        %1275 = vmatpush1.bf16.msra.mxu0 0
        %1276 = vmatprep.subr.bf16.mxu0 0
        %1277 = vmatpush1.bf16.msra.mxu0 0
        %1278 = vmatprep.subr.bf16.mxu0 0
        %1279 = vmatpush1.bf16.msra.mxu0 0
        %1280 = vmatprep.subr.bf16.mxu0 0
        %1281 = vmatpush1.bf16.msra.mxu0 0
        %1282 = vmatprep.subr.bf16.mxu0 0
        %1283 = vmatpush1.bf16.msra.mxu0 0
        %1284 = vmatprep.subr.bf16.mxu0 0
        %1285 = vmatpush1.bf16.msra.mxu0 0
        %1286 = vmatprep.mubr.bf16.mxu0 0
        %1287 = vmatmul.mubr.bf16.gmra.mrb[0].mxu0 %v1252
        %v1288 = vpop.f32.mrb[0].mxu0
        %v1289 = vadd.f32 0.0, %v1288
        %v1290 = vpop.f32.mrb[0].mxu0
        %v1291 = vadd.f32 0.0, %v1290
        %v1292 = vpop.f32.mrb[0].mxu0
        %v1293 = vadd.f32 0.0, %v1292
        %v1294 = vpop.f32.mrb[0].mxu0
        %v1295 = vadd.f32 0.0, %v1294
        %1296 = vdwg.mxu0
        %v1297 = vadd.f32 %v1174, %v1289
        %v1298 = vadd.f32 %v1175, %v1291
        %v1299 = vadd.f32 %v1176, %v1293
        %v1300 = vadd.f32 %v1177, %v1295
        %s1301 = scalar_lea.vmem %s5, 768
        %v1302 = vld [vmem:[%s1301] sm:$0xff]
        %v1303 = vld [vmem:[%s1301 + $0x8] sm:$0xff]
        %v1304 = vld [vmem:[%s1301 + $0x10] sm:$0xff]
        %v1305 = vld [vmem:[%s1301 + $0x18] sm:$0xff]
        %v1306 = vld [vmem:[%s1301 + $0x20] sm:$0xff]
        %v1307 = vld [vmem:[%s1301 + $0x28] sm:$0xff]
        %v1308 = vld [vmem:[%s1301 + $0x30] sm:$0xff]
        %v1309 = vld [vmem:[%s1301 + $0x38] sm:$0xff]
        %v1310 = vld [vmem:[%s1301 + $0x40] sm:$0xff]
        %v1311 = vld [vmem:[%s1301 + $0x48] sm:$0xff]
        %v1312 = vld [vmem:[%s1301 + $0x50] sm:$0xff]
        %v1313 = vld [vmem:[%s1301 + $0x58] sm:$0xff]
        %v1326 = vunpack.c.l.b16 %v1302
        %v1327 = vunpack.c.h.b16 %v1302
        %v1328 = vunpack.c.l.b16 %v1303
        %v1329 = vunpack.c.h.b16 %v1303
        %v1330 = vunpack.c.l.b16 %v1304
        %v1331 = vunpack.c.h.b16 %v1304
        %v1332 = vunpack.c.l.b16 %v1305
        %v1333 = vunpack.c.h.b16 %v1305
        %v1334 = vunpack.c.l.b16 %v1306
        %v1335 = vunpack.c.h.b16 %v1306
        %v1336 = vunpack.c.l.b16 %v1307
        %v1337 = vunpack.c.h.b16 %v1307
        %v1338 = vunpack.c.l.b16 %v1308
        %v1339 = vunpack.c.h.b16 %v1308
        %v1340 = vunpack.c.l.b16 %v1309
        %v1341 = vunpack.c.h.b16 %v1309
        %v1342 = vunpack.c.l.b16 %v1310
        %v1343 = vunpack.c.h.b16 %v1310
        %v1344 = vunpack.c.l.b16 %v1311
        %v1345 = vunpack.c.h.b16 %v1311
        %v1346 = vunpack.c.l.b16 %v1312
        %v1347 = vunpack.c.h.b16 %v1312
        %v1348 = vunpack.c.l.b16 %v1313
        %v1349 = vunpack.c.h.b16 %v1313
        %v1350 = vpack.c.b16 %v1328, %v1326
        %v1351 = vpack.c.b16 %v1329, %v1327
        %v1352 = vpack.c.b16 %v1332, %v1330
        %v1353 = vpack.c.b16 %v1333, %v1331
        %v1354 = vpack.c.b16 %v1336, %v1334
        %v1355 = vpack.c.b16 %v1337, %v1335
        %v1356 = vpack.c.b16 %v1340, %v1338
        %v1357 = vpack.c.b16 %v1341, %v1339
        %v1358 = vpack.c.b16 %v1344, %v1342
        %v1359 = vpack.c.b16 %v1345, %v1343
        %v1360 = vpack.c.b16 %v1348, %v1346
        %v1361 = vpack.c.b16 %v1349, %v1347
        %v1375 = vsel %vm902, %v763, 0
        %1377 = vmatprep.subr.bf16.mxu0 %v1351
        %1378 = vmatpush1.bf16.msra.mxu0 %v1350
        %1379 = vmatprep.subr.bf16.mxu0 %v1353
        %1380 = vmatpush1.bf16.msra.mxu0 %v1352
        %1381 = vmatprep.subr.bf16.mxu0 %v1355
        %1382 = vmatpush1.bf16.msra.mxu0 %v1354
        %1383 = vmatprep.subr.bf16.mxu0 %v1357
        %1384 = vmatpush1.bf16.msra.mxu0 %v1356
        %1385 = vmatprep.subr.bf16.mxu0 %v1359
        %1386 = vmatpush1.bf16.msra.mxu0 %v1358
        %1387 = vmatprep.subr.bf16.mxu0 %v1361
        %1388 = vmatpush1.bf16.msra.mxu0 %v1360
        %1389 = vmatprep.subr.bf16.mxu0 0
        %1390 = vmatpush1.bf16.msra.mxu0 0
        %1391 = vmatprep.subr.bf16.mxu0 0
        %1392 = vmatpush1.bf16.msra.mxu0 0
        %1393 = vmatprep.subr.bf16.mxu0 0
        %1394 = vmatpush1.bf16.msra.mxu0 0
        %1395 = vmatprep.subr.bf16.mxu0 0
        %1396 = vmatpush1.bf16.msra.mxu0 0
        %1397 = vmatprep.subr.bf16.mxu0 0
        %1398 = vmatpush1.bf16.msra.mxu0 0
        %1399 = vmatprep.subr.bf16.mxu0 0
        %1400 = vmatpush1.bf16.msra.mxu0 0
        %1401 = vmatprep.subr.bf16.mxu0 0
        %1402 = vmatpush1.bf16.msra.mxu0 0
        %1403 = vmatprep.subr.bf16.mxu0 0
        %1404 = vmatpush1.bf16.msra.mxu0 0
        %1405 = vmatprep.subr.bf16.mxu0 0
        %1406 = vmatpush1.bf16.msra.mxu0 0
        %1407 = vmatprep.subr.bf16.mxu0 0
        %1408 = vmatpush1.bf16.msra.mxu0 0
        %1409 = vmatprep.mubr.bf16.mxu0 0
        %1410 = vmatmul.mubr.bf16.gmra.mrb[0].mxu0 %v1375
        %v1411 = vpop.f32.mrb[0].mxu0
        %v1412 = vadd.f32 0.0, %v1411
        %v1413 = vpop.f32.mrb[0].mxu0
        %v1414 = vadd.f32 0.0, %v1413
        %v1415 = vpop.f32.mrb[0].mxu0
        %v1416 = vadd.f32 0.0, %v1415
        %v1417 = vpop.f32.mrb[0].mxu0
        %v1418 = vadd.f32 0.0, %v1417
        %1419 = vdwg.mxu0
        %v1420 = vadd.f32 %v1297, %v1412
        %v1421 = vadd.f32 %v1298, %v1414
        %v1422 = vadd.f32 %v1299, %v1416
        %v1423 = vadd.f32 %v1300, %v1418
        %s1424 = scalar_lea.vmem %s5, 96
        %v1425 = vld [vmem:[%s1424] sm:$0xff]
        %v1426 = vld [vmem:[%s1424 + $0x8] sm:$0xff]
        %v1427 = vld [vmem:[%s1424 + $0x10] sm:$0xff]
        %v1428 = vld [vmem:[%s1424 + $0x18] sm:$0xff]
        %v1429 = vld [vmem:[%s1424 + $0x20] sm:$0xff]
        %v1430 = vld [vmem:[%s1424 + $0x28] sm:$0xff]
        %v1431 = vld [vmem:[%s1424 + $0x30] sm:$0xff]
        %v1432 = vld [vmem:[%s1424 + $0x38] sm:$0xff]
        %v1433 = vld [vmem:[%s1424 + $0x40] sm:$0xff]
        %v1434 = vld [vmem:[%s1424 + $0x48] sm:$0xff]
        %v1435 = vld [vmem:[%s1424 + $0x50] sm:$0xff]
        %v1436 = vld [vmem:[%s1424 + $0x58] sm:$0xff]
        %s1437 = scalar_lea.vmem %s5, 288
        %v1438 = vld [vmem:[%s1437] sm:$0xff]
        %v1439 = vld [vmem:[%s1437 + $0x8] sm:$0xff]
        %v1440 = vld [vmem:[%s1437 + $0x10] sm:$0xff]
        %v1441 = vld [vmem:[%s1437 + $0x18] sm:$0xff]
        %v1442 = vld [vmem:[%s1437 + $0x20] sm:$0xff]
        %v1443 = vld [vmem:[%s1437 + $0x28] sm:$0xff]
        %v1444 = vld [vmem:[%s1437 + $0x30] sm:$0xff]
        %v1445 = vld [vmem:[%s1437 + $0x38] sm:$0xff]
        %v1446 = vld [vmem:[%s1437 + $0x40] sm:$0xff]
        %v1447 = vld [vmem:[%s1437 + $0x48] sm:$0xff]
        %v1448 = vld [vmem:[%s1437 + $0x50] sm:$0xff]
        %v1449 = vld [vmem:[%s1437 + $0x58] sm:$0xff]
        %v1462 = vunpack.c.l.b16 %v1438
        %v1463 = vunpack.c.h.b16 %v1438
        %v1464 = vunpack.c.l.b16 %v1439
        %v1465 = vunpack.c.h.b16 %v1439
        %v1466 = vunpack.c.l.b16 %v1440
        %v1467 = vunpack.c.h.b16 %v1440
        %v1468 = vunpack.c.l.b16 %v1441
        %v1469 = vunpack.c.h.b16 %v1441
        %v1470 = vunpack.c.l.b16 %v1442
        %v1471 = vunpack.c.h.b16 %v1442
        %v1472 = vunpack.c.l.b16 %v1443
        %v1473 = vunpack.c.h.b16 %v1443
        %v1474 = vunpack.c.l.b16 %v1444
        %v1475 = vunpack.c.h.b16 %v1444
        %v1476 = vunpack.c.l.b16 %v1445
        %v1477 = vunpack.c.h.b16 %v1445
        %v1478 = vunpack.c.l.b16 %v1446
        %v1479 = vunpack.c.h.b16 %v1446
        %v1480 = vunpack.c.l.b16 %v1447
        %v1481 = vunpack.c.h.b16 %v1447
        %v1482 = vunpack.c.l.b16 %v1448
        %v1483 = vunpack.c.h.b16 %v1448
        %v1484 = vunpack.c.l.b16 %v1449
        %v1485 = vunpack.c.h.b16 %v1449
        %v1486 = vpack.c.b16 %v1464, %v1462
        %v1487 = vpack.c.b16 %v1465, %v1463
        %v1488 = vpack.c.b16 %v1468, %v1466
        %v1489 = vpack.c.b16 %v1469, %v1467
        %v1490 = vpack.c.b16 %v1472, %v1470
        %v1491 = vpack.c.b16 %v1473, %v1471
        %v1492 = vpack.c.b16 %v1476, %v1474
        %v1493 = vpack.c.b16 %v1477, %v1475
        %v1494 = vpack.c.b16 %v1480, %v1478
        %v1495 = vpack.c.b16 %v1481, %v1479
        %v1496 = vpack.c.b16 %v1484, %v1482
        %v1497 = vpack.c.b16 %v1485, %v1483
        %1510 = vmatprep.subr.bf16.mxu0 %v1487
        %1511 = vmatpush1.bf16.msra.mxu0 %v1486
        %1512 = vmatprep.subr.bf16.mxu0 %v1489
        %1513 = vmatpush1.bf16.msra.mxu0 %v1488
        %1514 = vmatprep.subr.bf16.mxu0 %v1491
        %1515 = vmatpush1.bf16.msra.mxu0 %v1490
        %1516 = vmatprep.subr.bf16.mxu0 %v1493
        %1517 = vmatpush1.bf16.msra.mxu0 %v1492
        %1518 = vmatprep.subr.bf16.mxu0 %v1495
        %1519 = vmatpush1.bf16.msra.mxu0 %v1494
        %1520 = vmatprep.subr.bf16.mxu0 %v1497
        %1521 = vmatpush1.bf16.msra.mxu0 %v1496
        %1522 = vmatprep.subr.bf16.mxu0 0
        %1523 = vmatpush1.bf16.msra.mxu0 0
        %1524 = vmatprep.subr.bf16.mxu0 0
        %1525 = vmatpush1.bf16.msra.mxu0 0
        %1526 = vmatprep.subr.bf16.mxu0 0
        %1527 = vmatpush1.bf16.msra.mxu0 0
        %1528 = vmatprep.subr.bf16.mxu0 0
        %1529 = vmatpush1.bf16.msra.mxu0 0
        %1530 = vmatprep.subr.bf16.mxu0 0
        %1531 = vmatpush1.bf16.msra.mxu0 0
        %1532 = vmatprep.subr.bf16.mxu0 0
        %1533 = vmatpush1.bf16.msra.mxu0 0
        %1534 = vmatprep.subr.bf16.mxu0 0
        %1535 = vmatpush1.bf16.msra.mxu0 0
        %1536 = vmatprep.subr.bf16.mxu0 0
        %1537 = vmatpush1.bf16.msra.mxu0 0
        %1538 = vmatprep.subr.bf16.mxu0 0
        %1539 = vmatpush1.bf16.msra.mxu0 0
        %1540 = vmatprep.subr.bf16.mxu0 0
        %1541 = vmatpush1.bf16.msra.mxu0 0
        %1542 = vmatprep.mubr.bf16.mxu0 0
        %1543 = vmatmul.mubr.bf16.gmra.mrb[0].mxu0 %v904
        %v1544 = vpop.f32.mrb[0].mxu0
        %v1545 = vadd.f32 0.0, %v1544
        %v1546 = vpop.f32.mrb[0].mxu0
        %v1547 = vadd.f32 0.0, %v1546
        %v1548 = vpop.f32.mrb[0].mxu0
        %v1549 = vadd.f32 0.0, %v1548
        %v1550 = vpop.f32.mrb[0].mxu0
        %v1551 = vadd.f32 0.0, %v1550
        %1552 = vdwg.mxu0
        %v1565 = vunpack.c.l.b16 %v1425
        %v1566 = vunpack.c.h.b16 %v1425
        %v1567 = vunpack.c.l.b16 %v1426
        %v1568 = vunpack.c.h.b16 %v1426
        %v1569 = vunpack.c.l.b16 %v1427
        %v1570 = vunpack.c.h.b16 %v1427
        %v1571 = vunpack.c.l.b16 %v1428
        %v1572 = vunpack.c.h.b16 %v1428
        %v1573 = vunpack.c.l.b16 %v1429
        %v1574 = vunpack.c.h.b16 %v1429
        %v1575 = vunpack.c.l.b16 %v1430
        %v1576 = vunpack.c.h.b16 %v1430
        %v1577 = vunpack.c.l.b16 %v1431
        %v1578 = vunpack.c.h.b16 %v1431
        %v1579 = vunpack.c.l.b16 %v1432
        %v1580 = vunpack.c.h.b16 %v1432
        %v1581 = vunpack.c.l.b16 %v1433
        %v1582 = vunpack.c.h.b16 %v1433
        %v1583 = vunpack.c.l.b16 %v1434
        %v1584 = vunpack.c.h.b16 %v1434
        %v1585 = vunpack.c.l.b16 %v1435
        %v1586 = vunpack.c.h.b16 %v1435
        %v1587 = vunpack.c.l.b16 %v1436
        %v1588 = vunpack.c.h.b16 %v1436
        %v1589 = vpack.c.b16 %v1567, %v1565
        %v1590 = vpack.c.b16 %v1568, %v1566
        %v1591 = vpack.c.b16 %v1571, %v1569
        %v1592 = vpack.c.b16 %v1572, %v1570
        %v1593 = vpack.c.b16 %v1575, %v1573
        %v1594 = vpack.c.b16 %v1576, %v1574
        %v1595 = vpack.c.b16 %v1579, %v1577
        %v1596 = vpack.c.b16 %v1580, %v1578
        %v1597 = vpack.c.b16 %v1583, %v1581
        %v1598 = vpack.c.b16 %v1584, %v1582
        %v1599 = vpack.c.b16 %v1587, %v1585
        %v1600 = vpack.c.b16 %v1588, %v1586
        %1613 = vmatprep.subr.bf16.mxu0 %v1590
        %1614 = vmatpush1.bf16.msra.mxu0 %v1589
        %1615 = vmatprep.subr.bf16.mxu0 %v1592
        %1616 = vmatpush1.bf16.msra.mxu0 %v1591
        %1617 = vmatprep.subr.bf16.mxu0 %v1594
        %1618 = vmatpush1.bf16.msra.mxu0 %v1593
        %1619 = vmatprep.subr.bf16.mxu0 %v1596
        %1620 = vmatpush1.bf16.msra.mxu0 %v1595
        %1621 = vmatprep.subr.bf16.mxu0 %v1598
        %1622 = vmatpush1.bf16.msra.mxu0 %v1597
        %1623 = vmatprep.subr.bf16.mxu0 %v1600
        %1624 = vmatpush1.bf16.msra.mxu0 %v1599
        %1625 = vmatprep.subr.bf16.mxu0 0
        %1626 = vmatpush1.bf16.msra.mxu0 0
        %1627 = vmatprep.subr.bf16.mxu0 0
        %1628 = vmatpush1.bf16.msra.mxu0 0
        %1629 = vmatprep.subr.bf16.mxu0 0
        %1630 = vmatpush1.bf16.msra.mxu0 0
        %1631 = vmatprep.subr.bf16.mxu0 0
        %1632 = vmatpush1.bf16.msra.mxu0 0
        %1633 = vmatprep.subr.bf16.mxu0 0
        %1634 = vmatpush1.bf16.msra.mxu0 0
        %1635 = vmatprep.subr.bf16.mxu0 0
        %1636 = vmatpush1.bf16.msra.mxu0 0
        %1637 = vmatprep.subr.bf16.mxu0 0
        %1638 = vmatpush1.bf16.msra.mxu0 0
        %1639 = vmatprep.subr.bf16.mxu0 0
        %1640 = vmatpush1.bf16.msra.mxu0 0
        %1641 = vmatprep.subr.bf16.mxu0 0
        %1642 = vmatpush1.bf16.msra.mxu0 0
        %1643 = vmatprep.subr.bf16.mxu0 0
        %1644 = vmatpush1.bf16.msra.mxu0 0
        %1645 = vmatprep.mubr.bf16.mxu0 0
        %1646 = vmatmul.mubr.bf16.gmra.mrb[0].mxu0 %v1010
        %v1647 = vpop.f32.mrb[0].mxu0
        %v1648 = vadd.f32 %v1545, %v1647
        %v1649 = vpop.f32.mrb[0].mxu0
        %v1650 = vadd.f32 %v1547, %v1649
        %v1651 = vpop.f32.mrb[0].mxu0
        %v1652 = vadd.f32 %v1549, %v1651
        %v1653 = vpop.f32.mrb[0].mxu0
        %v1654 = vadd.f32 %v1551, %v1653
        %1655 = vdwg.mxu0
        %s1656 = scalar_lea.vmem %s5, 480
        %v1657 = vld [vmem:[%s1656] sm:$0xff]
        %v1658 = vld [vmem:[%s1656 + $0x8] sm:$0xff]
        %v1659 = vld [vmem:[%s1656 + $0x10] sm:$0xff]
        %v1660 = vld [vmem:[%s1656 + $0x18] sm:$0xff]
        %v1661 = vld [vmem:[%s1656 + $0x20] sm:$0xff]
        %v1662 = vld [vmem:[%s1656 + $0x28] sm:$0xff]
        %v1663 = vld [vmem:[%s1656 + $0x30] sm:$0xff]
        %v1664 = vld [vmem:[%s1656 + $0x38] sm:$0xff]
        %v1665 = vld [vmem:[%s1656 + $0x40] sm:$0xff]
        %v1666 = vld [vmem:[%s1656 + $0x48] sm:$0xff]
        %v1667 = vld [vmem:[%s1656 + $0x50] sm:$0xff]
        %v1668 = vld [vmem:[%s1656 + $0x58] sm:$0xff]
        %v1681 = vunpack.c.l.b16 %v1657
        %v1682 = vunpack.c.h.b16 %v1657
        %v1683 = vunpack.c.l.b16 %v1658
        %v1684 = vunpack.c.h.b16 %v1658
        %v1685 = vunpack.c.l.b16 %v1659
        %v1686 = vunpack.c.h.b16 %v1659
        %v1687 = vunpack.c.l.b16 %v1660
        %v1688 = vunpack.c.h.b16 %v1660
        %v1689 = vunpack.c.l.b16 %v1661
        %v1690 = vunpack.c.h.b16 %v1661
        %v1691 = vunpack.c.l.b16 %v1662
        %v1692 = vunpack.c.h.b16 %v1662
        %v1693 = vunpack.c.l.b16 %v1663
        %v1694 = vunpack.c.h.b16 %v1663
        %v1695 = vunpack.c.l.b16 %v1664
        %v1696 = vunpack.c.h.b16 %v1664
        %v1697 = vunpack.c.l.b16 %v1665
        %v1698 = vunpack.c.h.b16 %v1665
        %v1699 = vunpack.c.l.b16 %v1666
        %v1700 = vunpack.c.h.b16 %v1666
        %v1701 = vunpack.c.l.b16 %v1667
        %v1702 = vunpack.c.h.b16 %v1667
        %v1703 = vunpack.c.l.b16 %v1668
        %v1704 = vunpack.c.h.b16 %v1668
        %v1705 = vpack.c.b16 %v1683, %v1681
        %v1706 = vpack.c.b16 %v1684, %v1682
        %v1707 = vpack.c.b16 %v1687, %v1685
        %v1708 = vpack.c.b16 %v1688, %v1686
        %v1709 = vpack.c.b16 %v1691, %v1689
        %v1710 = vpack.c.b16 %v1692, %v1690
        %v1711 = vpack.c.b16 %v1695, %v1693
        %v1712 = vpack.c.b16 %v1696, %v1694
        %v1713 = vpack.c.b16 %v1699, %v1697
        %v1714 = vpack.c.b16 %v1700, %v1698
        %v1715 = vpack.c.b16 %v1703, %v1701
        %v1716 = vpack.c.b16 %v1704, %v1702
        %1729 = vmatprep.subr.bf16.mxu0 %v1706
        %1730 = vmatpush1.bf16.msra.mxu0 %v1705
        %1731 = vmatprep.subr.bf16.mxu0 %v1708
        %1732 = vmatpush1.bf16.msra.mxu0 %v1707
        %1733 = vmatprep.subr.bf16.mxu0 %v1710
        %1734 = vmatpush1.bf16.msra.mxu0 %v1709
        %1735 = vmatprep.subr.bf16.mxu0 %v1712
        %1736 = vmatpush1.bf16.msra.mxu0 %v1711
        %1737 = vmatprep.subr.bf16.mxu0 %v1714
        %1738 = vmatpush1.bf16.msra.mxu0 %v1713
        %1739 = vmatprep.subr.bf16.mxu0 %v1716
        %1740 = vmatpush1.bf16.msra.mxu0 %v1715
        %1741 = vmatprep.subr.bf16.mxu0 0
        %1742 = vmatpush1.bf16.msra.mxu0 0
        %1743 = vmatprep.subr.bf16.mxu0 0
        %1744 = vmatpush1.bf16.msra.mxu0 0
        %1745 = vmatprep.subr.bf16.mxu0 0
        %1746 = vmatpush1.bf16.msra.mxu0 0
        %1747 = vmatprep.subr.bf16.mxu0 0
        %1748 = vmatpush1.bf16.msra.mxu0 0
        %1749 = vmatprep.subr.bf16.mxu0 0
        %1750 = vmatpush1.bf16.msra.mxu0 0
        %1751 = vmatprep.subr.bf16.mxu0 0
        %1752 = vmatpush1.bf16.msra.mxu0 0
        %1753 = vmatprep.subr.bf16.mxu0 0
        %1754 = vmatpush1.bf16.msra.mxu0 0
        %1755 = vmatprep.subr.bf16.mxu0 0
        %1756 = vmatpush1.bf16.msra.mxu0 0
        %1757 = vmatprep.subr.bf16.mxu0 0
        %1758 = vmatpush1.bf16.msra.mxu0 0
        %1759 = vmatprep.subr.bf16.mxu0 0
        %1760 = vmatpush1.bf16.msra.mxu0 0
        %1761 = vmatprep.mubr.bf16.mxu0 0
        %1762 = vmatmul.mubr.bf16.gmra.mrb[0].mxu0 %v1129
        %v1763 = vpop.f32.mrb[0].mxu0
        %v1764 = vadd.f32 0.0, %v1763
        %v1765 = vpop.f32.mrb[0].mxu0
        %v1766 = vadd.f32 0.0, %v1765
        %v1767 = vpop.f32.mrb[0].mxu0
        %v1768 = vadd.f32 0.0, %v1767
        %v1769 = vpop.f32.mrb[0].mxu0
        %v1770 = vadd.f32 0.0, %v1769
        %1771 = vdwg.mxu0
        %v1772 = vadd.f32 %v1648, %v1764
        %v1773 = vadd.f32 %v1650, %v1766
        %v1774 = vadd.f32 %v1652, %v1768
        %v1775 = vadd.f32 %v1654, %v1770
        %s1776 = scalar_lea.vmem %s5, 672
        %v1777 = vld [vmem:[%s1776] sm:$0xff]
        %v1778 = vld [vmem:[%s1776 + $0x8] sm:$0xff]
        %v1779 = vld [vmem:[%s1776 + $0x10] sm:$0xff]
        %v1780 = vld [vmem:[%s1776 + $0x18] sm:$0xff]
        %v1781 = vld [vmem:[%s1776 + $0x20] sm:$0xff]
        %v1782 = vld [vmem:[%s1776 + $0x28] sm:$0xff]
        %v1783 = vld [vmem:[%s1776 + $0x30] sm:$0xff]
        %v1784 = vld [vmem:[%s1776 + $0x38] sm:$0xff]
        %v1785 = vld [vmem:[%s1776 + $0x40] sm:$0xff]
        %v1786 = vld [vmem:[%s1776 + $0x48] sm:$0xff]
        %v1787 = vld [vmem:[%s1776 + $0x50] sm:$0xff]
        %v1788 = vld [vmem:[%s1776 + $0x58] sm:$0xff]
        %v1801 = vunpack.c.l.b16 %v1777
        %v1802 = vunpack.c.h.b16 %v1777
        %v1803 = vunpack.c.l.b16 %v1778
        %v1804 = vunpack.c.h.b16 %v1778
        %v1805 = vunpack.c.l.b16 %v1779
        %v1806 = vunpack.c.h.b16 %v1779
        %v1807 = vunpack.c.l.b16 %v1780
        %v1808 = vunpack.c.h.b16 %v1780
        %v1809 = vunpack.c.l.b16 %v1781
        %v1810 = vunpack.c.h.b16 %v1781
        %v1811 = vunpack.c.l.b16 %v1782
        %v1812 = vunpack.c.h.b16 %v1782
        %v1813 = vunpack.c.l.b16 %v1783
        %v1814 = vunpack.c.h.b16 %v1783
        %v1815 = vunpack.c.l.b16 %v1784
        %v1816 = vunpack.c.h.b16 %v1784
        %v1817 = vunpack.c.l.b16 %v1785
        %v1818 = vunpack.c.h.b16 %v1785
        %v1819 = vunpack.c.l.b16 %v1786
        %v1820 = vunpack.c.h.b16 %v1786
        %v1821 = vunpack.c.l.b16 %v1787
        %v1822 = vunpack.c.h.b16 %v1787
        %v1823 = vunpack.c.l.b16 %v1788
        %v1824 = vunpack.c.h.b16 %v1788
        %v1825 = vpack.c.b16 %v1803, %v1801
        %v1826 = vpack.c.b16 %v1804, %v1802
        %v1827 = vpack.c.b16 %v1807, %v1805
        %v1828 = vpack.c.b16 %v1808, %v1806
        %v1829 = vpack.c.b16 %v1811, %v1809
        %v1830 = vpack.c.b16 %v1812, %v1810
        %v1831 = vpack.c.b16 %v1815, %v1813
        %v1832 = vpack.c.b16 %v1816, %v1814
        %v1833 = vpack.c.b16 %v1819, %v1817
        %v1834 = vpack.c.b16 %v1820, %v1818
        %v1835 = vpack.c.b16 %v1823, %v1821
        %v1836 = vpack.c.b16 %v1824, %v1822
        %1849 = vmatprep.subr.bf16.mxu0 %v1826
        %1850 = vmatpush1.bf16.msra.mxu0 %v1825
        %1851 = vmatprep.subr.bf16.mxu0 %v1828
        %1852 = vmatpush1.bf16.msra.mxu0 %v1827
        %1853 = vmatprep.subr.bf16.mxu0 %v1830
        %1854 = vmatpush1.bf16.msra.mxu0 %v1829
        %1855 = vmatprep.subr.bf16.mxu0 %v1832
        %1856 = vmatpush1.bf16.msra.mxu0 %v1831
        %1857 = vmatprep.subr.bf16.mxu0 %v1834
        %1858 = vmatpush1.bf16.msra.mxu0 %v1833
        %1859 = vmatprep.subr.bf16.mxu0 %v1836
        %1860 = vmatpush1.bf16.msra.mxu0 %v1835
        %1861 = vmatprep.subr.bf16.mxu0 0
        %1862 = vmatpush1.bf16.msra.mxu0 0
        %1863 = vmatprep.subr.bf16.mxu0 0
        %1864 = vmatpush1.bf16.msra.mxu0 0
        %1865 = vmatprep.subr.bf16.mxu0 0
        %1866 = vmatpush1.bf16.msra.mxu0 0
        %1867 = vmatprep.subr.bf16.mxu0 0
        %1868 = vmatpush1.bf16.msra.mxu0 0
        %1869 = vmatprep.subr.bf16.mxu0 0
        %1870 = vmatpush1.bf16.msra.mxu0 0
        %1871 = vmatprep.subr.bf16.mxu0 0
        %1872 = vmatpush1.bf16.msra.mxu0 0
        %1873 = vmatprep.subr.bf16.mxu0 0
        %1874 = vmatpush1.bf16.msra.mxu0 0
        %1875 = vmatprep.subr.bf16.mxu0 0
        %1876 = vmatpush1.bf16.msra.mxu0 0
        %1877 = vmatprep.subr.bf16.mxu0 0
        %1878 = vmatpush1.bf16.msra.mxu0 0
        %1879 = vmatprep.subr.bf16.mxu0 0
        %1880 = vmatpush1.bf16.msra.mxu0 0
        %1881 = vmatprep.mubr.bf16.mxu0 0
        %1882 = vmatmul.mubr.bf16.gmra.mrb[0].mxu0 %v1252
        %v1883 = vpop.f32.mrb[0].mxu0
        %v1884 = vadd.f32 0.0, %v1883
        %v1885 = vpop.f32.mrb[0].mxu0
        %v1886 = vadd.f32 0.0, %v1885
        %v1887 = vpop.f32.mrb[0].mxu0
        %v1888 = vadd.f32 0.0, %v1887
        %v1889 = vpop.f32.mrb[0].mxu0
        %v1890 = vadd.f32 0.0, %v1889
        %1891 = vdwg.mxu0
        %v1892 = vadd.f32 %v1772, %v1884
        %v1893 = vadd.f32 %v1773, %v1886
        %v1894 = vadd.f32 %v1774, %v1888
        %v1895 = vadd.f32 %v1775, %v1890
        %s1896 = scalar_lea.vmem %s5, 864
        %v1897 = vld [vmem:[%s1896] sm:$0xff]
        %v1898 = vld [vmem:[%s1896 + $0x8] sm:$0xff]
        %v1899 = vld [vmem:[%s1896 + $0x10] sm:$0xff]
        %v1900 = vld [vmem:[%s1896 + $0x18] sm:$0xff]
        %v1901 = vld [vmem:[%s1896 + $0x20] sm:$0xff]
        %v1902 = vld [vmem:[%s1896 + $0x28] sm:$0xff]
        %v1903 = vld [vmem:[%s1896 + $0x30] sm:$0xff]
        %v1904 = vld [vmem:[%s1896 + $0x38] sm:$0xff]
        %v1905 = vld [vmem:[%s1896 + $0x40] sm:$0xff]
        %v1906 = vld [vmem:[%s1896 + $0x48] sm:$0xff]
        %v1907 = vld [vmem:[%s1896 + $0x50] sm:$0xff]
        %v1908 = vld [vmem:[%s1896 + $0x58] sm:$0xff]
        %v1921 = vunpack.c.l.b16 %v1897
        %v1922 = vunpack.c.h.b16 %v1897
        %v1923 = vunpack.c.l.b16 %v1898
        %v1924 = vunpack.c.h.b16 %v1898
        %v1925 = vunpack.c.l.b16 %v1899
        %v1926 = vunpack.c.h.b16 %v1899
        %v1927 = vunpack.c.l.b16 %v1900
        %v1928 = vunpack.c.h.b16 %v1900
        %v1929 = vunpack.c.l.b16 %v1901
        %v1930 = vunpack.c.h.b16 %v1901
        %v1931 = vunpack.c.l.b16 %v1902
        %v1932 = vunpack.c.h.b16 %v1902
        %v1933 = vunpack.c.l.b16 %v1903
        %v1934 = vunpack.c.h.b16 %v1903
        %v1935 = vunpack.c.l.b16 %v1904
        %v1936 = vunpack.c.h.b16 %v1904
        %v1937 = vunpack.c.l.b16 %v1905
        %v1938 = vunpack.c.h.b16 %v1905
        %v1939 = vunpack.c.l.b16 %v1906
        %v1940 = vunpack.c.h.b16 %v1906
        %v1941 = vunpack.c.l.b16 %v1907
        %v1942 = vunpack.c.h.b16 %v1907
        %v1943 = vunpack.c.l.b16 %v1908
        %v1944 = vunpack.c.h.b16 %v1908
        %v1945 = vpack.c.b16 %v1923, %v1921
        %v1946 = vpack.c.b16 %v1924, %v1922
        %v1947 = vpack.c.b16 %v1927, %v1925
        %v1948 = vpack.c.b16 %v1928, %v1926
        %v1949 = vpack.c.b16 %v1931, %v1929
        %v1950 = vpack.c.b16 %v1932, %v1930
        %v1951 = vpack.c.b16 %v1935, %v1933
        %v1952 = vpack.c.b16 %v1936, %v1934
        %v1953 = vpack.c.b16 %v1939, %v1937
        %v1954 = vpack.c.b16 %v1940, %v1938
        %v1955 = vpack.c.b16 %v1943, %v1941
        %v1956 = vpack.c.b16 %v1944, %v1942
        %1969 = vmatprep.subr.bf16.mxu0 %v1946
        %1970 = vmatpush1.bf16.msra.mxu0 %v1945
        %1971 = vmatprep.subr.bf16.mxu0 %v1948
        %1972 = vmatpush1.bf16.msra.mxu0 %v1947
        %1973 = vmatprep.subr.bf16.mxu0 %v1950
        %1974 = vmatpush1.bf16.msra.mxu0 %v1949
        %1975 = vmatprep.subr.bf16.mxu0 %v1952
        %1976 = vmatpush1.bf16.msra.mxu0 %v1951
        %1977 = vmatprep.subr.bf16.mxu0 %v1954
        %1978 = vmatpush1.bf16.msra.mxu0 %v1953
        %1979 = vmatprep.subr.bf16.mxu0 %v1956
        %1980 = vmatpush1.bf16.msra.mxu0 %v1955
        %1981 = vmatprep.subr.bf16.mxu0 0
        %1982 = vmatpush1.bf16.msra.mxu0 0
        %1983 = vmatprep.subr.bf16.mxu0 0
        %1984 = vmatpush1.bf16.msra.mxu0 0
        %1985 = vmatprep.subr.bf16.mxu0 0
        %1986 = vmatpush1.bf16.msra.mxu0 0
        %1987 = vmatprep.subr.bf16.mxu0 0
        %1988 = vmatpush1.bf16.msra.mxu0 0
        %1989 = vmatprep.subr.bf16.mxu0 0
        %1990 = vmatpush1.bf16.msra.mxu0 0
        %1991 = vmatprep.subr.bf16.mxu0 0
        %1992 = vmatpush1.bf16.msra.mxu0 0
        %1993 = vmatprep.subr.bf16.mxu0 0
        %1994 = vmatpush1.bf16.msra.mxu0 0
        %1995 = vmatprep.subr.bf16.mxu0 0
        %1996 = vmatpush1.bf16.msra.mxu0 0
        %1997 = vmatprep.subr.bf16.mxu0 0
        %1998 = vmatpush1.bf16.msra.mxu0 0
        %1999 = vmatprep.subr.bf16.mxu0 0
        %2000 = vmatpush1.bf16.msra.mxu0 0
        %2001 = vmatprep.mubr.bf16.mxu0 0
        %2002 = vmatmul.mubr.bf16.gmra.mrb[0].mxu0 %v1375
        %v2003 = vpop.f32.mrb[0].mxu0
        %v2004 = vadd.f32 0.0, %v2003
        %v2005 = vpop.f32.mrb[0].mxu0
        %v2006 = vadd.f32 0.0, %v2005
        %v2007 = vpop.f32.mrb[0].mxu0
        %v2008 = vadd.f32 0.0, %v2007
        %v2009 = vpop.f32.mrb[0].mxu0
        %v2010 = vadd.f32 0.0, %v2009
        %2011 = vdwg.mxu0
        %v2012 = vadd.f32 %v1892, %v2004
        %v2013 = vadd.f32 %v1893, %v2006
        %v2014 = vadd.f32 %v1894, %v2008
        %v2015 = vadd.f32 %v1895, %v2010
        %v2016 = vmax.f32 %v1420, %v2012
        %v2017 = vmax.f32 %v1421, %v2013
        %v2018 = vmax.f32 %v1422, %v2014
        %v2019 = vmax.f32 %v1423, %v2015
        %2020 = vmatprep.subr.bf16.mxu0 %v879
        %2021 = vmatpush1.bf16.msra.mxu0 %v878
        %2022 = vmatprep.subr.bf16.mxu0 %v881
        %2023 = vmatpush1.bf16.msra.mxu0 %v880
        %2024 = vmatprep.subr.bf16.mxu0 %v883
        %2025 = vmatpush1.bf16.msra.mxu0 %v882
        %2026 = vmatprep.subr.bf16.mxu0 %v885
        %2027 = vmatpush1.bf16.msra.mxu0 %v884
        %2028 = vmatprep.subr.bf16.mxu0 %v887
        %2029 = vmatpush1.bf16.msra.mxu0 %v886
        %2030 = vmatprep.subr.bf16.mxu0 %v889
        %2031 = vmatpush1.bf16.msra.mxu0 %v888
        %2032 = vmatprep.subr.bf16.mxu0 0
        %2033 = vmatpush1.bf16.msra.mxu0 0
        %2034 = vmatprep.subr.bf16.mxu0 0
        %2035 = vmatpush1.bf16.msra.mxu0 0
        %2036 = vmatprep.subr.bf16.mxu0 0
        %2037 = vmatpush1.bf16.msra.mxu0 0
        %2038 = vmatprep.subr.bf16.mxu0 0
        %2039 = vmatpush1.bf16.msra.mxu0 0
        %2040 = vmatprep.subr.bf16.mxu0 0
        %2041 = vmatpush1.bf16.msra.mxu0 0
        %2042 = vmatprep.subr.bf16.mxu0 0
        %2043 = vmatpush1.bf16.msra.mxu0 0
        %2044 = vmatprep.subr.bf16.mxu0 0
        %2045 = vmatpush1.bf16.msra.mxu0 0
        %2046 = vmatprep.subr.bf16.mxu0 0
        %2047 = vmatpush1.bf16.msra.mxu0 0
        %2048 = vmatprep.subr.bf16.mxu0 0
        %2049 = vmatpush1.bf16.msra.mxu0 0
        %2050 = vmatprep.subr.bf16.mxu0 0
        %2051 = vmatpush1.bf16.msra.mxu0 0
        %2052 = vmatprep.mubr.bf16.mxu0 0
        %2053 = vmatmul.mubr.bf16.gmra.mrb[0].mxu0 %v1129
        %v2054 = vpop.f32.mrb[0].mxu0
        %v2055 = vadd.f32 0.0, %v2054
        %v2056 = vpop.f32.mrb[0].mxu0
        %v2057 = vadd.f32 0.0, %v2056
        %v2058 = vpop.f32.mrb[0].mxu0
        %v2059 = vadd.f32 0.0, %v2058
        %v2060 = vpop.f32.mrb[0].mxu0
        %v2061 = vadd.f32 0.0, %v2060
        %2062 = vdwg.mxu0
        %2063 = vmatprep.subr.bf16.mxu0 %v986
        %2064 = vmatpush1.bf16.msra.mxu0 %v985
        %2065 = vmatprep.subr.bf16.mxu0 %v988
        %2066 = vmatpush1.bf16.msra.mxu0 %v987
        %2067 = vmatprep.subr.bf16.mxu0 %v990
        %2068 = vmatpush1.bf16.msra.mxu0 %v989
        %2069 = vmatprep.subr.bf16.mxu0 %v992
        %2070 = vmatpush1.bf16.msra.mxu0 %v991
        %2071 = vmatprep.subr.bf16.mxu0 %v994
        %2072 = vmatpush1.bf16.msra.mxu0 %v993
        %2073 = vmatprep.subr.bf16.mxu0 %v996
        %2074 = vmatpush1.bf16.msra.mxu0 %v995
        %2075 = vmatprep.subr.bf16.mxu0 0
        %2076 = vmatpush1.bf16.msra.mxu0 0
        %2077 = vmatprep.subr.bf16.mxu0 0
        %2078 = vmatpush1.bf16.msra.mxu0 0
        %2079 = vmatprep.subr.bf16.mxu0 0
        %2080 = vmatpush1.bf16.msra.mxu0 0
        %2081 = vmatprep.subr.bf16.mxu0 0
        %2082 = vmatpush1.bf16.msra.mxu0 0
        %2083 = vmatprep.subr.bf16.mxu0 0
        %2084 = vmatpush1.bf16.msra.mxu0 0
        %2085 = vmatprep.subr.bf16.mxu0 0
        %2086 = vmatpush1.bf16.msra.mxu0 0
        %2087 = vmatprep.subr.bf16.mxu0 0
        %2088 = vmatpush1.bf16.msra.mxu0 0
        %2089 = vmatprep.subr.bf16.mxu0 0
        %2090 = vmatpush1.bf16.msra.mxu0 0
        %2091 = vmatprep.subr.bf16.mxu0 0
        %2092 = vmatpush1.bf16.msra.mxu0 0
        %2093 = vmatprep.subr.bf16.mxu0 0
        %2094 = vmatpush1.bf16.msra.mxu0 0
        %2095 = vmatprep.mubr.bf16.mxu0 0
        %2096 = vmatmul.mubr.bf16.gmra.mrb[0].mxu0 %v904
        %v2097 = vpop.f32.mrb[0].mxu0
        %v2098 = vadd.f32 %v2055, %v2097
        %v2099 = vpop.f32.mrb[0].mxu0
        %v2100 = vadd.f32 %v2057, %v2099
        %v2101 = vpop.f32.mrb[0].mxu0
        %v2102 = vadd.f32 %v2059, %v2101
        %v2103 = vpop.f32.mrb[0].mxu0
        %v2104 = vadd.f32 %v2061, %v2103
        %2105 = vdwg.mxu0
        %2106 = vmatprep.subr.bf16.mxu0 %v1105
        %2107 = vmatpush1.bf16.msra.mxu0 %v1104
        %2108 = vmatprep.subr.bf16.mxu0 %v1107
        %2109 = vmatpush1.bf16.msra.mxu0 %v1106
        %2110 = vmatprep.subr.bf16.mxu0 %v1109
        %2111 = vmatpush1.bf16.msra.mxu0 %v1108
        %2112 = vmatprep.subr.bf16.mxu0 %v1111
        %2113 = vmatpush1.bf16.msra.mxu0 %v1110
        %2114 = vmatprep.subr.bf16.mxu0 %v1113
        %2115 = vmatpush1.bf16.msra.mxu0 %v1112
        %2116 = vmatprep.subr.bf16.mxu0 %v1115
        %2117 = vmatpush1.bf16.msra.mxu0 %v1114
        %2118 = vmatprep.subr.bf16.mxu0 0
        %2119 = vmatpush1.bf16.msra.mxu0 0
        %2120 = vmatprep.subr.bf16.mxu0 0
        %2121 = vmatpush1.bf16.msra.mxu0 0
        %2122 = vmatprep.subr.bf16.mxu0 0
        %2123 = vmatpush1.bf16.msra.mxu0 0
        %2124 = vmatprep.subr.bf16.mxu0 0
        %2125 = vmatpush1.bf16.msra.mxu0 0
        %2126 = vmatprep.subr.bf16.mxu0 0
        %2127 = vmatpush1.bf16.msra.mxu0 0
        %2128 = vmatprep.subr.bf16.mxu0 0
        %2129 = vmatpush1.bf16.msra.mxu0 0
        %2130 = vmatprep.subr.bf16.mxu0 0
        %2131 = vmatpush1.bf16.msra.mxu0 0
        %2132 = vmatprep.subr.bf16.mxu0 0
        %2133 = vmatpush1.bf16.msra.mxu0 0
        %2134 = vmatprep.subr.bf16.mxu0 0
        %2135 = vmatpush1.bf16.msra.mxu0 0
        %2136 = vmatprep.subr.bf16.mxu0 0
        %2137 = vmatpush1.bf16.msra.mxu0 0
        %2138 = vmatprep.mubr.bf16.mxu0 0
        %2139 = vmatmul.mubr.bf16.gmra.mrb[0].mxu0 %v1252
        %v2140 = vpop.f32.mrb[0].mxu0
        %v2141 = vadd.f32 0.0, %v2140
        %v2142 = vpop.f32.mrb[0].mxu0
        %v2143 = vadd.f32 0.0, %v2142
        %v2144 = vpop.f32.mrb[0].mxu0
        %v2145 = vadd.f32 0.0, %v2144
        %v2146 = vpop.f32.mrb[0].mxu0
        %v2147 = vadd.f32 0.0, %v2146
        %2148 = vdwg.mxu0
        %v2149 = vadd.f32 %v2098, %v2141
        %v2150 = vadd.f32 %v2100, %v2143
        %v2151 = vadd.f32 %v2102, %v2145
        %v2152 = vadd.f32 %v2104, %v2147
        %2153 = vmatprep.subr.bf16.mxu0 %v1228
        %2154 = vmatpush1.bf16.msra.mxu0 %v1227
        %2155 = vmatprep.subr.bf16.mxu0 %v1230
        %2156 = vmatpush1.bf16.msra.mxu0 %v1229
        %2157 = vmatprep.subr.bf16.mxu0 %v1232
        %2158 = vmatpush1.bf16.msra.mxu0 %v1231
        %2159 = vmatprep.subr.bf16.mxu0 %v1234
        %2160 = vmatpush1.bf16.msra.mxu0 %v1233
        %2161 = vmatprep.subr.bf16.mxu0 %v1236
        %2162 = vmatpush1.bf16.msra.mxu0 %v1235
        %2163 = vmatprep.subr.bf16.mxu0 %v1238
        %2164 = vmatpush1.bf16.msra.mxu0 %v1237
        %2165 = vmatprep.subr.bf16.mxu0 0
        %2166 = vmatpush1.bf16.msra.mxu0 0
        %2167 = vmatprep.subr.bf16.mxu0 0
        %2168 = vmatpush1.bf16.msra.mxu0 0
        %2169 = vmatprep.subr.bf16.mxu0 0
        %2170 = vmatpush1.bf16.msra.mxu0 0
        %2171 = vmatprep.subr.bf16.mxu0 0
        %2172 = vmatpush1.bf16.msra.mxu0 0
        %2173 = vmatprep.subr.bf16.mxu0 0
        %2174 = vmatpush1.bf16.msra.mxu0 0
        %2175 = vmatprep.subr.bf16.mxu0 0
        %2176 = vmatpush1.bf16.msra.mxu0 0
        %2177 = vmatprep.subr.bf16.mxu0 0
        %2178 = vmatpush1.bf16.msra.mxu0 0
        %2179 = vmatprep.subr.bf16.mxu0 0
        %2180 = vmatpush1.bf16.msra.mxu0 0
        %2181 = vmatprep.subr.bf16.mxu0 0
        %2182 = vmatpush1.bf16.msra.mxu0 0
        %2183 = vmatprep.subr.bf16.mxu0 0
        %2184 = vmatpush1.bf16.msra.mxu0 0
        %2185 = vmatprep.mubr.bf16.mxu0 0
        %2186 = vmatmul.mubr.bf16.gmra.mrb[0].mxu0 %v1375
        %v2187 = vpop.f32.mrb[0].mxu0
        %v2188 = vadd.f32 0.0, %v2187
        %v2189 = vpop.f32.mrb[0].mxu0
        %v2190 = vadd.f32 0.0, %v2189
        %v2191 = vpop.f32.mrb[0].mxu0
        %v2192 = vadd.f32 0.0, %v2191
        %v2193 = vpop.f32.mrb[0].mxu0
        %v2194 = vadd.f32 0.0, %v2193
        %2195 = vdwg.mxu0
        %v2196 = vadd.f32 %v2149, %v2188
        %v2197 = vadd.f32 %v2150, %v2190
        %v2198 = vadd.f32 %v2151, %v2192
        %v2199 = vadd.f32 %v2152, %v2194
        %v2201 = vsel %vm902, %v816, 0
        %2203 = vmatprep.subr.bf16.mxu0 %v1351
        %2204 = vmatpush1.bf16.msra.mxu0 %v1350
        %2205 = vmatprep.subr.bf16.mxu0 %v1353
        %2206 = vmatpush1.bf16.msra.mxu0 %v1352
        %2207 = vmatprep.subr.bf16.mxu0 %v1355
        %2208 = vmatpush1.bf16.msra.mxu0 %v1354
        %2209 = vmatprep.subr.bf16.mxu0 %v1357
        %2210 = vmatpush1.bf16.msra.mxu0 %v1356
        %2211 = vmatprep.subr.bf16.mxu0 %v1359
        %2212 = vmatpush1.bf16.msra.mxu0 %v1358
        %2213 = vmatprep.subr.bf16.mxu0 %v1361
        %2214 = vmatpush1.bf16.msra.mxu0 %v1360
        %2215 = vmatprep.subr.bf16.mxu0 0
        %2216 = vmatpush1.bf16.msra.mxu0 0
        %2217 = vmatprep.subr.bf16.mxu0 0
        %2218 = vmatpush1.bf16.msra.mxu0 0
        %2219 = vmatprep.subr.bf16.mxu0 0
        %2220 = vmatpush1.bf16.msra.mxu0 0
        %2221 = vmatprep.subr.bf16.mxu0 0
        %2222 = vmatpush1.bf16.msra.mxu0 0
        %2223 = vmatprep.subr.bf16.mxu0 0
        %2224 = vmatpush1.bf16.msra.mxu0 0
        %2225 = vmatprep.subr.bf16.mxu0 0
        %2226 = vmatpush1.bf16.msra.mxu0 0
        %2227 = vmatprep.subr.bf16.mxu0 0
        %2228 = vmatpush1.bf16.msra.mxu0 0
        %2229 = vmatprep.subr.bf16.mxu0 0
        %2230 = vmatpush1.bf16.msra.mxu0 0
        %2231 = vmatprep.subr.bf16.mxu0 0
        %2232 = vmatpush1.bf16.msra.mxu0 0
        %2233 = vmatprep.subr.bf16.mxu0 0
        %2234 = vmatpush1.bf16.msra.mxu0 0
        %2235 = vmatprep.mubr.bf16.mxu0 0
        %2236 = vmatmul.mubr.bf16.gmra.mrb[0].mxu0 %v2201
        %v2237 = vpop.f32.mrb[0].mxu0
        %v2238 = vadd.f32 0.0, %v2237
        %v2239 = vpop.f32.mrb[0].mxu0
        %v2240 = vadd.f32 0.0, %v2239
        %v2241 = vpop.f32.mrb[0].mxu0
        %v2242 = vadd.f32 0.0, %v2241
        %v2243 = vpop.f32.mrb[0].mxu0
        %v2244 = vadd.f32 0.0, %v2243
        %2245 = vdwg.mxu0
        %v2246 = vadd.f32 %v2196, %v2238
        %v2247 = vadd.f32 %v2197, %v2240
        %v2248 = vadd.f32 %v2198, %v2242
        %v2249 = vadd.f32 %v2199, %v2244
        %2250 = vmatprep.subr.bf16.mxu0 %v1487
        %2251 = vmatpush1.bf16.msra.mxu0 %v1486
        %2252 = vmatprep.subr.bf16.mxu0 %v1489
        %2253 = vmatpush1.bf16.msra.mxu0 %v1488
        %2254 = vmatprep.subr.bf16.mxu0 %v1491
        %2255 = vmatpush1.bf16.msra.mxu0 %v1490
        %2256 = vmatprep.subr.bf16.mxu0 %v1493
        %2257 = vmatpush1.bf16.msra.mxu0 %v1492
        %2258 = vmatprep.subr.bf16.mxu0 %v1495
        %2259 = vmatpush1.bf16.msra.mxu0 %v1494
        %2260 = vmatprep.subr.bf16.mxu0 %v1497
        %2261 = vmatpush1.bf16.msra.mxu0 %v1496
        %2262 = vmatprep.subr.bf16.mxu0 0
        %2263 = vmatpush1.bf16.msra.mxu0 0
        %2264 = vmatprep.subr.bf16.mxu0 0
        %2265 = vmatpush1.bf16.msra.mxu0 0
        %2266 = vmatprep.subr.bf16.mxu0 0
        %2267 = vmatpush1.bf16.msra.mxu0 0
        %2268 = vmatprep.subr.bf16.mxu0 0
        %2269 = vmatpush1.bf16.msra.mxu0 0
        %2270 = vmatprep.subr.bf16.mxu0 0
        %2271 = vmatpush1.bf16.msra.mxu0 0
        %2272 = vmatprep.subr.bf16.mxu0 0
        %2273 = vmatpush1.bf16.msra.mxu0 0
        %2274 = vmatprep.subr.bf16.mxu0 0
        %2275 = vmatpush1.bf16.msra.mxu0 0
        %2276 = vmatprep.subr.bf16.mxu0 0
        %2277 = vmatpush1.bf16.msra.mxu0 0
        %2278 = vmatprep.subr.bf16.mxu0 0
        %2279 = vmatpush1.bf16.msra.mxu0 0
        %2280 = vmatprep.subr.bf16.mxu0 0
        %2281 = vmatpush1.bf16.msra.mxu0 0
        %2282 = vmatprep.mubr.bf16.mxu0 0
        %2283 = vmatmul.mubr.bf16.gmra.mrb[0].mxu0 %v1129
        %v2284 = vpop.f32.mrb[0].mxu0
        %v2285 = vadd.f32 0.0, %v2284
        %v2286 = vpop.f32.mrb[0].mxu0
        %v2287 = vadd.f32 0.0, %v2286
        %v2288 = vpop.f32.mrb[0].mxu0
        %v2289 = vadd.f32 0.0, %v2288
        %v2290 = vpop.f32.mrb[0].mxu0
        %v2291 = vadd.f32 0.0, %v2290
        %2292 = vdwg.mxu0
        %2293 = vmatprep.subr.bf16.mxu0 %v1590
        %2294 = vmatpush1.bf16.msra.mxu0 %v1589
        %2295 = vmatprep.subr.bf16.mxu0 %v1592
        %2296 = vmatpush1.bf16.msra.mxu0 %v1591
        %2297 = vmatprep.subr.bf16.mxu0 %v1594
        %2298 = vmatpush1.bf16.msra.mxu0 %v1593
        %2299 = vmatprep.subr.bf16.mxu0 %v1596
        %2300 = vmatpush1.bf16.msra.mxu0 %v1595
        %2301 = vmatprep.subr.bf16.mxu0 %v1598
        %2302 = vmatpush1.bf16.msra.mxu0 %v1597
        %2303 = vmatprep.subr.bf16.mxu0 %v1600
        %2304 = vmatpush1.bf16.msra.mxu0 %v1599
        %2305 = vmatprep.subr.bf16.mxu0 0
        %2306 = vmatpush1.bf16.msra.mxu0 0
        %2307 = vmatprep.subr.bf16.mxu0 0
        %2308 = vmatpush1.bf16.msra.mxu0 0
        %2309 = vmatprep.subr.bf16.mxu0 0
        %2310 = vmatpush1.bf16.msra.mxu0 0
        %2311 = vmatprep.subr.bf16.mxu0 0
        %2312 = vmatpush1.bf16.msra.mxu0 0
        %2313 = vmatprep.subr.bf16.mxu0 0
        %2314 = vmatpush1.bf16.msra.mxu0 0
        %2315 = vmatprep.subr.bf16.mxu0 0
        %2316 = vmatpush1.bf16.msra.mxu0 0
        %2317 = vmatprep.subr.bf16.mxu0 0
        %2318 = vmatpush1.bf16.msra.mxu0 0
        %2319 = vmatprep.subr.bf16.mxu0 0
        %2320 = vmatpush1.bf16.msra.mxu0 0
        %2321 = vmatprep.subr.bf16.mxu0 0
        %2322 = vmatpush1.bf16.msra.mxu0 0
        %2323 = vmatprep.subr.bf16.mxu0 0
        %2324 = vmatpush1.bf16.msra.mxu0 0
        %2325 = vmatprep.mubr.bf16.mxu0 0
        %2326 = vmatmul.mubr.bf16.gmra.mrb[0].mxu0 %v904
        %v2327 = vpop.f32.mrb[0].mxu0
        %v2328 = vadd.f32 %v2285, %v2327
        %v2329 = vpop.f32.mrb[0].mxu0
        %v2330 = vadd.f32 %v2287, %v2329
        %v2331 = vpop.f32.mrb[0].mxu0
        %v2332 = vadd.f32 %v2289, %v2331
        %v2333 = vpop.f32.mrb[0].mxu0
        %v2334 = vadd.f32 %v2291, %v2333
        %2335 = vdwg.mxu0
        %2336 = vmatprep.subr.bf16.mxu0 %v1706
        %2337 = vmatpush1.bf16.msra.mxu0 %v1705
        %2338 = vmatprep.subr.bf16.mxu0 %v1708
        %2339 = vmatpush1.bf16.msra.mxu0 %v1707
        %2340 = vmatprep.subr.bf16.mxu0 %v1710
        %2341 = vmatpush1.bf16.msra.mxu0 %v1709
        %2342 = vmatprep.subr.bf16.mxu0 %v1712
        %2343 = vmatpush1.bf16.msra.mxu0 %v1711
        %2344 = vmatprep.subr.bf16.mxu0 %v1714
        %2345 = vmatpush1.bf16.msra.mxu0 %v1713
        %2346 = vmatprep.subr.bf16.mxu0 %v1716
        %2347 = vmatpush1.bf16.msra.mxu0 %v1715
        %2348 = vmatprep.subr.bf16.mxu0 0
        %2349 = vmatpush1.bf16.msra.mxu0 0
        %2350 = vmatprep.subr.bf16.mxu0 0
        %2351 = vmatpush1.bf16.msra.mxu0 0
        %2352 = vmatprep.subr.bf16.mxu0 0
        %2353 = vmatpush1.bf16.msra.mxu0 0
        %2354 = vmatprep.subr.bf16.mxu0 0
        %2355 = vmatpush1.bf16.msra.mxu0 0
        %2356 = vmatprep.subr.bf16.mxu0 0
        %2357 = vmatpush1.bf16.msra.mxu0 0
        %2358 = vmatprep.subr.bf16.mxu0 0
        %2359 = vmatpush1.bf16.msra.mxu0 0
        %2360 = vmatprep.subr.bf16.mxu0 0
        %2361 = vmatpush1.bf16.msra.mxu0 0
        %2362 = vmatprep.subr.bf16.mxu0 0
        %2363 = vmatpush1.bf16.msra.mxu0 0
        %2364 = vmatprep.subr.bf16.mxu0 0
        %2365 = vmatpush1.bf16.msra.mxu0 0
        %2366 = vmatprep.subr.bf16.mxu0 0
        %2367 = vmatpush1.bf16.msra.mxu0 0
        %2368 = vmatprep.mubr.bf16.mxu0 0
        %2369 = vmatmul.mubr.bf16.gmra.mrb[0].mxu0 %v1252
        %v2370 = vpop.f32.mrb[0].mxu0
        %v2371 = vadd.f32 0.0, %v2370
        %v2372 = vpop.f32.mrb[0].mxu0
        %v2373 = vadd.f32 0.0, %v2372
        %v2374 = vpop.f32.mrb[0].mxu0
        %v2375 = vadd.f32 0.0, %v2374
        %v2376 = vpop.f32.mrb[0].mxu0
        %v2377 = vadd.f32 0.0, %v2376
        %2378 = vdwg.mxu0
        %v2379 = vadd.f32 %v2328, %v2371
        %v2380 = vadd.f32 %v2330, %v2373
        %v2381 = vadd.f32 %v2332, %v2375
        %v2382 = vadd.f32 %v2334, %v2377
        %2383 = vmatprep.subr.bf16.mxu0 %v1826
        %2384 = vmatpush1.bf16.msra.mxu0 %v1825
        %2385 = vmatprep.subr.bf16.mxu0 %v1828
        %2386 = vmatpush1.bf16.msra.mxu0 %v1827
        %2387 = vmatprep.subr.bf16.mxu0 %v1830
        %2388 = vmatpush1.bf16.msra.mxu0 %v1829
        %2389 = vmatprep.subr.bf16.mxu0 %v1832
        %2390 = vmatpush1.bf16.msra.mxu0 %v1831
        %2391 = vmatprep.subr.bf16.mxu0 %v1834
        %2392 = vmatpush1.bf16.msra.mxu0 %v1833
        %2393 = vmatprep.subr.bf16.mxu0 %v1836
        %2394 = vmatpush1.bf16.msra.mxu0 %v1835
        %2395 = vmatprep.subr.bf16.mxu0 0
        %2396 = vmatpush1.bf16.msra.mxu0 0
        %2397 = vmatprep.subr.bf16.mxu0 0
        %2398 = vmatpush1.bf16.msra.mxu0 0
        %2399 = vmatprep.subr.bf16.mxu0 0
        %2400 = vmatpush1.bf16.msra.mxu0 0
        %2401 = vmatprep.subr.bf16.mxu0 0
        %2402 = vmatpush1.bf16.msra.mxu0 0
        %2403 = vmatprep.subr.bf16.mxu0 0
        %2404 = vmatpush1.bf16.msra.mxu0 0
        %2405 = vmatprep.subr.bf16.mxu0 0
        %2406 = vmatpush1.bf16.msra.mxu0 0
        %2407 = vmatprep.subr.bf16.mxu0 0
        %2408 = vmatpush1.bf16.msra.mxu0 0
        %2409 = vmatprep.subr.bf16.mxu0 0
        %2410 = vmatpush1.bf16.msra.mxu0 0
        %2411 = vmatprep.subr.bf16.mxu0 0
        %2412 = vmatpush1.bf16.msra.mxu0 0
        %2413 = vmatprep.subr.bf16.mxu0 0
        %2414 = vmatpush1.bf16.msra.mxu0 0
        %2415 = vmatprep.mubr.bf16.mxu0 0
        %2416 = vmatmul.mubr.bf16.gmra.mrb[0].mxu0 %v1375
        %v2417 = vpop.f32.mrb[0].mxu0
        %v2418 = vadd.f32 0.0, %v2417
        %v2419 = vpop.f32.mrb[0].mxu0
        %v2420 = vadd.f32 0.0, %v2419
        %v2421 = vpop.f32.mrb[0].mxu0
        %v2422 = vadd.f32 0.0, %v2421
        %v2423 = vpop.f32.mrb[0].mxu0
        %v2424 = vadd.f32 0.0, %v2423
        %2425 = vdwg.mxu0
        %v2426 = vadd.f32 %v2379, %v2418
        %v2427 = vadd.f32 %v2380, %v2420
        %v2428 = vadd.f32 %v2381, %v2422
        %v2429 = vadd.f32 %v2382, %v2424
        %2430 = vmatprep.subr.bf16.mxu0 %v1946
        %2431 = vmatpush1.bf16.msra.mxu0 %v1945
        %2432 = vmatprep.subr.bf16.mxu0 %v1948
        %2433 = vmatpush1.bf16.msra.mxu0 %v1947
        %2434 = vmatprep.subr.bf16.mxu0 %v1950
        %2435 = vmatpush1.bf16.msra.mxu0 %v1949
        %2436 = vmatprep.subr.bf16.mxu0 %v1952
        %2437 = vmatpush1.bf16.msra.mxu0 %v1951
        %2438 = vmatprep.subr.bf16.mxu0 %v1954
        %2439 = vmatpush1.bf16.msra.mxu0 %v1953
        %2440 = vmatprep.subr.bf16.mxu0 %v1956
        %2441 = vmatpush1.bf16.msra.mxu0 %v1955
        %2442 = vmatprep.subr.bf16.mxu0 0
        %2443 = vmatpush1.bf16.msra.mxu0 0
        %2444 = vmatprep.subr.bf16.mxu0 0
        %2445 = vmatpush1.bf16.msra.mxu0 0
        %2446 = vmatprep.subr.bf16.mxu0 0
        %2447 = vmatpush1.bf16.msra.mxu0 0
        %2448 = vmatprep.subr.bf16.mxu0 0
        %2449 = vmatpush1.bf16.msra.mxu0 0
        %2450 = vmatprep.subr.bf16.mxu0 0
        %2451 = vmatpush1.bf16.msra.mxu0 0
        %2452 = vmatprep.subr.bf16.mxu0 0
        %2453 = vmatpush1.bf16.msra.mxu0 0
        %2454 = vmatprep.subr.bf16.mxu0 0
        %2455 = vmatpush1.bf16.msra.mxu0 0
        %2456 = vmatprep.subr.bf16.mxu0 0
        %2457 = vmatpush1.bf16.msra.mxu0 0
        %2458 = vmatprep.subr.bf16.mxu0 0
        %2459 = vmatpush1.bf16.msra.mxu0 0
        %2460 = vmatprep.subr.bf16.mxu0 0
        %2461 = vmatpush1.bf16.msra.mxu0 0
        %2462 = vmatprep.mubr.bf16.mxu0 0
        %2463 = vmatmul.mubr.bf16.gmra.mrb[0].mxu0 %v2201
        %v2464 = vpop.f32.mrb[0].mxu0
        %v2465 = vadd.f32 0.0, %v2464
        %v2466 = vpop.f32.mrb[0].mxu0
        %v2467 = vadd.f32 0.0, %v2466
        %v2468 = vpop.f32.mrb[0].mxu0
        %v2469 = vadd.f32 0.0, %v2468
        %v2470 = vpop.f32.mrb[0].mxu0
        %v2471 = vadd.f32 0.0, %v2470
        %2472 = vdwg.mxu0
        %v2473 = vadd.f32 %v2426, %v2465
        %v2474 = vadd.f32 %v2427, %v2467
        %v2475 = vadd.f32 %v2428, %v2469
        %v2476 = vadd.f32 %v2429, %v2471
        %v2477 = vmax.f32 %v2246, %v2473
        %v2478 = vmax.f32 %v2247, %v2474
        %v2479 = vmax.f32 %v2248, %v2475
        %v2480 = vmax.f32 %v2249, %v2476
        %v2481 = vmax.f32 %v2016, %v2477
        %v2482 = vmax.f32 %v2017, %v2478
        %v2483 = vmax.f32 %v2018, %v2479
        %v2484 = vmax.f32 %v2019, %v2480
        %v2485 = vld [vmem:[%s6] sm:$0x3]
        %v2487 = vlaneseq
        %v2488 = vshrl.u32 %v2487, 7
        %v2489 = vsub.s32 0, %v2488
        %v2490 = vrot.slane %v2485, %v2489
        %v2491 = vlaneseq
        %v2492 = vshrl.u32 %v2491, 7
        %v2493 = vsub.s32 1, %v2492
        %v2494 = vrot.slane %v2485, %v2493
        %v2497 = vadd.f32 %v2481, %v2490
        %v2498 = vadd.f32 %v2482, %v2494
        %v2499 = vadd.f32 %v2483, %v2490
        %v2500 = vadd.f32 %v2484, %v2494
        %v2501 = vmax.f32 %v2497, 0.0
        %v2502 = vmax.f32 %v2498, 0.0
        %v2503 = vmax.f32 %v2499, 0.0
        %v2504 = vmax.f32 %v2500, 0.0
        %v2505 = vpack.c.bf16 %v2503, %v2501
        %v2506 = vpack.c.bf16 %v2504, %v2502
        %v2507 = vld [vmem:[%s2] sm:$0xf]
        %v2508 = vld [vmem:[%s2 + $0x4] sm:$0x7]
        %v2511 = vunpack.c.l.b16 %v2507
        %v2512 = vunpack.c.l.b16 %v2508
        %v2513 = vpack.c.b16 %v2512, %v2511
        %vm2514 = vcmask 113664
        %v2516 = vsel %vm2514, %v2513, 0
        %vm2518 = vcmask 1046528
        %v2520 = vsel %vm2518, %v2505, 0
        %v2523 = vsel %vm2518, %v2506, 0
        %2525 = vmatprep.subr.bf16.mxu0 %v2523
        %2526 = vmatpush1.bf16.msra.mxu0 %v2520
        %2527 = vmatprep.subr.bf16.mxu0 0
        %2528 = vmatpush1.bf16.msra.mxu0 0
        %2529 = vmatprep.subr.bf16.mxu0 0
        %2530 = vmatpush1.bf16.msra.mxu0 0
        %2531 = vmatprep.subr.bf16.mxu0 0
        %2532 = vmatpush1.bf16.msra.mxu0 0
        %2533 = vmatprep.subr.bf16.mxu0 0
        %2534 = vmatpush1.bf16.msra.mxu0 0
        %2535 = vmatprep.subr.bf16.mxu0 0
        %2536 = vmatpush1.bf16.msra.mxu0 0
        %2537 = vmatprep.subr.bf16.mxu0 0
        %2538 = vmatpush1.bf16.msra.mxu0 0
        %2539 = vmatprep.subr.bf16.mxu0 0
        %2540 = vmatpush1.bf16.msra.mxu0 0
        %2541 = vmatprep.subr.bf16.mxu0 0
        %2542 = vmatpush1.bf16.msra.mxu0 0
        %2543 = vmatprep.subr.bf16.mxu0 0
        %2544 = vmatpush1.bf16.msra.mxu0 0
        %2545 = vmatprep.subr.bf16.mxu0 0
        %2546 = vmatpush1.bf16.msra.mxu0 0
        %2547 = vmatprep.subr.bf16.mxu0 0
        %2548 = vmatpush1.bf16.msra.mxu0 0
        %2549 = vmatprep.subr.bf16.mxu0 0
        %2550 = vmatpush1.bf16.msra.mxu0 0
        %2551 = vmatprep.subr.bf16.mxu0 0
        %2552 = vmatpush1.bf16.msra.mxu0 0
        %2553 = vmatprep.subr.bf16.mxu0 0
        %2554 = vmatpush1.bf16.msra.mxu0 0
        %2555 = vmatprep.subr.bf16.mxu0 0
        %2556 = vmatpush1.bf16.msra.mxu0 0
        %2557 = vmatprep.mubr.bf16.mxu0 0
        %2558 = vmatmul.mubr.bf16.gmra.mrb[0].mxu0 %v2516
        %v2559 = vpop.f32.mrb[0].mxu0
        %v2560 = vadd.f32 0.0, %v2559
        %v2561 = vpop.f32.mrb[0].mxu0
        %v2562 = vadd.f32 0.0, %v2561
        %v2563 = vpop.f32.mrb[0].mxu0
        %v2564 = vadd.f32 0.0, %v2563
        %v2565 = vpop.f32.mrb[0].mxu0
        %v2566 = vadd.f32 0.0, %v2565
        %2567 = vdwg.mxu0
        %v2568 = vpack.c.bf16 %v2564, %v2560
        %v2569 = vpack.c.bf16 %v2566, %v2562
        %v2570 = vld [vmem:[%s7] sm:$0xff]
        %v2571 = vld [vmem:[%s7 + $0x8] sm:$0xf]
        %v2572 = vld [vmem:[%s7 + $0xc] sm:$0xff]
        %v2573 = vld [vmem:[%s7 + $0x14] sm:$0xf]
        %v2574 = vld [vmem:[%s7 + $0x18] sm:$0xff]
        %v2575 = vld [vmem:[%s7 + $0x20] sm:$0xf]
        %v2576 = vld [vmem:[%s7 + $0x24] sm:$0xff]
        %v2577 = vld [vmem:[%s7 + $0x2c] sm:$0xf]
        %v2578 = vld [vmem:[%s7 + $0x30] sm:$0xff]
        %v2579 = vld [vmem:[%s7 + $0x38] sm:$0xf]
        %v2580 = vld [vmem:[%s7 + $0x3c] sm:$0xff]
        %v2581 = vld [vmem:[%s7 + $0x44] sm:$0xf]
        %v2582 = vld [vmem:[%s7 + $0x48] sm:$0xff]
        %v2583 = vld [vmem:[%s7 + $0x50] sm:$0xf]
        %v2584 = vld [vmem:[%s7 + $0x54] sm:$0xff]
        %v2585 = vld [vmem:[%s7 + $0x5c] sm:$0xf]
        %v2586 = vld [vmem:[%s7 + $0x60] sm:$0xff]
        %v2587 = vld [vmem:[%s7 + $0x68] sm:$0xf]
        %v2588 = vld [vmem:[%s7 + $0x6c] sm:$0xff]
        %v2589 = vld [vmem:[%s7 + $0x74] sm:$0xf]
        %v2590 = vld [vmem:[%s7 + $0x78] sm:$0xff]
        %v2591 = vld [vmem:[%s7 + $0x80] sm:$0xf]
        %v2592 = vld [vmem:[%s7 + $0x84] sm:$0xff]
        %v2593 = vld [vmem:[%s7 + $0x8c] sm:$0xf]
        %v2594 = vld [vmem:[%s7 + $0x90] sm:$0xff]
        %v2595 = vld [vmem:[%s7 + $0x98] sm:$0xf]
        %v2596 = vld [vmem:[%s7 + $0x9c] sm:$0xff]
        %v2597 = vld [vmem:[%s7 + $0xa4] sm:$0xf]
        %v2598 = vld [vmem:[%s7 + $0xa8] sm:$0xff]
        %v2599 = vld [vmem:[%s7 + $0xb0] sm:$0xf]
        %v2600 = vld [vmem:[%s7 + $0xb4] sm:$0xff]
        %v2601 = vld [vmem:[%s7 + $0xbc] sm:$0xf]
        %v2602 = vld [vmem:[%s7 + $0xc0] sm:$0xff]
        %v2603 = vld [vmem:[%s7 + $0xc8] sm:$0xf]
        %v2604 = vld [vmem:[%s7 + $0xcc] sm:$0x33]
        %v2605 = vld [vmem:[%s7 + $0xd4] sm:$0x3]
        %s2606 = scalar_lea.vmem %s2, 8
        %v2607 = vld [vmem:[%s2606] sm:$0xf]
        %v2608 = vld [vmem:[%s2606 + $0x4] sm:$0x7]
        %v2611 = vunpack.c.l.b16 %v2607
        %v2612 = vunpack.c.l.b16 %v2608
        %v2613 = vpack.c.b16 %v2612, %v2611
        %v2615 = vsel %vm2514, %v2613, 0
        %2617 = vmatprep.subr.bf16.mxu0 %v2523
        %2618 = vmatpush1.bf16.msra.mxu0 %v2520
        %2619 = vmatprep.subr.bf16.mxu0 0
        %2620 = vmatpush1.bf16.msra.mxu0 0
        %2621 = vmatprep.subr.bf16.mxu0 0
        %2622 = vmatpush1.bf16.msra.mxu0 0
        %2623 = vmatprep.subr.bf16.mxu0 0
        %2624 = vmatpush1.bf16.msra.mxu0 0
        %2625 = vmatprep.subr.bf16.mxu0 0
        %2626 = vmatpush1.bf16.msra.mxu0 0
        %2627 = vmatprep.subr.bf16.mxu0 0
        %2628 = vmatpush1.bf16.msra.mxu0 0
        %2629 = vmatprep.subr.bf16.mxu0 0
        %2630 = vmatpush1.bf16.msra.mxu0 0
        %2631 = vmatprep.subr.bf16.mxu0 0
        %2632 = vmatpush1.bf16.msra.mxu0 0
        %2633 = vmatprep.subr.bf16.mxu0 0
        %2634 = vmatpush1.bf16.msra.mxu0 0
        %2635 = vmatprep.subr.bf16.mxu0 0
        %2636 = vmatpush1.bf16.msra.mxu0 0
        %2637 = vmatprep.subr.bf16.mxu0 0
        %2638 = vmatpush1.bf16.msra.mxu0 0
        %2639 = vmatprep.subr.bf16.mxu0 0
        %2640 = vmatpush1.bf16.msra.mxu0 0
        %2641 = vmatprep.subr.bf16.mxu0 0
        %2642 = vmatpush1.bf16.msra.mxu0 0
        %2643 = vmatprep.subr.bf16.mxu0 0
        %2644 = vmatpush1.bf16.msra.mxu0 0
        %2645 = vmatprep.subr.bf16.mxu0 0
        %2646 = vmatpush1.bf16.msra.mxu0 0
        %2647 = vmatprep.subr.bf16.mxu0 0
        %2648 = vmatpush1.bf16.msra.mxu0 0
        %2649 = vmatprep.mubr.bf16.mxu0 0
        %2650 = vmatmul.mubr.bf16.gmra.mrb[0].mxu0 %v2615
        %v2651 = vpop.f32.mrb[0].mxu0
        %v2652 = vadd.f32 0.0, %v2651
        %v2653 = vpop.f32.mrb[0].mxu0
        %v2654 = vadd.f32 0.0, %v2653
        %v2655 = vpop.f32.mrb[0].mxu0
        %v2656 = vadd.f32 0.0, %v2655
        %v2657 = vpop.f32.mrb[0].mxu0
        %v2658 = vadd.f32 0.0, %v2657
        %2659 = vdwg.mxu0
        %v2660 = vpack.c.bf16 %v2656, %v2652
        %v2661 = vpack.c.bf16 %v2658, %v2654
        %s2662 = scalar_lea.vmem %s7, 216
        %v2663 = vld [vmem:[%s2662] sm:$0xff]
        %v2664 = vld [vmem:[%s2662 + $0x8] sm:$0xf]
        %v2665 = vld [vmem:[%s2662 + $0xc] sm:$0xff]
        %v2666 = vld [vmem:[%s2662 + $0x14] sm:$0xf]
        %v2667 = vld [vmem:[%s2662 + $0x18] sm:$0xff]
        %v2668 = vld [vmem:[%s2662 + $0x20] sm:$0xf]
        %v2669 = vld [vmem:[%s2662 + $0x24] sm:$0xff]
        %v2670 = vld [vmem:[%s2662 + $0x2c] sm:$0xf]
        %v2671 = vld [vmem:[%s2662 + $0x30] sm:$0xff]
        %v2672 = vld [vmem:[%s2662 + $0x38] sm:$0xf]
        %v2673 = vld [vmem:[%s2662 + $0x3c] sm:$0xff]
        %v2674 = vld [vmem:[%s2662 + $0x44] sm:$0xf]
        %v2675 = vld [vmem:[%s2662 + $0x48] sm:$0xff]
        %v2676 = vld [vmem:[%s2662 + $0x50] sm:$0xf]
        %v2677 = vld [vmem:[%s2662 + $0x54] sm:$0xff]
        %v2678 = vld [vmem:[%s2662 + $0x5c] sm:$0xf]
        %v2679 = vld [vmem:[%s2662 + $0x60] sm:$0xff]
        %v2680 = vld [vmem:[%s2662 + $0x68] sm:$0xf]
        %v2681 = vld [vmem:[%s2662 + $0x6c] sm:$0xff]
        %v2682 = vld [vmem:[%s2662 + $0x74] sm:$0xf]
        %v2683 = vld [vmem:[%s2662 + $0x78] sm:$0xff]
        %v2684 = vld [vmem:[%s2662 + $0x80] sm:$0xf]
        %v2685 = vld [vmem:[%s2662 + $0x84] sm:$0xff]
        %v2686 = vld [vmem:[%s2662 + $0x8c] sm:$0xf]
        %v2687 = vld [vmem:[%s2662 + $0x90] sm:$0xff]
        %v2688 = vld [vmem:[%s2662 + $0x98] sm:$0xf]
        %v2689 = vld [vmem:[%s2662 + $0x9c] sm:$0xff]
        %v2690 = vld [vmem:[%s2662 + $0xa4] sm:$0xf]
        %v2691 = vld [vmem:[%s2662 + $0xa8] sm:$0xff]
        %v2692 = vld [vmem:[%s2662 + $0xb0] sm:$0xf]
        %v2693 = vld [vmem:[%s2662 + $0xb4] sm:$0xff]
        %v2694 = vld [vmem:[%s2662 + $0xbc] sm:$0xf]
        %v2695 = vld [vmem:[%s2662 + $0xc0] sm:$0xff]
        %v2696 = vld [vmem:[%s2662 + $0xc8] sm:$0xf]
        %v2697 = vld [vmem:[%s2662 + $0xcc] sm:$0x33]
        %v2698 = vld [vmem:[%s2662 + $0xd4] sm:$0x3]
        %v2735 = vunpack.c.l.b16 %v2663
        %v2736 = vunpack.c.h.b16 %v2663
        %v2737 = vunpack.c.l.b16 %v2664
        %v2738 = vunpack.c.l.b16 %v2665
        %v2739 = vunpack.c.h.b16 %v2665
        %v2740 = vunpack.c.l.b16 %v2666
        %v2741 = vunpack.c.l.b16 %v2667
        %v2742 = vunpack.c.h.b16 %v2667
        %v2743 = vunpack.c.l.b16 %v2668
        %v2744 = vunpack.c.l.b16 %v2669
        %v2745 = vunpack.c.h.b16 %v2669
        %v2746 = vunpack.c.l.b16 %v2670
        %v2747 = vunpack.c.l.b16 %v2671
        %v2748 = vunpack.c.h.b16 %v2671
        %v2749 = vunpack.c.l.b16 %v2672
        %v2750 = vunpack.c.l.b16 %v2673
        %v2751 = vunpack.c.h.b16 %v2673
        %v2752 = vunpack.c.l.b16 %v2674
        %v2753 = vunpack.c.l.b16 %v2675
        %v2754 = vunpack.c.h.b16 %v2675
        %v2755 = vunpack.c.l.b16 %v2676
        %v2756 = vunpack.c.l.b16 %v2677
        %v2757 = vunpack.c.h.b16 %v2677
        %v2758 = vunpack.c.l.b16 %v2678
        %v2759 = vunpack.c.l.b16 %v2679
        %v2760 = vunpack.c.h.b16 %v2679
        %v2761 = vunpack.c.l.b16 %v2680
        %v2762 = vunpack.c.l.b16 %v2681
        %v2763 = vunpack.c.h.b16 %v2681
        %v2764 = vunpack.c.l.b16 %v2682
        %v2765 = vunpack.c.l.b16 %v2683
        %v2766 = vunpack.c.h.b16 %v2683
        %v2767 = vunpack.c.l.b16 %v2684
        %v2768 = vunpack.c.l.b16 %v2685
        %v2769 = vunpack.c.h.b16 %v2685
        %v2770 = vunpack.c.l.b16 %v2686
        %v2771 = vunpack.c.l.b16 %v2687
        %v2772 = vunpack.c.h.b16 %v2687
        %v2773 = vunpack.c.l.b16 %v2688
        %v2774 = vunpack.c.l.b16 %v2689
        %v2775 = vunpack.c.h.b16 %v2689
        %v2776 = vunpack.c.l.b16 %v2690
        %v2777 = vunpack.c.l.b16 %v2691
        %v2778 = vunpack.c.h.b16 %v2691
        %v2779 = vunpack.c.l.b16 %v2692
        %v2780 = vunpack.c.l.b16 %v2693
        %v2781 = vunpack.c.h.b16 %v2693
        %v2782 = vunpack.c.l.b16 %v2694
        %v2783 = vunpack.c.l.b16 %v2695
        %v2784 = vunpack.c.h.b16 %v2695
        %v2785 = vunpack.c.l.b16 %v2696
        %v2786 = vunpack.c.l.b16 %v2697
        %v2787 = vunpack.c.h.b16 %v2697
        %v2788 = vunpack.c.l.b16 %v2698
        %v2789 = vpack.c.b16 %v2738, %v2735
        %v2790 = vpack.c.b16 %v2739, %v2736
        %v2791 = vpack.c.b16 %v2740, %v2737
        %v2792 = vpack.c.b16 %v2744, %v2741
        %v2793 = vpack.c.b16 %v2745, %v2742
        %v2794 = vpack.c.b16 %v2746, %v2743
        %v2795 = vpack.c.b16 %v2750, %v2747
        %v2796 = vpack.c.b16 %v2751, %v2748
        %v2797 = vpack.c.b16 %v2752, %v2749
        %v2798 = vpack.c.b16 %v2756, %v2753
        %v2799 = vpack.c.b16 %v2757, %v2754
        %v2800 = vpack.c.b16 %v2758, %v2755
        %v2801 = vpack.c.b16 %v2762, %v2759
        %v2802 = vpack.c.b16 %v2763, %v2760
        %v2803 = vpack.c.b16 %v2764, %v2761
        %v2804 = vpack.c.b16 %v2768, %v2765
        %v2805 = vpack.c.b16 %v2769, %v2766
        %v2806 = vpack.c.b16 %v2770, %v2767
        %v2807 = vpack.c.b16 %v2774, %v2771
        %v2808 = vpack.c.b16 %v2775, %v2772
        %v2809 = vpack.c.b16 %v2776, %v2773
        %v2810 = vpack.c.b16 %v2780, %v2777
        %v2811 = vpack.c.b16 %v2781, %v2778
        %v2812 = vpack.c.b16 %v2782, %v2779
        %v2813 = vpack.c.b16 %v2786, %v2783
        %v2814 = vpack.c.b16 %v2787, %v2784
        %v2815 = vpack.c.b16 %v2788, %v2785
        %vm2840 = vcmask 97280
        %v2842 = vsel %vm2840, %v2661, 0
        %vm2844 = vcmask 1045504
        %v2846 = vsel %vm2844, %v2813, 0
        %v2849 = vsel %vm2844, %v2814, 0
        %v2852 = vsel %vm2844, %v2815, 0
        %2854 = vmatprep.subr.bf16.mxu0 %v2790
        %2855 = vmatpush1.bf16.msra.mxu0 %v2789
        %2856 = vmatprep.subr.bf16.mxu0 %v2793
        %2857 = vmatpush1.bf16.msra.mxu0 %v2792
        %2858 = vmatprep.subr.bf16.mxu0 %v2796
        %2859 = vmatpush1.bf16.msra.mxu0 %v2795
        %2860 = vmatprep.subr.bf16.mxu0 %v2799
        %2861 = vmatpush1.bf16.msra.mxu0 %v2798
        %2862 = vmatprep.subr.bf16.mxu0 %v2802
        %2863 = vmatpush1.bf16.msra.mxu0 %v2801
        %2864 = vmatprep.subr.bf16.mxu0 %v2805
        %2865 = vmatpush1.bf16.msra.mxu0 %v2804
        %2866 = vmatprep.subr.bf16.mxu0 %v2808
        %2867 = vmatpush1.bf16.msra.mxu0 %v2807
        %2868 = vmatprep.subr.bf16.mxu0 %v2811
        %2869 = vmatpush1.bf16.msra.mxu0 %v2810
        %2870 = vmatprep.subr.bf16.mxu0 %v2849
        %2871 = vmatpush1.bf16.msra.mxu0 %v2846
        %2872 = vmatprep.subr.bf16.mxu0 0
        %2873 = vmatpush1.bf16.msra.mxu0 0
        %2874 = vmatprep.subr.bf16.mxu0 0
        %2875 = vmatpush1.bf16.msra.mxu0 0
        %2876 = vmatprep.subr.bf16.mxu0 0
        %2877 = vmatpush1.bf16.msra.mxu0 0
        %2878 = vmatprep.subr.bf16.mxu0 0
        %2879 = vmatpush1.bf16.msra.mxu0 0
        %2880 = vmatprep.subr.bf16.mxu0 0
        %2881 = vmatpush1.bf16.msra.mxu0 0
        %2882 = vmatprep.subr.bf16.mxu0 0
        %2883 = vmatpush1.bf16.msra.mxu0 0
        %2884 = vmatprep.subr.bf16.mxu0 0
        %2885 = vmatpush1.bf16.msra.mxu0 0
        %2886 = vmatprep.mubr.bf16.mxu0 %v2842
        %2887 = vmatmul.mubr.bf16.gmra.mrb[0].mxu0 %v2660
        %v2888 = vpop.f32.mrb[0].mxu0
        %v2889 = vadd.f32 0.0, %v2888
        %v2890 = vpop.f32.mrb[0].mxu0
        %v2891 = vadd.f32 0.0, %v2890
        %v2892 = vpop.f32.mrb[0].mxu0
        %v2893 = vadd.f32 0.0, %v2892
        %v2894 = vpop.f32.mrb[0].mxu0
        %v2895 = vadd.f32 0.0, %v2894
        %2896 = vdwg.mxu0
        %2897 = vmatprep.subr.bf16.mxu0 0
        %2898 = vmatpush1.bf16.msra.mxu0 %v2791
        %2899 = vmatprep.subr.bf16.mxu0 0
        %2900 = vmatpush1.bf16.msra.mxu0 %v2794
        %2901 = vmatprep.subr.bf16.mxu0 0
        %2902 = vmatpush1.bf16.msra.mxu0 %v2797
        %2903 = vmatprep.subr.bf16.mxu0 0
        %2904 = vmatpush1.bf16.msra.mxu0 %v2800
        %2905 = vmatprep.subr.bf16.mxu0 0
        %2906 = vmatpush1.bf16.msra.mxu0 %v2803
        %2907 = vmatprep.subr.bf16.mxu0 0
        %2908 = vmatpush1.bf16.msra.mxu0 %v2806
        %2909 = vmatprep.subr.bf16.mxu0 0
        %2910 = vmatpush1.bf16.msra.mxu0 %v2809
        %2911 = vmatprep.subr.bf16.mxu0 0
        %2912 = vmatpush1.bf16.msra.mxu0 %v2812
        %2913 = vmatprep.subr.bf16.mxu0 0
        %2914 = vmatpush1.bf16.msra.mxu0 %v2852
        %2915 = vmatprep.subr.bf16.mxu0 0
        %2916 = vmatpush1.bf16.msra.mxu0 0
        %2917 = vmatprep.subr.bf16.mxu0 0
        %2918 = vmatpush1.bf16.msra.mxu0 0
        %2919 = vmatprep.subr.bf16.mxu0 0
        %2920 = vmatpush1.bf16.msra.mxu0 0
        %2921 = vmatprep.subr.bf16.mxu0 0
        %2922 = vmatpush1.bf16.msra.mxu0 0
        %2923 = vmatprep.subr.bf16.mxu0 0
        %2924 = vmatpush1.bf16.msra.mxu0 0
        %2925 = vmatprep.subr.bf16.mxu0 0
        %2926 = vmatpush1.bf16.msra.mxu0 0
        %2927 = vmatprep.subr.bf16.mxu0 0
        %2928 = vmatpush1.bf16.msra.mxu0 0
        %2929 = vmatprep.mubr.bf16.mxu0 %v2842
        %2930 = vmatmul.mubr.bf16.gmra.mrb[0].mxu0 %v2660
        %v2931 = vpop.f32.mrb[0].mxu0
        %v2932 = vadd.f32 0.0, %v2931
        %v2933 = vpop.f32.mrb[0].mxu0
        %v2934 = vpop.f32.mrb[0].mxu0
        %v2935 = vadd.f32 0.0, %v2934
        %v2936 = vpop.f32.mrb[0].mxu0
        %2937 = vdwg.mxu0
        %v2974 = vunpack.c.l.b16 %v2570
        %v2975 = vunpack.c.h.b16 %v2570
        %v2976 = vunpack.c.l.b16 %v2571
        %v2977 = vunpack.c.l.b16 %v2572
        %v2978 = vunpack.c.h.b16 %v2572
        %v2979 = vunpack.c.l.b16 %v2573
        %v2980 = vunpack.c.l.b16 %v2574
        %v2981 = vunpack.c.h.b16 %v2574
        %v2982 = vunpack.c.l.b16 %v2575
        %v2983 = vunpack.c.l.b16 %v2576
        %v2984 = vunpack.c.h.b16 %v2576
        %v2985 = vunpack.c.l.b16 %v2577
        %v2986 = vunpack.c.l.b16 %v2578
        %v2987 = vunpack.c.h.b16 %v2578
        %v2988 = vunpack.c.l.b16 %v2579
        %v2989 = vunpack.c.l.b16 %v2580
        %v2990 = vunpack.c.h.b16 %v2580
        %v2991 = vunpack.c.l.b16 %v2581
        %v2992 = vunpack.c.l.b16 %v2582
        %v2993 = vunpack.c.h.b16 %v2582
        %v2994 = vunpack.c.l.b16 %v2583
        %v2995 = vunpack.c.l.b16 %v2584
        %v2996 = vunpack.c.h.b16 %v2584
        %v2997 = vunpack.c.l.b16 %v2585
        %v2998 = vunpack.c.l.b16 %v2586
        %v2999 = vunpack.c.h.b16 %v2586
        %v3000 = vunpack.c.l.b16 %v2587
        %v3001 = vunpack.c.l.b16 %v2588
        %v3002 = vunpack.c.h.b16 %v2588
        %v3003 = vunpack.c.l.b16 %v2589
        %v3004 = vunpack.c.l.b16 %v2590
        %v3005 = vunpack.c.h.b16 %v2590
        %v3006 = vunpack.c.l.b16 %v2591
        %v3007 = vunpack.c.l.b16 %v2592
        %v3008 = vunpack.c.h.b16 %v2592
        %v3009 = vunpack.c.l.b16 %v2593
        %v3010 = vunpack.c.l.b16 %v2594
        %v3011 = vunpack.c.h.b16 %v2594
        %v3012 = vunpack.c.l.b16 %v2595
        %v3013 = vunpack.c.l.b16 %v2596
        %v3014 = vunpack.c.h.b16 %v2596
        %v3015 = vunpack.c.l.b16 %v2597
        %v3016 = vunpack.c.l.b16 %v2598
        %v3017 = vunpack.c.h.b16 %v2598
        %v3018 = vunpack.c.l.b16 %v2599
        %v3019 = vunpack.c.l.b16 %v2600
        %v3020 = vunpack.c.h.b16 %v2600
        %v3021 = vunpack.c.l.b16 %v2601
        %v3022 = vunpack.c.l.b16 %v2602
        %v3023 = vunpack.c.h.b16 %v2602
        %v3024 = vunpack.c.l.b16 %v2603
        %v3025 = vunpack.c.l.b16 %v2604
        %v3026 = vunpack.c.h.b16 %v2604
        %v3027 = vunpack.c.l.b16 %v2605
        %v3028 = vpack.c.b16 %v2977, %v2974
        %v3029 = vpack.c.b16 %v2978, %v2975
        %v3030 = vpack.c.b16 %v2979, %v2976
        %v3031 = vpack.c.b16 %v2983, %v2980
        %v3032 = vpack.c.b16 %v2984, %v2981
        %v3033 = vpack.c.b16 %v2985, %v2982
        %v3034 = vpack.c.b16 %v2989, %v2986
        %v3035 = vpack.c.b16 %v2990, %v2987
        %v3036 = vpack.c.b16 %v2991, %v2988
        %v3037 = vpack.c.b16 %v2995, %v2992
        %v3038 = vpack.c.b16 %v2996, %v2993
        %v3039 = vpack.c.b16 %v2997, %v2994
        %v3040 = vpack.c.b16 %v3001, %v2998
        %v3041 = vpack.c.b16 %v3002, %v2999
        %v3042 = vpack.c.b16 %v3003, %v3000
        %v3043 = vpack.c.b16 %v3007, %v3004
        %v3044 = vpack.c.b16 %v3008, %v3005
        %v3045 = vpack.c.b16 %v3009, %v3006
        %v3046 = vpack.c.b16 %v3013, %v3010
        %v3047 = vpack.c.b16 %v3014, %v3011
        %v3048 = vpack.c.b16 %v3015, %v3012
        %v3049 = vpack.c.b16 %v3019, %v3016
        %v3050 = vpack.c.b16 %v3020, %v3017
        %v3051 = vpack.c.b16 %v3021, %v3018
        %v3052 = vpack.c.b16 %v3025, %v3022
        %v3053 = vpack.c.b16 %v3026, %v3023
        %v3054 = vpack.c.b16 %v3027, %v3024
        %v3080 = vsel %vm2840, %v2569, 0
        %v3083 = vsel %vm2844, %v3052, 0
        %v3086 = vsel %vm2844, %v3053, 0
        %v3089 = vsel %vm2844, %v3054, 0
        %3091 = vmatprep.subr.bf16.mxu0 %v3029
        %3092 = vmatpush1.bf16.msra.mxu0 %v3028
        %3093 = vmatprep.subr.bf16.mxu0 %v3032
        %3094 = vmatpush1.bf16.msra.mxu0 %v3031
        %3095 = vmatprep.subr.bf16.mxu0 %v3035
        %3096 = vmatpush1.bf16.msra.mxu0 %v3034
        %3097 = vmatprep.subr.bf16.mxu0 %v3038
        %3098 = vmatpush1.bf16.msra.mxu0 %v3037
        %3099 = vmatprep.subr.bf16.mxu0 %v3041
        %3100 = vmatpush1.bf16.msra.mxu0 %v3040
        %3101 = vmatprep.subr.bf16.mxu0 %v3044
        %3102 = vmatpush1.bf16.msra.mxu0 %v3043
        %3103 = vmatprep.subr.bf16.mxu0 %v3047
        %3104 = vmatpush1.bf16.msra.mxu0 %v3046
        %3105 = vmatprep.subr.bf16.mxu0 %v3050
        %3106 = vmatpush1.bf16.msra.mxu0 %v3049
        %3107 = vmatprep.subr.bf16.mxu0 %v3086
        %3108 = vmatpush1.bf16.msra.mxu0 %v3083
        %3109 = vmatprep.subr.bf16.mxu0 0
        %3110 = vmatpush1.bf16.msra.mxu0 0
        %3111 = vmatprep.subr.bf16.mxu0 0
        %3112 = vmatpush1.bf16.msra.mxu0 0
        %3113 = vmatprep.subr.bf16.mxu0 0
        %3114 = vmatpush1.bf16.msra.mxu0 0
        %3115 = vmatprep.subr.bf16.mxu0 0
        %3116 = vmatpush1.bf16.msra.mxu0 0
        %3117 = vmatprep.subr.bf16.mxu0 0
        %3118 = vmatpush1.bf16.msra.mxu0 0
        %3119 = vmatprep.subr.bf16.mxu0 0
        %3120 = vmatpush1.bf16.msra.mxu0 0
        %3121 = vmatprep.subr.bf16.mxu0 0
        %3122 = vmatpush1.bf16.msra.mxu0 0
        %3123 = vmatprep.mubr.bf16.mxu0 %v3080
        %3124 = vmatmul.mubr.bf16.gmra.mrb[0].mxu0 %v2568
        %v3125 = vpop.f32.mrb[0].mxu0
        %v3126 = vadd.f32 %v2889, %v3125
        %v3127 = vpop.f32.mrb[0].mxu0
        %v3128 = vadd.f32 %v2891, %v3127
        %v3129 = vpop.f32.mrb[0].mxu0
        %v3130 = vadd.f32 %v2893, %v3129
        %v3131 = vpop.f32.mrb[0].mxu0
        %v3132 = vadd.f32 %v2895, %v3131
        %3133 = vdwg.mxu0
        %3134 = vmatprep.subr.bf16.mxu0 0
        %3135 = vmatpush1.bf16.msra.mxu0 %v3030
        %3136 = vmatprep.subr.bf16.mxu0 0
        %3137 = vmatpush1.bf16.msra.mxu0 %v3033
        %3138 = vmatprep.subr.bf16.mxu0 0
        %3139 = vmatpush1.bf16.msra.mxu0 %v3036
        %3140 = vmatprep.subr.bf16.mxu0 0
        %3141 = vmatpush1.bf16.msra.mxu0 %v3039
        %3142 = vmatprep.subr.bf16.mxu0 0
        %3143 = vmatpush1.bf16.msra.mxu0 %v3042
        %3144 = vmatprep.subr.bf16.mxu0 0
        %3145 = vmatpush1.bf16.msra.mxu0 %v3045
        %3146 = vmatprep.subr.bf16.mxu0 0
        %3147 = vmatpush1.bf16.msra.mxu0 %v3048
        %3148 = vmatprep.subr.bf16.mxu0 0
        %3149 = vmatpush1.bf16.msra.mxu0 %v3051
        %3150 = vmatprep.subr.bf16.mxu0 0
        %3151 = vmatpush1.bf16.msra.mxu0 %v3089
        %3152 = vmatprep.subr.bf16.mxu0 0
        %3153 = vmatpush1.bf16.msra.mxu0 0
        %3154 = vmatprep.subr.bf16.mxu0 0
        %3155 = vmatpush1.bf16.msra.mxu0 0
        %3156 = vmatprep.subr.bf16.mxu0 0
        %3157 = vmatpush1.bf16.msra.mxu0 0
        %3158 = vmatprep.subr.bf16.mxu0 0
        %3159 = vmatpush1.bf16.msra.mxu0 0
        %3160 = vmatprep.subr.bf16.mxu0 0
        %3161 = vmatpush1.bf16.msra.mxu0 0
        %3162 = vmatprep.subr.bf16.mxu0 0
        %3163 = vmatpush1.bf16.msra.mxu0 0
        %3164 = vmatprep.subr.bf16.mxu0 0
        %3165 = vmatpush1.bf16.msra.mxu0 0
        %3166 = vmatprep.mubr.bf16.mxu0 %v3080
        %3167 = vmatmul.mubr.bf16.gmra.mrb[0].mxu0 %v2568
        %v3168 = vpop.f32.mrb[0].mxu0
        %v3169 = vadd.f32 %v2932, %v3168
        %v3170 = vpop.f32.mrb[0].mxu0
        %v3171 = vpop.f32.mrb[0].mxu0
        %v3172 = vadd.f32 %v2935, %v3171
        %v3173 = vpop.f32.mrb[0].mxu0
        %3174 = vdwg.mxu0
        %s3175 = scalar_lea.vmem %s2, 16
        %v3176 = vld [vmem:[%s3175] sm:$0xf]
        %v3177 = vld [vmem:[%s3175 + $0x4] sm:$0x7]
        %v3180 = vunpack.c.l.b16 %v3176
        %v3181 = vunpack.c.l.b16 %v3177
        %v3182 = vpack.c.b16 %v3181, %v3180
        %v3184 = vsel %vm2514, %v3182, 0
        %3186 = vmatprep.subr.bf16.mxu0 %v2523
        %3187 = vmatpush1.bf16.msra.mxu0 %v2520
        %3188 = vmatprep.subr.bf16.mxu0 0
        %3189 = vmatpush1.bf16.msra.mxu0 0
        %3190 = vmatprep.subr.bf16.mxu0 0
        %3191 = vmatpush1.bf16.msra.mxu0 0
        %3192 = vmatprep.subr.bf16.mxu0 0
        %3193 = vmatpush1.bf16.msra.mxu0 0
        %3194 = vmatprep.subr.bf16.mxu0 0
        %3195 = vmatpush1.bf16.msra.mxu0 0
        %3196 = vmatprep.subr.bf16.mxu0 0
        %3197 = vmatpush1.bf16.msra.mxu0 0
        %3198 = vmatprep.subr.bf16.mxu0 0
        %3199 = vmatpush1.bf16.msra.mxu0 0
        %3200 = vmatprep.subr.bf16.mxu0 0
        %3201 = vmatpush1.bf16.msra.mxu0 0
        %3202 = vmatprep.subr.bf16.mxu0 0
        %3203 = vmatpush1.bf16.msra.mxu0 0
        %3204 = vmatprep.subr.bf16.mxu0 0
        %3205 = vmatpush1.bf16.msra.mxu0 0
        %3206 = vmatprep.subr.bf16.mxu0 0
        %3207 = vmatpush1.bf16.msra.mxu0 0
        %3208 = vmatprep.subr.bf16.mxu0 0
        %3209 = vmatpush1.bf16.msra.mxu0 0
        %3210 = vmatprep.subr.bf16.mxu0 0
        %3211 = vmatpush1.bf16.msra.mxu0 0
        %3212 = vmatprep.subr.bf16.mxu0 0
        %3213 = vmatpush1.bf16.msra.mxu0 0
        %3214 = vmatprep.subr.bf16.mxu0 0
        %3215 = vmatpush1.bf16.msra.mxu0 0
        %3216 = vmatprep.subr.bf16.mxu0 0
        %3217 = vmatpush1.bf16.msra.mxu0 0
        %3218 = vmatprep.mubr.bf16.mxu0 0
        %3219 = vmatmul.mubr.bf16.gmra.mrb[0].mxu0 %v3184
        %v3220 = vpop.f32.mrb[0].mxu0
        %v3221 = vadd.f32 0.0, %v3220
        %v3222 = vpop.f32.mrb[0].mxu0
        %v3223 = vadd.f32 0.0, %v3222
        %v3224 = vpop.f32.mrb[0].mxu0
        %v3225 = vadd.f32 0.0, %v3224
        %v3226 = vpop.f32.mrb[0].mxu0
        %v3227 = vadd.f32 0.0, %v3226
        %3228 = vdwg.mxu0
        %v3229 = vpack.c.bf16 %v3225, %v3221
        %v3230 = vpack.c.bf16 %v3227, %v3223
        %s3231 = scalar_lea.vmem %s7, 432
        %v3232 = vld [vmem:[%s3231] sm:$0xff]
        %v3233 = vld [vmem:[%s3231 + $0x8] sm:$0xf]
        %v3234 = vld [vmem:[%s3231 + $0xc] sm:$0xff]
        %v3235 = vld [vmem:[%s3231 + $0x14] sm:$0xf]
        %v3236 = vld [vmem:[%s3231 + $0x18] sm:$0xff]
        %v3237 = vld [vmem:[%s3231 + $0x20] sm:$0xf]
        %v3238 = vld [vmem:[%s3231 + $0x24] sm:$0xff]
        %v3239 = vld [vmem:[%s3231 + $0x2c] sm:$0xf]
        %v3240 = vld [vmem:[%s3231 + $0x30] sm:$0xff]
        %v3241 = vld [vmem:[%s3231 + $0x38] sm:$0xf]
        %v3242 = vld [vmem:[%s3231 + $0x3c] sm:$0xff]
        %v3243 = vld [vmem:[%s3231 + $0x44] sm:$0xf]
        %v3244 = vld [vmem:[%s3231 + $0x48] sm:$0xff]
        %v3245 = vld [vmem:[%s3231 + $0x50] sm:$0xf]
        %v3246 = vld [vmem:[%s3231 + $0x54] sm:$0xff]
        %v3247 = vld [vmem:[%s3231 + $0x5c] sm:$0xf]
        %v3248 = vld [vmem:[%s3231 + $0x60] sm:$0xff]
        %v3249 = vld [vmem:[%s3231 + $0x68] sm:$0xf]
        %v3250 = vld [vmem:[%s3231 + $0x6c] sm:$0xff]
        %v3251 = vld [vmem:[%s3231 + $0x74] sm:$0xf]
        %v3252 = vld [vmem:[%s3231 + $0x78] sm:$0xff]
        %v3253 = vld [vmem:[%s3231 + $0x80] sm:$0xf]
        %v3254 = vld [vmem:[%s3231 + $0x84] sm:$0xff]
        %v3255 = vld [vmem:[%s3231 + $0x8c] sm:$0xf]
        %v3256 = vld [vmem:[%s3231 + $0x90] sm:$0xff]
        %v3257 = vld [vmem:[%s3231 + $0x98] sm:$0xf]
        %v3258 = vld [vmem:[%s3231 + $0x9c] sm:$0xff]
        %v3259 = vld [vmem:[%s3231 + $0xa4] sm:$0xf]
        %v3260 = vld [vmem:[%s3231 + $0xa8] sm:$0xff]
        %v3261 = vld [vmem:[%s3231 + $0xb0] sm:$0xf]
        %v3262 = vld [vmem:[%s3231 + $0xb4] sm:$0xff]
        %v3263 = vld [vmem:[%s3231 + $0xbc] sm:$0xf]
        %v3264 = vld [vmem:[%s3231 + $0xc0] sm:$0xff]
        %v3265 = vld [vmem:[%s3231 + $0xc8] sm:$0xf]
        %v3266 = vld [vmem:[%s3231 + $0xcc] sm:$0x33]
        %v3267 = vld [vmem:[%s3231 + $0xd4] sm:$0x3]
        %v3304 = vunpack.c.l.b16 %v3232
        %v3305 = vunpack.c.h.b16 %v3232
        %v3306 = vunpack.c.l.b16 %v3233
        %v3307 = vunpack.c.l.b16 %v3234
        %v3308 = vunpack.c.h.b16 %v3234
        %v3309 = vunpack.c.l.b16 %v3235
        %v3310 = vunpack.c.l.b16 %v3236
        %v3311 = vunpack.c.h.b16 %v3236
        %v3312 = vunpack.c.l.b16 %v3237
        %v3313 = vunpack.c.l.b16 %v3238
        %v3314 = vunpack.c.h.b16 %v3238
        %v3315 = vunpack.c.l.b16 %v3239
        %v3316 = vunpack.c.l.b16 %v3240
        %v3317 = vunpack.c.h.b16 %v3240
        %v3318 = vunpack.c.l.b16 %v3241
        %v3319 = vunpack.c.l.b16 %v3242
        %v3320 = vunpack.c.h.b16 %v3242
        %v3321 = vunpack.c.l.b16 %v3243
        %v3322 = vunpack.c.l.b16 %v3244
        %v3323 = vunpack.c.h.b16 %v3244
        %v3324 = vunpack.c.l.b16 %v3245
        %v3325 = vunpack.c.l.b16 %v3246
        %v3326 = vunpack.c.h.b16 %v3246
        %v3327 = vunpack.c.l.b16 %v3247
        %v3328 = vunpack.c.l.b16 %v3248
        %v3329 = vunpack.c.h.b16 %v3248
        %v3330 = vunpack.c.l.b16 %v3249
        %v3331 = vunpack.c.l.b16 %v3250
        %v3332 = vunpack.c.h.b16 %v3250
        %v3333 = vunpack.c.l.b16 %v3251
        %v3334 = vunpack.c.l.b16 %v3252
        %v3335 = vunpack.c.h.b16 %v3252
        %v3336 = vunpack.c.l.b16 %v3253
        %v3337 = vunpack.c.l.b16 %v3254
        %v3338 = vunpack.c.h.b16 %v3254
        %v3339 = vunpack.c.l.b16 %v3255
        %v3340 = vunpack.c.l.b16 %v3256
        %v3341 = vunpack.c.h.b16 %v3256
        %v3342 = vunpack.c.l.b16 %v3257
        %v3343 = vunpack.c.l.b16 %v3258
        %v3344 = vunpack.c.h.b16 %v3258
        %v3345 = vunpack.c.l.b16 %v3259
        %v3346 = vunpack.c.l.b16 %v3260
        %v3347 = vunpack.c.h.b16 %v3260
        %v3348 = vunpack.c.l.b16 %v3261
        %v3349 = vunpack.c.l.b16 %v3262
        %v3350 = vunpack.c.h.b16 %v3262
        %v3351 = vunpack.c.l.b16 %v3263
        %v3352 = vunpack.c.l.b16 %v3264
        %v3353 = vunpack.c.h.b16 %v3264
        %v3354 = vunpack.c.l.b16 %v3265
        %v3355 = vunpack.c.l.b16 %v3266
        %v3356 = vunpack.c.h.b16 %v3266
        %v3357 = vunpack.c.l.b16 %v3267
        %v3358 = vpack.c.b16 %v3307, %v3304
        %v3359 = vpack.c.b16 %v3308, %v3305
        %v3360 = vpack.c.b16 %v3309, %v3306
        %v3361 = vpack.c.b16 %v3313, %v3310
        %v3362 = vpack.c.b16 %v3314, %v3311
        %v3363 = vpack.c.b16 %v3315, %v3312
        %v3364 = vpack.c.b16 %v3319, %v3316
        %v3365 = vpack.c.b16 %v3320, %v3317
        %v3366 = vpack.c.b16 %v3321, %v3318
        %v3367 = vpack.c.b16 %v3325, %v3322
        %v3368 = vpack.c.b16 %v3326, %v3323
        %v3369 = vpack.c.b16 %v3327, %v3324
        %v3370 = vpack.c.b16 %v3331, %v3328
        %v3371 = vpack.c.b16 %v3332, %v3329
        %v3372 = vpack.c.b16 %v3333, %v3330
        %v3373 = vpack.c.b16 %v3337, %v3334
        %v3374 = vpack.c.b16 %v3338, %v3335
        %v3375 = vpack.c.b16 %v3339, %v3336
        %v3376 = vpack.c.b16 %v3343, %v3340
        %v3377 = vpack.c.b16 %v3344, %v3341
        %v3378 = vpack.c.b16 %v3345, %v3342
        %v3379 = vpack.c.b16 %v3349, %v3346
        %v3380 = vpack.c.b16 %v3350, %v3347
        %v3381 = vpack.c.b16 %v3351, %v3348
        %v3382 = vpack.c.b16 %v3355, %v3352
        %v3383 = vpack.c.b16 %v3356, %v3353
        %v3384 = vpack.c.b16 %v3357, %v3354
        %v3410 = vsel %vm2840, %v3230, 0
        %v3413 = vsel %vm2844, %v3382, 0
        %v3416 = vsel %vm2844, %v3383, 0
        %v3419 = vsel %vm2844, %v3384, 0
        %3421 = vmatprep.subr.bf16.mxu0 %v3359
        %3422 = vmatpush1.bf16.msra.mxu0 %v3358
        %3423 = vmatprep.subr.bf16.mxu0 %v3362
        %3424 = vmatpush1.bf16.msra.mxu0 %v3361
        %3425 = vmatprep.subr.bf16.mxu0 %v3365
        %3426 = vmatpush1.bf16.msra.mxu0 %v3364
        %3427 = vmatprep.subr.bf16.mxu0 %v3368
        %3428 = vmatpush1.bf16.msra.mxu0 %v3367
        %3429 = vmatprep.subr.bf16.mxu0 %v3371
        %3430 = vmatpush1.bf16.msra.mxu0 %v3370
        %3431 = vmatprep.subr.bf16.mxu0 %v3374
        %3432 = vmatpush1.bf16.msra.mxu0 %v3373
        %3433 = vmatprep.subr.bf16.mxu0 %v3377
        %3434 = vmatpush1.bf16.msra.mxu0 %v3376
        %3435 = vmatprep.subr.bf16.mxu0 %v3380
        %3436 = vmatpush1.bf16.msra.mxu0 %v3379
        %3437 = vmatprep.subr.bf16.mxu0 %v3416
        %3438 = vmatpush1.bf16.msra.mxu0 %v3413
        %3439 = vmatprep.subr.bf16.mxu0 0
        %3440 = vmatpush1.bf16.msra.mxu0 0
        %3441 = vmatprep.subr.bf16.mxu0 0
        %3442 = vmatpush1.bf16.msra.mxu0 0
        %3443 = vmatprep.subr.bf16.mxu0 0
        %3444 = vmatpush1.bf16.msra.mxu0 0
        %3445 = vmatprep.subr.bf16.mxu0 0
        %3446 = vmatpush1.bf16.msra.mxu0 0
        %3447 = vmatprep.subr.bf16.mxu0 0
        %3448 = vmatpush1.bf16.msra.mxu0 0
        %3449 = vmatprep.subr.bf16.mxu0 0
        %3450 = vmatpush1.bf16.msra.mxu0 0
        %3451 = vmatprep.subr.bf16.mxu0 0
        %3452 = vmatpush1.bf16.msra.mxu0 0
        %3453 = vmatprep.mubr.bf16.mxu0 %v3410
        %3454 = vmatmul.mubr.bf16.gmra.mrb[0].mxu0 %v3229
        %v3455 = vpop.f32.mrb[0].mxu0
        %v3456 = vadd.f32 0.0, %v3455
        %v3457 = vpop.f32.mrb[0].mxu0
        %v3458 = vadd.f32 0.0, %v3457
        %v3459 = vpop.f32.mrb[0].mxu0
        %v3460 = vadd.f32 0.0, %v3459
        %v3461 = vpop.f32.mrb[0].mxu0
        %v3462 = vadd.f32 0.0, %v3461
        %3463 = vdwg.mxu0
        %3464 = vmatprep.subr.bf16.mxu0 0
        %3465 = vmatpush1.bf16.msra.mxu0 %v3360
        %3466 = vmatprep.subr.bf16.mxu0 0
        %3467 = vmatpush1.bf16.msra.mxu0 %v3363
        %3468 = vmatprep.subr.bf16.mxu0 0
        %3469 = vmatpush1.bf16.msra.mxu0 %v3366
        %3470 = vmatprep.subr.bf16.mxu0 0
        %3471 = vmatpush1.bf16.msra.mxu0 %v3369
        %3472 = vmatprep.subr.bf16.mxu0 0
        %3473 = vmatpush1.bf16.msra.mxu0 %v3372
        %3474 = vmatprep.subr.bf16.mxu0 0
        %3475 = vmatpush1.bf16.msra.mxu0 %v3375
        %3476 = vmatprep.subr.bf16.mxu0 0
        %3477 = vmatpush1.bf16.msra.mxu0 %v3378
        %3478 = vmatprep.subr.bf16.mxu0 0
        %3479 = vmatpush1.bf16.msra.mxu0 %v3381
        %3480 = vmatprep.subr.bf16.mxu0 0
        %3481 = vmatpush1.bf16.msra.mxu0 %v3419
        %3482 = vmatprep.subr.bf16.mxu0 0
        %3483 = vmatpush1.bf16.msra.mxu0 0
        %3484 = vmatprep.subr.bf16.mxu0 0
        %3485 = vmatpush1.bf16.msra.mxu0 0
        %3486 = vmatprep.subr.bf16.mxu0 0
        %3487 = vmatpush1.bf16.msra.mxu0 0
        %3488 = vmatprep.subr.bf16.mxu0 0
        %3489 = vmatpush1.bf16.msra.mxu0 0
        %3490 = vmatprep.subr.bf16.mxu0 0
        %3491 = vmatpush1.bf16.msra.mxu0 0
        %3492 = vmatprep.subr.bf16.mxu0 0
        %3493 = vmatpush1.bf16.msra.mxu0 0
        %3494 = vmatprep.subr.bf16.mxu0 0
        %3495 = vmatpush1.bf16.msra.mxu0 0
        %3496 = vmatprep.mubr.bf16.mxu0 %v3410
        %3497 = vmatmul.mubr.bf16.gmra.mrb[0].mxu0 %v3229
        %v3498 = vpop.f32.mrb[0].mxu0
        %v3499 = vadd.f32 0.0, %v3498
        %v3500 = vpop.f32.mrb[0].mxu0
        %v3501 = vpop.f32.mrb[0].mxu0
        %v3502 = vadd.f32 0.0, %v3501
        %v3503 = vpop.f32.mrb[0].mxu0
        %3504 = vdwg.mxu0
        %v3505 = vadd.f32 %v3126, %v3456
        %v3506 = vadd.f32 %v3128, %v3458
        %v3507 = vadd.f32 %v3169, %v3499
        %v3508 = vadd.f32 %v3130, %v3460
        %v3509 = vadd.f32 %v3132, %v3462
        %v3510 = vadd.f32 %v3172, %v3502
        %s3511 = scalar_lea.vmem %s2, 24
        %v3512 = vld [vmem:[%s3511] sm:$0xf]
        %v3513 = vld [vmem:[%s3511 + $0x4] sm:$0x7]
        %v3516 = vunpack.c.l.b16 %v3512
        %v3517 = vunpack.c.l.b16 %v3513
        %v3518 = vpack.c.b16 %v3517, %v3516
        %v3520 = vsel %vm2514, %v3518, 0
        %3522 = vmatprep.subr.bf16.mxu0 %v2523
        %3523 = vmatpush1.bf16.msra.mxu0 %v2520
        %3524 = vmatprep.subr.bf16.mxu0 0
        %3525 = vmatpush1.bf16.msra.mxu0 0
        %3526 = vmatprep.subr.bf16.mxu0 0
        %3527 = vmatpush1.bf16.msra.mxu0 0
        %3528 = vmatprep.subr.bf16.mxu0 0
        %3529 = vmatpush1.bf16.msra.mxu0 0
        %3530 = vmatprep.subr.bf16.mxu0 0
        %3531 = vmatpush1.bf16.msra.mxu0 0
        %3532 = vmatprep.subr.bf16.mxu0 0
        %3533 = vmatpush1.bf16.msra.mxu0 0
        %3534 = vmatprep.subr.bf16.mxu0 0
        %3535 = vmatpush1.bf16.msra.mxu0 0
        %3536 = vmatprep.subr.bf16.mxu0 0
        %3537 = vmatpush1.bf16.msra.mxu0 0
        %3538 = vmatprep.subr.bf16.mxu0 0
        %3539 = vmatpush1.bf16.msra.mxu0 0
        %3540 = vmatprep.subr.bf16.mxu0 0
        %3541 = vmatpush1.bf16.msra.mxu0 0
        %3542 = vmatprep.subr.bf16.mxu0 0
        %3543 = vmatpush1.bf16.msra.mxu0 0
        %3544 = vmatprep.subr.bf16.mxu0 0
        %3545 = vmatpush1.bf16.msra.mxu0 0
        %3546 = vmatprep.subr.bf16.mxu0 0
        %3547 = vmatpush1.bf16.msra.mxu0 0
        %3548 = vmatprep.subr.bf16.mxu0 0
        %3549 = vmatpush1.bf16.msra.mxu0 0
        %3550 = vmatprep.subr.bf16.mxu0 0
        %3551 = vmatpush1.bf16.msra.mxu0 0
        %3552 = vmatprep.subr.bf16.mxu0 0
        %3553 = vmatpush1.bf16.msra.mxu0 0
        %3554 = vmatprep.mubr.bf16.mxu0 0
        %3555 = vmatmul.mubr.bf16.gmra.mrb[0].mxu0 %v3520
        %v3556 = vpop.f32.mrb[0].mxu0
        %v3557 = vadd.f32 0.0, %v3556
        %v3558 = vpop.f32.mrb[0].mxu0
        %v3559 = vadd.f32 0.0, %v3558
        %v3560 = vpop.f32.mrb[0].mxu0
        %v3561 = vadd.f32 0.0, %v3560
        %v3562 = vpop.f32.mrb[0].mxu0
        %v3563 = vadd.f32 0.0, %v3562
        %3564 = vdwg.mxu0
        %v3565 = vpack.c.bf16 %v3561, %v3557
        %v3566 = vpack.c.bf16 %v3563, %v3559
        %s3567 = scalar_lea.vmem %s7, 648
        %v3568 = vld [vmem:[%s3567] sm:$0xff]
        %v3569 = vld [vmem:[%s3567 + $0x8] sm:$0xf]
        %v3570 = vld [vmem:[%s3567 + $0xc] sm:$0xff]
        %v3571 = vld [vmem:[%s3567 + $0x14] sm:$0xf]
        %v3572 = vld [vmem:[%s3567 + $0x18] sm:$0xff]
        %v3573 = vld [vmem:[%s3567 + $0x20] sm:$0xf]
        %v3574 = vld [vmem:[%s3567 + $0x24] sm:$0xff]
        %v3575 = vld [vmem:[%s3567 + $0x2c] sm:$0xf]
        %v3576 = vld [vmem:[%s3567 + $0x30] sm:$0xff]
        %v3577 = vld [vmem:[%s3567 + $0x38] sm:$0xf]
        %v3578 = vld [vmem:[%s3567 + $0x3c] sm:$0xff]
        %v3579 = vld [vmem:[%s3567 + $0x44] sm:$0xf]
        %v3580 = vld [vmem:[%s3567 + $0x48] sm:$0xff]
        %v3581 = vld [vmem:[%s3567 + $0x50] sm:$0xf]
        %v3582 = vld [vmem:[%s3567 + $0x54] sm:$0xff]
        %v3583 = vld [vmem:[%s3567 + $0x5c] sm:$0xf]
        %v3584 = vld [vmem:[%s3567 + $0x60] sm:$0xff]
        %v3585 = vld [vmem:[%s3567 + $0x68] sm:$0xf]
        %v3586 = vld [vmem:[%s3567 + $0x6c] sm:$0xff]
        %v3587 = vld [vmem:[%s3567 + $0x74] sm:$0xf]
        %v3588 = vld [vmem:[%s3567 + $0x78] sm:$0xff]
        %v3589 = vld [vmem:[%s3567 + $0x80] sm:$0xf]
        %v3590 = vld [vmem:[%s3567 + $0x84] sm:$0xff]
        %v3591 = vld [vmem:[%s3567 + $0x8c] sm:$0xf]
        %v3592 = vld [vmem:[%s3567 + $0x90] sm:$0xff]
        %v3593 = vld [vmem:[%s3567 + $0x98] sm:$0xf]
        %v3594 = vld [vmem:[%s3567 + $0x9c] sm:$0xff]
        %v3595 = vld [vmem:[%s3567 + $0xa4] sm:$0xf]
        %v3596 = vld [vmem:[%s3567 + $0xa8] sm:$0xff]
        %v3597 = vld [vmem:[%s3567 + $0xb0] sm:$0xf]
        %v3598 = vld [vmem:[%s3567 + $0xb4] sm:$0xff]
        %v3599 = vld [vmem:[%s3567 + $0xbc] sm:$0xf]
        %v3600 = vld [vmem:[%s3567 + $0xc0] sm:$0xff]
        %v3601 = vld [vmem:[%s3567 + $0xc8] sm:$0xf]
        %v3602 = vld [vmem:[%s3567 + $0xcc] sm:$0x33]
        %v3603 = vld [vmem:[%s3567 + $0xd4] sm:$0x3]
        %v3640 = vunpack.c.l.b16 %v3568
        %v3641 = vunpack.c.h.b16 %v3568
        %v3642 = vunpack.c.l.b16 %v3569
        %v3643 = vunpack.c.l.b16 %v3570
        %v3644 = vunpack.c.h.b16 %v3570
        %v3645 = vunpack.c.l.b16 %v3571
        %v3646 = vunpack.c.l.b16 %v3572
        %v3647 = vunpack.c.h.b16 %v3572
        %v3648 = vunpack.c.l.b16 %v3573
        %v3649 = vunpack.c.l.b16 %v3574
        %v3650 = vunpack.c.h.b16 %v3574
        %v3651 = vunpack.c.l.b16 %v3575
        %v3652 = vunpack.c.l.b16 %v3576
        %v3653 = vunpack.c.h.b16 %v3576
        %v3654 = vunpack.c.l.b16 %v3577
        %v3655 = vunpack.c.l.b16 %v3578
        %v3656 = vunpack.c.h.b16 %v3578
        %v3657 = vunpack.c.l.b16 %v3579
        %v3658 = vunpack.c.l.b16 %v3580
        %v3659 = vunpack.c.h.b16 %v3580
        %v3660 = vunpack.c.l.b16 %v3581
        %v3661 = vunpack.c.l.b16 %v3582
        %v3662 = vunpack.c.h.b16 %v3582
        %v3663 = vunpack.c.l.b16 %v3583
        %v3664 = vunpack.c.l.b16 %v3584
        %v3665 = vunpack.c.h.b16 %v3584
        %v3666 = vunpack.c.l.b16 %v3585
        %v3667 = vunpack.c.l.b16 %v3586
        %v3668 = vunpack.c.h.b16 %v3586
        %v3669 = vunpack.c.l.b16 %v3587
        %v3670 = vunpack.c.l.b16 %v3588
        %v3671 = vunpack.c.h.b16 %v3588
        %v3672 = vunpack.c.l.b16 %v3589
        %v3673 = vunpack.c.l.b16 %v3590
        %v3674 = vunpack.c.h.b16 %v3590
        %v3675 = vunpack.c.l.b16 %v3591
        %v3676 = vunpack.c.l.b16 %v3592
        %v3677 = vunpack.c.h.b16 %v3592
        %v3678 = vunpack.c.l.b16 %v3593
        %v3679 = vunpack.c.l.b16 %v3594
        %v3680 = vunpack.c.h.b16 %v3594
        %v3681 = vunpack.c.l.b16 %v3595
        %v3682 = vunpack.c.l.b16 %v3596
        %v3683 = vunpack.c.h.b16 %v3596
        %v3684 = vunpack.c.l.b16 %v3597
        %v3685 = vunpack.c.l.b16 %v3598
        %v3686 = vunpack.c.h.b16 %v3598
        %v3687 = vunpack.c.l.b16 %v3599
        %v3688 = vunpack.c.l.b16 %v3600
        %v3689 = vunpack.c.h.b16 %v3600
        %v3690 = vunpack.c.l.b16 %v3601
        %v3691 = vunpack.c.l.b16 %v3602
        %v3692 = vunpack.c.h.b16 %v3602
        %v3693 = vunpack.c.l.b16 %v3603
        %v3694 = vpack.c.b16 %v3643, %v3640
        %v3695 = vpack.c.b16 %v3644, %v3641
        %v3696 = vpack.c.b16 %v3645, %v3642
        %v3697 = vpack.c.b16 %v3649, %v3646
        %v3698 = vpack.c.b16 %v3650, %v3647
        %v3699 = vpack.c.b16 %v3651, %v3648
        %v3700 = vpack.c.b16 %v3655, %v3652
        %v3701 = vpack.c.b16 %v3656, %v3653
        %v3702 = vpack.c.b16 %v3657, %v3654
        %v3703 = vpack.c.b16 %v3661, %v3658
        %v3704 = vpack.c.b16 %v3662, %v3659
        %v3705 = vpack.c.b16 %v3663, %v3660
        %v3706 = vpack.c.b16 %v3667, %v3664
        %v3707 = vpack.c.b16 %v3668, %v3665
        %v3708 = vpack.c.b16 %v3669, %v3666
        %v3709 = vpack.c.b16 %v3673, %v3670
        %v3710 = vpack.c.b16 %v3674, %v3671
        %v3711 = vpack.c.b16 %v3675, %v3672
        %v3712 = vpack.c.b16 %v3679, %v3676
        %v3713 = vpack.c.b16 %v3680, %v3677
        %v3714 = vpack.c.b16 %v3681, %v3678
        %v3715 = vpack.c.b16 %v3685, %v3682
        %v3716 = vpack.c.b16 %v3686, %v3683
        %v3717 = vpack.c.b16 %v3687, %v3684
        %v3718 = vpack.c.b16 %v3691, %v3688
        %v3719 = vpack.c.b16 %v3692, %v3689
        %v3720 = vpack.c.b16 %v3693, %v3690
        %v3746 = vsel %vm2840, %v3566, 0
        %v3749 = vsel %vm2844, %v3718, 0
        %v3752 = vsel %vm2844, %v3719, 0
        %v3755 = vsel %vm2844, %v3720, 0
        %3757 = vmatprep.subr.bf16.mxu0 %v3695
        %3758 = vmatpush1.bf16.msra.mxu0 %v3694
        %3759 = vmatprep.subr.bf16.mxu0 %v3698
        %3760 = vmatpush1.bf16.msra.mxu0 %v3697
        %3761 = vmatprep.subr.bf16.mxu0 %v3701
        %3762 = vmatpush1.bf16.msra.mxu0 %v3700
        %3763 = vmatprep.subr.bf16.mxu0 %v3704
        %3764 = vmatpush1.bf16.msra.mxu0 %v3703
        %3765 = vmatprep.subr.bf16.mxu0 %v3707
        %3766 = vmatpush1.bf16.msra.mxu0 %v3706
        %3767 = vmatprep.subr.bf16.mxu0 %v3710
        %3768 = vmatpush1.bf16.msra.mxu0 %v3709
        %3769 = vmatprep.subr.bf16.mxu0 %v3713
        %3770 = vmatpush1.bf16.msra.mxu0 %v3712
        %3771 = vmatprep.subr.bf16.mxu0 %v3716
        %3772 = vmatpush1.bf16.msra.mxu0 %v3715
        %3773 = vmatprep.subr.bf16.mxu0 %v3752
        %3774 = vmatpush1.bf16.msra.mxu0 %v3749
        %3775 = vmatprep.subr.bf16.mxu0 0
        %3776 = vmatpush1.bf16.msra.mxu0 0
        %3777 = vmatprep.subr.bf16.mxu0 0
        %3778 = vmatpush1.bf16.msra.mxu0 0
        %3779 = vmatprep.subr.bf16.mxu0 0
        %3780 = vmatpush1.bf16.msra.mxu0 0
        %3781 = vmatprep.subr.bf16.mxu0 0
        %3782 = vmatpush1.bf16.msra.mxu0 0
        %3783 = vmatprep.subr.bf16.mxu0 0
        %3784 = vmatpush1.bf16.msra.mxu0 0
        %3785 = vmatprep.subr.bf16.mxu0 0
        %3786 = vmatpush1.bf16.msra.mxu0 0
        %3787 = vmatprep.subr.bf16.mxu0 0
        %3788 = vmatpush1.bf16.msra.mxu0 0
        %3789 = vmatprep.mubr.bf16.mxu0 %v3746
        %3790 = vmatmul.mubr.bf16.gmra.mrb[0].mxu0 %v3565
        %v3791 = vpop.f32.mrb[0].mxu0
        %v3792 = vadd.f32 0.0, %v3791
        %v3793 = vpop.f32.mrb[0].mxu0
        %v3794 = vadd.f32 0.0, %v3793
        %v3795 = vpop.f32.mrb[0].mxu0
        %v3796 = vadd.f32 0.0, %v3795
        %v3797 = vpop.f32.mrb[0].mxu0
        %v3798 = vadd.f32 0.0, %v3797
        %3799 = vdwg.mxu0
        %3800 = vmatprep.subr.bf16.mxu0 0
        %3801 = vmatpush1.bf16.msra.mxu0 %v3696
        %3802 = vmatprep.subr.bf16.mxu0 0
        %3803 = vmatpush1.bf16.msra.mxu0 %v3699
        %3804 = vmatprep.subr.bf16.mxu0 0
        %3805 = vmatpush1.bf16.msra.mxu0 %v3702
        %3806 = vmatprep.subr.bf16.mxu0 0
        %3807 = vmatpush1.bf16.msra.mxu0 %v3705
        %3808 = vmatprep.subr.bf16.mxu0 0
        %3809 = vmatpush1.bf16.msra.mxu0 %v3708
        %3810 = vmatprep.subr.bf16.mxu0 0
        %3811 = vmatpush1.bf16.msra.mxu0 %v3711
        %3812 = vmatprep.subr.bf16.mxu0 0
        %3813 = vmatpush1.bf16.msra.mxu0 %v3714
        %3814 = vmatprep.subr.bf16.mxu0 0
        %3815 = vmatpush1.bf16.msra.mxu0 %v3717
        %3816 = vmatprep.subr.bf16.mxu0 0
        %3817 = vmatpush1.bf16.msra.mxu0 %v3755
        %3818 = vmatprep.subr.bf16.mxu0 0
        %3819 = vmatpush1.bf16.msra.mxu0 0
        %3820 = vmatprep.subr.bf16.mxu0 0
        %3821 = vmatpush1.bf16.msra.mxu0 0
        %3822 = vmatprep.subr.bf16.mxu0 0
        %3823 = vmatpush1.bf16.msra.mxu0 0
        %3824 = vmatprep.subr.bf16.mxu0 0
        %3825 = vmatpush1.bf16.msra.mxu0 0
        %3826 = vmatprep.subr.bf16.mxu0 0
        %3827 = vmatpush1.bf16.msra.mxu0 0
        %3828 = vmatprep.subr.bf16.mxu0 0
        %3829 = vmatpush1.bf16.msra.mxu0 0
        %3830 = vmatprep.subr.bf16.mxu0 0
        %3831 = vmatpush1.bf16.msra.mxu0 0
        %3832 = vmatprep.mubr.bf16.mxu0 %v3746
        %3833 = vmatmul.mubr.bf16.gmra.mrb[0].mxu0 %v3565
        %v3834 = vpop.f32.mrb[0].mxu0
        %v3835 = vadd.f32 0.0, %v3834
        %v3836 = vpop.f32.mrb[0].mxu0
        %v3837 = vpop.f32.mrb[0].mxu0
        %v3838 = vadd.f32 0.0, %v3837
        %v3839 = vpop.f32.mrb[0].mxu0
        %3840 = vdwg.mxu0
        %v3841 = vadd.f32 %v3505, %v3792
        %v3842 = vadd.f32 %v3506, %v3794
        %v3843 = vadd.f32 %v3507, %v3835
        %v3844 = vadd.f32 %v3508, %v3796
        %v3845 = vadd.f32 %v3509, %v3798
        %v3846 = vadd.f32 %v3510, %v3838
        %s3847 = scalar_lea.vmem %s2, 32
        %v3848 = vld [vmem:[%s3847] sm:$0xf]
        %v3849 = vld [vmem:[%s3847 + $0x4] sm:$0x7]
        %v3852 = vunpack.c.l.b16 %v3848
        %v3853 = vunpack.c.l.b16 %v3849
        %v3854 = vpack.c.b16 %v3853, %v3852
        %v3856 = vsel %vm2514, %v3854, 0
        %3858 = vmatprep.subr.bf16.mxu0 %v2523
        %3859 = vmatpush1.bf16.msra.mxu0 %v2520
        %3860 = vmatprep.subr.bf16.mxu0 0
        %3861 = vmatpush1.bf16.msra.mxu0 0
        %3862 = vmatprep.subr.bf16.mxu0 0
        %3863 = vmatpush1.bf16.msra.mxu0 0
        %3864 = vmatprep.subr.bf16.mxu0 0
        %3865 = vmatpush1.bf16.msra.mxu0 0
        %3866 = vmatprep.subr.bf16.mxu0 0
        %3867 = vmatpush1.bf16.msra.mxu0 0
        %3868 = vmatprep.subr.bf16.mxu0 0
        %3869 = vmatpush1.bf16.msra.mxu0 0
        %3870 = vmatprep.subr.bf16.mxu0 0
        %3871 = vmatpush1.bf16.msra.mxu0 0
        %3872 = vmatprep.subr.bf16.mxu0 0
        %3873 = vmatpush1.bf16.msra.mxu0 0
        %3874 = vmatprep.subr.bf16.mxu0 0
        %3875 = vmatpush1.bf16.msra.mxu0 0
        %3876 = vmatprep.subr.bf16.mxu0 0
        %3877 = vmatpush1.bf16.msra.mxu0 0
        %3878 = vmatprep.subr.bf16.mxu0 0
        %3879 = vmatpush1.bf16.msra.mxu0 0
        %3880 = vmatprep.subr.bf16.mxu0 0
        %3881 = vmatpush1.bf16.msra.mxu0 0
        %3882 = vmatprep.subr.bf16.mxu0 0
        %3883 = vmatpush1.bf16.msra.mxu0 0
        %3884 = vmatprep.subr.bf16.mxu0 0
        %3885 = vmatpush1.bf16.msra.mxu0 0
        %3886 = vmatprep.subr.bf16.mxu0 0
        %3887 = vmatpush1.bf16.msra.mxu0 0
        %3888 = vmatprep.subr.bf16.mxu0 0
        %3889 = vmatpush1.bf16.msra.mxu0 0
        %3890 = vmatprep.mubr.bf16.mxu0 0
        %3891 = vmatmul.mubr.bf16.gmra.mrb[0].mxu0 %v3856
        %v3892 = vpop.f32.mrb[0].mxu0
        %v3893 = vadd.f32 0.0, %v3892
        %v3894 = vpop.f32.mrb[0].mxu0
        %v3895 = vadd.f32 0.0, %v3894
        %v3896 = vpop.f32.mrb[0].mxu0
        %v3897 = vadd.f32 0.0, %v3896
        %v3898 = vpop.f32.mrb[0].mxu0
        %v3899 = vadd.f32 0.0, %v3898
        %3900 = vdwg.mxu0
        %v3901 = vpack.c.bf16 %v3897, %v3893
        %v3902 = vpack.c.bf16 %v3899, %v3895
        %s3903 = scalar_lea.vmem %s7, 864
        %v3904 = vld [vmem:[%s3903] sm:$0xff]
        %v3905 = vld [vmem:[%s3903 + $0x8] sm:$0xf]
        %v3906 = vld [vmem:[%s3903 + $0xc] sm:$0xff]
        %v3907 = vld [vmem:[%s3903 + $0x14] sm:$0xf]
        %v3908 = vld [vmem:[%s3903 + $0x18] sm:$0xff]
        %v3909 = vld [vmem:[%s3903 + $0x20] sm:$0xf]
        %v3910 = vld [vmem:[%s3903 + $0x24] sm:$0xff]
        %v3911 = vld [vmem:[%s3903 + $0x2c] sm:$0xf]
        %v3912 = vld [vmem:[%s3903 + $0x30] sm:$0xff]
        %v3913 = vld [vmem:[%s3903 + $0x38] sm:$0xf]
        %v3914 = vld [vmem:[%s3903 + $0x3c] sm:$0xff]
        %v3915 = vld [vmem:[%s3903 + $0x44] sm:$0xf]
        %v3916 = vld [vmem:[%s3903 + $0x48] sm:$0xff]
        %v3917 = vld [vmem:[%s3903 + $0x50] sm:$0xf]
        %v3918 = vld [vmem:[%s3903 + $0x54] sm:$0xff]
        %v3919 = vld [vmem:[%s3903 + $0x5c] sm:$0xf]
        %v3920 = vld [vmem:[%s3903 + $0x60] sm:$0xff]
        %v3921 = vld [vmem:[%s3903 + $0x68] sm:$0xf]
        %v3922 = vld [vmem:[%s3903 + $0x6c] sm:$0xff]
        %v3923 = vld [vmem:[%s3903 + $0x74] sm:$0xf]
        %v3924 = vld [vmem:[%s3903 + $0x78] sm:$0xff]
        %v3925 = vld [vmem:[%s3903 + $0x80] sm:$0xf]
        %v3926 = vld [vmem:[%s3903 + $0x84] sm:$0xff]
        %v3927 = vld [vmem:[%s3903 + $0x8c] sm:$0xf]
        %v3928 = vld [vmem:[%s3903 + $0x90] sm:$0xff]
        %v3929 = vld [vmem:[%s3903 + $0x98] sm:$0xf]
        %v3930 = vld [vmem:[%s3903 + $0x9c] sm:$0xff]
        %v3931 = vld [vmem:[%s3903 + $0xa4] sm:$0xf]
        %v3932 = vld [vmem:[%s3903 + $0xa8] sm:$0xff]
        %v3933 = vld [vmem:[%s3903 + $0xb0] sm:$0xf]
        %v3934 = vld [vmem:[%s3903 + $0xb4] sm:$0xff]
        %v3935 = vld [vmem:[%s3903 + $0xbc] sm:$0xf]
        %v3936 = vld [vmem:[%s3903 + $0xc0] sm:$0xff]
        %v3937 = vld [vmem:[%s3903 + $0xc8] sm:$0xf]
        %v3938 = vld [vmem:[%s3903 + $0xcc] sm:$0x33]
        %v3939 = vld [vmem:[%s3903 + $0xd4] sm:$0x3]
        %v3976 = vunpack.c.l.b16 %v3904
        %v3977 = vunpack.c.h.b16 %v3904
        %v3978 = vunpack.c.l.b16 %v3905
        %v3979 = vunpack.c.l.b16 %v3906
        %v3980 = vunpack.c.h.b16 %v3906
        %v3981 = vunpack.c.l.b16 %v3907
        %v3982 = vunpack.c.l.b16 %v3908
        %v3983 = vunpack.c.h.b16 %v3908
        %v3984 = vunpack.c.l.b16 %v3909
        %v3985 = vunpack.c.l.b16 %v3910
        %v3986 = vunpack.c.h.b16 %v3910
        %v3987 = vunpack.c.l.b16 %v3911
        %v3988 = vunpack.c.l.b16 %v3912
        %v3989 = vunpack.c.h.b16 %v3912
        %v3990 = vunpack.c.l.b16 %v3913
        %v3991 = vunpack.c.l.b16 %v3914
        %v3992 = vunpack.c.h.b16 %v3914
        %v3993 = vunpack.c.l.b16 %v3915
        %v3994 = vunpack.c.l.b16 %v3916
        %v3995 = vunpack.c.h.b16 %v3916
        %v3996 = vunpack.c.l.b16 %v3917
        %v3997 = vunpack.c.l.b16 %v3918
        %v3998 = vunpack.c.h.b16 %v3918
        %v3999 = vunpack.c.l.b16 %v3919
        %v4000 = vunpack.c.l.b16 %v3920
        %v4001 = vunpack.c.h.b16 %v3920
        %v4002 = vunpack.c.l.b16 %v3921
        %v4003 = vunpack.c.l.b16 %v3922
        %v4004 = vunpack.c.h.b16 %v3922
        %v4005 = vunpack.c.l.b16 %v3923
        %v4006 = vunpack.c.l.b16 %v3924
        %v4007 = vunpack.c.h.b16 %v3924
        %v4008 = vunpack.c.l.b16 %v3925
        %v4009 = vunpack.c.l.b16 %v3926
        %v4010 = vunpack.c.h.b16 %v3926
        %v4011 = vunpack.c.l.b16 %v3927
        %v4012 = vunpack.c.l.b16 %v3928
        %v4013 = vunpack.c.h.b16 %v3928
        %v4014 = vunpack.c.l.b16 %v3929
        %v4015 = vunpack.c.l.b16 %v3930
        %v4016 = vunpack.c.h.b16 %v3930
        %v4017 = vunpack.c.l.b16 %v3931
        %v4018 = vunpack.c.l.b16 %v3932
        %v4019 = vunpack.c.h.b16 %v3932
        %v4020 = vunpack.c.l.b16 %v3933
        %v4021 = vunpack.c.l.b16 %v3934
        %v4022 = vunpack.c.h.b16 %v3934
        %v4023 = vunpack.c.l.b16 %v3935
        %v4024 = vunpack.c.l.b16 %v3936
        %v4025 = vunpack.c.h.b16 %v3936
        %v4026 = vunpack.c.l.b16 %v3937
        %v4027 = vunpack.c.l.b16 %v3938
        %v4028 = vunpack.c.h.b16 %v3938
        %v4029 = vunpack.c.l.b16 %v3939
        %v4030 = vpack.c.b16 %v3979, %v3976
        %v4031 = vpack.c.b16 %v3980, %v3977
        %v4032 = vpack.c.b16 %v3981, %v3978
        %v4033 = vpack.c.b16 %v3985, %v3982
        %v4034 = vpack.c.b16 %v3986, %v3983
        %v4035 = vpack.c.b16 %v3987, %v3984
        %v4036 = vpack.c.b16 %v3991, %v3988
        %v4037 = vpack.c.b16 %v3992, %v3989
        %v4038 = vpack.c.b16 %v3993, %v3990
        %v4039 = vpack.c.b16 %v3997, %v3994
        %v4040 = vpack.c.b16 %v3998, %v3995
        %v4041 = vpack.c.b16 %v3999, %v3996
        %v4042 = vpack.c.b16 %v4003, %v4000
        %v4043 = vpack.c.b16 %v4004, %v4001
        %v4044 = vpack.c.b16 %v4005, %v4002
        %v4045 = vpack.c.b16 %v4009, %v4006
        %v4046 = vpack.c.b16 %v4010, %v4007
        %v4047 = vpack.c.b16 %v4011, %v4008
        %v4048 = vpack.c.b16 %v4015, %v4012
        %v4049 = vpack.c.b16 %v4016, %v4013
        %v4050 = vpack.c.b16 %v4017, %v4014
        %v4051 = vpack.c.b16 %v4021, %v4018
        %v4052 = vpack.c.b16 %v4022, %v4019
        %v4053 = vpack.c.b16 %v4023, %v4020
        %v4054 = vpack.c.b16 %v4027, %v4024
        %v4055 = vpack.c.b16 %v4028, %v4025
        %v4056 = vpack.c.b16 %v4029, %v4026
        %v4082 = vsel %vm2840, %v3902, 0
        %v4085 = vsel %vm2844, %v4054, 0
        %v4088 = vsel %vm2844, %v4055, 0
        %v4091 = vsel %vm2844, %v4056, 0
        %4093 = vmatprep.subr.bf16.mxu0 %v4031
        %4094 = vmatpush1.bf16.msra.mxu0 %v4030
        %4095 = vmatprep.subr.bf16.mxu0 %v4034
        %4096 = vmatpush1.bf16.msra.mxu0 %v4033
        %4097 = vmatprep.subr.bf16.mxu0 %v4037
        %4098 = vmatpush1.bf16.msra.mxu0 %v4036
        %4099 = vmatprep.subr.bf16.mxu0 %v4040
        %4100 = vmatpush1.bf16.msra.mxu0 %v4039
        %4101 = vmatprep.subr.bf16.mxu0 %v4043
        %4102 = vmatpush1.bf16.msra.mxu0 %v4042
        %4103 = vmatprep.subr.bf16.mxu0 %v4046
        %4104 = vmatpush1.bf16.msra.mxu0 %v4045
        %4105 = vmatprep.subr.bf16.mxu0 %v4049
        %4106 = vmatpush1.bf16.msra.mxu0 %v4048
        %4107 = vmatprep.subr.bf16.mxu0 %v4052
        %4108 = vmatpush1.bf16.msra.mxu0 %v4051
        %4109 = vmatprep.subr.bf16.mxu0 %v4088
        %4110 = vmatpush1.bf16.msra.mxu0 %v4085
        %4111 = vmatprep.subr.bf16.mxu0 0
        %4112 = vmatpush1.bf16.msra.mxu0 0
        %4113 = vmatprep.subr.bf16.mxu0 0
        %4114 = vmatpush1.bf16.msra.mxu0 0
        %4115 = vmatprep.subr.bf16.mxu0 0
        %4116 = vmatpush1.bf16.msra.mxu0 0
        %4117 = vmatprep.subr.bf16.mxu0 0
        %4118 = vmatpush1.bf16.msra.mxu0 0
        %4119 = vmatprep.subr.bf16.mxu0 0
        %4120 = vmatpush1.bf16.msra.mxu0 0
        %4121 = vmatprep.subr.bf16.mxu0 0
        %4122 = vmatpush1.bf16.msra.mxu0 0
        %4123 = vmatprep.subr.bf16.mxu0 0
        %4124 = vmatpush1.bf16.msra.mxu0 0
        %4125 = vmatprep.mubr.bf16.mxu0 %v4082
        %4126 = vmatmul.mubr.bf16.gmra.mrb[0].mxu0 %v3901
        %v4127 = vpop.f32.mrb[0].mxu0
        %v4128 = vadd.f32 0.0, %v4127
        %v4129 = vpop.f32.mrb[0].mxu0
        %v4130 = vadd.f32 0.0, %v4129
        %v4131 = vpop.f32.mrb[0].mxu0
        %v4132 = vadd.f32 0.0, %v4131
        %v4133 = vpop.f32.mrb[0].mxu0
        %v4134 = vadd.f32 0.0, %v4133
        %4135 = vdwg.mxu0
        %4136 = vmatprep.subr.bf16.mxu0 0
        %4137 = vmatpush1.bf16.msra.mxu0 %v4032
        %4138 = vmatprep.subr.bf16.mxu0 0
        %4139 = vmatpush1.bf16.msra.mxu0 %v4035
        %4140 = vmatprep.subr.bf16.mxu0 0
        %4141 = vmatpush1.bf16.msra.mxu0 %v4038
        %4142 = vmatprep.subr.bf16.mxu0 0
        %4143 = vmatpush1.bf16.msra.mxu0 %v4041
        %4144 = vmatprep.subr.bf16.mxu0 0
        %4145 = vmatpush1.bf16.msra.mxu0 %v4044
        %4146 = vmatprep.subr.bf16.mxu0 0
        %4147 = vmatpush1.bf16.msra.mxu0 %v4047
        %4148 = vmatprep.subr.bf16.mxu0 0
        %4149 = vmatpush1.bf16.msra.mxu0 %v4050
        %4150 = vmatprep.subr.bf16.mxu0 0
        %4151 = vmatpush1.bf16.msra.mxu0 %v4053
        %4152 = vmatprep.subr.bf16.mxu0 0
        %4153 = vmatpush1.bf16.msra.mxu0 %v4091
        %4154 = vmatprep.subr.bf16.mxu0 0
        %4155 = vmatpush1.bf16.msra.mxu0 0
        %4156 = vmatprep.subr.bf16.mxu0 0
        %4157 = vmatpush1.bf16.msra.mxu0 0
        %4158 = vmatprep.subr.bf16.mxu0 0
        %4159 = vmatpush1.bf16.msra.mxu0 0
        %4160 = vmatprep.subr.bf16.mxu0 0
        %4161 = vmatpush1.bf16.msra.mxu0 0
        %4162 = vmatprep.subr.bf16.mxu0 0
        %4163 = vmatpush1.bf16.msra.mxu0 0
        %4164 = vmatprep.subr.bf16.mxu0 0
        %4165 = vmatpush1.bf16.msra.mxu0 0
        %4166 = vmatprep.subr.bf16.mxu0 0
        %4167 = vmatpush1.bf16.msra.mxu0 0
        %4168 = vmatprep.mubr.bf16.mxu0 %v4082
        %4169 = vmatmul.mubr.bf16.gmra.mrb[0].mxu0 %v3901
        %v4170 = vpop.f32.mrb[0].mxu0
        %v4171 = vadd.f32 0.0, %v4170
        %v4172 = vpop.f32.mrb[0].mxu0
        %v4173 = vpop.f32.mrb[0].mxu0
        %v4174 = vadd.f32 0.0, %v4173
        %v4175 = vpop.f32.mrb[0].mxu0
        %4176 = vdwg.mxu0
        %v4177 = vadd.f32 %v3841, %v4128
        %v4178 = vadd.f32 %v3842, %v4130
        %v4179 = vadd.f32 %v3843, %v4171
        %v4180 = vadd.f32 %v3844, %v4132
        %v4181 = vadd.f32 %v3845, %v4134
        %v4182 = vadd.f32 %v3846, %v4174
        %v4183 = vld [vmem:[%s8] sm:$0x7]
        %v4185 = vlaneseq
        %v4186 = vshrl.u32 %v4185, 7
        %v4187 = vsub.s32 0, %v4186
        %v4188 = vrot.slane %v4183, %v4187
        %v4189 = vlaneseq
        %v4190 = vshrl.u32 %v4189, 7
        %v4191 = vsub.s32 1, %v4190
        %v4192 = vrot.slane %v4183, %v4191
        %v4193 = vlaneseq
        %v4194 = vshrl.u32 %v4193, 7
        %v4195 = vsub.s32 2, %v4194
        %v4196 = vrot.slane %v4183, %v4195
        %v4200 = vadd.f32 %v4177, %v4188
        %v4201 = vadd.f32 %v4178, %v4192
        %v4202 = vadd.f32 %v4179, %v4196
        %v4203 = vadd.f32 %v4180, %v4188
        %v4204 = vadd.f32 %v4181, %v4192
        %v4205 = vadd.f32 %v4182, %v4196
        %v4206 = vmax.f32 %v4200, 0.0
        %v4207 = vmax.f32 %v4201, 0.0
        %v4208 = vmax.f32 %v4202, 0.0
        %v4209 = vmax.f32 %v4203, 0.0
        %v4210 = vmax.f32 %v4204, 0.0
        %v4211 = vmax.f32 %v4205, 0.0
        %v4212 = vpack.c.bf16 %v4209, %v4206
        %v4213 = vpack.c.bf16 %v4210, %v4207
        %v4214 = vpack.c.bf16 %v4211, %v4208
        %v4215 = vld [vmem:[%s3] sm:$0x7]
        %v4217 = vsel %vm2514, %v4215, 0
        %v4220 = vsel %vm2518, %v4212, 0
        %v4223 = vsel %vm2518, %v4213, 0
        %v4226 = vsel %vm2518, %v4214, 0
        %4228 = vmatprep.subr.bf16.mxu0 %v4223
        %4229 = vmatpush1.bf16.msra.mxu0 %v4220
        %4230 = vmatprep.subr.bf16.mxu0 0
        %4231 = vmatpush1.bf16.msra.mxu0 0
        %4232 = vmatprep.subr.bf16.mxu0 0
        %4233 = vmatpush1.bf16.msra.mxu0 0
        %4234 = vmatprep.subr.bf16.mxu0 0
        %4235 = vmatpush1.bf16.msra.mxu0 0
        %4236 = vmatprep.subr.bf16.mxu0 0
        %4237 = vmatpush1.bf16.msra.mxu0 0
        %4238 = vmatprep.subr.bf16.mxu0 0
        %4239 = vmatpush1.bf16.msra.mxu0 0
        %4240 = vmatprep.subr.bf16.mxu0 0
        %4241 = vmatpush1.bf16.msra.mxu0 0
        %4242 = vmatprep.subr.bf16.mxu0 0
        %4243 = vmatpush1.bf16.msra.mxu0 0
        %4244 = vmatprep.subr.bf16.mxu0 0
        %4245 = vmatpush1.bf16.msra.mxu0 0
        %4246 = vmatprep.subr.bf16.mxu0 0
        %4247 = vmatpush1.bf16.msra.mxu0 0
        %4248 = vmatprep.subr.bf16.mxu0 0
        %4249 = vmatpush1.bf16.msra.mxu0 0
        %4250 = vmatprep.subr.bf16.mxu0 0
        %4251 = vmatpush1.bf16.msra.mxu0 0
        %4252 = vmatprep.subr.bf16.mxu0 0
        %4253 = vmatpush1.bf16.msra.mxu0 0
        %4254 = vmatprep.subr.bf16.mxu0 0
        %4255 = vmatpush1.bf16.msra.mxu0 0
        %4256 = vmatprep.subr.bf16.mxu0 0
        %4257 = vmatpush1.bf16.msra.mxu0 0
        %4258 = vmatprep.subr.bf16.mxu0 0
        %4259 = vmatpush1.bf16.msra.mxu0 0
        %4260 = vmatprep.mubr.bf16.mxu0 0
        %4261 = vmatmul.mubr.bf16.gmra.mrb[0].mxu0 %v4217
        %v4262 = vpop.f32.mrb[0].mxu0
        %v4263 = vadd.f32 0.0, %v4262
        %v4264 = vpop.f32.mrb[0].mxu0
        %v4265 = vadd.f32 0.0, %v4264
        %v4266 = vpop.f32.mrb[0].mxu0
        %v4267 = vpop.f32.mrb[0].mxu0
        %4268 = vdwg.mxu0
        %4269 = vmatprep.subr.bf16.mxu0 0
        %4270 = vmatpush1.bf16.msra.mxu0 %v4226
        %4271 = vmatprep.subr.bf16.mxu0 0
        %4272 = vmatpush1.bf16.msra.mxu0 0
        %4273 = vmatprep.subr.bf16.mxu0 0
        %4274 = vmatpush1.bf16.msra.mxu0 0
        %4275 = vmatprep.subr.bf16.mxu0 0
        %4276 = vmatpush1.bf16.msra.mxu0 0
        %4277 = vmatprep.subr.bf16.mxu0 0
        %4278 = vmatpush1.bf16.msra.mxu0 0
        %4279 = vmatprep.subr.bf16.mxu0 0
        %4280 = vmatpush1.bf16.msra.mxu0 0
        %4281 = vmatprep.subr.bf16.mxu0 0
        %4282 = vmatpush1.bf16.msra.mxu0 0
        %4283 = vmatprep.subr.bf16.mxu0 0
        %4284 = vmatpush1.bf16.msra.mxu0 0
        %4285 = vmatprep.subr.bf16.mxu0 0
        %4286 = vmatpush1.bf16.msra.mxu0 0
        %4287 = vmatprep.subr.bf16.mxu0 0
        %4288 = vmatpush1.bf16.msra.mxu0 0
        %4289 = vmatprep.subr.bf16.mxu0 0
        %4290 = vmatpush1.bf16.msra.mxu0 0
        %4291 = vmatprep.subr.bf16.mxu0 0
        %4292 = vmatpush1.bf16.msra.mxu0 0
        %4293 = vmatprep.subr.bf16.mxu0 0
        %4294 = vmatpush1.bf16.msra.mxu0 0
        %4295 = vmatprep.subr.bf16.mxu0 0
        %4296 = vmatpush1.bf16.msra.mxu0 0
        %4297 = vmatprep.subr.bf16.mxu0 0
        %4298 = vmatpush1.bf16.msra.mxu0 0
        %4299 = vmatprep.subr.bf16.mxu0 0
        %4300 = vmatpush1.bf16.msra.mxu0 0
        %4301 = vmatprep.mubr.bf16.mxu0 0
        %4302 = vmatmul.mubr.bf16.gmra.mrb[0].mxu0 %v4217
        %v4303 = vpop.f32.mrb[0].mxu0
        %v4304 = vadd.f32 0.0, %v4303
        %v4305 = vpop.f32.mrb[0].mxu0
        %v4306 = vpop.f32.mrb[0].mxu0
        %v4307 = vpop.f32.mrb[0].mxu0
        %4308 = vdwg.mxu0
        %v4309 = vpack.c.bf16 %v4263, %v4263
        %v4310 = vpack.c.bf16 %v4265, %v4265
        %v4311 = vpack.c.bf16 %v4304, %v4304
        %s4312 = scalar_lea.vmem %s3, 4
        %v4313 = vld [vmem:[%s4312] sm:$0x7]
        %v4315 = vsel %vm2514, %v4313, 0
        %4317 = vmatprep.subr.bf16.mxu0 %v4223
        %4318 = vmatpush1.bf16.msra.mxu0 %v4220
        %4319 = vmatprep.subr.bf16.mxu0 0
        %4320 = vmatpush1.bf16.msra.mxu0 0
        %4321 = vmatprep.subr.bf16.mxu0 0
        %4322 = vmatpush1.bf16.msra.mxu0 0
        %4323 = vmatprep.subr.bf16.mxu0 0
        %4324 = vmatpush1.bf16.msra.mxu0 0
        %4325 = vmatprep.subr.bf16.mxu0 0
        %4326 = vmatpush1.bf16.msra.mxu0 0
        %4327 = vmatprep.subr.bf16.mxu0 0
        %4328 = vmatpush1.bf16.msra.mxu0 0
        %4329 = vmatprep.subr.bf16.mxu0 0
        %4330 = vmatpush1.bf16.msra.mxu0 0
        %4331 = vmatprep.subr.bf16.mxu0 0
        %4332 = vmatpush1.bf16.msra.mxu0 0
        %4333 = vmatprep.subr.bf16.mxu0 0
        %4334 = vmatpush1.bf16.msra.mxu0 0
        %4335 = vmatprep.subr.bf16.mxu0 0
        %4336 = vmatpush1.bf16.msra.mxu0 0
        %4337 = vmatprep.subr.bf16.mxu0 0
        %4338 = vmatpush1.bf16.msra.mxu0 0
        %4339 = vmatprep.subr.bf16.mxu0 0
        %4340 = vmatpush1.bf16.msra.mxu0 0
        %4341 = vmatprep.subr.bf16.mxu0 0
        %4342 = vmatpush1.bf16.msra.mxu0 0
        %4343 = vmatprep.subr.bf16.mxu0 0
        %4344 = vmatpush1.bf16.msra.mxu0 0
        %4345 = vmatprep.subr.bf16.mxu0 0
        %4346 = vmatpush1.bf16.msra.mxu0 0
        %4347 = vmatprep.subr.bf16.mxu0 0
        %4348 = vmatpush1.bf16.msra.mxu0 0
        %4349 = vmatprep.mubr.bf16.mxu0 0
        %4350 = vmatmul.mubr.bf16.gmra.mrb[0].mxu0 %v4315
        %v4351 = vpop.f32.mrb[0].mxu0
        %v4352 = vadd.f32 0.0, %v4351
        %v4353 = vpop.f32.mrb[0].mxu0
        %v4354 = vadd.f32 0.0, %v4353
        %v4355 = vpop.f32.mrb[0].mxu0
        %v4356 = vpop.f32.mrb[0].mxu0
        %4357 = vdwg.mxu0
        %4358 = vmatprep.subr.bf16.mxu0 0
        %4359 = vmatpush1.bf16.msra.mxu0 %v4226
        %4360 = vmatprep.subr.bf16.mxu0 0
        %4361 = vmatpush1.bf16.msra.mxu0 0
        %4362 = vmatprep.subr.bf16.mxu0 0
        %4363 = vmatpush1.bf16.msra.mxu0 0
        %4364 = vmatprep.subr.bf16.mxu0 0
        %4365 = vmatpush1.bf16.msra.mxu0 0
        %4366 = vmatprep.subr.bf16.mxu0 0
        %4367 = vmatpush1.bf16.msra.mxu0 0
        %4368 = vmatprep.subr.bf16.mxu0 0
        %4369 = vmatpush1.bf16.msra.mxu0 0
        %4370 = vmatprep.subr.bf16.mxu0 0
        %4371 = vmatpush1.bf16.msra.mxu0 0
        %4372 = vmatprep.subr.bf16.mxu0 0
        %4373 = vmatpush1.bf16.msra.mxu0 0
        %4374 = vmatprep.subr.bf16.mxu0 0
        %4375 = vmatpush1.bf16.msra.mxu0 0
        %4376 = vmatprep.subr.bf16.mxu0 0
        %4377 = vmatpush1.bf16.msra.mxu0 0
        %4378 = vmatprep.subr.bf16.mxu0 0
        %4379 = vmatpush1.bf16.msra.mxu0 0
        %4380 = vmatprep.subr.bf16.mxu0 0
        %4381 = vmatpush1.bf16.msra.mxu0 0
        %4382 = vmatprep.subr.bf16.mxu0 0
        %4383 = vmatpush1.bf16.msra.mxu0 0
        %4384 = vmatprep.subr.bf16.mxu0 0
        %4385 = vmatpush1.bf16.msra.mxu0 0
        %4386 = vmatprep.subr.bf16.mxu0 0
        %4387 = vmatpush1.bf16.msra.mxu0 0
        %4388 = vmatprep.subr.bf16.mxu0 0
        %4389 = vmatpush1.bf16.msra.mxu0 0
        %4390 = vmatprep.mubr.bf16.mxu0 0
        %4391 = vmatmul.mubr.bf16.gmra.mrb[0].mxu0 %v4315
        %v4392 = vpop.f32.mrb[0].mxu0
        %v4393 = vadd.f32 0.0, %v4392
        %v4394 = vpop.f32.mrb[0].mxu0
        %v4395 = vpop.f32.mrb[0].mxu0
        %v4396 = vpop.f32.mrb[0].mxu0
        %4397 = vdwg.mxu0
        %v4398 = vpack.c.bf16 %v4352, %v4352
        %v4399 = vpack.c.bf16 %v4354, %v4354
        %v4400 = vpack.c.bf16 %v4393, %v4393
        %s4401 = scalar_lea.vmem %s3, 8
        %v4402 = vld [vmem:[%s4401] sm:$0x7]
        %v4404 = vsel %vm2514, %v4402, 0
        %4406 = vmatprep.subr.bf16.mxu0 %v4223
        %4407 = vmatpush1.bf16.msra.mxu0 %v4220
        %4408 = vmatprep.subr.bf16.mxu0 0
        %4409 = vmatpush1.bf16.msra.mxu0 0
        %4410 = vmatprep.subr.bf16.mxu0 0
        %4411 = vmatpush1.bf16.msra.mxu0 0
        %4412 = vmatprep.subr.bf16.mxu0 0
        %4413 = vmatpush1.bf16.msra.mxu0 0
        %4414 = vmatprep.subr.bf16.mxu0 0
        %4415 = vmatpush1.bf16.msra.mxu0 0
        %4416 = vmatprep.subr.bf16.mxu0 0
        %4417 = vmatpush1.bf16.msra.mxu0 0
        %4418 = vmatprep.subr.bf16.mxu0 0
        %4419 = vmatpush1.bf16.msra.mxu0 0
        %4420 = vmatprep.subr.bf16.mxu0 0
        %4421 = vmatpush1.bf16.msra.mxu0 0
        %4422 = vmatprep.subr.bf16.mxu0 0
        %4423 = vmatpush1.bf16.msra.mxu0 0
        %4424 = vmatprep.subr.bf16.mxu0 0
        %4425 = vmatpush1.bf16.msra.mxu0 0
        %4426 = vmatprep.subr.bf16.mxu0 0
        %4427 = vmatpush1.bf16.msra.mxu0 0
        %4428 = vmatprep.subr.bf16.mxu0 0
        %4429 = vmatpush1.bf16.msra.mxu0 0
        %4430 = vmatprep.subr.bf16.mxu0 0
        %4431 = vmatpush1.bf16.msra.mxu0 0
        %4432 = vmatprep.subr.bf16.mxu0 0
        %4433 = vmatpush1.bf16.msra.mxu0 0
        %4434 = vmatprep.subr.bf16.mxu0 0
        %4435 = vmatpush1.bf16.msra.mxu0 0
        %4436 = vmatprep.subr.bf16.mxu0 0
        %4437 = vmatpush1.bf16.msra.mxu0 0
        %4438 = vmatprep.mubr.bf16.mxu0 0
        %4439 = vmatmul.mubr.bf16.gmra.mrb[0].mxu0 %v4404
        %v4440 = vpop.f32.mrb[0].mxu0
        %v4441 = vadd.f32 0.0, %v4440
        %v4442 = vpop.f32.mrb[0].mxu0
        %v4443 = vadd.f32 0.0, %v4442
        %v4444 = vpop.f32.mrb[0].mxu0
        %v4445 = vpop.f32.mrb[0].mxu0
        %4446 = vdwg.mxu0
        %4447 = vmatprep.subr.bf16.mxu0 0
        %4448 = vmatpush1.bf16.msra.mxu0 %v4226
        %4449 = vmatprep.subr.bf16.mxu0 0
        %4450 = vmatpush1.bf16.msra.mxu0 0
        %4451 = vmatprep.subr.bf16.mxu0 0
        %4452 = vmatpush1.bf16.msra.mxu0 0
        %4453 = vmatprep.subr.bf16.mxu0 0
        %4454 = vmatpush1.bf16.msra.mxu0 0
        %4455 = vmatprep.subr.bf16.mxu0 0
        %4456 = vmatpush1.bf16.msra.mxu0 0
        %4457 = vmatprep.subr.bf16.mxu0 0
        %4458 = vmatpush1.bf16.msra.mxu0 0
        %4459 = vmatprep.subr.bf16.mxu0 0
        %4460 = vmatpush1.bf16.msra.mxu0 0
        %4461 = vmatprep.subr.bf16.mxu0 0
        %4462 = vmatpush1.bf16.msra.mxu0 0
        %4463 = vmatprep.subr.bf16.mxu0 0
        %4464 = vmatpush1.bf16.msra.mxu0 0
        %4465 = vmatprep.subr.bf16.mxu0 0
        %4466 = vmatpush1.bf16.msra.mxu0 0
        %4467 = vmatprep.subr.bf16.mxu0 0
        %4468 = vmatpush1.bf16.msra.mxu0 0
        %4469 = vmatprep.subr.bf16.mxu0 0
        %4470 = vmatpush1.bf16.msra.mxu0 0
        %4471 = vmatprep.subr.bf16.mxu0 0
        %4472 = vmatpush1.bf16.msra.mxu0 0
        %4473 = vmatprep.subr.bf16.mxu0 0
        %4474 = vmatpush1.bf16.msra.mxu0 0
        %4475 = vmatprep.subr.bf16.mxu0 0
        %4476 = vmatpush1.bf16.msra.mxu0 0
        %4477 = vmatprep.subr.bf16.mxu0 0
        %4478 = vmatpush1.bf16.msra.mxu0 0
        %4479 = vmatprep.mubr.bf16.mxu0 0
        %4480 = vmatmul.mubr.bf16.gmra.mrb[0].mxu0 %v4404
        %v4481 = vpop.f32.mrb[0].mxu0
        %v4482 = vadd.f32 0.0, %v4481
        %v4483 = vpop.f32.mrb[0].mxu0
        %v4484 = vpop.f32.mrb[0].mxu0
        %v4485 = vpop.f32.mrb[0].mxu0
        %4486 = vdwg.mxu0
        %v4487 = vpack.c.bf16 %v4441, %v4441
        %v4488 = vpack.c.bf16 %v4443, %v4443
        %v4489 = vpack.c.bf16 %v4482, %v4482
        %s4490 = scalar_lea.vmem %s3, 12
        %v4491 = vld [vmem:[%s4490] sm:$0x7]
        %v4493 = vsel %vm2514, %v4491, 0
        %4495 = vmatprep.subr.bf16.mxu0 %v4223
        %4496 = vmatpush1.bf16.msra.mxu0 %v4220
        %4497 = vmatprep.subr.bf16.mxu0 0
        %4498 = vmatpush1.bf16.msra.mxu0 0
        %4499 = vmatprep.subr.bf16.mxu0 0
        %4500 = vmatpush1.bf16.msra.mxu0 0
        %4501 = vmatprep.subr.bf16.mxu0 0
        %4502 = vmatpush1.bf16.msra.mxu0 0
        %4503 = vmatprep.subr.bf16.mxu0 0
        %4504 = vmatpush1.bf16.msra.mxu0 0
        %4505 = vmatprep.subr.bf16.mxu0 0
        %4506 = vmatpush1.bf16.msra.mxu0 0
        %4507 = vmatprep.subr.bf16.mxu0 0
        %4508 = vmatpush1.bf16.msra.mxu0 0
        %4509 = vmatprep.subr.bf16.mxu0 0
        %4510 = vmatpush1.bf16.msra.mxu0 0
        %4511 = vmatprep.subr.bf16.mxu0 0
        %4512 = vmatpush1.bf16.msra.mxu0 0
        %4513 = vmatprep.subr.bf16.mxu0 0
        %4514 = vmatpush1.bf16.msra.mxu0 0
        %4515 = vmatprep.subr.bf16.mxu0 0
        %4516 = vmatpush1.bf16.msra.mxu0 0
        %4517 = vmatprep.subr.bf16.mxu0 0
        %4518 = vmatpush1.bf16.msra.mxu0 0
        %4519 = vmatprep.subr.bf16.mxu0 0
        %4520 = vmatpush1.bf16.msra.mxu0 0
        %4521 = vmatprep.subr.bf16.mxu0 0
        %4522 = vmatpush1.bf16.msra.mxu0 0
        %4523 = vmatprep.subr.bf16.mxu0 0
        %4524 = vmatpush1.bf16.msra.mxu0 0
        %4525 = vmatprep.subr.bf16.mxu0 0
        %4526 = vmatpush1.bf16.msra.mxu0 0
        %4527 = vmatprep.mubr.bf16.mxu0 0
        %4528 = vmatmul.mubr.bf16.gmra.mrb[0].mxu0 %v4493
        %v4529 = vpop.f32.mrb[0].mxu0
        %v4530 = vadd.f32 0.0, %v4529
        %v4531 = vpop.f32.mrb[0].mxu0
        %v4532 = vadd.f32 0.0, %v4531
        %v4533 = vpop.f32.mrb[0].mxu0
        %v4534 = vpop.f32.mrb[0].mxu0
        %4535 = vdwg.mxu0
        %4536 = vmatprep.subr.bf16.mxu0 0
        %4537 = vmatpush1.bf16.msra.mxu0 %v4226
        %4538 = vmatprep.subr.bf16.mxu0 0
        %4539 = vmatpush1.bf16.msra.mxu0 0
        %4540 = vmatprep.subr.bf16.mxu0 0
        %4541 = vmatpush1.bf16.msra.mxu0 0
        %4542 = vmatprep.subr.bf16.mxu0 0
        %4543 = vmatpush1.bf16.msra.mxu0 0
        %4544 = vmatprep.subr.bf16.mxu0 0
        %4545 = vmatpush1.bf16.msra.mxu0 0
        %4546 = vmatprep.subr.bf16.mxu0 0
        %4547 = vmatpush1.bf16.msra.mxu0 0
        %4548 = vmatprep.subr.bf16.mxu0 0
        %4549 = vmatpush1.bf16.msra.mxu0 0
        %4550 = vmatprep.subr.bf16.mxu0 0
        %4551 = vmatpush1.bf16.msra.mxu0 0
        %4552 = vmatprep.subr.bf16.mxu0 0
        %4553 = vmatpush1.bf16.msra.mxu0 0
        %4554 = vmatprep.subr.bf16.mxu0 0
        %4555 = vmatpush1.bf16.msra.mxu0 0
        %4556 = vmatprep.subr.bf16.mxu0 0
        %4557 = vmatpush1.bf16.msra.mxu0 0
        %4558 = vmatprep.subr.bf16.mxu0 0
        %4559 = vmatpush1.bf16.msra.mxu0 0
        %4560 = vmatprep.subr.bf16.mxu0 0
        %4561 = vmatpush1.bf16.msra.mxu0 0
        %4562 = vmatprep.subr.bf16.mxu0 0
        %4563 = vmatpush1.bf16.msra.mxu0 0
        %4564 = vmatprep.subr.bf16.mxu0 0
        %4565 = vmatpush1.bf16.msra.mxu0 0
        %4566 = vmatprep.subr.bf16.mxu0 0
        %4567 = vmatpush1.bf16.msra.mxu0 0
        %4568 = vmatprep.mubr.bf16.mxu0 0
        %4569 = vmatmul.mubr.bf16.gmra.mrb[0].mxu0 %v4493
        %v4570 = vpop.f32.mrb[0].mxu0
        %v4571 = vadd.f32 0.0, %v4570
        %v4572 = vpop.f32.mrb[0].mxu0
        %v4573 = vpop.f32.mrb[0].mxu0
        %v4574 = vpop.f32.mrb[0].mxu0
        %4575 = vdwg.mxu0
        %v4576 = vpack.c.bf16 %v4530, %v4530
        %v4577 = vpack.c.bf16 %v4532, %v4532
        %v4578 = vpack.c.bf16 %v4571, %v4571
        %s4579 = scalar_lea.vmem %s3, 16
        %v4580 = vld [vmem:[%s4579] sm:$0x7]
        %v4582 = vsel %vm2514, %v4580, 0
        %4584 = vmatprep.subr.bf16.mxu0 %v4223
        %4585 = vmatpush1.bf16.msra.mxu0 %v4220
        %4586 = vmatprep.subr.bf16.mxu0 0
        %4587 = vmatpush1.bf16.msra.mxu0 0
        %4588 = vmatprep.subr.bf16.mxu0 0
        %4589 = vmatpush1.bf16.msra.mxu0 0
        %4590 = vmatprep.subr.bf16.mxu0 0
        %4591 = vmatpush1.bf16.msra.mxu0 0
        %4592 = vmatprep.subr.bf16.mxu0 0
        %4593 = vmatpush1.bf16.msra.mxu0 0
        %4594 = vmatprep.subr.bf16.mxu0 0
        %4595 = vmatpush1.bf16.msra.mxu0 0
        %4596 = vmatprep.subr.bf16.mxu0 0
        %4597 = vmatpush1.bf16.msra.mxu0 0
        %4598 = vmatprep.subr.bf16.mxu0 0
        %4599 = vmatpush1.bf16.msra.mxu0 0
        %4600 = vmatprep.subr.bf16.mxu0 0
        %4601 = vmatpush1.bf16.msra.mxu0 0
        %4602 = vmatprep.subr.bf16.mxu0 0
        %4603 = vmatpush1.bf16.msra.mxu0 0
        %4604 = vmatprep.subr.bf16.mxu0 0
        %4605 = vmatpush1.bf16.msra.mxu0 0
        %4606 = vmatprep.subr.bf16.mxu0 0
        %4607 = vmatpush1.bf16.msra.mxu0 0
        %4608 = vmatprep.subr.bf16.mxu0 0
        %4609 = vmatpush1.bf16.msra.mxu0 0
        %4610 = vmatprep.subr.bf16.mxu0 0
        %4611 = vmatpush1.bf16.msra.mxu0 0
        %4612 = vmatprep.subr.bf16.mxu0 0
        %4613 = vmatpush1.bf16.msra.mxu0 0
        %4614 = vmatprep.subr.bf16.mxu0 0
        %4615 = vmatpush1.bf16.msra.mxu0 0
        %4616 = vmatprep.mubr.bf16.mxu0 0
        %4617 = vmatmul.mubr.bf16.gmra.mrb[0].mxu0 %v4582
        %v4618 = vpop.f32.mrb[0].mxu0
        %v4619 = vadd.f32 0.0, %v4618
        %v4620 = vpop.f32.mrb[0].mxu0
        %v4621 = vadd.f32 0.0, %v4620
        %v4622 = vpop.f32.mrb[0].mxu0
        %v4623 = vpop.f32.mrb[0].mxu0
        %4624 = vdwg.mxu0
        %4625 = vmatprep.subr.bf16.mxu0 0
        %4626 = vmatpush1.bf16.msra.mxu0 %v4226
        %4627 = vmatprep.subr.bf16.mxu0 0
        %4628 = vmatpush1.bf16.msra.mxu0 0
        %4629 = vmatprep.subr.bf16.mxu0 0
        %4630 = vmatpush1.bf16.msra.mxu0 0
        %4631 = vmatprep.subr.bf16.mxu0 0
        %4632 = vmatpush1.bf16.msra.mxu0 0
        %4633 = vmatprep.subr.bf16.mxu0 0
        %4634 = vmatpush1.bf16.msra.mxu0 0
        %4635 = vmatprep.subr.bf16.mxu0 0
        %4636 = vmatpush1.bf16.msra.mxu0 0
        %4637 = vmatprep.subr.bf16.mxu0 0
        %4638 = vmatpush1.bf16.msra.mxu0 0
        %4639 = vmatprep.subr.bf16.mxu0 0
        %4640 = vmatpush1.bf16.msra.mxu0 0
        %4641 = vmatprep.subr.bf16.mxu0 0
        %4642 = vmatpush1.bf16.msra.mxu0 0
        %4643 = vmatprep.subr.bf16.mxu0 0
        %4644 = vmatpush1.bf16.msra.mxu0 0
        %4645 = vmatprep.subr.bf16.mxu0 0
        %4646 = vmatpush1.bf16.msra.mxu0 0
        %4647 = vmatprep.subr.bf16.mxu0 0
        %4648 = vmatpush1.bf16.msra.mxu0 0
        %4649 = vmatprep.subr.bf16.mxu0 0
        %4650 = vmatpush1.bf16.msra.mxu0 0
        %4651 = vmatprep.subr.bf16.mxu0 0
        %4652 = vmatpush1.bf16.msra.mxu0 0
        %4653 = vmatprep.subr.bf16.mxu0 0
        %4654 = vmatpush1.bf16.msra.mxu0 0
        %4655 = vmatprep.subr.bf16.mxu0 0
        %4656 = vmatpush1.bf16.msra.mxu0 0
        %4657 = vmatprep.mubr.bf16.mxu0 0
        %4658 = vmatmul.mubr.bf16.gmra.mrb[0].mxu0 %v4582
        %v4659 = vpop.f32.mrb[0].mxu0
        %v4660 = vadd.f32 0.0, %v4659
        %v4661 = vpop.f32.mrb[0].mxu0
        %v4662 = vpop.f32.mrb[0].mxu0
        %v4663 = vpop.f32.mrb[0].mxu0
        %4664 = vdwg.mxu0
        %v4665 = vpack.c.bf16 %v4619, %v4619
        %v4666 = vpack.c.bf16 %v4621, %v4621
        %v4667 = vpack.c.bf16 %v4660, %v4660
        %s4668 = scalar_lea.vmem %s3, 20
        %v4669 = vld [vmem:[%s4668] sm:$0x7]
        %v4671 = vsel %vm2514, %v4669, 0
        %4673 = vmatprep.subr.bf16.mxu0 %v4223
        %4674 = vmatpush1.bf16.msra.mxu0 %v4220
        %4675 = vmatprep.subr.bf16.mxu0 0
        %4676 = vmatpush1.bf16.msra.mxu0 0
        %4677 = vmatprep.subr.bf16.mxu0 0
        %4678 = vmatpush1.bf16.msra.mxu0 0
        %4679 = vmatprep.subr.bf16.mxu0 0
        %4680 = vmatpush1.bf16.msra.mxu0 0
        %4681 = vmatprep.subr.bf16.mxu0 0
        %4682 = vmatpush1.bf16.msra.mxu0 0
        %4683 = vmatprep.subr.bf16.mxu0 0
        %4684 = vmatpush1.bf16.msra.mxu0 0
        %4685 = vmatprep.subr.bf16.mxu0 0
        %4686 = vmatpush1.bf16.msra.mxu0 0
        %4687 = vmatprep.subr.bf16.mxu0 0
        %4688 = vmatpush1.bf16.msra.mxu0 0
        %4689 = vmatprep.subr.bf16.mxu0 0
        %4690 = vmatpush1.bf16.msra.mxu0 0
        %4691 = vmatprep.subr.bf16.mxu0 0
        %4692 = vmatpush1.bf16.msra.mxu0 0
        %4693 = vmatprep.subr.bf16.mxu0 0
        %4694 = vmatpush1.bf16.msra.mxu0 0
        %4695 = vmatprep.subr.bf16.mxu0 0
        %4696 = vmatpush1.bf16.msra.mxu0 0
        %4697 = vmatprep.subr.bf16.mxu0 0
        %4698 = vmatpush1.bf16.msra.mxu0 0
        %4699 = vmatprep.subr.bf16.mxu0 0
        %4700 = vmatpush1.bf16.msra.mxu0 0
        %4701 = vmatprep.subr.bf16.mxu0 0
        %4702 = vmatpush1.bf16.msra.mxu0 0
        %4703 = vmatprep.subr.bf16.mxu0 0
        %4704 = vmatpush1.bf16.msra.mxu0 0
        %4705 = vmatprep.mubr.bf16.mxu0 0
        %4706 = vmatmul.mubr.bf16.gmra.mrb[0].mxu0 %v4671
        %v4707 = vpop.f32.mrb[0].mxu0
        %v4708 = vadd.f32 0.0, %v4707
        %v4709 = vpop.f32.mrb[0].mxu0
        %v4710 = vadd.f32 0.0, %v4709
        %v4711 = vpop.f32.mrb[0].mxu0
        %v4712 = vpop.f32.mrb[0].mxu0
        %4713 = vdwg.mxu0
        %4714 = vmatprep.subr.bf16.mxu0 0
        %4715 = vmatpush1.bf16.msra.mxu0 %v4226
        %4716 = vmatprep.subr.bf16.mxu0 0
        %4717 = vmatpush1.bf16.msra.mxu0 0
        %4718 = vmatprep.subr.bf16.mxu0 0
        %4719 = vmatpush1.bf16.msra.mxu0 0
        %4720 = vmatprep.subr.bf16.mxu0 0
        %4721 = vmatpush1.bf16.msra.mxu0 0
        %4722 = vmatprep.subr.bf16.mxu0 0
        %4723 = vmatpush1.bf16.msra.mxu0 0
        %4724 = vmatprep.subr.bf16.mxu0 0
        %4725 = vmatpush1.bf16.msra.mxu0 0
        %4726 = vmatprep.subr.bf16.mxu0 0
        %4727 = vmatpush1.bf16.msra.mxu0 0
        %4728 = vmatprep.subr.bf16.mxu0 0
        %4729 = vmatpush1.bf16.msra.mxu0 0
        %4730 = vmatprep.subr.bf16.mxu0 0
        %4731 = vmatpush1.bf16.msra.mxu0 0
        %4732 = vmatprep.subr.bf16.mxu0 0
        %4733 = vmatpush1.bf16.msra.mxu0 0
        %4734 = vmatprep.subr.bf16.mxu0 0
        %4735 = vmatpush1.bf16.msra.mxu0 0
        %4736 = vmatprep.subr.bf16.mxu0 0
        %4737 = vmatpush1.bf16.msra.mxu0 0
        %4738 = vmatprep.subr.bf16.mxu0 0
        %4739 = vmatpush1.bf16.msra.mxu0 0
        %4740 = vmatprep.subr.bf16.mxu0 0
        %4741 = vmatpush1.bf16.msra.mxu0 0
        %4742 = vmatprep.subr.bf16.mxu0 0
        %4743 = vmatpush1.bf16.msra.mxu0 0
        %4744 = vmatprep.subr.bf16.mxu0 0
        %4745 = vmatpush1.bf16.msra.mxu0 0
        %4746 = vmatprep.mubr.bf16.mxu0 0
        %4747 = vmatmul.mubr.bf16.gmra.mrb[0].mxu0 %v4671
        %v4748 = vpop.f32.mrb[0].mxu0
        %v4749 = vadd.f32 0.0, %v4748
        %v4750 = vpop.f32.mrb[0].mxu0
        %v4751 = vpop.f32.mrb[0].mxu0
        %v4752 = vpop.f32.mrb[0].mxu0
        %4753 = vdwg.mxu0
        %v4754 = vpack.c.bf16 %v4708, %v4708
        %v4755 = vpack.c.bf16 %v4710, %v4710
        %v4756 = vpack.c.bf16 %v4749, %v4749
        %v4757 = vld [vmem:[%s9] sm:$0xf]
        %v4758 = vld [vmem:[%s9 + $0x4] sm:$0xf]
        %v4759 = vld [vmem:[%s9 + $0x8] sm:$0xf]
        %v4760 = vld [vmem:[%s9 + $0xc] sm:$0xf]
        %v4761 = vld [vmem:[%s9 + $0x10] sm:$0xf]
        %v4762 = vld [vmem:[%s9 + $0x14] sm:$0xf]
        %v4763 = vld [vmem:[%s9 + $0x18] sm:$0xf]
        %v4764 = vld [vmem:[%s9 + $0x1c] sm:$0xf]
        %v4765 = vld [vmem:[%s9 + $0x20] sm:$0xf]
        %v4766 = vld [vmem:[%s9 + $0x24] sm:$0xf]
        %v4767 = vld [vmem:[%s9 + $0x28] sm:$0xf]
        %v4768 = vld [vmem:[%s9 + $0x2c] sm:$0xf]
        %v4769 = vld [vmem:[%s9 + $0x30] sm:$0xf]
        %v4770 = vld [vmem:[%s9 + $0x34] sm:$0xf]
        %v4771 = vld [vmem:[%s9 + $0x38] sm:$0xf]
        %v4772 = vld [vmem:[%s9 + $0x3c] sm:$0xf]
        %v4773 = vld [vmem:[%s9 + $0x40] sm:$0xf]
        %v4774 = vld [vmem:[%s9 + $0x44] sm:$0xf]
        %v4775 = vld [vmem:[%s9 + $0x48] sm:$0xf]
        %v4776 = vld [vmem:[%s9 + $0x4c] sm:$0xf]
        %v4777 = vld [vmem:[%s9 + $0x50] sm:$0xf]
        %v4778 = vld [vmem:[%s9 + $0x54] sm:$0xf]
        %v4779 = vld [vmem:[%s9 + $0x58] sm:$0xf]
        %v4780 = vld [vmem:[%s9 + $0x5c] sm:$0xf]
        %v4781 = vld [vmem:[%s9 + $0x60] sm:$0xf]
        %v4782 = vld [vmem:[%s9 + $0x64] sm:$0xf]
        %v4783 = vld [vmem:[%s9 + $0x68] sm:$0xf]
        %v4784 = vld [vmem:[%s9 + $0x6c] sm:$0xf]
        %v4785 = vld [vmem:[%s9 + $0x70] sm:$0xf]
        %v4786 = vld [vmem:[%s9 + $0x74] sm:$0xf]
        %v4787 = vld [vmem:[%s9 + $0x78] sm:$0xf]
        %v4788 = vld [vmem:[%s9 + $0x7c] sm:$0xf]
        %v4789 = vld [vmem:[%s9 + $0x80] sm:$0xf]
        %v4790 = vld [vmem:[%s9 + $0x84] sm:$0xf]
        %v4791 = vld [vmem:[%s9 + $0x88] sm:$0xf]
        %s4792 = scalar_lea.vmem %s9, 280
        %v4793 = vld [vmem:[%s4792] sm:$0xf]
        %v4794 = vld [vmem:[%s4792 + $0x4] sm:$0xf]
        %v4795 = vld [vmem:[%s4792 + $0x8] sm:$0xf]
        %v4796 = vld [vmem:[%s4792 + $0xc] sm:$0xf]
        %v4797 = vld [vmem:[%s4792 + $0x10] sm:$0xf]
        %v4798 = vld [vmem:[%s4792 + $0x14] sm:$0xf]
        %v4799 = vld [vmem:[%s4792 + $0x18] sm:$0xf]
        %v4800 = vld [vmem:[%s4792 + $0x1c] sm:$0xf]
        %v4801 = vld [vmem:[%s4792 + $0x20] sm:$0xf]
        %v4802 = vld [vmem:[%s4792 + $0x24] sm:$0xf]
        %v4803 = vld [vmem:[%s4792 + $0x28] sm:$0xf]
        %v4804 = vld [vmem:[%s4792 + $0x2c] sm:$0xf]
        %v4805 = vld [vmem:[%s4792 + $0x30] sm:$0xf]
        %v4806 = vld [vmem:[%s4792 + $0x34] sm:$0xf]
        %v4807 = vld [vmem:[%s4792 + $0x38] sm:$0xf]
        %v4808 = vld [vmem:[%s4792 + $0x3c] sm:$0xf]
        %v4809 = vld [vmem:[%s4792 + $0x40] sm:$0xf]
        %v4810 = vld [vmem:[%s4792 + $0x44] sm:$0xf]
        %v4811 = vld [vmem:[%s4792 + $0x48] sm:$0xf]
        %v4812 = vld [vmem:[%s4792 + $0x4c] sm:$0xf]
        %v4813 = vld [vmem:[%s4792 + $0x50] sm:$0xf]
        %v4814 = vld [vmem:[%s4792 + $0x54] sm:$0xf]
        %v4815 = vld [vmem:[%s4792 + $0x58] sm:$0xf]
        %v4816 = vld [vmem:[%s4792 + $0x5c] sm:$0xf]
        %v4817 = vld [vmem:[%s4792 + $0x60] sm:$0xf]
        %v4818 = vld [vmem:[%s4792 + $0x64] sm:$0xf]
        %v4819 = vld [vmem:[%s4792 + $0x68] sm:$0xf]
        %v4820 = vld [vmem:[%s4792 + $0x6c] sm:$0xf]
        %v4821 = vld [vmem:[%s4792 + $0x70] sm:$0xf]
        %v4822 = vld [vmem:[%s4792 + $0x74] sm:$0xf]
        %v4823 = vld [vmem:[%s4792 + $0x78] sm:$0xf]
        %v4824 = vld [vmem:[%s4792 + $0x7c] sm:$0xf]
        %v4825 = vld [vmem:[%s4792 + $0x80] sm:$0xf]
        %v4826 = vld [vmem:[%s4792 + $0x84] sm:$0xf]
        %v4827 = vld [vmem:[%s4792 + $0x88] sm:$0xf]
        %v4863 = vunpack.c.l.b16 %v4793
        %v4864 = vunpack.c.l.b16 %v4794
        %v4865 = vunpack.c.l.b16 %v4795
        %v4866 = vunpack.c.l.b16 %v4796
        %v4867 = vunpack.c.l.b16 %v4797
        %v4868 = vunpack.c.l.b16 %v4798
        %v4869 = vunpack.c.l.b16 %v4799
        %v4870 = vunpack.c.l.b16 %v4800
        %v4871 = vunpack.c.l.b16 %v4801
        %v4872 = vunpack.c.l.b16 %v4802
        %v4873 = vunpack.c.l.b16 %v4803
        %v4874 = vunpack.c.l.b16 %v4804
        %v4875 = vunpack.c.l.b16 %v4805
        %v4876 = vunpack.c.l.b16 %v4806
        %v4877 = vunpack.c.l.b16 %v4807
        %v4878 = vunpack.c.l.b16 %v4808
        %v4879 = vunpack.c.l.b16 %v4809
        %v4880 = vunpack.c.l.b16 %v4810
        %v4881 = vunpack.c.l.b16 %v4811
        %v4882 = vunpack.c.l.b16 %v4812
        %v4883 = vunpack.c.l.b16 %v4813
        %v4884 = vunpack.c.l.b16 %v4814
        %v4885 = vunpack.c.l.b16 %v4815
        %v4886 = vunpack.c.l.b16 %v4816
        %v4887 = vunpack.c.l.b16 %v4817
        %v4888 = vunpack.c.l.b16 %v4818
        %v4889 = vunpack.c.l.b16 %v4819
        %v4890 = vunpack.c.l.b16 %v4820
        %v4891 = vunpack.c.l.b16 %v4821
        %v4892 = vunpack.c.l.b16 %v4822
        %v4893 = vunpack.c.l.b16 %v4823
        %v4894 = vunpack.c.l.b16 %v4824
        %v4895 = vunpack.c.l.b16 %v4825
        %v4896 = vunpack.c.l.b16 %v4826
        %v4897 = vunpack.c.l.b16 %v4827
        %v4898 = vpack.c.b16 %v4864, %v4863
        %v4899 = vpack.c.b16 %v4866, %v4865
        %v4900 = vpack.c.b16 %v4868, %v4867
        %v4901 = vpack.c.b16 %v4870, %v4869
        %v4902 = vpack.c.b16 %v4872, %v4871
        %v4903 = vpack.c.b16 %v4874, %v4873
        %v4904 = vpack.c.b16 %v4876, %v4875
        %v4905 = vpack.c.b16 %v4878, %v4877
        %v4906 = vpack.c.b16 %v4880, %v4879
        %v4907 = vpack.c.b16 %v4882, %v4881
        %v4908 = vpack.c.b16 %v4884, %v4883
        %v4909 = vpack.c.b16 %v4886, %v4885
        %v4910 = vpack.c.b16 %v4888, %v4887
        %v4911 = vpack.c.b16 %v4890, %v4889
        %v4912 = vpack.c.b16 %v4892, %v4891
        %v4913 = vpack.c.b16 %v4894, %v4893
        %v4914 = vpack.c.b16 %v4896, %v4895
        %v4915 = vpack.c.b16 %v4897, %v4897
        %vm4933 = vcmask 195584
        %v4935 = vsel %vm4933, %v4400, 0
        %vm4937 = vcmask 1043456
        %v4939 = vsel %vm4937, %v4915, 0
        %4941 = vmatprep.subr.bf16.mxu0 0
        %4942 = vmatpush1.bf16.msra.mxu0 %v4898
        %4943 = vmatprep.subr.bf16.mxu0 0
        %4944 = vmatpush1.bf16.msra.mxu0 %v4899
        %4945 = vmatprep.subr.bf16.mxu0 0
        %4946 = vmatpush1.bf16.msra.mxu0 %v4900
        %4947 = vmatprep.subr.bf16.mxu0 0
        %4948 = vmatpush1.bf16.msra.mxu0 %v4901
        %4949 = vmatprep.subr.bf16.mxu0 0
        %4950 = vmatpush1.bf16.msra.mxu0 %v4902
        %4951 = vmatprep.subr.bf16.mxu0 0
        %4952 = vmatpush1.bf16.msra.mxu0 %v4903
        %4953 = vmatprep.subr.bf16.mxu0 0
        %4954 = vmatpush1.bf16.msra.mxu0 %v4904
        %4955 = vmatprep.subr.bf16.mxu0 0
        %4956 = vmatpush1.bf16.msra.mxu0 %v4905
        %4957 = vmatprep.subr.bf16.mxu0 0
        %4958 = vmatpush1.bf16.msra.mxu0 %v4906
        %4959 = vmatprep.subr.bf16.mxu0 0
        %4960 = vmatpush1.bf16.msra.mxu0 %v4907
        %4961 = vmatprep.subr.bf16.mxu0 0
        %4962 = vmatpush1.bf16.msra.mxu0 %v4908
        %4963 = vmatprep.subr.bf16.mxu0 0
        %4964 = vmatpush1.bf16.msra.mxu0 %v4909
        %4965 = vmatprep.subr.bf16.mxu0 0
        %4966 = vmatpush1.bf16.msra.mxu0 %v4910
        %4967 = vmatprep.subr.bf16.mxu0 0
        %4968 = vmatpush1.bf16.msra.mxu0 %v4911
        %4969 = vmatprep.subr.bf16.mxu0 0
        %4970 = vmatpush1.bf16.msra.mxu0 %v4912
        %4971 = vmatprep.subr.bf16.mxu0 0
        %4972 = vmatpush1.bf16.msra.mxu0 %v4913
        %4973 = vmatprep.mubr.bf16.mxu0 %v4399
        %4974 = vmatmul.mubr.bf16.gmra.mrb[0].mxu0 %v4398
        %v4975 = vpop.f32.mrb[0].mxu0
        %v4976 = vadd.f32 0.0, %v4975
        %v4977 = vpop.f32.mrb[0].mxu0
        %v4978 = vpop.f32.mrb[0].mxu0
        %v4979 = vpop.f32.mrb[0].mxu0
        %4980 = vdwg.mxu0
        %4981 = vmatprep.subr.bf16.mxu0 0
        %4982 = vmatpush1.bf16.msra.mxu0 %v4914
        %4983 = vmatprep.subr.bf16.mxu0 0
        %4984 = vmatpush1.bf16.msra.mxu0 %v4939
        %4985 = vmatprep.subr.bf16.mxu0 0
        %4986 = vmatpush1.bf16.msra.mxu0 0
        %4987 = vmatprep.subr.bf16.mxu0 0
        %4988 = vmatpush1.bf16.msra.mxu0 0
        %4989 = vmatprep.subr.bf16.mxu0 0
        %4990 = vmatpush1.bf16.msra.mxu0 0
        %4991 = vmatprep.subr.bf16.mxu0 0
        %4992 = vmatpush1.bf16.msra.mxu0 0
        %4993 = vmatprep.subr.bf16.mxu0 0
        %4994 = vmatpush1.bf16.msra.mxu0 0
        %4995 = vmatprep.subr.bf16.mxu0 0
        %4996 = vmatpush1.bf16.msra.mxu0 0
        %4997 = vmatprep.subr.bf16.mxu0 0
        %4998 = vmatpush1.bf16.msra.mxu0 0
        %4999 = vmatprep.subr.bf16.mxu0 0
        %5000 = vmatpush1.bf16.msra.mxu0 0
        %5001 = vmatprep.subr.bf16.mxu0 0
        %5002 = vmatpush1.bf16.msra.mxu0 0
        %5003 = vmatprep.subr.bf16.mxu0 0
        %5004 = vmatpush1.bf16.msra.mxu0 0
        %5005 = vmatprep.subr.bf16.mxu0 0
        %5006 = vmatpush1.bf16.msra.mxu0 0
        %5007 = vmatprep.subr.bf16.mxu0 0
        %5008 = vmatpush1.bf16.msra.mxu0 0
        %5009 = vmatprep.subr.bf16.mxu0 0
        %5010 = vmatpush1.bf16.msra.mxu0 0
        %5011 = vmatprep.subr.bf16.mxu0 0
        %5012 = vmatpush1.bf16.msra.mxu0 0
        %5013 = vmatprep.mubr.bf16.mxu0 0
        %5014 = vmatmul.mubr.bf16.gmra.mrb[0].mxu0 %v4935
        %v5015 = vpop.f32.mrb[0].mxu0
        %v5016 = vadd.f32 %v4976, %v5015
        %v5017 = vpop.f32.mrb[0].mxu0
        %v5018 = vpop.f32.mrb[0].mxu0
        %v5019 = vpop.f32.mrb[0].mxu0
        %5020 = vdwg.mxu0
        %v5056 = vunpack.c.l.b16 %v4757
        %v5057 = vunpack.c.l.b16 %v4758
        %v5058 = vunpack.c.l.b16 %v4759
        %v5059 = vunpack.c.l.b16 %v4760
        %v5060 = vunpack.c.l.b16 %v4761
        %v5061 = vunpack.c.l.b16 %v4762
        %v5062 = vunpack.c.l.b16 %v4763
        %v5063 = vunpack.c.l.b16 %v4764
        %v5064 = vunpack.c.l.b16 %v4765
        %v5065 = vunpack.c.l.b16 %v4766
        %v5066 = vunpack.c.l.b16 %v4767
        %v5067 = vunpack.c.l.b16 %v4768
        %v5068 = vunpack.c.l.b16 %v4769
        %v5069 = vunpack.c.l.b16 %v4770
        %v5070 = vunpack.c.l.b16 %v4771
        %v5071 = vunpack.c.l.b16 %v4772
        %v5072 = vunpack.c.l.b16 %v4773
        %v5073 = vunpack.c.l.b16 %v4774
        %v5074 = vunpack.c.l.b16 %v4775
        %v5075 = vunpack.c.l.b16 %v4776
        %v5076 = vunpack.c.l.b16 %v4777
        %v5077 = vunpack.c.l.b16 %v4778
        %v5078 = vunpack.c.l.b16 %v4779
        %v5079 = vunpack.c.l.b16 %v4780
        %v5080 = vunpack.c.l.b16 %v4781
        %v5081 = vunpack.c.l.b16 %v4782
        %v5082 = vunpack.c.l.b16 %v4783
        %v5083 = vunpack.c.l.b16 %v4784
        %v5084 = vunpack.c.l.b16 %v4785
        %v5085 = vunpack.c.l.b16 %v4786
        %v5086 = vunpack.c.l.b16 %v4787
        %v5087 = vunpack.c.l.b16 %v4788
        %v5088 = vunpack.c.l.b16 %v4789
        %v5089 = vunpack.c.l.b16 %v4790
        %v5090 = vunpack.c.l.b16 %v4791
        %v5091 = vpack.c.b16 %v5057, %v5056
        %v5092 = vpack.c.b16 %v5059, %v5058
        %v5093 = vpack.c.b16 %v5061, %v5060
        %v5094 = vpack.c.b16 %v5063, %v5062
        %v5095 = vpack.c.b16 %v5065, %v5064
        %v5096 = vpack.c.b16 %v5067, %v5066
        %v5097 = vpack.c.b16 %v5069, %v5068
        %v5098 = vpack.c.b16 %v5071, %v5070
        %v5099 = vpack.c.b16 %v5073, %v5072
        %v5100 = vpack.c.b16 %v5075, %v5074
        %v5101 = vpack.c.b16 %v5077, %v5076
        %v5102 = vpack.c.b16 %v5079, %v5078
        %v5103 = vpack.c.b16 %v5081, %v5080
        %v5104 = vpack.c.b16 %v5083, %v5082
        %v5105 = vpack.c.b16 %v5085, %v5084
        %v5106 = vpack.c.b16 %v5087, %v5086
        %v5107 = vpack.c.b16 %v5089, %v5088
        %v5108 = vpack.c.b16 %v5090, %v5090
        %v5127 = vsel %vm4933, %v4311, 0
        %v5130 = vsel %vm4937, %v5108, 0
        %5132 = vmatprep.subr.bf16.mxu0 0
        %5133 = vmatpush1.bf16.msra.mxu0 %v5091
        %5134 = vmatprep.subr.bf16.mxu0 0
        %5135 = vmatpush1.bf16.msra.mxu0 %v5092
        %5136 = vmatprep.subr.bf16.mxu0 0
        %5137 = vmatpush1.bf16.msra.mxu0 %v5093
        %5138 = vmatprep.subr.bf16.mxu0 0
        %5139 = vmatpush1.bf16.msra.mxu0 %v5094
        %5140 = vmatprep.subr.bf16.mxu0 0
        %5141 = vmatpush1.bf16.msra.mxu0 %v5095
        %5142 = vmatprep.subr.bf16.mxu0 0
        %5143 = vmatpush1.bf16.msra.mxu0 %v5096
        %5144 = vmatprep.subr.bf16.mxu0 0
        %5145 = vmatpush1.bf16.msra.mxu0 %v5097
        %5146 = vmatprep.subr.bf16.mxu0 0
        %5147 = vmatpush1.bf16.msra.mxu0 %v5098
        %5148 = vmatprep.subr.bf16.mxu0 0
        %5149 = vmatpush1.bf16.msra.mxu0 %v5099
        %5150 = vmatprep.subr.bf16.mxu0 0
        %5151 = vmatpush1.bf16.msra.mxu0 %v5100
        %5152 = vmatprep.subr.bf16.mxu0 0
        %5153 = vmatpush1.bf16.msra.mxu0 %v5101
        %5154 = vmatprep.subr.bf16.mxu0 0
        %5155 = vmatpush1.bf16.msra.mxu0 %v5102
        %5156 = vmatprep.subr.bf16.mxu0 0
        %5157 = vmatpush1.bf16.msra.mxu0 %v5103
        %5158 = vmatprep.subr.bf16.mxu0 0
        %5159 = vmatpush1.bf16.msra.mxu0 %v5104
        %5160 = vmatprep.subr.bf16.mxu0 0
        %5161 = vmatpush1.bf16.msra.mxu0 %v5105
        %5162 = vmatprep.subr.bf16.mxu0 0
        %5163 = vmatpush1.bf16.msra.mxu0 %v5106
        %5164 = vmatprep.mubr.bf16.mxu0 %v4310
        %5165 = vmatmul.mubr.bf16.gmra.mrb[0].mxu0 %v4309
        %v5166 = vpop.f32.mrb[0].mxu0
        %v5167 = vadd.f32 %v5016, %v5166
        %v5168 = vpop.f32.mrb[0].mxu0
        %v5169 = vpop.f32.mrb[0].mxu0
        %v5170 = vpop.f32.mrb[0].mxu0
        %5171 = vdwg.mxu0
        %5172 = vmatprep.subr.bf16.mxu0 0
        %5173 = vmatpush1.bf16.msra.mxu0 %v5107
        %5174 = vmatprep.subr.bf16.mxu0 0
        %5175 = vmatpush1.bf16.msra.mxu0 %v5130
        %5176 = vmatprep.subr.bf16.mxu0 0
        %5177 = vmatpush1.bf16.msra.mxu0 0
        %5178 = vmatprep.subr.bf16.mxu0 0
        %5179 = vmatpush1.bf16.msra.mxu0 0
        %5180 = vmatprep.subr.bf16.mxu0 0
        %5181 = vmatpush1.bf16.msra.mxu0 0
        %5182 = vmatprep.subr.bf16.mxu0 0
        %5183 = vmatpush1.bf16.msra.mxu0 0
        %5184 = vmatprep.subr.bf16.mxu0 0
        %5185 = vmatpush1.bf16.msra.mxu0 0
        %5186 = vmatprep.subr.bf16.mxu0 0
        %5187 = vmatpush1.bf16.msra.mxu0 0
        %5188 = vmatprep.subr.bf16.mxu0 0
        %5189 = vmatpush1.bf16.msra.mxu0 0
        %5190 = vmatprep.subr.bf16.mxu0 0
        %5191 = vmatpush1.bf16.msra.mxu0 0
        %5192 = vmatprep.subr.bf16.mxu0 0
        %5193 = vmatpush1.bf16.msra.mxu0 0
        %5194 = vmatprep.subr.bf16.mxu0 0
        %5195 = vmatpush1.bf16.msra.mxu0 0
        %5196 = vmatprep.subr.bf16.mxu0 0
        %5197 = vmatpush1.bf16.msra.mxu0 0
        %5198 = vmatprep.subr.bf16.mxu0 0
        %5199 = vmatpush1.bf16.msra.mxu0 0
        %5200 = vmatprep.subr.bf16.mxu0 0
        %5201 = vmatpush1.bf16.msra.mxu0 0
        %5202 = vmatprep.subr.bf16.mxu0 0
        %5203 = vmatpush1.bf16.msra.mxu0 0
        %5204 = vmatprep.mubr.bf16.mxu0 0
        %5205 = vmatmul.mubr.bf16.gmra.mrb[0].mxu0 %v5127
        %v5206 = vpop.f32.mrb[0].mxu0
        %v5207 = vadd.f32 %v5167, %v5206
        %v5208 = vpop.f32.mrb[0].mxu0
        %v5209 = vpop.f32.mrb[0].mxu0
        %v5210 = vpop.f32.mrb[0].mxu0
        %5211 = vdwg.mxu0
        %s5212 = scalar_lea.vmem %s9, 560
        %v5213 = vld [vmem:[%s5212] sm:$0xf]
        %v5214 = vld [vmem:[%s5212 + $0x4] sm:$0xf]
        %v5215 = vld [vmem:[%s5212 + $0x8] sm:$0xf]
        %v5216 = vld [vmem:[%s5212 + $0xc] sm:$0xf]
        %v5217 = vld [vmem:[%s5212 + $0x10] sm:$0xf]
        %v5218 = vld [vmem:[%s5212 + $0x14] sm:$0xf]
        %v5219 = vld [vmem:[%s5212 + $0x18] sm:$0xf]
        %v5220 = vld [vmem:[%s5212 + $0x1c] sm:$0xf]
        %v5221 = vld [vmem:[%s5212 + $0x20] sm:$0xf]
        %v5222 = vld [vmem:[%s5212 + $0x24] sm:$0xf]
        %v5223 = vld [vmem:[%s5212 + $0x28] sm:$0xf]
        %v5224 = vld [vmem:[%s5212 + $0x2c] sm:$0xf]
        %v5225 = vld [vmem:[%s5212 + $0x30] sm:$0xf]
        %v5226 = vld [vmem:[%s5212 + $0x34] sm:$0xf]
        %v5227 = vld [vmem:[%s5212 + $0x38] sm:$0xf]
        %v5228 = vld [vmem:[%s5212 + $0x3c] sm:$0xf]
        %v5229 = vld [vmem:[%s5212 + $0x40] sm:$0xf]
        %v5230 = vld [vmem:[%s5212 + $0x44] sm:$0xf]
        %v5231 = vld [vmem:[%s5212 + $0x48] sm:$0xf]
        %v5232 = vld [vmem:[%s5212 + $0x4c] sm:$0xf]
        %v5233 = vld [vmem:[%s5212 + $0x50] sm:$0xf]
        %v5234 = vld [vmem:[%s5212 + $0x54] sm:$0xf]
        %v5235 = vld [vmem:[%s5212 + $0x58] sm:$0xf]
        %v5236 = vld [vmem:[%s5212 + $0x5c] sm:$0xf]
        %v5237 = vld [vmem:[%s5212 + $0x60] sm:$0xf]
        %v5238 = vld [vmem:[%s5212 + $0x64] sm:$0xf]
        %v5239 = vld [vmem:[%s5212 + $0x68] sm:$0xf]
        %v5240 = vld [vmem:[%s5212 + $0x6c] sm:$0xf]
        %v5241 = vld [vmem:[%s5212 + $0x70] sm:$0xf]
        %v5242 = vld [vmem:[%s5212 + $0x74] sm:$0xf]
        %v5243 = vld [vmem:[%s5212 + $0x78] sm:$0xf]
        %v5244 = vld [vmem:[%s5212 + $0x7c] sm:$0xf]
        %v5245 = vld [vmem:[%s5212 + $0x80] sm:$0xf]
        %v5246 = vld [vmem:[%s5212 + $0x84] sm:$0xf]
        %v5247 = vld [vmem:[%s5212 + $0x88] sm:$0xf]
        %v5283 = vunpack.c.l.b16 %v5213
        %v5284 = vunpack.c.l.b16 %v5214
        %v5285 = vunpack.c.l.b16 %v5215
        %v5286 = vunpack.c.l.b16 %v5216
        %v5287 = vunpack.c.l.b16 %v5217
        %v5288 = vunpack.c.l.b16 %v5218
        %v5289 = vunpack.c.l.b16 %v5219
        %v5290 = vunpack.c.l.b16 %v5220
        %v5291 = vunpack.c.l.b16 %v5221
        %v5292 = vunpack.c.l.b16 %v5222
        %v5293 = vunpack.c.l.b16 %v5223
        %v5294 = vunpack.c.l.b16 %v5224
        %v5295 = vunpack.c.l.b16 %v5225
        %v5296 = vunpack.c.l.b16 %v5226
        %v5297 = vunpack.c.l.b16 %v5227
        %v5298 = vunpack.c.l.b16 %v5228
        %v5299 = vunpack.c.l.b16 %v5229
        %v5300 = vunpack.c.l.b16 %v5230
        %v5301 = vunpack.c.l.b16 %v5231
        %v5302 = vunpack.c.l.b16 %v5232
        %v5303 = vunpack.c.l.b16 %v5233
        %v5304 = vunpack.c.l.b16 %v5234
        %v5305 = vunpack.c.l.b16 %v5235
        %v5306 = vunpack.c.l.b16 %v5236
        %v5307 = vunpack.c.l.b16 %v5237
        %v5308 = vunpack.c.l.b16 %v5238
        %v5309 = vunpack.c.l.b16 %v5239
        %v5310 = vunpack.c.l.b16 %v5240
        %v5311 = vunpack.c.l.b16 %v5241
        %v5312 = vunpack.c.l.b16 %v5242
        %v5313 = vunpack.c.l.b16 %v5243
        %v5314 = vunpack.c.l.b16 %v5244
        %v5315 = vunpack.c.l.b16 %v5245
        %v5316 = vunpack.c.l.b16 %v5246
        %v5317 = vunpack.c.l.b16 %v5247
        %v5318 = vpack.c.b16 %v5284, %v5283
        %v5319 = vpack.c.b16 %v5286, %v5285
        %v5320 = vpack.c.b16 %v5288, %v5287
        %v5321 = vpack.c.b16 %v5290, %v5289
        %v5322 = vpack.c.b16 %v5292, %v5291
        %v5323 = vpack.c.b16 %v5294, %v5293
        %v5324 = vpack.c.b16 %v5296, %v5295
        %v5325 = vpack.c.b16 %v5298, %v5297
        %v5326 = vpack.c.b16 %v5300, %v5299
        %v5327 = vpack.c.b16 %v5302, %v5301
        %v5328 = vpack.c.b16 %v5304, %v5303
        %v5329 = vpack.c.b16 %v5306, %v5305
        %v5330 = vpack.c.b16 %v5308, %v5307
        %v5331 = vpack.c.b16 %v5310, %v5309
        %v5332 = vpack.c.b16 %v5312, %v5311
        %v5333 = vpack.c.b16 %v5314, %v5313
        %v5334 = vpack.c.b16 %v5316, %v5315
        %v5335 = vpack.c.b16 %v5317, %v5317
        %v5354 = vsel %vm4933, %v4489, 0
        %v5357 = vsel %vm4937, %v5335, 0
        %5359 = vmatprep.subr.bf16.mxu0 0
        %5360 = vmatpush1.bf16.msra.mxu0 %v5318
        %5361 = vmatprep.subr.bf16.mxu0 0
        %5362 = vmatpush1.bf16.msra.mxu0 %v5319
        %5363 = vmatprep.subr.bf16.mxu0 0
        %5364 = vmatpush1.bf16.msra.mxu0 %v5320
        %5365 = vmatprep.subr.bf16.mxu0 0
        %5366 = vmatpush1.bf16.msra.mxu0 %v5321
        %5367 = vmatprep.subr.bf16.mxu0 0
        %5368 = vmatpush1.bf16.msra.mxu0 %v5322
        %5369 = vmatprep.subr.bf16.mxu0 0
        %5370 = vmatpush1.bf16.msra.mxu0 %v5323
        %5371 = vmatprep.subr.bf16.mxu0 0
        %5372 = vmatpush1.bf16.msra.mxu0 %v5324
        %5373 = vmatprep.subr.bf16.mxu0 0
        %5374 = vmatpush1.bf16.msra.mxu0 %v5325
        %5375 = vmatprep.subr.bf16.mxu0 0
        %5376 = vmatpush1.bf16.msra.mxu0 %v5326
        %5377 = vmatprep.subr.bf16.mxu0 0
        %5378 = vmatpush1.bf16.msra.mxu0 %v5327
        %5379 = vmatprep.subr.bf16.mxu0 0
        %5380 = vmatpush1.bf16.msra.mxu0 %v5328
        %5381 = vmatprep.subr.bf16.mxu0 0
        %5382 = vmatpush1.bf16.msra.mxu0 %v5329
        %5383 = vmatprep.subr.bf16.mxu0 0
        %5384 = vmatpush1.bf16.msra.mxu0 %v5330
        %5385 = vmatprep.subr.bf16.mxu0 0
        %5386 = vmatpush1.bf16.msra.mxu0 %v5331
        %5387 = vmatprep.subr.bf16.mxu0 0
        %5388 = vmatpush1.bf16.msra.mxu0 %v5332
        %5389 = vmatprep.subr.bf16.mxu0 0
        %5390 = vmatpush1.bf16.msra.mxu0 %v5333
        %5391 = vmatprep.mubr.bf16.mxu0 %v4488
        %5392 = vmatmul.mubr.bf16.gmra.mrb[0].mxu0 %v4487
        %v5393 = vpop.f32.mrb[0].mxu0
        %v5394 = vadd.f32 0.0, %v5393
        %v5395 = vpop.f32.mrb[0].mxu0
        %v5396 = vpop.f32.mrb[0].mxu0
        %v5397 = vpop.f32.mrb[0].mxu0
        %5398 = vdwg.mxu0
        %5399 = vmatprep.subr.bf16.mxu0 0
        %5400 = vmatpush1.bf16.msra.mxu0 %v5334
        %5401 = vmatprep.subr.bf16.mxu0 0
        %5402 = vmatpush1.bf16.msra.mxu0 %v5357
        %5403 = vmatprep.subr.bf16.mxu0 0
        %5404 = vmatpush1.bf16.msra.mxu0 0
        %5405 = vmatprep.subr.bf16.mxu0 0
        %5406 = vmatpush1.bf16.msra.mxu0 0
        %5407 = vmatprep.subr.bf16.mxu0 0
        %5408 = vmatpush1.bf16.msra.mxu0 0
        %5409 = vmatprep.subr.bf16.mxu0 0
        %5410 = vmatpush1.bf16.msra.mxu0 0
        %5411 = vmatprep.subr.bf16.mxu0 0
        %5412 = vmatpush1.bf16.msra.mxu0 0
        %5413 = vmatprep.subr.bf16.mxu0 0
        %5414 = vmatpush1.bf16.msra.mxu0 0
        %5415 = vmatprep.subr.bf16.mxu0 0
        %5416 = vmatpush1.bf16.msra.mxu0 0
        %5417 = vmatprep.subr.bf16.mxu0 0
        %5418 = vmatpush1.bf16.msra.mxu0 0
        %5419 = vmatprep.subr.bf16.mxu0 0
        %5420 = vmatpush1.bf16.msra.mxu0 0
        %5421 = vmatprep.subr.bf16.mxu0 0
        %5422 = vmatpush1.bf16.msra.mxu0 0
        %5423 = vmatprep.subr.bf16.mxu0 0
        %5424 = vmatpush1.bf16.msra.mxu0 0
        %5425 = vmatprep.subr.bf16.mxu0 0
        %5426 = vmatpush1.bf16.msra.mxu0 0
        %5427 = vmatprep.subr.bf16.mxu0 0
        %5428 = vmatpush1.bf16.msra.mxu0 0
        %5429 = vmatprep.subr.bf16.mxu0 0
        %5430 = vmatpush1.bf16.msra.mxu0 0
        %5431 = vmatprep.mubr.bf16.mxu0 0
        %5432 = vmatmul.mubr.bf16.gmra.mrb[0].mxu0 %v5354
        %v5433 = vpop.f32.mrb[0].mxu0
        %v5434 = vadd.f32 %v5394, %v5433
        %v5435 = vpop.f32.mrb[0].mxu0
        %v5436 = vpop.f32.mrb[0].mxu0
        %v5437 = vpop.f32.mrb[0].mxu0
        %5438 = vdwg.mxu0
        %v5439 = vadd.f32 %v5207, %v5434
        %s5440 = scalar_lea.vmem %s9, 840
        %v5441 = vld [vmem:[%s5440] sm:$0xf]
        %v5442 = vld [vmem:[%s5440 + $0x4] sm:$0xf]
        %v5443 = vld [vmem:[%s5440 + $0x8] sm:$0xf]
        %v5444 = vld [vmem:[%s5440 + $0xc] sm:$0xf]
        %v5445 = vld [vmem:[%s5440 + $0x10] sm:$0xf]
        %v5446 = vld [vmem:[%s5440 + $0x14] sm:$0xf]
        %v5447 = vld [vmem:[%s5440 + $0x18] sm:$0xf]
        %v5448 = vld [vmem:[%s5440 + $0x1c] sm:$0xf]
        %v5449 = vld [vmem:[%s5440 + $0x20] sm:$0xf]
        %v5450 = vld [vmem:[%s5440 + $0x24] sm:$0xf]
        %v5451 = vld [vmem:[%s5440 + $0x28] sm:$0xf]
        %v5452 = vld [vmem:[%s5440 + $0x2c] sm:$0xf]
        %v5453 = vld [vmem:[%s5440 + $0x30] sm:$0xf]
        %v5454 = vld [vmem:[%s5440 + $0x34] sm:$0xf]
        %v5455 = vld [vmem:[%s5440 + $0x38] sm:$0xf]
        %v5456 = vld [vmem:[%s5440 + $0x3c] sm:$0xf]
        %v5457 = vld [vmem:[%s5440 + $0x40] sm:$0xf]
        %v5458 = vld [vmem:[%s5440 + $0x44] sm:$0xf]
        %v5459 = vld [vmem:[%s5440 + $0x48] sm:$0xf]
        %v5460 = vld [vmem:[%s5440 + $0x4c] sm:$0xf]
        %v5461 = vld [vmem:[%s5440 + $0x50] sm:$0xf]
        %v5462 = vld [vmem:[%s5440 + $0x54] sm:$0xf]
        %v5463 = vld [vmem:[%s5440 + $0x58] sm:$0xf]
        %v5464 = vld [vmem:[%s5440 + $0x5c] sm:$0xf]
        %v5465 = vld [vmem:[%s5440 + $0x60] sm:$0xf]
        %v5466 = vld [vmem:[%s5440 + $0x64] sm:$0xf]
        %v5467 = vld [vmem:[%s5440 + $0x68] sm:$0xf]
        %v5468 = vld [vmem:[%s5440 + $0x6c] sm:$0xf]
        %v5469 = vld [vmem:[%s5440 + $0x70] sm:$0xf]
        %v5470 = vld [vmem:[%s5440 + $0x74] sm:$0xf]
        %v5471 = vld [vmem:[%s5440 + $0x78] sm:$0xf]
        %v5472 = vld [vmem:[%s5440 + $0x7c] sm:$0xf]
        %v5473 = vld [vmem:[%s5440 + $0x80] sm:$0xf]
        %v5474 = vld [vmem:[%s5440 + $0x84] sm:$0xf]
        %v5475 = vld [vmem:[%s5440 + $0x88] sm:$0xf]
        %v5511 = vunpack.c.l.b16 %v5441
        %v5512 = vunpack.c.l.b16 %v5442
        %v5513 = vunpack.c.l.b16 %v5443
        %v5514 = vunpack.c.l.b16 %v5444
        %v5515 = vunpack.c.l.b16 %v5445
        %v5516 = vunpack.c.l.b16 %v5446
        %v5517 = vunpack.c.l.b16 %v5447
        %v5518 = vunpack.c.l.b16 %v5448
        %v5519 = vunpack.c.l.b16 %v5449
        %v5520 = vunpack.c.l.b16 %v5450
        %v5521 = vunpack.c.l.b16 %v5451
        %v5522 = vunpack.c.l.b16 %v5452
        %v5523 = vunpack.c.l.b16 %v5453
        %v5524 = vunpack.c.l.b16 %v5454
        %v5525 = vunpack.c.l.b16 %v5455
        %v5526 = vunpack.c.l.b16 %v5456
        %v5527 = vunpack.c.l.b16 %v5457
        %v5528 = vunpack.c.l.b16 %v5458
        %v5529 = vunpack.c.l.b16 %v5459
        %v5530 = vunpack.c.l.b16 %v5460
        %v5531 = vunpack.c.l.b16 %v5461
        %v5532 = vunpack.c.l.b16 %v5462
        %v5533 = vunpack.c.l.b16 %v5463
        %v5534 = vunpack.c.l.b16 %v5464
        %v5535 = vunpack.c.l.b16 %v5465
        %v5536 = vunpack.c.l.b16 %v5466
        %v5537 = vunpack.c.l.b16 %v5467
        %v5538 = vunpack.c.l.b16 %v5468
        %v5539 = vunpack.c.l.b16 %v5469
        %v5540 = vunpack.c.l.b16 %v5470
        %v5541 = vunpack.c.l.b16 %v5471
        %v5542 = vunpack.c.l.b16 %v5472
        %v5543 = vunpack.c.l.b16 %v5473
        %v5544 = vunpack.c.l.b16 %v5474
        %v5545 = vunpack.c.l.b16 %v5475
        %v5546 = vpack.c.b16 %v5512, %v5511
        %v5547 = vpack.c.b16 %v5514, %v5513
        %v5548 = vpack.c.b16 %v5516, %v5515
        %v5549 = vpack.c.b16 %v5518, %v5517
        %v5550 = vpack.c.b16 %v5520, %v5519
        %v5551 = vpack.c.b16 %v5522, %v5521
        %v5552 = vpack.c.b16 %v5524, %v5523
        %v5553 = vpack.c.b16 %v5526, %v5525
        %v5554 = vpack.c.b16 %v5528, %v5527
        %v5555 = vpack.c.b16 %v5530, %v5529
        %v5556 = vpack.c.b16 %v5532, %v5531
        %v5557 = vpack.c.b16 %v5534, %v5533
        %v5558 = vpack.c.b16 %v5536, %v5535
        %v5559 = vpack.c.b16 %v5538, %v5537
        %v5560 = vpack.c.b16 %v5540, %v5539
        %v5561 = vpack.c.b16 %v5542, %v5541
        %v5562 = vpack.c.b16 %v5544, %v5543
        %v5563 = vpack.c.b16 %v5545, %v5545
        %v5582 = vsel %vm4933, %v4578, 0
        %v5585 = vsel %vm4937, %v5563, 0
        %5587 = vmatprep.subr.bf16.mxu0 0
        %5588 = vmatpush1.bf16.msra.mxu0 %v5546
        %5589 = vmatprep.subr.bf16.mxu0 0
        %5590 = vmatpush1.bf16.msra.mxu0 %v5547
        %5591 = vmatprep.subr.bf16.mxu0 0
        %5592 = vmatpush1.bf16.msra.mxu0 %v5548
        %5593 = vmatprep.subr.bf16.mxu0 0
        %5594 = vmatpush1.bf16.msra.mxu0 %v5549
        %5595 = vmatprep.subr.bf16.mxu0 0
        %5596 = vmatpush1.bf16.msra.mxu0 %v5550
        %5597 = vmatprep.subr.bf16.mxu0 0
        %5598 = vmatpush1.bf16.msra.mxu0 %v5551
        %5599 = vmatprep.subr.bf16.mxu0 0
        %5600 = vmatpush1.bf16.msra.mxu0 %v5552
        %5601 = vmatprep.subr.bf16.mxu0 0
        %5602 = vmatpush1.bf16.msra.mxu0 %v5553
        %5603 = vmatprep.subr.bf16.mxu0 0
        %5604 = vmatpush1.bf16.msra.mxu0 %v5554
        %5605 = vmatprep.subr.bf16.mxu0 0
        %5606 = vmatpush1.bf16.msra.mxu0 %v5555
        %5607 = vmatprep.subr.bf16.mxu0 0
        %5608 = vmatpush1.bf16.msra.mxu0 %v5556
        %5609 = vmatprep.subr.bf16.mxu0 0
        %5610 = vmatpush1.bf16.msra.mxu0 %v5557
        %5611 = vmatprep.subr.bf16.mxu0 0
        %5612 = vmatpush1.bf16.msra.mxu0 %v5558
        %5613 = vmatprep.subr.bf16.mxu0 0
        %5614 = vmatpush1.bf16.msra.mxu0 %v5559
        %5615 = vmatprep.subr.bf16.mxu0 0
        %5616 = vmatpush1.bf16.msra.mxu0 %v5560
        %5617 = vmatprep.subr.bf16.mxu0 0
        %5618 = vmatpush1.bf16.msra.mxu0 %v5561
        %5619 = vmatprep.mubr.bf16.mxu0 %v4577
        %5620 = vmatmul.mubr.bf16.gmra.mrb[0].mxu0 %v4576
        %v5621 = vpop.f32.mrb[0].mxu0
        %v5622 = vadd.f32 0.0, %v5621
        %v5623 = vpop.f32.mrb[0].mxu0
        %v5624 = vpop.f32.mrb[0].mxu0
        %v5625 = vpop.f32.mrb[0].mxu0
        %5626 = vdwg.mxu0
        %5627 = vmatprep.subr.bf16.mxu0 0
        %5628 = vmatpush1.bf16.msra.mxu0 %v5562
        %5629 = vmatprep.subr.bf16.mxu0 0
        %5630 = vmatpush1.bf16.msra.mxu0 %v5585
        %5631 = vmatprep.subr.bf16.mxu0 0
        %5632 = vmatpush1.bf16.msra.mxu0 0
        %5633 = vmatprep.subr.bf16.mxu0 0
        %5634 = vmatpush1.bf16.msra.mxu0 0
        %5635 = vmatprep.subr.bf16.mxu0 0
        %5636 = vmatpush1.bf16.msra.mxu0 0
        %5637 = vmatprep.subr.bf16.mxu0 0
        %5638 = vmatpush1.bf16.msra.mxu0 0
        %5639 = vmatprep.subr.bf16.mxu0 0
        %5640 = vmatpush1.bf16.msra.mxu0 0
        %5641 = vmatprep.subr.bf16.mxu0 0
        %5642 = vmatpush1.bf16.msra.mxu0 0
        %5643 = vmatprep.subr.bf16.mxu0 0
        %5644 = vmatpush1.bf16.msra.mxu0 0
        %5645 = vmatprep.subr.bf16.mxu0 0
        %5646 = vmatpush1.bf16.msra.mxu0 0
        %5647 = vmatprep.subr.bf16.mxu0 0
        %5648 = vmatpush1.bf16.msra.mxu0 0
        %5649 = vmatprep.subr.bf16.mxu0 0
        %5650 = vmatpush1.bf16.msra.mxu0 0
        %5651 = vmatprep.subr.bf16.mxu0 0
        %5652 = vmatpush1.bf16.msra.mxu0 0
        %5653 = vmatprep.subr.bf16.mxu0 0
        %5654 = vmatpush1.bf16.msra.mxu0 0
        %5655 = vmatprep.subr.bf16.mxu0 0
        %5656 = vmatpush1.bf16.msra.mxu0 0
        %5657 = vmatprep.subr.bf16.mxu0 0
        %5658 = vmatpush1.bf16.msra.mxu0 0
        %5659 = vmatprep.mubr.bf16.mxu0 0
        %5660 = vmatmul.mubr.bf16.gmra.mrb[0].mxu0 %v5582
        %v5661 = vpop.f32.mrb[0].mxu0
        %v5662 = vadd.f32 %v5622, %v5661
        %v5663 = vpop.f32.mrb[0].mxu0
        %v5664 = vpop.f32.mrb[0].mxu0
        %v5665 = vpop.f32.mrb[0].mxu0
        %5666 = vdwg.mxu0
        %v5667 = vadd.f32 %v5439, %v5662
        %s5668 = scalar_lea.vmem %s9, 1120
        %v5669 = vld [vmem:[%s5668] sm:$0xf]
        %v5670 = vld [vmem:[%s5668 + $0x4] sm:$0xf]
        %v5671 = vld [vmem:[%s5668 + $0x8] sm:$0xf]
        %v5672 = vld [vmem:[%s5668 + $0xc] sm:$0xf]
        %v5673 = vld [vmem:[%s5668 + $0x10] sm:$0xf]
        %v5674 = vld [vmem:[%s5668 + $0x14] sm:$0xf]
        %v5675 = vld [vmem:[%s5668 + $0x18] sm:$0xf]
        %v5676 = vld [vmem:[%s5668 + $0x1c] sm:$0xf]
        %v5677 = vld [vmem:[%s5668 + $0x20] sm:$0xf]
        %v5678 = vld [vmem:[%s5668 + $0x24] sm:$0xf]
        %v5679 = vld [vmem:[%s5668 + $0x28] sm:$0xf]
        %v5680 = vld [vmem:[%s5668 + $0x2c] sm:$0xf]
        %v5681 = vld [vmem:[%s5668 + $0x30] sm:$0xf]
        %v5682 = vld [vmem:[%s5668 + $0x34] sm:$0xf]
        %v5683 = vld [vmem:[%s5668 + $0x38] sm:$0xf]
        %v5684 = vld [vmem:[%s5668 + $0x3c] sm:$0xf]
        %v5685 = vld [vmem:[%s5668 + $0x40] sm:$0xf]
        %v5686 = vld [vmem:[%s5668 + $0x44] sm:$0xf]
        %v5687 = vld [vmem:[%s5668 + $0x48] sm:$0xf]
        %v5688 = vld [vmem:[%s5668 + $0x4c] sm:$0xf]
        %v5689 = vld [vmem:[%s5668 + $0x50] sm:$0xf]
        %v5690 = vld [vmem:[%s5668 + $0x54] sm:$0xf]
        %v5691 = vld [vmem:[%s5668 + $0x58] sm:$0xf]
        %v5692 = vld [vmem:[%s5668 + $0x5c] sm:$0xf]
        %v5693 = vld [vmem:[%s5668 + $0x60] sm:$0xf]
        %v5694 = vld [vmem:[%s5668 + $0x64] sm:$0xf]
        %v5695 = vld [vmem:[%s5668 + $0x68] sm:$0xf]
        %v5696 = vld [vmem:[%s5668 + $0x6c] sm:$0xf]
        %v5697 = vld [vmem:[%s5668 + $0x70] sm:$0xf]
        %v5698 = vld [vmem:[%s5668 + $0x74] sm:$0xf]
        %v5699 = vld [vmem:[%s5668 + $0x78] sm:$0xf]
        %v5700 = vld [vmem:[%s5668 + $0x7c] sm:$0xf]
        %v5701 = vld [vmem:[%s5668 + $0x80] sm:$0xf]
        %v5702 = vld [vmem:[%s5668 + $0x84] sm:$0xf]
        %v5703 = vld [vmem:[%s5668 + $0x88] sm:$0xf]
        %v5739 = vunpack.c.l.b16 %v5669
        %v5740 = vunpack.c.l.b16 %v5670
        %v5741 = vunpack.c.l.b16 %v5671
        %v5742 = vunpack.c.l.b16 %v5672
        %v5743 = vunpack.c.l.b16 %v5673
        %v5744 = vunpack.c.l.b16 %v5674
        %v5745 = vunpack.c.l.b16 %v5675
        %v5746 = vunpack.c.l.b16 %v5676
        %v5747 = vunpack.c.l.b16 %v5677
        %v5748 = vunpack.c.l.b16 %v5678
        %v5749 = vunpack.c.l.b16 %v5679
        %v5750 = vunpack.c.l.b16 %v5680
        %v5751 = vunpack.c.l.b16 %v5681
        %v5752 = vunpack.c.l.b16 %v5682
        %v5753 = vunpack.c.l.b16 %v5683
        %v5754 = vunpack.c.l.b16 %v5684
        %v5755 = vunpack.c.l.b16 %v5685
        %v5756 = vunpack.c.l.b16 %v5686
        %v5757 = vunpack.c.l.b16 %v5687
        %v5758 = vunpack.c.l.b16 %v5688
        %v5759 = vunpack.c.l.b16 %v5689
        %v5760 = vunpack.c.l.b16 %v5690
        %v5761 = vunpack.c.l.b16 %v5691
        %v5762 = vunpack.c.l.b16 %v5692
        %v5763 = vunpack.c.l.b16 %v5693
        %v5764 = vunpack.c.l.b16 %v5694
        %v5765 = vunpack.c.l.b16 %v5695
        %v5766 = vunpack.c.l.b16 %v5696
        %v5767 = vunpack.c.l.b16 %v5697
        %v5768 = vunpack.c.l.b16 %v5698
        %v5769 = vunpack.c.l.b16 %v5699
        %v5770 = vunpack.c.l.b16 %v5700
        %v5771 = vunpack.c.l.b16 %v5701
        %v5772 = vunpack.c.l.b16 %v5702
        %v5773 = vunpack.c.l.b16 %v5703
        %v5774 = vpack.c.b16 %v5740, %v5739
        %v5775 = vpack.c.b16 %v5742, %v5741
        %v5776 = vpack.c.b16 %v5744, %v5743
        %v5777 = vpack.c.b16 %v5746, %v5745
        %v5778 = vpack.c.b16 %v5748, %v5747
        %v5779 = vpack.c.b16 %v5750, %v5749
        %v5780 = vpack.c.b16 %v5752, %v5751
        %v5781 = vpack.c.b16 %v5754, %v5753
        %v5782 = vpack.c.b16 %v5756, %v5755
        %v5783 = vpack.c.b16 %v5758, %v5757
        %v5784 = vpack.c.b16 %v5760, %v5759
        %v5785 = vpack.c.b16 %v5762, %v5761
        %v5786 = vpack.c.b16 %v5764, %v5763
        %v5787 = vpack.c.b16 %v5766, %v5765
        %v5788 = vpack.c.b16 %v5768, %v5767
        %v5789 = vpack.c.b16 %v5770, %v5769
        %v5790 = vpack.c.b16 %v5772, %v5771
        %v5791 = vpack.c.b16 %v5773, %v5773
        %v5810 = vsel %vm4933, %v4667, 0
        %v5813 = vsel %vm4937, %v5791, 0
        %5815 = vmatprep.subr.bf16.mxu0 0
        %5816 = vmatpush1.bf16.msra.mxu0 %v5774
        %5817 = vmatprep.subr.bf16.mxu0 0
        %5818 = vmatpush1.bf16.msra.mxu0 %v5775
        %5819 = vmatprep.subr.bf16.mxu0 0
        %5820 = vmatpush1.bf16.msra.mxu0 %v5776
        %5821 = vmatprep.subr.bf16.mxu0 0
        %5822 = vmatpush1.bf16.msra.mxu0 %v5777
        %5823 = vmatprep.subr.bf16.mxu0 0
        %5824 = vmatpush1.bf16.msra.mxu0 %v5778
        %5825 = vmatprep.subr.bf16.mxu0 0
        %5826 = vmatpush1.bf16.msra.mxu0 %v5779
        %5827 = vmatprep.subr.bf16.mxu0 0
        %5828 = vmatpush1.bf16.msra.mxu0 %v5780
        %5829 = vmatprep.subr.bf16.mxu0 0
        %5830 = vmatpush1.bf16.msra.mxu0 %v5781
        %5831 = vmatprep.subr.bf16.mxu0 0
        %5832 = vmatpush1.bf16.msra.mxu0 %v5782
        %5833 = vmatprep.subr.bf16.mxu0 0
        %5834 = vmatpush1.bf16.msra.mxu0 %v5783
        %5835 = vmatprep.subr.bf16.mxu0 0
        %5836 = vmatpush1.bf16.msra.mxu0 %v5784
        %5837 = vmatprep.subr.bf16.mxu0 0
        %5838 = vmatpush1.bf16.msra.mxu0 %v5785
        %5839 = vmatprep.subr.bf16.mxu0 0
        %5840 = vmatpush1.bf16.msra.mxu0 %v5786
        %5841 = vmatprep.subr.bf16.mxu0 0
        %5842 = vmatpush1.bf16.msra.mxu0 %v5787
        %5843 = vmatprep.subr.bf16.mxu0 0
        %5844 = vmatpush1.bf16.msra.mxu0 %v5788
        %5845 = vmatprep.subr.bf16.mxu0 0
        %5846 = vmatpush1.bf16.msra.mxu0 %v5789
        %5847 = vmatprep.mubr.bf16.mxu0 %v4666
        %5848 = vmatmul.mubr.bf16.gmra.mrb[0].mxu0 %v4665
        %v5849 = vpop.f32.mrb[0].mxu0
        %v5850 = vadd.f32 0.0, %v5849
        %v5851 = vpop.f32.mrb[0].mxu0
        %v5852 = vpop.f32.mrb[0].mxu0
        %v5853 = vpop.f32.mrb[0].mxu0
        %5854 = vdwg.mxu0
        %5855 = vmatprep.subr.bf16.mxu0 0
        %5856 = vmatpush1.bf16.msra.mxu0 %v5790
        %5857 = vmatprep.subr.bf16.mxu0 0
        %5858 = vmatpush1.bf16.msra.mxu0 %v5813
        %5859 = vmatprep.subr.bf16.mxu0 0
        %5860 = vmatpush1.bf16.msra.mxu0 0
        %5861 = vmatprep.subr.bf16.mxu0 0
        %5862 = vmatpush1.bf16.msra.mxu0 0
        %5863 = vmatprep.subr.bf16.mxu0 0
        %5864 = vmatpush1.bf16.msra.mxu0 0
        %5865 = vmatprep.subr.bf16.mxu0 0
        %5866 = vmatpush1.bf16.msra.mxu0 0
        %5867 = vmatprep.subr.bf16.mxu0 0
        %5868 = vmatpush1.bf16.msra.mxu0 0
        %5869 = vmatprep.subr.bf16.mxu0 0
        %5870 = vmatpush1.bf16.msra.mxu0 0
        %5871 = vmatprep.subr.bf16.mxu0 0
        %5872 = vmatpush1.bf16.msra.mxu0 0
        %5873 = vmatprep.subr.bf16.mxu0 0
        %5874 = vmatpush1.bf16.msra.mxu0 0
        %5875 = vmatprep.subr.bf16.mxu0 0
        %5876 = vmatpush1.bf16.msra.mxu0 0
        %5877 = vmatprep.subr.bf16.mxu0 0
        %5878 = vmatpush1.bf16.msra.mxu0 0
        %5879 = vmatprep.subr.bf16.mxu0 0
        %5880 = vmatpush1.bf16.msra.mxu0 0
        %5881 = vmatprep.subr.bf16.mxu0 0
        %5882 = vmatpush1.bf16.msra.mxu0 0
        %5883 = vmatprep.subr.bf16.mxu0 0
        %5884 = vmatpush1.bf16.msra.mxu0 0
        %5885 = vmatprep.subr.bf16.mxu0 0
        %5886 = vmatpush1.bf16.msra.mxu0 0
        %5887 = vmatprep.mubr.bf16.mxu0 0
        %5888 = vmatmul.mubr.bf16.gmra.mrb[0].mxu0 %v5810
        %v5889 = vpop.f32.mrb[0].mxu0
        %v5890 = vadd.f32 %v5850, %v5889
        %v5891 = vpop.f32.mrb[0].mxu0
        %v5892 = vpop.f32.mrb[0].mxu0
        %v5893 = vpop.f32.mrb[0].mxu0
        %5894 = vdwg.mxu0
        %v5895 = vadd.f32 %v5667, %v5890
        %s5896 = scalar_lea.vmem %s9, 140
        %v5897 = vld [vmem:[%s5896] sm:$0xf]
        %v5898 = vld [vmem:[%s5896 + $0x4] sm:$0xf]
        %v5899 = vld [vmem:[%s5896 + $0x8] sm:$0xf]
        %v5900 = vld [vmem:[%s5896 + $0xc] sm:$0xf]
        %v5901 = vld [vmem:[%s5896 + $0x10] sm:$0xf]
        %v5902 = vld [vmem:[%s5896 + $0x14] sm:$0xf]
        %v5903 = vld [vmem:[%s5896 + $0x18] sm:$0xf]
        %v5904 = vld [vmem:[%s5896 + $0x1c] sm:$0xf]
        %v5905 = vld [vmem:[%s5896 + $0x20] sm:$0xf]
        %v5906 = vld [vmem:[%s5896 + $0x24] sm:$0xf]
        %v5907 = vld [vmem:[%s5896 + $0x28] sm:$0xf]
        %v5908 = vld [vmem:[%s5896 + $0x2c] sm:$0xf]
        %v5909 = vld [vmem:[%s5896 + $0x30] sm:$0xf]
        %v5910 = vld [vmem:[%s5896 + $0x34] sm:$0xf]
        %v5911 = vld [vmem:[%s5896 + $0x38] sm:$0xf]
        %v5912 = vld [vmem:[%s5896 + $0x3c] sm:$0xf]
        %v5913 = vld [vmem:[%s5896 + $0x40] sm:$0xf]
        %v5914 = vld [vmem:[%s5896 + $0x44] sm:$0xf]
        %v5915 = vld [vmem:[%s5896 + $0x48] sm:$0xf]
        %v5916 = vld [vmem:[%s5896 + $0x4c] sm:$0xf]
        %v5917 = vld [vmem:[%s5896 + $0x50] sm:$0xf]
        %v5918 = vld [vmem:[%s5896 + $0x54] sm:$0xf]
        %v5919 = vld [vmem:[%s5896 + $0x58] sm:$0xf]
        %v5920 = vld [vmem:[%s5896 + $0x5c] sm:$0xf]
        %v5921 = vld [vmem:[%s5896 + $0x60] sm:$0xf]
        %v5922 = vld [vmem:[%s5896 + $0x64] sm:$0xf]
        %v5923 = vld [vmem:[%s5896 + $0x68] sm:$0xf]
        %v5924 = vld [vmem:[%s5896 + $0x6c] sm:$0xf]
        %v5925 = vld [vmem:[%s5896 + $0x70] sm:$0xf]
        %v5926 = vld [vmem:[%s5896 + $0x74] sm:$0xf]
        %v5927 = vld [vmem:[%s5896 + $0x78] sm:$0xf]
        %v5928 = vld [vmem:[%s5896 + $0x7c] sm:$0xf]
        %v5929 = vld [vmem:[%s5896 + $0x80] sm:$0xf]
        %v5930 = vld [vmem:[%s5896 + $0x84] sm:$0xf]
        %v5931 = vld [vmem:[%s5896 + $0x88] sm:$0xf]
        %s5932 = scalar_lea.vmem %s9, 420
        %v5933 = vld [vmem:[%s5932] sm:$0xf]
        %v5934 = vld [vmem:[%s5932 + $0x4] sm:$0xf]
        %v5935 = vld [vmem:[%s5932 + $0x8] sm:$0xf]
        %v5936 = vld [vmem:[%s5932 + $0xc] sm:$0xf]
        %v5937 = vld [vmem:[%s5932 + $0x10] sm:$0xf]
        %v5938 = vld [vmem:[%s5932 + $0x14] sm:$0xf]
        %v5939 = vld [vmem:[%s5932 + $0x18] sm:$0xf]
        %v5940 = vld [vmem:[%s5932 + $0x1c] sm:$0xf]
        %v5941 = vld [vmem:[%s5932 + $0x20] sm:$0xf]
        %v5942 = vld [vmem:[%s5932 + $0x24] sm:$0xf]
        %v5943 = vld [vmem:[%s5932 + $0x28] sm:$0xf]
        %v5944 = vld [vmem:[%s5932 + $0x2c] sm:$0xf]
        %v5945 = vld [vmem:[%s5932 + $0x30] sm:$0xf]
        %v5946 = vld [vmem:[%s5932 + $0x34] sm:$0xf]
        %v5947 = vld [vmem:[%s5932 + $0x38] sm:$0xf]
        %v5948 = vld [vmem:[%s5932 + $0x3c] sm:$0xf]
        %v5949 = vld [vmem:[%s5932 + $0x40] sm:$0xf]
        %v5950 = vld [vmem:[%s5932 + $0x44] sm:$0xf]
        %v5951 = vld [vmem:[%s5932 + $0x48] sm:$0xf]
        %v5952 = vld [vmem:[%s5932 + $0x4c] sm:$0xf]
        %v5953 = vld [vmem:[%s5932 + $0x50] sm:$0xf]
        %v5954 = vld [vmem:[%s5932 + $0x54] sm:$0xf]
        %v5955 = vld [vmem:[%s5932 + $0x58] sm:$0xf]
        %v5956 = vld [vmem:[%s5932 + $0x5c] sm:$0xf]
        %v5957 = vld [vmem:[%s5932 + $0x60] sm:$0xf]
        %v5958 = vld [vmem:[%s5932 + $0x64] sm:$0xf]
        %v5959 = vld [vmem:[%s5932 + $0x68] sm:$0xf]
        %v5960 = vld [vmem:[%s5932 + $0x6c] sm:$0xf]
        %v5961 = vld [vmem:[%s5932 + $0x70] sm:$0xf]
        %v5962 = vld [vmem:[%s5932 + $0x74] sm:$0xf]
        %v5963 = vld [vmem:[%s5932 + $0x78] sm:$0xf]
        %v5964 = vld [vmem:[%s5932 + $0x7c] sm:$0xf]
        %v5965 = vld [vmem:[%s5932 + $0x80] sm:$0xf]
        %v5966 = vld [vmem:[%s5932 + $0x84] sm:$0xf]
        %v5967 = vld [vmem:[%s5932 + $0x88] sm:$0xf]
        %v6003 = vunpack.c.l.b16 %v5933
        %v6004 = vunpack.c.l.b16 %v5934
        %v6005 = vunpack.c.l.b16 %v5935
        %v6006 = vunpack.c.l.b16 %v5936
        %v6007 = vunpack.c.l.b16 %v5937
        %v6008 = vunpack.c.l.b16 %v5938
        %v6009 = vunpack.c.l.b16 %v5939
        %v6010 = vunpack.c.l.b16 %v5940
        %v6011 = vunpack.c.l.b16 %v5941
        %v6012 = vunpack.c.l.b16 %v5942
        %v6013 = vunpack.c.l.b16 %v5943
        %v6014 = vunpack.c.l.b16 %v5944
        %v6015 = vunpack.c.l.b16 %v5945
        %v6016 = vunpack.c.l.b16 %v5946
        %v6017 = vunpack.c.l.b16 %v5947
        %v6018 = vunpack.c.l.b16 %v5948
        %v6019 = vunpack.c.l.b16 %v5949
        %v6020 = vunpack.c.l.b16 %v5950
        %v6021 = vunpack.c.l.b16 %v5951
        %v6022 = vunpack.c.l.b16 %v5952
        %v6023 = vunpack.c.l.b16 %v5953
        %v6024 = vunpack.c.l.b16 %v5954
        %v6025 = vunpack.c.l.b16 %v5955
        %v6026 = vunpack.c.l.b16 %v5956
        %v6027 = vunpack.c.l.b16 %v5957
        %v6028 = vunpack.c.l.b16 %v5958
        %v6029 = vunpack.c.l.b16 %v5959
        %v6030 = vunpack.c.l.b16 %v5960
        %v6031 = vunpack.c.l.b16 %v5961
        %v6032 = vunpack.c.l.b16 %v5962
        %v6033 = vunpack.c.l.b16 %v5963
        %v6034 = vunpack.c.l.b16 %v5964
        %v6035 = vunpack.c.l.b16 %v5965
        %v6036 = vunpack.c.l.b16 %v5966
        %v6037 = vunpack.c.l.b16 %v5967
        %v6038 = vpack.c.b16 %v6004, %v6003
        %v6039 = vpack.c.b16 %v6006, %v6005
        %v6040 = vpack.c.b16 %v6008, %v6007
        %v6041 = vpack.c.b16 %v6010, %v6009
        %v6042 = vpack.c.b16 %v6012, %v6011
        %v6043 = vpack.c.b16 %v6014, %v6013
        %v6044 = vpack.c.b16 %v6016, %v6015
        %v6045 = vpack.c.b16 %v6018, %v6017
        %v6046 = vpack.c.b16 %v6020, %v6019
        %v6047 = vpack.c.b16 %v6022, %v6021
        %v6048 = vpack.c.b16 %v6024, %v6023
        %v6049 = vpack.c.b16 %v6026, %v6025
        %v6050 = vpack.c.b16 %v6028, %v6027
        %v6051 = vpack.c.b16 %v6030, %v6029
        %v6052 = vpack.c.b16 %v6032, %v6031
        %v6053 = vpack.c.b16 %v6034, %v6033
        %v6054 = vpack.c.b16 %v6036, %v6035
        %v6055 = vpack.c.b16 %v6037, %v6037
        %v6074 = vsel %vm4937, %v6055, 0
        %6076 = vmatprep.subr.bf16.mxu0 0
        %6077 = vmatpush1.bf16.msra.mxu0 %v6038
        %6078 = vmatprep.subr.bf16.mxu0 0
        %6079 = vmatpush1.bf16.msra.mxu0 %v6039
        %6080 = vmatprep.subr.bf16.mxu0 0
        %6081 = vmatpush1.bf16.msra.mxu0 %v6040
        %6082 = vmatprep.subr.bf16.mxu0 0
        %6083 = vmatpush1.bf16.msra.mxu0 %v6041
        %6084 = vmatprep.subr.bf16.mxu0 0
        %6085 = vmatpush1.bf16.msra.mxu0 %v6042
        %6086 = vmatprep.subr.bf16.mxu0 0
        %6087 = vmatpush1.bf16.msra.mxu0 %v6043
        %6088 = vmatprep.subr.bf16.mxu0 0
        %6089 = vmatpush1.bf16.msra.mxu0 %v6044
        %6090 = vmatprep.subr.bf16.mxu0 0
        %6091 = vmatpush1.bf16.msra.mxu0 %v6045
        %6092 = vmatprep.subr.bf16.mxu0 0
        %6093 = vmatpush1.bf16.msra.mxu0 %v6046
        %6094 = vmatprep.subr.bf16.mxu0 0
        %6095 = vmatpush1.bf16.msra.mxu0 %v6047
        %6096 = vmatprep.subr.bf16.mxu0 0
        %6097 = vmatpush1.bf16.msra.mxu0 %v6048
        %6098 = vmatprep.subr.bf16.mxu0 0
        %6099 = vmatpush1.bf16.msra.mxu0 %v6049
        %6100 = vmatprep.subr.bf16.mxu0 0
        %6101 = vmatpush1.bf16.msra.mxu0 %v6050
        %6102 = vmatprep.subr.bf16.mxu0 0
        %6103 = vmatpush1.bf16.msra.mxu0 %v6051
        %6104 = vmatprep.subr.bf16.mxu0 0
        %6105 = vmatpush1.bf16.msra.mxu0 %v6052
        %6106 = vmatprep.subr.bf16.mxu0 0
        %6107 = vmatpush1.bf16.msra.mxu0 %v6053
        %6108 = vmatprep.mubr.bf16.mxu0 %v4399
        %6109 = vmatmul.mubr.bf16.gmra.mrb[0].mxu0 %v4398
        %v6110 = vpop.f32.mrb[0].mxu0
        %v6111 = vadd.f32 0.0, %v6110
        %v6112 = vpop.f32.mrb[0].mxu0
        %v6113 = vpop.f32.mrb[0].mxu0
        %v6114 = vpop.f32.mrb[0].mxu0
        %6115 = vdwg.mxu0
        %6116 = vmatprep.subr.bf16.mxu0 0
        %6117 = vmatpush1.bf16.msra.mxu0 %v6054
        %6118 = vmatprep.subr.bf16.mxu0 0
        %6119 = vmatpush1.bf16.msra.mxu0 %v6074
        %6120 = vmatprep.subr.bf16.mxu0 0
        %6121 = vmatpush1.bf16.msra.mxu0 0
        %6122 = vmatprep.subr.bf16.mxu0 0
        %6123 = vmatpush1.bf16.msra.mxu0 0
        %6124 = vmatprep.subr.bf16.mxu0 0
        %6125 = vmatpush1.bf16.msra.mxu0 0
        %6126 = vmatprep.subr.bf16.mxu0 0
        %6127 = vmatpush1.bf16.msra.mxu0 0
        %6128 = vmatprep.subr.bf16.mxu0 0
        %6129 = vmatpush1.bf16.msra.mxu0 0
        %6130 = vmatprep.subr.bf16.mxu0 0
        %6131 = vmatpush1.bf16.msra.mxu0 0
        %6132 = vmatprep.subr.bf16.mxu0 0
        %6133 = vmatpush1.bf16.msra.mxu0 0
        %6134 = vmatprep.subr.bf16.mxu0 0
        %6135 = vmatpush1.bf16.msra.mxu0 0
        %6136 = vmatprep.subr.bf16.mxu0 0
        %6137 = vmatpush1.bf16.msra.mxu0 0
        %6138 = vmatprep.subr.bf16.mxu0 0
        %6139 = vmatpush1.bf16.msra.mxu0 0
        %6140 = vmatprep.subr.bf16.mxu0 0
        %6141 = vmatpush1.bf16.msra.mxu0 0
        %6142 = vmatprep.subr.bf16.mxu0 0
        %6143 = vmatpush1.bf16.msra.mxu0 0
        %6144 = vmatprep.subr.bf16.mxu0 0
        %6145 = vmatpush1.bf16.msra.mxu0 0
        %6146 = vmatprep.subr.bf16.mxu0 0
        %6147 = vmatpush1.bf16.msra.mxu0 0
        %6148 = vmatprep.mubr.bf16.mxu0 0
        %6149 = vmatmul.mubr.bf16.gmra.mrb[0].mxu0 %v4935
        %v6150 = vpop.f32.mrb[0].mxu0
        %v6151 = vadd.f32 %v6111, %v6150
        %v6152 = vpop.f32.mrb[0].mxu0
        %v6153 = vpop.f32.mrb[0].mxu0
        %v6154 = vpop.f32.mrb[0].mxu0
        %6155 = vdwg.mxu0
        %v6191 = vunpack.c.l.b16 %v5897
        %v6192 = vunpack.c.l.b16 %v5898
        %v6193 = vunpack.c.l.b16 %v5899
        %v6194 = vunpack.c.l.b16 %v5900
        %v6195 = vunpack.c.l.b16 %v5901
        %v6196 = vunpack.c.l.b16 %v5902
        %v6197 = vunpack.c.l.b16 %v5903
        %v6198 = vunpack.c.l.b16 %v5904
        %v6199 = vunpack.c.l.b16 %v5905
        %v6200 = vunpack.c.l.b16 %v5906
        %v6201 = vunpack.c.l.b16 %v5907
        %v6202 = vunpack.c.l.b16 %v5908
        %v6203 = vunpack.c.l.b16 %v5909
        %v6204 = vunpack.c.l.b16 %v5910
        %v6205 = vunpack.c.l.b16 %v5911
        %v6206 = vunpack.c.l.b16 %v5912
        %v6207 = vunpack.c.l.b16 %v5913
        %v6208 = vunpack.c.l.b16 %v5914
        %v6209 = vunpack.c.l.b16 %v5915
        %v6210 = vunpack.c.l.b16 %v5916
        %v6211 = vunpack.c.l.b16 %v5917
        %v6212 = vunpack.c.l.b16 %v5918
        %v6213 = vunpack.c.l.b16 %v5919
        %v6214 = vunpack.c.l.b16 %v5920
        %v6215 = vunpack.c.l.b16 %v5921
        %v6216 = vunpack.c.l.b16 %v5922
        %v6217 = vunpack.c.l.b16 %v5923
        %v6218 = vunpack.c.l.b16 %v5924
        %v6219 = vunpack.c.l.b16 %v5925
        %v6220 = vunpack.c.l.b16 %v5926
        %v6221 = vunpack.c.l.b16 %v5927
        %v6222 = vunpack.c.l.b16 %v5928
        %v6223 = vunpack.c.l.b16 %v5929
        %v6224 = vunpack.c.l.b16 %v5930
        %v6225 = vunpack.c.l.b16 %v5931
        %v6226 = vpack.c.b16 %v6192, %v6191
        %v6227 = vpack.c.b16 %v6194, %v6193
        %v6228 = vpack.c.b16 %v6196, %v6195
        %v6229 = vpack.c.b16 %v6198, %v6197
        %v6230 = vpack.c.b16 %v6200, %v6199
        %v6231 = vpack.c.b16 %v6202, %v6201
        %v6232 = vpack.c.b16 %v6204, %v6203
        %v6233 = vpack.c.b16 %v6206, %v6205
        %v6234 = vpack.c.b16 %v6208, %v6207
        %v6235 = vpack.c.b16 %v6210, %v6209
        %v6236 = vpack.c.b16 %v6212, %v6211
        %v6237 = vpack.c.b16 %v6214, %v6213
        %v6238 = vpack.c.b16 %v6216, %v6215
        %v6239 = vpack.c.b16 %v6218, %v6217
        %v6240 = vpack.c.b16 %v6220, %v6219
        %v6241 = vpack.c.b16 %v6222, %v6221
        %v6242 = vpack.c.b16 %v6224, %v6223
        %v6243 = vpack.c.b16 %v6225, %v6225
        %v6262 = vsel %vm4937, %v6243, 0
        %6264 = vmatprep.subr.bf16.mxu0 0
        %6265 = vmatpush1.bf16.msra.mxu0 %v6226
        %6266 = vmatprep.subr.bf16.mxu0 0
        %6267 = vmatpush1.bf16.msra.mxu0 %v6227
        %6268 = vmatprep.subr.bf16.mxu0 0
        %6269 = vmatpush1.bf16.msra.mxu0 %v6228
        %6270 = vmatprep.subr.bf16.mxu0 0
        %6271 = vmatpush1.bf16.msra.mxu0 %v6229
        %6272 = vmatprep.subr.bf16.mxu0 0
        %6273 = vmatpush1.bf16.msra.mxu0 %v6230
        %6274 = vmatprep.subr.bf16.mxu0 0
        %6275 = vmatpush1.bf16.msra.mxu0 %v6231
        %6276 = vmatprep.subr.bf16.mxu0 0
        %6277 = vmatpush1.bf16.msra.mxu0 %v6232
        %6278 = vmatprep.subr.bf16.mxu0 0
        %6279 = vmatpush1.bf16.msra.mxu0 %v6233
        %6280 = vmatprep.subr.bf16.mxu0 0
        %6281 = vmatpush1.bf16.msra.mxu0 %v6234
        %6282 = vmatprep.subr.bf16.mxu0 0
        %6283 = vmatpush1.bf16.msra.mxu0 %v6235
        %6284 = vmatprep.subr.bf16.mxu0 0
        %6285 = vmatpush1.bf16.msra.mxu0 %v6236
        %6286 = vmatprep.subr.bf16.mxu0 0
        %6287 = vmatpush1.bf16.msra.mxu0 %v6237
        %6288 = vmatprep.subr.bf16.mxu0 0
        %6289 = vmatpush1.bf16.msra.mxu0 %v6238
        %6290 = vmatprep.subr.bf16.mxu0 0
        %6291 = vmatpush1.bf16.msra.mxu0 %v6239
        %6292 = vmatprep.subr.bf16.mxu0 0
        %6293 = vmatpush1.bf16.msra.mxu0 %v6240
        %6294 = vmatprep.subr.bf16.mxu0 0
        %6295 = vmatpush1.bf16.msra.mxu0 %v6241
        %6296 = vmatprep.mubr.bf16.mxu0 %v4310
        %6297 = vmatmul.mubr.bf16.gmra.mrb[0].mxu0 %v4309
        %v6298 = vpop.f32.mrb[0].mxu0
        %v6299 = vadd.f32 %v6151, %v6298
        %v6300 = vpop.f32.mrb[0].mxu0
        %v6301 = vpop.f32.mrb[0].mxu0
        %v6302 = vpop.f32.mrb[0].mxu0
        %6303 = vdwg.mxu0
        %6304 = vmatprep.subr.bf16.mxu0 0
        %6305 = vmatpush1.bf16.msra.mxu0 %v6242
        %6306 = vmatprep.subr.bf16.mxu0 0
        %6307 = vmatpush1.bf16.msra.mxu0 %v6262
        %6308 = vmatprep.subr.bf16.mxu0 0
        %6309 = vmatpush1.bf16.msra.mxu0 0
        %6310 = vmatprep.subr.bf16.mxu0 0
        %6311 = vmatpush1.bf16.msra.mxu0 0
        %6312 = vmatprep.subr.bf16.mxu0 0
        %6313 = vmatpush1.bf16.msra.mxu0 0
        %6314 = vmatprep.subr.bf16.mxu0 0
        %6315 = vmatpush1.bf16.msra.mxu0 0
        %6316 = vmatprep.subr.bf16.mxu0 0
        %6317 = vmatpush1.bf16.msra.mxu0 0
        %6318 = vmatprep.subr.bf16.mxu0 0
        %6319 = vmatpush1.bf16.msra.mxu0 0
        %6320 = vmatprep.subr.bf16.mxu0 0
        %6321 = vmatpush1.bf16.msra.mxu0 0
        %6322 = vmatprep.subr.bf16.mxu0 0
        %6323 = vmatpush1.bf16.msra.mxu0 0
        %6324 = vmatprep.subr.bf16.mxu0 0
        %6325 = vmatpush1.bf16.msra.mxu0 0
        %6326 = vmatprep.subr.bf16.mxu0 0
        %6327 = vmatpush1.bf16.msra.mxu0 0
        %6328 = vmatprep.subr.bf16.mxu0 0
        %6329 = vmatpush1.bf16.msra.mxu0 0
        %6330 = vmatprep.subr.bf16.mxu0 0
        %6331 = vmatpush1.bf16.msra.mxu0 0
        %6332 = vmatprep.subr.bf16.mxu0 0
        %6333 = vmatpush1.bf16.msra.mxu0 0
        %6334 = vmatprep.subr.bf16.mxu0 0
        %6335 = vmatpush1.bf16.msra.mxu0 0
        %6336 = vmatprep.mubr.bf16.mxu0 0
        %6337 = vmatmul.mubr.bf16.gmra.mrb[0].mxu0 %v5127
        %v6338 = vpop.f32.mrb[0].mxu0
        %v6339 = vadd.f32 %v6299, %v6338
        %v6340 = vpop.f32.mrb[0].mxu0
        %v6341 = vpop.f32.mrb[0].mxu0
        %v6342 = vpop.f32.mrb[0].mxu0
        %6343 = vdwg.mxu0
        %s6344 = scalar_lea.vmem %s9, 700
        %v6345 = vld [vmem:[%s6344] sm:$0xf]
        %v6346 = vld [vmem:[%s6344 + $0x4] sm:$0xf]
        %v6347 = vld [vmem:[%s6344 + $0x8] sm:$0xf]
        %v6348 = vld [vmem:[%s6344 + $0xc] sm:$0xf]
        %v6349 = vld [vmem:[%s6344 + $0x10] sm:$0xf]
        %v6350 = vld [vmem:[%s6344 + $0x14] sm:$0xf]
        %v6351 = vld [vmem:[%s6344 + $0x18] sm:$0xf]
        %v6352 = vld [vmem:[%s6344 + $0x1c] sm:$0xf]
        %v6353 = vld [vmem:[%s6344 + $0x20] sm:$0xf]
        %v6354 = vld [vmem:[%s6344 + $0x24] sm:$0xf]
        %v6355 = vld [vmem:[%s6344 + $0x28] sm:$0xf]
        %v6356 = vld [vmem:[%s6344 + $0x2c] sm:$0xf]
        %v6357 = vld [vmem:[%s6344 + $0x30] sm:$0xf]
        %v6358 = vld [vmem:[%s6344 + $0x34] sm:$0xf]
        %v6359 = vld [vmem:[%s6344 + $0x38] sm:$0xf]
        %v6360 = vld [vmem:[%s6344 + $0x3c] sm:$0xf]
        %v6361 = vld [vmem:[%s6344 + $0x40] sm:$0xf]
        %v6362 = vld [vmem:[%s6344 + $0x44] sm:$0xf]
        %v6363 = vld [vmem:[%s6344 + $0x48] sm:$0xf]
        %v6364 = vld [vmem:[%s6344 + $0x4c] sm:$0xf]
        %v6365 = vld [vmem:[%s6344 + $0x50] sm:$0xf]
        %v6366 = vld [vmem:[%s6344 + $0x54] sm:$0xf]
        %v6367 = vld [vmem:[%s6344 + $0x58] sm:$0xf]
        %v6368 = vld [vmem:[%s6344 + $0x5c] sm:$0xf]
        %v6369 = vld [vmem:[%s6344 + $0x60] sm:$0xf]
        %v6370 = vld [vmem:[%s6344 + $0x64] sm:$0xf]
        %v6371 = vld [vmem:[%s6344 + $0x68] sm:$0xf]
        %v6372 = vld [vmem:[%s6344 + $0x6c] sm:$0xf]
        %v6373 = vld [vmem:[%s6344 + $0x70] sm:$0xf]
        %v6374 = vld [vmem:[%s6344 + $0x74] sm:$0xf]
        %v6375 = vld [vmem:[%s6344 + $0x78] sm:$0xf]
        %v6376 = vld [vmem:[%s6344 + $0x7c] sm:$0xf]
        %v6377 = vld [vmem:[%s6344 + $0x80] sm:$0xf]
        %v6378 = vld [vmem:[%s6344 + $0x84] sm:$0xf]
        %v6379 = vld [vmem:[%s6344 + $0x88] sm:$0xf]
        %v6415 = vunpack.c.l.b16 %v6345
        %v6416 = vunpack.c.l.b16 %v6346
        %v6417 = vunpack.c.l.b16 %v6347
        %v6418 = vunpack.c.l.b16 %v6348
        %v6419 = vunpack.c.l.b16 %v6349
        %v6420 = vunpack.c.l.b16 %v6350
        %v6421 = vunpack.c.l.b16 %v6351
        %v6422 = vunpack.c.l.b16 %v6352
        %v6423 = vunpack.c.l.b16 %v6353
        %v6424 = vunpack.c.l.b16 %v6354
        %v6425 = vunpack.c.l.b16 %v6355
        %v6426 = vunpack.c.l.b16 %v6356
        %v6427 = vunpack.c.l.b16 %v6357
        %v6428 = vunpack.c.l.b16 %v6358
        %v6429 = vunpack.c.l.b16 %v6359
        %v6430 = vunpack.c.l.b16 %v6360
        %v6431 = vunpack.c.l.b16 %v6361
        %v6432 = vunpack.c.l.b16 %v6362
        %v6433 = vunpack.c.l.b16 %v6363
        %v6434 = vunpack.c.l.b16 %v6364
        %v6435 = vunpack.c.l.b16 %v6365
        %v6436 = vunpack.c.l.b16 %v6366
        %v6437 = vunpack.c.l.b16 %v6367
        %v6438 = vunpack.c.l.b16 %v6368
        %v6439 = vunpack.c.l.b16 %v6369
        %v6440 = vunpack.c.l.b16 %v6370
        %v6441 = vunpack.c.l.b16 %v6371
        %v6442 = vunpack.c.l.b16 %v6372
        %v6443 = vunpack.c.l.b16 %v6373
        %v6444 = vunpack.c.l.b16 %v6374
        %v6445 = vunpack.c.l.b16 %v6375
        %v6446 = vunpack.c.l.b16 %v6376
        %v6447 = vunpack.c.l.b16 %v6377
        %v6448 = vunpack.c.l.b16 %v6378
        %v6449 = vunpack.c.l.b16 %v6379
        %v6450 = vpack.c.b16 %v6416, %v6415
        %v6451 = vpack.c.b16 %v6418, %v6417
        %v6452 = vpack.c.b16 %v6420, %v6419
        %v6453 = vpack.c.b16 %v6422, %v6421
        %v6454 = vpack.c.b16 %v6424, %v6423
        %v6455 = vpack.c.b16 %v6426, %v6425
        %v6456 = vpack.c.b16 %v6428, %v6427
        %v6457 = vpack.c.b16 %v6430, %v6429
        %v6458 = vpack.c.b16 %v6432, %v6431
        %v6459 = vpack.c.b16 %v6434, %v6433
        %v6460 = vpack.c.b16 %v6436, %v6435
        %v6461 = vpack.c.b16 %v6438, %v6437
        %v6462 = vpack.c.b16 %v6440, %v6439
        %v6463 = vpack.c.b16 %v6442, %v6441
        %v6464 = vpack.c.b16 %v6444, %v6443
        %v6465 = vpack.c.b16 %v6446, %v6445
        %v6466 = vpack.c.b16 %v6448, %v6447
        %v6467 = vpack.c.b16 %v6449, %v6449
        %v6486 = vsel %vm4937, %v6467, 0
        %6488 = vmatprep.subr.bf16.mxu0 0
        %6489 = vmatpush1.bf16.msra.mxu0 %v6450
        %6490 = vmatprep.subr.bf16.mxu0 0
        %6491 = vmatpush1.bf16.msra.mxu0 %v6451
        %6492 = vmatprep.subr.bf16.mxu0 0
        %6493 = vmatpush1.bf16.msra.mxu0 %v6452
        %6494 = vmatprep.subr.bf16.mxu0 0
        %6495 = vmatpush1.bf16.msra.mxu0 %v6453
        %6496 = vmatprep.subr.bf16.mxu0 0
        %6497 = vmatpush1.bf16.msra.mxu0 %v6454
        %6498 = vmatprep.subr.bf16.mxu0 0
        %6499 = vmatpush1.bf16.msra.mxu0 %v6455
        %6500 = vmatprep.subr.bf16.mxu0 0
        %6501 = vmatpush1.bf16.msra.mxu0 %v6456
        %6502 = vmatprep.subr.bf16.mxu0 0
        %6503 = vmatpush1.bf16.msra.mxu0 %v6457
        %6504 = vmatprep.subr.bf16.mxu0 0
        %6505 = vmatpush1.bf16.msra.mxu0 %v6458
        %6506 = vmatprep.subr.bf16.mxu0 0
        %6507 = vmatpush1.bf16.msra.mxu0 %v6459
        %6508 = vmatprep.subr.bf16.mxu0 0
        %6509 = vmatpush1.bf16.msra.mxu0 %v6460
        %6510 = vmatprep.subr.bf16.mxu0 0
        %6511 = vmatpush1.bf16.msra.mxu0 %v6461
        %6512 = vmatprep.subr.bf16.mxu0 0
        %6513 = vmatpush1.bf16.msra.mxu0 %v6462
        %6514 = vmatprep.subr.bf16.mxu0 0
        %6515 = vmatpush1.bf16.msra.mxu0 %v6463
        %6516 = vmatprep.subr.bf16.mxu0 0
        %6517 = vmatpush1.bf16.msra.mxu0 %v6464
        %6518 = vmatprep.subr.bf16.mxu0 0
        %6519 = vmatpush1.bf16.msra.mxu0 %v6465
        %6520 = vmatprep.mubr.bf16.mxu0 %v4488
        %6521 = vmatmul.mubr.bf16.gmra.mrb[0].mxu0 %v4487
        %v6522 = vpop.f32.mrb[0].mxu0
        %v6523 = vadd.f32 0.0, %v6522
        %v6524 = vpop.f32.mrb[0].mxu0
        %v6525 = vpop.f32.mrb[0].mxu0
        %v6526 = vpop.f32.mrb[0].mxu0
        %6527 = vdwg.mxu0
        %6528 = vmatprep.subr.bf16.mxu0 0
        %6529 = vmatpush1.bf16.msra.mxu0 %v6466
        %6530 = vmatprep.subr.bf16.mxu0 0
        %6531 = vmatpush1.bf16.msra.mxu0 %v6486
        %6532 = vmatprep.subr.bf16.mxu0 0
        %6533 = vmatpush1.bf16.msra.mxu0 0
        %6534 = vmatprep.subr.bf16.mxu0 0
        %6535 = vmatpush1.bf16.msra.mxu0 0
        %6536 = vmatprep.subr.bf16.mxu0 0
        %6537 = vmatpush1.bf16.msra.mxu0 0
        %6538 = vmatprep.subr.bf16.mxu0 0
        %6539 = vmatpush1.bf16.msra.mxu0 0
        %6540 = vmatprep.subr.bf16.mxu0 0
        %6541 = vmatpush1.bf16.msra.mxu0 0
        %6542 = vmatprep.subr.bf16.mxu0 0
        %6543 = vmatpush1.bf16.msra.mxu0 0
        %6544 = vmatprep.subr.bf16.mxu0 0
        %6545 = vmatpush1.bf16.msra.mxu0 0
        %6546 = vmatprep.subr.bf16.mxu0 0
        %6547 = vmatpush1.bf16.msra.mxu0 0
        %6548 = vmatprep.subr.bf16.mxu0 0
        %6549 = vmatpush1.bf16.msra.mxu0 0
        %6550 = vmatprep.subr.bf16.mxu0 0
        %6551 = vmatpush1.bf16.msra.mxu0 0
        %6552 = vmatprep.subr.bf16.mxu0 0
        %6553 = vmatpush1.bf16.msra.mxu0 0
        %6554 = vmatprep.subr.bf16.mxu0 0
        %6555 = vmatpush1.bf16.msra.mxu0 0
        %6556 = vmatprep.subr.bf16.mxu0 0
        %6557 = vmatpush1.bf16.msra.mxu0 0
        %6558 = vmatprep.subr.bf16.mxu0 0
        %6559 = vmatpush1.bf16.msra.mxu0 0
        %6560 = vmatprep.mubr.bf16.mxu0 0
        %6561 = vmatmul.mubr.bf16.gmra.mrb[0].mxu0 %v5354
        %v6562 = vpop.f32.mrb[0].mxu0
        %v6563 = vadd.f32 %v6523, %v6562
        %v6564 = vpop.f32.mrb[0].mxu0
        %v6565 = vpop.f32.mrb[0].mxu0
        %v6566 = vpop.f32.mrb[0].mxu0
        %6567 = vdwg.mxu0
        %v6568 = vadd.f32 %v6339, %v6563
        %s6569 = scalar_lea.vmem %s9, 980
        %v6570 = vld [vmem:[%s6569] sm:$0xf]
        %v6571 = vld [vmem:[%s6569 + $0x4] sm:$0xf]
        %v6572 = vld [vmem:[%s6569 + $0x8] sm:$0xf]
        %v6573 = vld [vmem:[%s6569 + $0xc] sm:$0xf]
        %v6574 = vld [vmem:[%s6569 + $0x10] sm:$0xf]
        %v6575 = vld [vmem:[%s6569 + $0x14] sm:$0xf]
        %v6576 = vld [vmem:[%s6569 + $0x18] sm:$0xf]
        %v6577 = vld [vmem:[%s6569 + $0x1c] sm:$0xf]
        %v6578 = vld [vmem:[%s6569 + $0x20] sm:$0xf]
        %v6579 = vld [vmem:[%s6569 + $0x24] sm:$0xf]
        %v6580 = vld [vmem:[%s6569 + $0x28] sm:$0xf]
        %v6581 = vld [vmem:[%s6569 + $0x2c] sm:$0xf]
        %v6582 = vld [vmem:[%s6569 + $0x30] sm:$0xf]
        %v6583 = vld [vmem:[%s6569 + $0x34] sm:$0xf]
        %v6584 = vld [vmem:[%s6569 + $0x38] sm:$0xf]
        %v6585 = vld [vmem:[%s6569 + $0x3c] sm:$0xf]
        %v6586 = vld [vmem:[%s6569 + $0x40] sm:$0xf]
        %v6587 = vld [vmem:[%s6569 + $0x44] sm:$0xf]
        %v6588 = vld [vmem:[%s6569 + $0x48] sm:$0xf]
        %v6589 = vld [vmem:[%s6569 + $0x4c] sm:$0xf]
        %v6590 = vld [vmem:[%s6569 + $0x50] sm:$0xf]
        %v6591 = vld [vmem:[%s6569 + $0x54] sm:$0xf]
        %v6592 = vld [vmem:[%s6569 + $0x58] sm:$0xf]
        %v6593 = vld [vmem:[%s6569 + $0x5c] sm:$0xf]
        %v6594 = vld [vmem:[%s6569 + $0x60] sm:$0xf]
        %v6595 = vld [vmem:[%s6569 + $0x64] sm:$0xf]
        %v6596 = vld [vmem:[%s6569 + $0x68] sm:$0xf]
        %v6597 = vld [vmem:[%s6569 + $0x6c] sm:$0xf]
        %v6598 = vld [vmem:[%s6569 + $0x70] sm:$0xf]
        %v6599 = vld [vmem:[%s6569 + $0x74] sm:$0xf]
        %v6600 = vld [vmem:[%s6569 + $0x78] sm:$0xf]
        %v6601 = vld [vmem:[%s6569 + $0x7c] sm:$0xf]
        %v6602 = vld [vmem:[%s6569 + $0x80] sm:$0xf]
        %v6603 = vld [vmem:[%s6569 + $0x84] sm:$0xf]
        %v6604 = vld [vmem:[%s6569 + $0x88] sm:$0xf]
        %v6640 = vunpack.c.l.b16 %v6570
        %v6641 = vunpack.c.l.b16 %v6571
        %v6642 = vunpack.c.l.b16 %v6572
        %v6643 = vunpack.c.l.b16 %v6573
        %v6644 = vunpack.c.l.b16 %v6574
        %v6645 = vunpack.c.l.b16 %v6575
        %v6646 = vunpack.c.l.b16 %v6576
        %v6647 = vunpack.c.l.b16 %v6577
        %v6648 = vunpack.c.l.b16 %v6578
        %v6649 = vunpack.c.l.b16 %v6579
        %v6650 = vunpack.c.l.b16 %v6580
        %v6651 = vunpack.c.l.b16 %v6581
        %v6652 = vunpack.c.l.b16 %v6582
        %v6653 = vunpack.c.l.b16 %v6583
        %v6654 = vunpack.c.l.b16 %v6584
        %v6655 = vunpack.c.l.b16 %v6585
        %v6656 = vunpack.c.l.b16 %v6586
        %v6657 = vunpack.c.l.b16 %v6587
        %v6658 = vunpack.c.l.b16 %v6588
        %v6659 = vunpack.c.l.b16 %v6589
        %v6660 = vunpack.c.l.b16 %v6590
        %v6661 = vunpack.c.l.b16 %v6591
        %v6662 = vunpack.c.l.b16 %v6592
        %v6663 = vunpack.c.l.b16 %v6593
        %v6664 = vunpack.c.l.b16 %v6594
        %v6665 = vunpack.c.l.b16 %v6595
        %v6666 = vunpack.c.l.b16 %v6596
        %v6667 = vunpack.c.l.b16 %v6597
        %v6668 = vunpack.c.l.b16 %v6598
        %v6669 = vunpack.c.l.b16 %v6599
        %v6670 = vunpack.c.l.b16 %v6600
        %v6671 = vunpack.c.l.b16 %v6601
        %v6672 = vunpack.c.l.b16 %v6602
        %v6673 = vunpack.c.l.b16 %v6603
        %v6674 = vunpack.c.l.b16 %v6604
        %v6675 = vpack.c.b16 %v6641, %v6640
        %v6676 = vpack.c.b16 %v6643, %v6642
        %v6677 = vpack.c.b16 %v6645, %v6644
        %v6678 = vpack.c.b16 %v6647, %v6646
        %v6679 = vpack.c.b16 %v6649, %v6648
        %v6680 = vpack.c.b16 %v6651, %v6650
        %v6681 = vpack.c.b16 %v6653, %v6652
        %v6682 = vpack.c.b16 %v6655, %v6654
        %v6683 = vpack.c.b16 %v6657, %v6656
        %v6684 = vpack.c.b16 %v6659, %v6658
        %v6685 = vpack.c.b16 %v6661, %v6660
        %v6686 = vpack.c.b16 %v6663, %v6662
        %v6687 = vpack.c.b16 %v6665, %v6664
        %v6688 = vpack.c.b16 %v6667, %v6666
        %v6689 = vpack.c.b16 %v6669, %v6668
        %v6690 = vpack.c.b16 %v6671, %v6670
        %v6691 = vpack.c.b16 %v6673, %v6672
        %v6692 = vpack.c.b16 %v6674, %v6674
        %v6711 = vsel %vm4937, %v6692, 0
        %6713 = vmatprep.subr.bf16.mxu0 0
        %6714 = vmatpush1.bf16.msra.mxu0 %v6675
        %6715 = vmatprep.subr.bf16.mxu0 0
        %6716 = vmatpush1.bf16.msra.mxu0 %v6676
        %6717 = vmatprep.subr.bf16.mxu0 0
        %6718 = vmatpush1.bf16.msra.mxu0 %v6677
        %6719 = vmatprep.subr.bf16.mxu0 0
        %6720 = vmatpush1.bf16.msra.mxu0 %v6678
        %6721 = vmatprep.subr.bf16.mxu0 0
        %6722 = vmatpush1.bf16.msra.mxu0 %v6679
        %6723 = vmatprep.subr.bf16.mxu0 0
        %6724 = vmatpush1.bf16.msra.mxu0 %v6680
        %6725 = vmatprep.subr.bf16.mxu0 0
        %6726 = vmatpush1.bf16.msra.mxu0 %v6681
        %6727 = vmatprep.subr.bf16.mxu0 0
        %6728 = vmatpush1.bf16.msra.mxu0 %v6682
        %6729 = vmatprep.subr.bf16.mxu0 0
        %6730 = vmatpush1.bf16.msra.mxu0 %v6683
        %6731 = vmatprep.subr.bf16.mxu0 0
        %6732 = vmatpush1.bf16.msra.mxu0 %v6684
        %6733 = vmatprep.subr.bf16.mxu0 0
        %6734 = vmatpush1.bf16.msra.mxu0 %v6685
        %6735 = vmatprep.subr.bf16.mxu0 0
        %6736 = vmatpush1.bf16.msra.mxu0 %v6686
        %6737 = vmatprep.subr.bf16.mxu0 0
        %6738 = vmatpush1.bf16.msra.mxu0 %v6687
        %6739 = vmatprep.subr.bf16.mxu0 0
        %6740 = vmatpush1.bf16.msra.mxu0 %v6688
        %6741 = vmatprep.subr.bf16.mxu0 0
        %6742 = vmatpush1.bf16.msra.mxu0 %v6689
        %6743 = vmatprep.subr.bf16.mxu0 0
        %6744 = vmatpush1.bf16.msra.mxu0 %v6690
        %6745 = vmatprep.mubr.bf16.mxu0 %v4577
        %6746 = vmatmul.mubr.bf16.gmra.mrb[0].mxu0 %v4576
        %v6747 = vpop.f32.mrb[0].mxu0
        %v6748 = vadd.f32 0.0, %v6747
        %v6749 = vpop.f32.mrb[0].mxu0
        %v6750 = vpop.f32.mrb[0].mxu0
        %v6751 = vpop.f32.mrb[0].mxu0
        %6752 = vdwg.mxu0
        %6753 = vmatprep.subr.bf16.mxu0 0
        %6754 = vmatpush1.bf16.msra.mxu0 %v6691
        %6755 = vmatprep.subr.bf16.mxu0 0
        %6756 = vmatpush1.bf16.msra.mxu0 %v6711
        %6757 = vmatprep.subr.bf16.mxu0 0
        %6758 = vmatpush1.bf16.msra.mxu0 0
        %6759 = vmatprep.subr.bf16.mxu0 0
        %6760 = vmatpush1.bf16.msra.mxu0 0
        %6761 = vmatprep.subr.bf16.mxu0 0
        %6762 = vmatpush1.bf16.msra.mxu0 0
        %6763 = vmatprep.subr.bf16.mxu0 0
        %6764 = vmatpush1.bf16.msra.mxu0 0
        %6765 = vmatprep.subr.bf16.mxu0 0
        %6766 = vmatpush1.bf16.msra.mxu0 0
        %6767 = vmatprep.subr.bf16.mxu0 0
        %6768 = vmatpush1.bf16.msra.mxu0 0
        %6769 = vmatprep.subr.bf16.mxu0 0
        %6770 = vmatpush1.bf16.msra.mxu0 0
        %6771 = vmatprep.subr.bf16.mxu0 0
        %6772 = vmatpush1.bf16.msra.mxu0 0
        %6773 = vmatprep.subr.bf16.mxu0 0
        %6774 = vmatpush1.bf16.msra.mxu0 0
        %6775 = vmatprep.subr.bf16.mxu0 0
        %6776 = vmatpush1.bf16.msra.mxu0 0
        %6777 = vmatprep.subr.bf16.mxu0 0
        %6778 = vmatpush1.bf16.msra.mxu0 0
        %6779 = vmatprep.subr.bf16.mxu0 0
        %6780 = vmatpush1.bf16.msra.mxu0 0
        %6781 = vmatprep.subr.bf16.mxu0 0
        %6782 = vmatpush1.bf16.msra.mxu0 0
        %6783 = vmatprep.subr.bf16.mxu0 0
        %6784 = vmatpush1.bf16.msra.mxu0 0
        %6785 = vmatprep.mubr.bf16.mxu0 0
        %6786 = vmatmul.mubr.bf16.gmra.mrb[0].mxu0 %v5582
        %v6787 = vpop.f32.mrb[0].mxu0
        %v6788 = vadd.f32 %v6748, %v6787
        %v6789 = vpop.f32.mrb[0].mxu0
        %v6790 = vpop.f32.mrb[0].mxu0
        %v6791 = vpop.f32.mrb[0].mxu0
        %6792 = vdwg.mxu0
        %v6793 = vadd.f32 %v6568, %v6788
        %s6794 = scalar_lea.vmem %s9, 1260
        %v6795 = vld [vmem:[%s6794] sm:$0xf]
        %v6796 = vld [vmem:[%s6794 + $0x4] sm:$0xf]
        %v6797 = vld [vmem:[%s6794 + $0x8] sm:$0xf]
        %v6798 = vld [vmem:[%s6794 + $0xc] sm:$0xf]
        %v6799 = vld [vmem:[%s6794 + $0x10] sm:$0xf]
        %v6800 = vld [vmem:[%s6794 + $0x14] sm:$0xf]
        %v6801 = vld [vmem:[%s6794 + $0x18] sm:$0xf]
        %v6802 = vld [vmem:[%s6794 + $0x1c] sm:$0xf]
        %v6803 = vld [vmem:[%s6794 + $0x20] sm:$0xf]
        %v6804 = vld [vmem:[%s6794 + $0x24] sm:$0xf]
        %v6805 = vld [vmem:[%s6794 + $0x28] sm:$0xf]
        %v6806 = vld [vmem:[%s6794 + $0x2c] sm:$0xf]
        %v6807 = vld [vmem:[%s6794 + $0x30] sm:$0xf]
        %v6808 = vld [vmem:[%s6794 + $0x34] sm:$0xf]
        %v6809 = vld [vmem:[%s6794 + $0x38] sm:$0xf]
        %v6810 = vld [vmem:[%s6794 + $0x3c] sm:$0xf]
        %v6811 = vld [vmem:[%s6794 + $0x40] sm:$0xf]
        %v6812 = vld [vmem:[%s6794 + $0x44] sm:$0xf]
        %v6813 = vld [vmem:[%s6794 + $0x48] sm:$0xf]
        %v6814 = vld [vmem:[%s6794 + $0x4c] sm:$0xf]
        %v6815 = vld [vmem:[%s6794 + $0x50] sm:$0xf]
        %v6816 = vld [vmem:[%s6794 + $0x54] sm:$0xf]
        %v6817 = vld [vmem:[%s6794 + $0x58] sm:$0xf]
        %v6818 = vld [vmem:[%s6794 + $0x5c] sm:$0xf]
        %v6819 = vld [vmem:[%s6794 + $0x60] sm:$0xf]
        %v6820 = vld [vmem:[%s6794 + $0x64] sm:$0xf]
        %v6821 = vld [vmem:[%s6794 + $0x68] sm:$0xf]
        %v6822 = vld [vmem:[%s6794 + $0x6c] sm:$0xf]
        %v6823 = vld [vmem:[%s6794 + $0x70] sm:$0xf]
        %v6824 = vld [vmem:[%s6794 + $0x74] sm:$0xf]
        %v6825 = vld [vmem:[%s6794 + $0x78] sm:$0xf]
        %v6826 = vld [vmem:[%s6794 + $0x7c] sm:$0xf]
        %v6827 = vld [vmem:[%s6794 + $0x80] sm:$0xf]
        %v6828 = vld [vmem:[%s6794 + $0x84] sm:$0xf]
        %v6829 = vld [vmem:[%s6794 + $0x88] sm:$0xf]
        %v6865 = vunpack.c.l.b16 %v6795
        %v6866 = vunpack.c.l.b16 %v6796
        %v6867 = vunpack.c.l.b16 %v6797
        %v6868 = vunpack.c.l.b16 %v6798
        %v6869 = vunpack.c.l.b16 %v6799
        %v6870 = vunpack.c.l.b16 %v6800
        %v6871 = vunpack.c.l.b16 %v6801
        %v6872 = vunpack.c.l.b16 %v6802
        %v6873 = vunpack.c.l.b16 %v6803
        %v6874 = vunpack.c.l.b16 %v6804
        %v6875 = vunpack.c.l.b16 %v6805
        %v6876 = vunpack.c.l.b16 %v6806
        %v6877 = vunpack.c.l.b16 %v6807
        %v6878 = vunpack.c.l.b16 %v6808
        %v6879 = vunpack.c.l.b16 %v6809
        %v6880 = vunpack.c.l.b16 %v6810
        %v6881 = vunpack.c.l.b16 %v6811
        %v6882 = vunpack.c.l.b16 %v6812
        %v6883 = vunpack.c.l.b16 %v6813
        %v6884 = vunpack.c.l.b16 %v6814
        %v6885 = vunpack.c.l.b16 %v6815
        %v6886 = vunpack.c.l.b16 %v6816
        %v6887 = vunpack.c.l.b16 %v6817
        %v6888 = vunpack.c.l.b16 %v6818
        %v6889 = vunpack.c.l.b16 %v6819
        %v6890 = vunpack.c.l.b16 %v6820
        %v6891 = vunpack.c.l.b16 %v6821
        %v6892 = vunpack.c.l.b16 %v6822
        %v6893 = vunpack.c.l.b16 %v6823
        %v6894 = vunpack.c.l.b16 %v6824
        %v6895 = vunpack.c.l.b16 %v6825
        %v6896 = vunpack.c.l.b16 %v6826
        %v6897 = vunpack.c.l.b16 %v6827
        %v6898 = vunpack.c.l.b16 %v6828
        %v6899 = vunpack.c.l.b16 %v6829
        %v6900 = vpack.c.b16 %v6866, %v6865
        %v6901 = vpack.c.b16 %v6868, %v6867
        %v6902 = vpack.c.b16 %v6870, %v6869
        %v6903 = vpack.c.b16 %v6872, %v6871
        %v6904 = vpack.c.b16 %v6874, %v6873
        %v6905 = vpack.c.b16 %v6876, %v6875
        %v6906 = vpack.c.b16 %v6878, %v6877
        %v6907 = vpack.c.b16 %v6880, %v6879
        %v6908 = vpack.c.b16 %v6882, %v6881
        %v6909 = vpack.c.b16 %v6884, %v6883
        %v6910 = vpack.c.b16 %v6886, %v6885
        %v6911 = vpack.c.b16 %v6888, %v6887
        %v6912 = vpack.c.b16 %v6890, %v6889
        %v6913 = vpack.c.b16 %v6892, %v6891
        %v6914 = vpack.c.b16 %v6894, %v6893
        %v6915 = vpack.c.b16 %v6896, %v6895
        %v6916 = vpack.c.b16 %v6898, %v6897
        %v6917 = vpack.c.b16 %v6899, %v6899
        %v6936 = vsel %vm4937, %v6917, 0
        %6938 = vmatprep.subr.bf16.mxu0 0
        %6939 = vmatpush1.bf16.msra.mxu0 %v6900
        %6940 = vmatprep.subr.bf16.mxu0 0
        %6941 = vmatpush1.bf16.msra.mxu0 %v6901
        %6942 = vmatprep.subr.bf16.mxu0 0
        %6943 = vmatpush1.bf16.msra.mxu0 %v6902
        %6944 = vmatprep.subr.bf16.mxu0 0
        %6945 = vmatpush1.bf16.msra.mxu0 %v6903
        %6946 = vmatprep.subr.bf16.mxu0 0
        %6947 = vmatpush1.bf16.msra.mxu0 %v6904
        %6948 = vmatprep.subr.bf16.mxu0 0
        %6949 = vmatpush1.bf16.msra.mxu0 %v6905
        %6950 = vmatprep.subr.bf16.mxu0 0
        %6951 = vmatpush1.bf16.msra.mxu0 %v6906
        %6952 = vmatprep.subr.bf16.mxu0 0
        %6953 = vmatpush1.bf16.msra.mxu0 %v6907
        %6954 = vmatprep.subr.bf16.mxu0 0
        %6955 = vmatpush1.bf16.msra.mxu0 %v6908
        %6956 = vmatprep.subr.bf16.mxu0 0
        %6957 = vmatpush1.bf16.msra.mxu0 %v6909
        %6958 = vmatprep.subr.bf16.mxu0 0
        %6959 = vmatpush1.bf16.msra.mxu0 %v6910
        %6960 = vmatprep.subr.bf16.mxu0 0
        %6961 = vmatpush1.bf16.msra.mxu0 %v6911
        %6962 = vmatprep.subr.bf16.mxu0 0
        %6963 = vmatpush1.bf16.msra.mxu0 %v6912
        %6964 = vmatprep.subr.bf16.mxu0 0
        %6965 = vmatpush1.bf16.msra.mxu0 %v6913
        %6966 = vmatprep.subr.bf16.mxu0 0
        %6967 = vmatpush1.bf16.msra.mxu0 %v6914
        %6968 = vmatprep.subr.bf16.mxu0 0
        %6969 = vmatpush1.bf16.msra.mxu0 %v6915
        %6970 = vmatprep.mubr.bf16.mxu0 %v4666
        %6971 = vmatmul.mubr.bf16.gmra.mrb[0].mxu0 %v4665
        %v6972 = vpop.f32.mrb[0].mxu0
        %v6973 = vadd.f32 0.0, %v6972
        %v6974 = vpop.f32.mrb[0].mxu0
        %v6975 = vpop.f32.mrb[0].mxu0
        %v6976 = vpop.f32.mrb[0].mxu0
        %6977 = vdwg.mxu0
        %6978 = vmatprep.subr.bf16.mxu0 0
        %6979 = vmatpush1.bf16.msra.mxu0 %v6916
        %6980 = vmatprep.subr.bf16.mxu0 0
        %6981 = vmatpush1.bf16.msra.mxu0 %v6936
        %6982 = vmatprep.subr.bf16.mxu0 0
        %6983 = vmatpush1.bf16.msra.mxu0 0
        %6984 = vmatprep.subr.bf16.mxu0 0
        %6985 = vmatpush1.bf16.msra.mxu0 0
        %6986 = vmatprep.subr.bf16.mxu0 0
        %6987 = vmatpush1.bf16.msra.mxu0 0
        %6988 = vmatprep.subr.bf16.mxu0 0
        %6989 = vmatpush1.bf16.msra.mxu0 0
        %6990 = vmatprep.subr.bf16.mxu0 0
        %6991 = vmatpush1.bf16.msra.mxu0 0
        %6992 = vmatprep.subr.bf16.mxu0 0
        %6993 = vmatpush1.bf16.msra.mxu0 0
        %6994 = vmatprep.subr.bf16.mxu0 0
        %6995 = vmatpush1.bf16.msra.mxu0 0
        %6996 = vmatprep.subr.bf16.mxu0 0
        %6997 = vmatpush1.bf16.msra.mxu0 0
        %6998 = vmatprep.subr.bf16.mxu0 0
        %6999 = vmatpush1.bf16.msra.mxu0 0
        %7000 = vmatprep.subr.bf16.mxu0 0
        %7001 = vmatpush1.bf16.msra.mxu0 0
        %7002 = vmatprep.subr.bf16.mxu0 0
        %7003 = vmatpush1.bf16.msra.mxu0 0
        %7004 = vmatprep.subr.bf16.mxu0 0
        %7005 = vmatpush1.bf16.msra.mxu0 0
        %7006 = vmatprep.subr.bf16.mxu0 0
        %7007 = vmatpush1.bf16.msra.mxu0 0
        %7008 = vmatprep.subr.bf16.mxu0 0
        %7009 = vmatpush1.bf16.msra.mxu0 0
        %7010 = vmatprep.mubr.bf16.mxu0 0
        %7011 = vmatmul.mubr.bf16.gmra.mrb[0].mxu0 %v5810
        %v7012 = vpop.f32.mrb[0].mxu0
        %v7013 = vadd.f32 %v6973, %v7012
        %v7014 = vpop.f32.mrb[0].mxu0
        %v7015 = vpop.f32.mrb[0].mxu0
        %v7016 = vpop.f32.mrb[0].mxu0
        %7017 = vdwg.mxu0
        %v7018 = vadd.f32 %v6793, %v7013
        %v7019 = vmax.f32 %v5895, %v7018
        %7020 = vmatprep.subr.bf16.mxu0 0
        %7021 = vmatpush1.bf16.msra.mxu0 %v4898
        %7022 = vmatprep.subr.bf16.mxu0 0
        %7023 = vmatpush1.bf16.msra.mxu0 %v4899
        %7024 = vmatprep.subr.bf16.mxu0 0
        %7025 = vmatpush1.bf16.msra.mxu0 %v4900
        %7026 = vmatprep.subr.bf16.mxu0 0
        %7027 = vmatpush1.bf16.msra.mxu0 %v4901
        %7028 = vmatprep.subr.bf16.mxu0 0
        %7029 = vmatpush1.bf16.msra.mxu0 %v4902
        %7030 = vmatprep.subr.bf16.mxu0 0
        %7031 = vmatpush1.bf16.msra.mxu0 %v4903
        %7032 = vmatprep.subr.bf16.mxu0 0
        %7033 = vmatpush1.bf16.msra.mxu0 %v4904
        %7034 = vmatprep.subr.bf16.mxu0 0
        %7035 = vmatpush1.bf16.msra.mxu0 %v4905
        %7036 = vmatprep.subr.bf16.mxu0 0
        %7037 = vmatpush1.bf16.msra.mxu0 %v4906
        %7038 = vmatprep.subr.bf16.mxu0 0
        %7039 = vmatpush1.bf16.msra.mxu0 %v4907
        %7040 = vmatprep.subr.bf16.mxu0 0
        %7041 = vmatpush1.bf16.msra.mxu0 %v4908
        %7042 = vmatprep.subr.bf16.mxu0 0
        %7043 = vmatpush1.bf16.msra.mxu0 %v4909
        %7044 = vmatprep.subr.bf16.mxu0 0
        %7045 = vmatpush1.bf16.msra.mxu0 %v4910
        %7046 = vmatprep.subr.bf16.mxu0 0
        %7047 = vmatpush1.bf16.msra.mxu0 %v4911
        %7048 = vmatprep.subr.bf16.mxu0 0
        %7049 = vmatpush1.bf16.msra.mxu0 %v4912
        %7050 = vmatprep.subr.bf16.mxu0 0
        %7051 = vmatpush1.bf16.msra.mxu0 %v4913
        %7052 = vmatprep.mubr.bf16.mxu0 %v4488
        %7053 = vmatmul.mubr.bf16.gmra.mrb[0].mxu0 %v4487
        %v7054 = vpop.f32.mrb[0].mxu0
        %v7055 = vadd.f32 0.0, %v7054
        %v7056 = vpop.f32.mrb[0].mxu0
        %v7057 = vpop.f32.mrb[0].mxu0
        %v7058 = vpop.f32.mrb[0].mxu0
        %7059 = vdwg.mxu0
        %7060 = vmatprep.subr.bf16.mxu0 0
        %7061 = vmatpush1.bf16.msra.mxu0 %v4914
        %7062 = vmatprep.subr.bf16.mxu0 0
        %7063 = vmatpush1.bf16.msra.mxu0 %v4939
        %7064 = vmatprep.subr.bf16.mxu0 0
        %7065 = vmatpush1.bf16.msra.mxu0 0
        %7066 = vmatprep.subr.bf16.mxu0 0
        %7067 = vmatpush1.bf16.msra.mxu0 0
        %7068 = vmatprep.subr.bf16.mxu0 0
        %7069 = vmatpush1.bf16.msra.mxu0 0
        %7070 = vmatprep.subr.bf16.mxu0 0
        %7071 = vmatpush1.bf16.msra.mxu0 0
        %7072 = vmatprep.subr.bf16.mxu0 0
        %7073 = vmatpush1.bf16.msra.mxu0 0
        %7074 = vmatprep.subr.bf16.mxu0 0
        %7075 = vmatpush1.bf16.msra.mxu0 0
        %7076 = vmatprep.subr.bf16.mxu0 0
        %7077 = vmatpush1.bf16.msra.mxu0 0
        %7078 = vmatprep.subr.bf16.mxu0 0
        %7079 = vmatpush1.bf16.msra.mxu0 0
        %7080 = vmatprep.subr.bf16.mxu0 0
        %7081 = vmatpush1.bf16.msra.mxu0 0
        %7082 = vmatprep.subr.bf16.mxu0 0
        %7083 = vmatpush1.bf16.msra.mxu0 0
        %7084 = vmatprep.subr.bf16.mxu0 0
        %7085 = vmatpush1.bf16.msra.mxu0 0
        %7086 = vmatprep.subr.bf16.mxu0 0
        %7087 = vmatpush1.bf16.msra.mxu0 0
        %7088 = vmatprep.subr.bf16.mxu0 0
        %7089 = vmatpush1.bf16.msra.mxu0 0
        %7090 = vmatprep.subr.bf16.mxu0 0
        %7091 = vmatpush1.bf16.msra.mxu0 0
        %7092 = vmatprep.mubr.bf16.mxu0 0
        %7093 = vmatmul.mubr.bf16.gmra.mrb[0].mxu0 %v5354
        %v7094 = vpop.f32.mrb[0].mxu0
        %v7095 = vadd.f32 %v7055, %v7094
        %v7096 = vpop.f32.mrb[0].mxu0
        %v7097 = vpop.f32.mrb[0].mxu0
        %v7098 = vpop.f32.mrb[0].mxu0
        %7099 = vdwg.mxu0
        %7100 = vmatprep.subr.bf16.mxu0 0
        %7101 = vmatpush1.bf16.msra.mxu0 %v5091
        %7102 = vmatprep.subr.bf16.mxu0 0
        %7103 = vmatpush1.bf16.msra.mxu0 %v5092
        %7104 = vmatprep.subr.bf16.mxu0 0
        %7105 = vmatpush1.bf16.msra.mxu0 %v5093
        %7106 = vmatprep.subr.bf16.mxu0 0
        %7107 = vmatpush1.bf16.msra.mxu0 %v5094
        %7108 = vmatprep.subr.bf16.mxu0 0
        %7109 = vmatpush1.bf16.msra.mxu0 %v5095
        %7110 = vmatprep.subr.bf16.mxu0 0
        %7111 = vmatpush1.bf16.msra.mxu0 %v5096
        %7112 = vmatprep.subr.bf16.mxu0 0
        %7113 = vmatpush1.bf16.msra.mxu0 %v5097
        %7114 = vmatprep.subr.bf16.mxu0 0
        %7115 = vmatpush1.bf16.msra.mxu0 %v5098
        %7116 = vmatprep.subr.bf16.mxu0 0
        %7117 = vmatpush1.bf16.msra.mxu0 %v5099
        %7118 = vmatprep.subr.bf16.mxu0 0
        %7119 = vmatpush1.bf16.msra.mxu0 %v5100
        %7120 = vmatprep.subr.bf16.mxu0 0
        %7121 = vmatpush1.bf16.msra.mxu0 %v5101
        %7122 = vmatprep.subr.bf16.mxu0 0
        %7123 = vmatpush1.bf16.msra.mxu0 %v5102
        %7124 = vmatprep.subr.bf16.mxu0 0
        %7125 = vmatpush1.bf16.msra.mxu0 %v5103
        %7126 = vmatprep.subr.bf16.mxu0 0
        %7127 = vmatpush1.bf16.msra.mxu0 %v5104
        %7128 = vmatprep.subr.bf16.mxu0 0
        %7129 = vmatpush1.bf16.msra.mxu0 %v5105
        %7130 = vmatprep.subr.bf16.mxu0 0
        %7131 = vmatpush1.bf16.msra.mxu0 %v5106
        %7132 = vmatprep.mubr.bf16.mxu0 %v4399
        %7133 = vmatmul.mubr.bf16.gmra.mrb[0].mxu0 %v4398
        %v7134 = vpop.f32.mrb[0].mxu0
        %v7135 = vadd.f32 %v7095, %v7134
        %v7136 = vpop.f32.mrb[0].mxu0
        %v7137 = vpop.f32.mrb[0].mxu0
        %v7138 = vpop.f32.mrb[0].mxu0
        %7139 = vdwg.mxu0
        %7140 = vmatprep.subr.bf16.mxu0 0
        %7141 = vmatpush1.bf16.msra.mxu0 %v5107
        %7142 = vmatprep.subr.bf16.mxu0 0
        %7143 = vmatpush1.bf16.msra.mxu0 %v5130
        %7144 = vmatprep.subr.bf16.mxu0 0
        %7145 = vmatpush1.bf16.msra.mxu0 0
        %7146 = vmatprep.subr.bf16.mxu0 0
        %7147 = vmatpush1.bf16.msra.mxu0 0
        %7148 = vmatprep.subr.bf16.mxu0 0
        %7149 = vmatpush1.bf16.msra.mxu0 0
        %7150 = vmatprep.subr.bf16.mxu0 0
        %7151 = vmatpush1.bf16.msra.mxu0 0
        %7152 = vmatprep.subr.bf16.mxu0 0
        %7153 = vmatpush1.bf16.msra.mxu0 0
        %7154 = vmatprep.subr.bf16.mxu0 0
        %7155 = vmatpush1.bf16.msra.mxu0 0
        %7156 = vmatprep.subr.bf16.mxu0 0
        %7157 = vmatpush1.bf16.msra.mxu0 0
        %7158 = vmatprep.subr.bf16.mxu0 0
        %7159 = vmatpush1.bf16.msra.mxu0 0
        %7160 = vmatprep.subr.bf16.mxu0 0
        %7161 = vmatpush1.bf16.msra.mxu0 0
        %7162 = vmatprep.subr.bf16.mxu0 0
        %7163 = vmatpush1.bf16.msra.mxu0 0
        %7164 = vmatprep.subr.bf16.mxu0 0
        %7165 = vmatpush1.bf16.msra.mxu0 0
        %7166 = vmatprep.subr.bf16.mxu0 0
        %7167 = vmatpush1.bf16.msra.mxu0 0
        %7168 = vmatprep.subr.bf16.mxu0 0
        %7169 = vmatpush1.bf16.msra.mxu0 0
        %7170 = vmatprep.subr.bf16.mxu0 0
        %7171 = vmatpush1.bf16.msra.mxu0 0
        %7172 = vmatprep.mubr.bf16.mxu0 0
        %7173 = vmatmul.mubr.bf16.gmra.mrb[0].mxu0 %v4935
        %v7174 = vpop.f32.mrb[0].mxu0
        %v7175 = vadd.f32 %v7135, %v7174
        %v7176 = vpop.f32.mrb[0].mxu0
        %v7177 = vpop.f32.mrb[0].mxu0
        %v7178 = vpop.f32.mrb[0].mxu0
        %7179 = vdwg.mxu0
        %7180 = vmatprep.subr.bf16.mxu0 0
        %7181 = vmatpush1.bf16.msra.mxu0 %v5318
        %7182 = vmatprep.subr.bf16.mxu0 0
        %7183 = vmatpush1.bf16.msra.mxu0 %v5319
        %7184 = vmatprep.subr.bf16.mxu0 0
        %7185 = vmatpush1.bf16.msra.mxu0 %v5320
        %7186 = vmatprep.subr.bf16.mxu0 0
        %7187 = vmatpush1.bf16.msra.mxu0 %v5321
        %7188 = vmatprep.subr.bf16.mxu0 0
        %7189 = vmatpush1.bf16.msra.mxu0 %v5322
        %7190 = vmatprep.subr.bf16.mxu0 0
        %7191 = vmatpush1.bf16.msra.mxu0 %v5323
        %7192 = vmatprep.subr.bf16.mxu0 0
        %7193 = vmatpush1.bf16.msra.mxu0 %v5324
        %7194 = vmatprep.subr.bf16.mxu0 0
        %7195 = vmatpush1.bf16.msra.mxu0 %v5325
        %7196 = vmatprep.subr.bf16.mxu0 0
        %7197 = vmatpush1.bf16.msra.mxu0 %v5326
        %7198 = vmatprep.subr.bf16.mxu0 0
        %7199 = vmatpush1.bf16.msra.mxu0 %v5327
        %7200 = vmatprep.subr.bf16.mxu0 0
        %7201 = vmatpush1.bf16.msra.mxu0 %v5328
        %7202 = vmatprep.subr.bf16.mxu0 0
        %7203 = vmatpush1.bf16.msra.mxu0 %v5329
        %7204 = vmatprep.subr.bf16.mxu0 0
        %7205 = vmatpush1.bf16.msra.mxu0 %v5330
        %7206 = vmatprep.subr.bf16.mxu0 0
        %7207 = vmatpush1.bf16.msra.mxu0 %v5331
        %7208 = vmatprep.subr.bf16.mxu0 0
        %7209 = vmatpush1.bf16.msra.mxu0 %v5332
        %7210 = vmatprep.subr.bf16.mxu0 0
        %7211 = vmatpush1.bf16.msra.mxu0 %v5333
        %7212 = vmatprep.mubr.bf16.mxu0 %v4577
        %7213 = vmatmul.mubr.bf16.gmra.mrb[0].mxu0 %v4576
        %v7214 = vpop.f32.mrb[0].mxu0
        %v7215 = vadd.f32 0.0, %v7214
        %v7216 = vpop.f32.mrb[0].mxu0
        %v7217 = vpop.f32.mrb[0].mxu0
        %v7218 = vpop.f32.mrb[0].mxu0
        %7219 = vdwg.mxu0
        %7220 = vmatprep.subr.bf16.mxu0 0
        %7221 = vmatpush1.bf16.msra.mxu0 %v5334
        %7222 = vmatprep.subr.bf16.mxu0 0
        %7223 = vmatpush1.bf16.msra.mxu0 %v5357
        %7224 = vmatprep.subr.bf16.mxu0 0
        %7225 = vmatpush1.bf16.msra.mxu0 0
        %7226 = vmatprep.subr.bf16.mxu0 0
        %7227 = vmatpush1.bf16.msra.mxu0 0
        %7228 = vmatprep.subr.bf16.mxu0 0
        %7229 = vmatpush1.bf16.msra.mxu0 0
        %7230 = vmatprep.subr.bf16.mxu0 0
        %7231 = vmatpush1.bf16.msra.mxu0 0
        %7232 = vmatprep.subr.bf16.mxu0 0
        %7233 = vmatpush1.bf16.msra.mxu0 0
        %7234 = vmatprep.subr.bf16.mxu0 0
        %7235 = vmatpush1.bf16.msra.mxu0 0
        %7236 = vmatprep.subr.bf16.mxu0 0
        %7237 = vmatpush1.bf16.msra.mxu0 0
        %7238 = vmatprep.subr.bf16.mxu0 0
        %7239 = vmatpush1.bf16.msra.mxu0 0
        %7240 = vmatprep.subr.bf16.mxu0 0
        %7241 = vmatpush1.bf16.msra.mxu0 0
        %7242 = vmatprep.subr.bf16.mxu0 0
        %7243 = vmatpush1.bf16.msra.mxu0 0
        %7244 = vmatprep.subr.bf16.mxu0 0
        %7245 = vmatpush1.bf16.msra.mxu0 0
        %7246 = vmatprep.subr.bf16.mxu0 0
        %7247 = vmatpush1.bf16.msra.mxu0 0
        %7248 = vmatprep.subr.bf16.mxu0 0
        %7249 = vmatpush1.bf16.msra.mxu0 0
        %7250 = vmatprep.subr.bf16.mxu0 0
        %7251 = vmatpush1.bf16.msra.mxu0 0
        %7252 = vmatprep.mubr.bf16.mxu0 0
        %7253 = vmatmul.mubr.bf16.gmra.mrb[0].mxu0 %v5582
        %v7254 = vpop.f32.mrb[0].mxu0
        %v7255 = vadd.f32 %v7215, %v7254
        %v7256 = vpop.f32.mrb[0].mxu0
        %v7257 = vpop.f32.mrb[0].mxu0
        %v7258 = vpop.f32.mrb[0].mxu0
        %7259 = vdwg.mxu0
        %v7260 = vadd.f32 %v7175, %v7255
        %7261 = vmatprep.subr.bf16.mxu0 0
        %7262 = vmatpush1.bf16.msra.mxu0 %v5546
        %7263 = vmatprep.subr.bf16.mxu0 0
        %7264 = vmatpush1.bf16.msra.mxu0 %v5547
        %7265 = vmatprep.subr.bf16.mxu0 0
        %7266 = vmatpush1.bf16.msra.mxu0 %v5548
        %7267 = vmatprep.subr.bf16.mxu0 0
        %7268 = vmatpush1.bf16.msra.mxu0 %v5549
        %7269 = vmatprep.subr.bf16.mxu0 0
        %7270 = vmatpush1.bf16.msra.mxu0 %v5550
        %7271 = vmatprep.subr.bf16.mxu0 0
        %7272 = vmatpush1.bf16.msra.mxu0 %v5551
        %7273 = vmatprep.subr.bf16.mxu0 0
        %7274 = vmatpush1.bf16.msra.mxu0 %v5552
        %7275 = vmatprep.subr.bf16.mxu0 0
        %7276 = vmatpush1.bf16.msra.mxu0 %v5553
        %7277 = vmatprep.subr.bf16.mxu0 0
        %7278 = vmatpush1.bf16.msra.mxu0 %v5554
        %7279 = vmatprep.subr.bf16.mxu0 0
        %7280 = vmatpush1.bf16.msra.mxu0 %v5555
        %7281 = vmatprep.subr.bf16.mxu0 0
        %7282 = vmatpush1.bf16.msra.mxu0 %v5556
        %7283 = vmatprep.subr.bf16.mxu0 0
        %7284 = vmatpush1.bf16.msra.mxu0 %v5557
        %7285 = vmatprep.subr.bf16.mxu0 0
        %7286 = vmatpush1.bf16.msra.mxu0 %v5558
        %7287 = vmatprep.subr.bf16.mxu0 0
        %7288 = vmatpush1.bf16.msra.mxu0 %v5559
        %7289 = vmatprep.subr.bf16.mxu0 0
        %7290 = vmatpush1.bf16.msra.mxu0 %v5560
        %7291 = vmatprep.subr.bf16.mxu0 0
        %7292 = vmatpush1.bf16.msra.mxu0 %v5561
        %7293 = vmatprep.mubr.bf16.mxu0 %v4666
        %7294 = vmatmul.mubr.bf16.gmra.mrb[0].mxu0 %v4665
        %v7295 = vpop.f32.mrb[0].mxu0
        %v7296 = vadd.f32 0.0, %v7295
        %v7297 = vpop.f32.mrb[0].mxu0
        %v7298 = vpop.f32.mrb[0].mxu0
        %v7299 = vpop.f32.mrb[0].mxu0
        %7300 = vdwg.mxu0
        %7301 = vmatprep.subr.bf16.mxu0 0
        %7302 = vmatpush1.bf16.msra.mxu0 %v5562
        %7303 = vmatprep.subr.bf16.mxu0 0
        %7304 = vmatpush1.bf16.msra.mxu0 %v5585
        %7305 = vmatprep.subr.bf16.mxu0 0
        %7306 = vmatpush1.bf16.msra.mxu0 0
        %7307 = vmatprep.subr.bf16.mxu0 0
        %7308 = vmatpush1.bf16.msra.mxu0 0
        %7309 = vmatprep.subr.bf16.mxu0 0
        %7310 = vmatpush1.bf16.msra.mxu0 0
        %7311 = vmatprep.subr.bf16.mxu0 0
        %7312 = vmatpush1.bf16.msra.mxu0 0
        %7313 = vmatprep.subr.bf16.mxu0 0
        %7314 = vmatpush1.bf16.msra.mxu0 0
        %7315 = vmatprep.subr.bf16.mxu0 0
        %7316 = vmatpush1.bf16.msra.mxu0 0
        %7317 = vmatprep.subr.bf16.mxu0 0
        %7318 = vmatpush1.bf16.msra.mxu0 0
        %7319 = vmatprep.subr.bf16.mxu0 0
        %7320 = vmatpush1.bf16.msra.mxu0 0
        %7321 = vmatprep.subr.bf16.mxu0 0
        %7322 = vmatpush1.bf16.msra.mxu0 0
        %7323 = vmatprep.subr.bf16.mxu0 0
        %7324 = vmatpush1.bf16.msra.mxu0 0
        %7325 = vmatprep.subr.bf16.mxu0 0
        %7326 = vmatpush1.bf16.msra.mxu0 0
        %7327 = vmatprep.subr.bf16.mxu0 0
        %7328 = vmatpush1.bf16.msra.mxu0 0
        %7329 = vmatprep.subr.bf16.mxu0 0
        %7330 = vmatpush1.bf16.msra.mxu0 0
        %7331 = vmatprep.subr.bf16.mxu0 0
        %7332 = vmatpush1.bf16.msra.mxu0 0
        %7333 = vmatprep.mubr.bf16.mxu0 0
        %7334 = vmatmul.mubr.bf16.gmra.mrb[0].mxu0 %v5810
        %v7335 = vpop.f32.mrb[0].mxu0
        %v7336 = vadd.f32 %v7296, %v7335
        %v7337 = vpop.f32.mrb[0].mxu0
        %v7338 = vpop.f32.mrb[0].mxu0
        %v7339 = vpop.f32.mrb[0].mxu0
        %7340 = vdwg.mxu0
        %v7341 = vadd.f32 %v7260, %v7336
        %v7343 = vsel %vm4933, %v4756, 0
        %7345 = vmatprep.subr.bf16.mxu0 0
        %7346 = vmatpush1.bf16.msra.mxu0 %v5774
        %7347 = vmatprep.subr.bf16.mxu0 0
        %7348 = vmatpush1.bf16.msra.mxu0 %v5775
        %7349 = vmatprep.subr.bf16.mxu0 0
        %7350 = vmatpush1.bf16.msra.mxu0 %v5776
        %7351 = vmatprep.subr.bf16.mxu0 0
        %7352 = vmatpush1.bf16.msra.mxu0 %v5777
        %7353 = vmatprep.subr.bf16.mxu0 0
        %7354 = vmatpush1.bf16.msra.mxu0 %v5778
        %7355 = vmatprep.subr.bf16.mxu0 0
        %7356 = vmatpush1.bf16.msra.mxu0 %v5779
        %7357 = vmatprep.subr.bf16.mxu0 0
        %7358 = vmatpush1.bf16.msra.mxu0 %v5780
        %7359 = vmatprep.subr.bf16.mxu0 0
        %7360 = vmatpush1.bf16.msra.mxu0 %v5781
        %7361 = vmatprep.subr.bf16.mxu0 0
        %7362 = vmatpush1.bf16.msra.mxu0 %v5782
        %7363 = vmatprep.subr.bf16.mxu0 0
        %7364 = vmatpush1.bf16.msra.mxu0 %v5783
        %7365 = vmatprep.subr.bf16.mxu0 0
        %7366 = vmatpush1.bf16.msra.mxu0 %v5784
        %7367 = vmatprep.subr.bf16.mxu0 0
        %7368 = vmatpush1.bf16.msra.mxu0 %v5785
        %7369 = vmatprep.subr.bf16.mxu0 0
        %7370 = vmatpush1.bf16.msra.mxu0 %v5786
        %7371 = vmatprep.subr.bf16.mxu0 0
        %7372 = vmatpush1.bf16.msra.mxu0 %v5787
        %7373 = vmatprep.subr.bf16.mxu0 0
        %7374 = vmatpush1.bf16.msra.mxu0 %v5788
        %7375 = vmatprep.subr.bf16.mxu0 0
        %7376 = vmatpush1.bf16.msra.mxu0 %v5789
        %7377 = vmatprep.mubr.bf16.mxu0 %v4755
        %7378 = vmatmul.mubr.bf16.gmra.mrb[0].mxu0 %v4754
        %v7379 = vpop.f32.mrb[0].mxu0
        %v7380 = vadd.f32 0.0, %v7379
        %v7381 = vpop.f32.mrb[0].mxu0
        %v7382 = vpop.f32.mrb[0].mxu0
        %v7383 = vpop.f32.mrb[0].mxu0
        %7384 = vdwg.mxu0
        %7385 = vmatprep.subr.bf16.mxu0 0
        %7386 = vmatpush1.bf16.msra.mxu0 %v5790
        %7387 = vmatprep.subr.bf16.mxu0 0
        %7388 = vmatpush1.bf16.msra.mxu0 %v5813
        %7389 = vmatprep.subr.bf16.mxu0 0
        %7390 = vmatpush1.bf16.msra.mxu0 0
        %7391 = vmatprep.subr.bf16.mxu0 0
        %7392 = vmatpush1.bf16.msra.mxu0 0
        %7393 = vmatprep.subr.bf16.mxu0 0
        %7394 = vmatpush1.bf16.msra.mxu0 0
        %7395 = vmatprep.subr.bf16.mxu0 0
        %7396 = vmatpush1.bf16.msra.mxu0 0
        %7397 = vmatprep.subr.bf16.mxu0 0
        %7398 = vmatpush1.bf16.msra.mxu0 0
        %7399 = vmatprep.subr.bf16.mxu0 0
        %7400 = vmatpush1.bf16.msra.mxu0 0
        %7401 = vmatprep.subr.bf16.mxu0 0
        %7402 = vmatpush1.bf16.msra.mxu0 0
        %7403 = vmatprep.subr.bf16.mxu0 0
        %7404 = vmatpush1.bf16.msra.mxu0 0
        %7405 = vmatprep.subr.bf16.mxu0 0
        %7406 = vmatpush1.bf16.msra.mxu0 0
        %7407 = vmatprep.subr.bf16.mxu0 0
        %7408 = vmatpush1.bf16.msra.mxu0 0
        %7409 = vmatprep.subr.bf16.mxu0 0
        %7410 = vmatpush1.bf16.msra.mxu0 0
        %7411 = vmatprep.subr.bf16.mxu0 0
        %7412 = vmatpush1.bf16.msra.mxu0 0
        %7413 = vmatprep.subr.bf16.mxu0 0
        %7414 = vmatpush1.bf16.msra.mxu0 0
        %7415 = vmatprep.subr.bf16.mxu0 0
        %7416 = vmatpush1.bf16.msra.mxu0 0
        %7417 = vmatprep.mubr.bf16.mxu0 0
        %7418 = vmatmul.mubr.bf16.gmra.mrb[0].mxu0 %v7343
        %v7419 = vpop.f32.mrb[0].mxu0
        %v7420 = vadd.f32 %v7380, %v7419
        %v7421 = vpop.f32.mrb[0].mxu0
        %v7422 = vpop.f32.mrb[0].mxu0
        %v7423 = vpop.f32.mrb[0].mxu0
        %7424 = vdwg.mxu0
        %v7425 = vadd.f32 %v7341, %v7420
        %7426 = vmatprep.subr.bf16.mxu0 0
        %7427 = vmatpush1.bf16.msra.mxu0 %v6038
        %7428 = vmatprep.subr.bf16.mxu0 0
        %7429 = vmatpush1.bf16.msra.mxu0 %v6039
        %7430 = vmatprep.subr.bf16.mxu0 0
        %7431 = vmatpush1.bf16.msra.mxu0 %v6040
        %7432 = vmatprep.subr.bf16.mxu0 0
        %7433 = vmatpush1.bf16.msra.mxu0 %v6041
        %7434 = vmatprep.subr.bf16.mxu0 0
        %7435 = vmatpush1.bf16.msra.mxu0 %v6042
        %7436 = vmatprep.subr.bf16.mxu0 0
        %7437 = vmatpush1.bf16.msra.mxu0 %v6043
        %7438 = vmatprep.subr.bf16.mxu0 0
        %7439 = vmatpush1.bf16.msra.mxu0 %v6044
        %7440 = vmatprep.subr.bf16.mxu0 0
        %7441 = vmatpush1.bf16.msra.mxu0 %v6045
        %7442 = vmatprep.subr.bf16.mxu0 0
        %7443 = vmatpush1.bf16.msra.mxu0 %v6046
        %7444 = vmatprep.subr.bf16.mxu0 0
        %7445 = vmatpush1.bf16.msra.mxu0 %v6047
        %7446 = vmatprep.subr.bf16.mxu0 0
        %7447 = vmatpush1.bf16.msra.mxu0 %v6048
        %7448 = vmatprep.subr.bf16.mxu0 0
        %7449 = vmatpush1.bf16.msra.mxu0 %v6049
        %7450 = vmatprep.subr.bf16.mxu0 0
        %7451 = vmatpush1.bf16.msra.mxu0 %v6050
        %7452 = vmatprep.subr.bf16.mxu0 0
        %7453 = vmatpush1.bf16.msra.mxu0 %v6051
        %7454 = vmatprep.subr.bf16.mxu0 0
        %7455 = vmatpush1.bf16.msra.mxu0 %v6052
        %7456 = vmatprep.subr.bf16.mxu0 0
        %7457 = vmatpush1.bf16.msra.mxu0 %v6053
        %7458 = vmatprep.mubr.bf16.mxu0 %v4488
        %7459 = vmatmul.mubr.bf16.gmra.mrb[0].mxu0 %v4487
        %v7460 = vpop.f32.mrb[0].mxu0
        %v7461 = vadd.f32 0.0, %v7460
        %v7462 = vpop.f32.mrb[0].mxu0
        %v7463 = vpop.f32.mrb[0].mxu0
        %v7464 = vpop.f32.mrb[0].mxu0
        %7465 = vdwg.mxu0
        %7466 = vmatprep.subr.bf16.mxu0 0
        %7467 = vmatpush1.bf16.msra.mxu0 %v6054
        %7468 = vmatprep.subr.bf16.mxu0 0
        %7469 = vmatpush1.bf16.msra.mxu0 %v6074
        %7470 = vmatprep.subr.bf16.mxu0 0
        %7471 = vmatpush1.bf16.msra.mxu0 0
        %7472 = vmatprep.subr.bf16.mxu0 0
        %7473 = vmatpush1.bf16.msra.mxu0 0
        %7474 = vmatprep.subr.bf16.mxu0 0
        %7475 = vmatpush1.bf16.msra.mxu0 0
        %7476 = vmatprep.subr.bf16.mxu0 0
        %7477 = vmatpush1.bf16.msra.mxu0 0
        %7478 = vmatprep.subr.bf16.mxu0 0
        %7479 = vmatpush1.bf16.msra.mxu0 0
        %7480 = vmatprep.subr.bf16.mxu0 0
        %7481 = vmatpush1.bf16.msra.mxu0 0
        %7482 = vmatprep.subr.bf16.mxu0 0
        %7483 = vmatpush1.bf16.msra.mxu0 0
        %7484 = vmatprep.subr.bf16.mxu0 0
        %7485 = vmatpush1.bf16.msra.mxu0 0
        %7486 = vmatprep.subr.bf16.mxu0 0
        %7487 = vmatpush1.bf16.msra.mxu0 0
        %7488 = vmatprep.subr.bf16.mxu0 0
        %7489 = vmatpush1.bf16.msra.mxu0 0
        %7490 = vmatprep.subr.bf16.mxu0 0
        %7491 = vmatpush1.bf16.msra.mxu0 0
        %7492 = vmatprep.subr.bf16.mxu0 0
        %7493 = vmatpush1.bf16.msra.mxu0 0
        %7494 = vmatprep.subr.bf16.mxu0 0
        %7495 = vmatpush1.bf16.msra.mxu0 0
        %7496 = vmatprep.subr.bf16.mxu0 0
        %7497 = vmatpush1.bf16.msra.mxu0 0
        %7498 = vmatprep.mubr.bf16.mxu0 0
        %7499 = vmatmul.mubr.bf16.gmra.mrb[0].mxu0 %v5354
        %v7500 = vpop.f32.mrb[0].mxu0
        %v7501 = vadd.f32 %v7461, %v7500
        %v7502 = vpop.f32.mrb[0].mxu0
        %v7503 = vpop.f32.mrb[0].mxu0
        %v7504 = vpop.f32.mrb[0].mxu0
        %7505 = vdwg.mxu0
        %7506 = vmatprep.subr.bf16.mxu0 0
        %7507 = vmatpush1.bf16.msra.mxu0 %v6226
        %7508 = vmatprep.subr.bf16.mxu0 0
        %7509 = vmatpush1.bf16.msra.mxu0 %v6227
        %7510 = vmatprep.subr.bf16.mxu0 0
        %7511 = vmatpush1.bf16.msra.mxu0 %v6228
        %7512 = vmatprep.subr.bf16.mxu0 0
        %7513 = vmatpush1.bf16.msra.mxu0 %v6229
        %7514 = vmatprep.subr.bf16.mxu0 0
        %7515 = vmatpush1.bf16.msra.mxu0 %v6230
        %7516 = vmatprep.subr.bf16.mxu0 0
        %7517 = vmatpush1.bf16.msra.mxu0 %v6231
        %7518 = vmatprep.subr.bf16.mxu0 0
        %7519 = vmatpush1.bf16.msra.mxu0 %v6232
        %7520 = vmatprep.subr.bf16.mxu0 0
        %7521 = vmatpush1.bf16.msra.mxu0 %v6233
        %7522 = vmatprep.subr.bf16.mxu0 0
        %7523 = vmatpush1.bf16.msra.mxu0 %v6234
        %7524 = vmatprep.subr.bf16.mxu0 0
        %7525 = vmatpush1.bf16.msra.mxu0 %v6235
        %7526 = vmatprep.subr.bf16.mxu0 0
        %7527 = vmatpush1.bf16.msra.mxu0 %v6236
        %7528 = vmatprep.subr.bf16.mxu0 0
        %7529 = vmatpush1.bf16.msra.mxu0 %v6237
        %7530 = vmatprep.subr.bf16.mxu0 0
        %7531 = vmatpush1.bf16.msra.mxu0 %v6238
        %7532 = vmatprep.subr.bf16.mxu0 0
        %7533 = vmatpush1.bf16.msra.mxu0 %v6239
        %7534 = vmatprep.subr.bf16.mxu0 0
        %7535 = vmatpush1.bf16.msra.mxu0 %v6240
        %7536 = vmatprep.subr.bf16.mxu0 0
        %7537 = vmatpush1.bf16.msra.mxu0 %v6241
        %7538 = vmatprep.mubr.bf16.mxu0 %v4399
        %7539 = vmatmul.mubr.bf16.gmra.mrb[0].mxu0 %v4398
        %v7540 = vpop.f32.mrb[0].mxu0
        %v7541 = vadd.f32 %v7501, %v7540
        %v7542 = vpop.f32.mrb[0].mxu0
        %v7543 = vpop.f32.mrb[0].mxu0
        %v7544 = vpop.f32.mrb[0].mxu0
        %7545 = vdwg.mxu0
        %7546 = vmatprep.subr.bf16.mxu0 0
        %7547 = vmatpush1.bf16.msra.mxu0 %v6242
        %7548 = vmatprep.subr.bf16.mxu0 0
        %7549 = vmatpush1.bf16.msra.mxu0 %v6262
        %7550 = vmatprep.subr.bf16.mxu0 0
        %7551 = vmatpush1.bf16.msra.mxu0 0
        %7552 = vmatprep.subr.bf16.mxu0 0
        %7553 = vmatpush1.bf16.msra.mxu0 0
        %7554 = vmatprep.subr.bf16.mxu0 0
        %7555 = vmatpush1.bf16.msra.mxu0 0
        %7556 = vmatprep.subr.bf16.mxu0 0
        %7557 = vmatpush1.bf16.msra.mxu0 0
        %7558 = vmatprep.subr.bf16.mxu0 0
        %7559 = vmatpush1.bf16.msra.mxu0 0
        %7560 = vmatprep.subr.bf16.mxu0 0
        %7561 = vmatpush1.bf16.msra.mxu0 0
        %7562 = vmatprep.subr.bf16.mxu0 0
        %7563 = vmatpush1.bf16.msra.mxu0 0
        %7564 = vmatprep.subr.bf16.mxu0 0
        %7565 = vmatpush1.bf16.msra.mxu0 0
        %7566 = vmatprep.subr.bf16.mxu0 0
        %7567 = vmatpush1.bf16.msra.mxu0 0
        %7568 = vmatprep.subr.bf16.mxu0 0
        %7569 = vmatpush1.bf16.msra.mxu0 0
        %7570 = vmatprep.subr.bf16.mxu0 0
        %7571 = vmatpush1.bf16.msra.mxu0 0
        %7572 = vmatprep.subr.bf16.mxu0 0
        %7573 = vmatpush1.bf16.msra.mxu0 0
        %7574 = vmatprep.subr.bf16.mxu0 0
        %7575 = vmatpush1.bf16.msra.mxu0 0
        %7576 = vmatprep.subr.bf16.mxu0 0
        %7577 = vmatpush1.bf16.msra.mxu0 0
        %7578 = vmatprep.mubr.bf16.mxu0 0
        %7579 = vmatmul.mubr.bf16.gmra.mrb[0].mxu0 %v4935
        %v7580 = vpop.f32.mrb[0].mxu0
        %v7581 = vadd.f32 %v7541, %v7580
        %v7582 = vpop.f32.mrb[0].mxu0
        %v7583 = vpop.f32.mrb[0].mxu0
        %v7584 = vpop.f32.mrb[0].mxu0
        %7585 = vdwg.mxu0
        %7586 = vmatprep.subr.bf16.mxu0 0
        %7587 = vmatpush1.bf16.msra.mxu0 %v6450
        %7588 = vmatprep.subr.bf16.mxu0 0
        %7589 = vmatpush1.bf16.msra.mxu0 %v6451
        %7590 = vmatprep.subr.bf16.mxu0 0
        %7591 = vmatpush1.bf16.msra.mxu0 %v6452
        %7592 = vmatprep.subr.bf16.mxu0 0
        %7593 = vmatpush1.bf16.msra.mxu0 %v6453
        %7594 = vmatprep.subr.bf16.mxu0 0
        %7595 = vmatpush1.bf16.msra.mxu0 %v6454
        %7596 = vmatprep.subr.bf16.mxu0 0
        %7597 = vmatpush1.bf16.msra.mxu0 %v6455
        %7598 = vmatprep.subr.bf16.mxu0 0
        %7599 = vmatpush1.bf16.msra.mxu0 %v6456
        %7600 = vmatprep.subr.bf16.mxu0 0
        %7601 = vmatpush1.bf16.msra.mxu0 %v6457
        %7602 = vmatprep.subr.bf16.mxu0 0
        %7603 = vmatpush1.bf16.msra.mxu0 %v6458
        %7604 = vmatprep.subr.bf16.mxu0 0
        %7605 = vmatpush1.bf16.msra.mxu0 %v6459
        %7606 = vmatprep.subr.bf16.mxu0 0
        %7607 = vmatpush1.bf16.msra.mxu0 %v6460
        %7608 = vmatprep.subr.bf16.mxu0 0
        %7609 = vmatpush1.bf16.msra.mxu0 %v6461
        %7610 = vmatprep.subr.bf16.mxu0 0
        %7611 = vmatpush1.bf16.msra.mxu0 %v6462
        %7612 = vmatprep.subr.bf16.mxu0 0
        %7613 = vmatpush1.bf16.msra.mxu0 %v6463
        %7614 = vmatprep.subr.bf16.mxu0 0
        %7615 = vmatpush1.bf16.msra.mxu0 %v6464
        %7616 = vmatprep.subr.bf16.mxu0 0
        %7617 = vmatpush1.bf16.msra.mxu0 %v6465
        %7618 = vmatprep.mubr.bf16.mxu0 %v4577
        %7619 = vmatmul.mubr.bf16.gmra.mrb[0].mxu0 %v4576
        %v7620 = vpop.f32.mrb[0].mxu0
        %v7621 = vadd.f32 0.0, %v7620
        %v7622 = vpop.f32.mrb[0].mxu0
        %v7623 = vpop.f32.mrb[0].mxu0
        %v7624 = vpop.f32.mrb[0].mxu0
        %7625 = vdwg.mxu0
        %7626 = vmatprep.subr.bf16.mxu0 0
        %7627 = vmatpush1.bf16.msra.mxu0 %v6466
        %7628 = vmatprep.subr.bf16.mxu0 0
        %7629 = vmatpush1.bf16.msra.mxu0 %v6486
        %7630 = vmatprep.subr.bf16.mxu0 0
        %7631 = vmatpush1.bf16.msra.mxu0 0
        %7632 = vmatprep.subr.bf16.mxu0 0
        %7633 = vmatpush1.bf16.msra.mxu0 0
        %7634 = vmatprep.subr.bf16.mxu0 0
        %7635 = vmatpush1.bf16.msra.mxu0 0
        %7636 = vmatprep.subr.bf16.mxu0 0
        %7637 = vmatpush1.bf16.msra.mxu0 0
        %7638 = vmatprep.subr.bf16.mxu0 0
        %7639 = vmatpush1.bf16.msra.mxu0 0
        %7640 = vmatprep.subr.bf16.mxu0 0
        %7641 = vmatpush1.bf16.msra.mxu0 0
        %7642 = vmatprep.subr.bf16.mxu0 0
        %7643 = vmatpush1.bf16.msra.mxu0 0
        %7644 = vmatprep.subr.bf16.mxu0 0
        %7645 = vmatpush1.bf16.msra.mxu0 0
        %7646 = vmatprep.subr.bf16.mxu0 0
        %7647 = vmatpush1.bf16.msra.mxu0 0
        %7648 = vmatprep.subr.bf16.mxu0 0
        %7649 = vmatpush1.bf16.msra.mxu0 0
        %7650 = vmatprep.subr.bf16.mxu0 0
        %7651 = vmatpush1.bf16.msra.mxu0 0
        %7652 = vmatprep.subr.bf16.mxu0 0
        %7653 = vmatpush1.bf16.msra.mxu0 0
        %7654 = vmatprep.subr.bf16.mxu0 0
        %7655 = vmatpush1.bf16.msra.mxu0 0
        %7656 = vmatprep.subr.bf16.mxu0 0
        %7657 = vmatpush1.bf16.msra.mxu0 0
        %7658 = vmatprep.mubr.bf16.mxu0 0
        %7659 = vmatmul.mubr.bf16.gmra.mrb[0].mxu0 %v5582
        %v7660 = vpop.f32.mrb[0].mxu0
        %v7661 = vadd.f32 %v7621, %v7660
        %v7662 = vpop.f32.mrb[0].mxu0
        %v7663 = vpop.f32.mrb[0].mxu0
        %v7664 = vpop.f32.mrb[0].mxu0
        %7665 = vdwg.mxu0
        %v7666 = vadd.f32 %v7581, %v7661
        %7667 = vmatprep.subr.bf16.mxu0 0
        %7668 = vmatpush1.bf16.msra.mxu0 %v6675
        %7669 = vmatprep.subr.bf16.mxu0 0
        %7670 = vmatpush1.bf16.msra.mxu0 %v6676
        %7671 = vmatprep.subr.bf16.mxu0 0
        %7672 = vmatpush1.bf16.msra.mxu0 %v6677
        %7673 = vmatprep.subr.bf16.mxu0 0
        %7674 = vmatpush1.bf16.msra.mxu0 %v6678
        %7675 = vmatprep.subr.bf16.mxu0 0
        %7676 = vmatpush1.bf16.msra.mxu0 %v6679
        %7677 = vmatprep.subr.bf16.mxu0 0
        %7678 = vmatpush1.bf16.msra.mxu0 %v6680
        %7679 = vmatprep.subr.bf16.mxu0 0
        %7680 = vmatpush1.bf16.msra.mxu0 %v6681
        %7681 = vmatprep.subr.bf16.mxu0 0
        %7682 = vmatpush1.bf16.msra.mxu0 %v6682
        %7683 = vmatprep.subr.bf16.mxu0 0
        %7684 = vmatpush1.bf16.msra.mxu0 %v6683
        %7685 = vmatprep.subr.bf16.mxu0 0
        %7686 = vmatpush1.bf16.msra.mxu0 %v6684
        %7687 = vmatprep.subr.bf16.mxu0 0
        %7688 = vmatpush1.bf16.msra.mxu0 %v6685
        %7689 = vmatprep.subr.bf16.mxu0 0
        %7690 = vmatpush1.bf16.msra.mxu0 %v6686
        %7691 = vmatprep.subr.bf16.mxu0 0
        %7692 = vmatpush1.bf16.msra.mxu0 %v6687
        %7693 = vmatprep.subr.bf16.mxu0 0
        %7694 = vmatpush1.bf16.msra.mxu0 %v6688
        %7695 = vmatprep.subr.bf16.mxu0 0
        %7696 = vmatpush1.bf16.msra.mxu0 %v6689
        %7697 = vmatprep.subr.bf16.mxu0 0
        %7698 = vmatpush1.bf16.msra.mxu0 %v6690
        %7699 = vmatprep.mubr.bf16.mxu0 %v4666
        %7700 = vmatmul.mubr.bf16.gmra.mrb[0].mxu0 %v4665
        %v7701 = vpop.f32.mrb[0].mxu0
        %v7702 = vadd.f32 0.0, %v7701
        %v7703 = vpop.f32.mrb[0].mxu0
        %v7704 = vpop.f32.mrb[0].mxu0
        %v7705 = vpop.f32.mrb[0].mxu0
        %7706 = vdwg.mxu0
        %7707 = vmatprep.subr.bf16.mxu0 0
        %7708 = vmatpush1.bf16.msra.mxu0 %v6691
        %7709 = vmatprep.subr.bf16.mxu0 0
        %7710 = vmatpush1.bf16.msra.mxu0 %v6711
        %7711 = vmatprep.subr.bf16.mxu0 0
        %7712 = vmatpush1.bf16.msra.mxu0 0
        %7713 = vmatprep.subr.bf16.mxu0 0
        %7714 = vmatpush1.bf16.msra.mxu0 0
        %7715 = vmatprep.subr.bf16.mxu0 0
        %7716 = vmatpush1.bf16.msra.mxu0 0
        %7717 = vmatprep.subr.bf16.mxu0 0
        %7718 = vmatpush1.bf16.msra.mxu0 0
        %7719 = vmatprep.subr.bf16.mxu0 0
        %7720 = vmatpush1.bf16.msra.mxu0 0
        %7721 = vmatprep.subr.bf16.mxu0 0
        %7722 = vmatpush1.bf16.msra.mxu0 0
        %7723 = vmatprep.subr.bf16.mxu0 0
        %7724 = vmatpush1.bf16.msra.mxu0 0
        %7725 = vmatprep.subr.bf16.mxu0 0
        %7726 = vmatpush1.bf16.msra.mxu0 0
        %7727 = vmatprep.subr.bf16.mxu0 0
        %7728 = vmatpush1.bf16.msra.mxu0 0
        %7729 = vmatprep.subr.bf16.mxu0 0
        %7730 = vmatpush1.bf16.msra.mxu0 0
        %7731 = vmatprep.subr.bf16.mxu0 0
        %7732 = vmatpush1.bf16.msra.mxu0 0
        %7733 = vmatprep.subr.bf16.mxu0 0
        %7734 = vmatpush1.bf16.msra.mxu0 0
        %7735 = vmatprep.subr.bf16.mxu0 0
        %7736 = vmatpush1.bf16.msra.mxu0 0
        %7737 = vmatprep.subr.bf16.mxu0 0
        %7738 = vmatpush1.bf16.msra.mxu0 0
        %7739 = vmatprep.mubr.bf16.mxu0 0
        %7740 = vmatmul.mubr.bf16.gmra.mrb[0].mxu0 %v5810
        %v7741 = vpop.f32.mrb[0].mxu0
        %v7742 = vadd.f32 %v7702, %v7741
        %v7743 = vpop.f32.mrb[0].mxu0
        %v7744 = vpop.f32.mrb[0].mxu0
        %v7745 = vpop.f32.mrb[0].mxu0
        %7746 = vdwg.mxu0
        %v7747 = vadd.f32 %v7666, %v7742
        %7748 = vmatprep.subr.bf16.mxu0 0
        %7749 = vmatpush1.bf16.msra.mxu0 %v6900
        %7750 = vmatprep.subr.bf16.mxu0 0
        %7751 = vmatpush1.bf16.msra.mxu0 %v6901
        %7752 = vmatprep.subr.bf16.mxu0 0
        %7753 = vmatpush1.bf16.msra.mxu0 %v6902
        %7754 = vmatprep.subr.bf16.mxu0 0
        %7755 = vmatpush1.bf16.msra.mxu0 %v6903
        %7756 = vmatprep.subr.bf16.mxu0 0
        %7757 = vmatpush1.bf16.msra.mxu0 %v6904
        %7758 = vmatprep.subr.bf16.mxu0 0
        %7759 = vmatpush1.bf16.msra.mxu0 %v6905
        %7760 = vmatprep.subr.bf16.mxu0 0
        %7761 = vmatpush1.bf16.msra.mxu0 %v6906
        %7762 = vmatprep.subr.bf16.mxu0 0
        %7763 = vmatpush1.bf16.msra.mxu0 %v6907
        %7764 = vmatprep.subr.bf16.mxu0 0
        %7765 = vmatpush1.bf16.msra.mxu0 %v6908
        %7766 = vmatprep.subr.bf16.mxu0 0
        %7767 = vmatpush1.bf16.msra.mxu0 %v6909
        %7768 = vmatprep.subr.bf16.mxu0 0
        %7769 = vmatpush1.bf16.msra.mxu0 %v6910
        %7770 = vmatprep.subr.bf16.mxu0 0
        %7771 = vmatpush1.bf16.msra.mxu0 %v6911
        %7772 = vmatprep.subr.bf16.mxu0 0
        %7773 = vmatpush1.bf16.msra.mxu0 %v6912
        %7774 = vmatprep.subr.bf16.mxu0 0
        %7775 = vmatpush1.bf16.msra.mxu0 %v6913
        %7776 = vmatprep.subr.bf16.mxu0 0
        %7777 = vmatpush1.bf16.msra.mxu0 %v6914
        %7778 = vmatprep.subr.bf16.mxu0 0
        %7779 = vmatpush1.bf16.msra.mxu0 %v6915
        %7780 = vmatprep.mubr.bf16.mxu0 %v4755
        %7781 = vmatmul.mubr.bf16.gmra.mrb[0].mxu0 %v4754
        %v7782 = vpop.f32.mrb[0].mxu0
        %v7783 = vadd.f32 0.0, %v7782
        %v7784 = vpop.f32.mrb[0].mxu0
        %v7785 = vpop.f32.mrb[0].mxu0
        %v7786 = vpop.f32.mrb[0].mxu0
        %7787 = vdwg.mxu0
        %7788 = vmatprep.subr.bf16.mxu0 0
        %7789 = vmatpush1.bf16.msra.mxu0 %v6916
        %7790 = vmatprep.subr.bf16.mxu0 0
        %7791 = vmatpush1.bf16.msra.mxu0 %v6936
        %7792 = vmatprep.subr.bf16.mxu0 0
        %7793 = vmatpush1.bf16.msra.mxu0 0
        %7794 = vmatprep.subr.bf16.mxu0 0
        %7795 = vmatpush1.bf16.msra.mxu0 0
        %7796 = vmatprep.subr.bf16.mxu0 0
        %7797 = vmatpush1.bf16.msra.mxu0 0
        %7798 = vmatprep.subr.bf16.mxu0 0
        %7799 = vmatpush1.bf16.msra.mxu0 0
        %7800 = vmatprep.subr.bf16.mxu0 0
        %7801 = vmatpush1.bf16.msra.mxu0 0
        %7802 = vmatprep.subr.bf16.mxu0 0
        %7803 = vmatpush1.bf16.msra.mxu0 0
        %7804 = vmatprep.subr.bf16.mxu0 0
        %7805 = vmatpush1.bf16.msra.mxu0 0
        %7806 = vmatprep.subr.bf16.mxu0 0
        %7807 = vmatpush1.bf16.msra.mxu0 0
        %7808 = vmatprep.subr.bf16.mxu0 0
        %7809 = vmatpush1.bf16.msra.mxu0 0
        %7810 = vmatprep.subr.bf16.mxu0 0
        %7811 = vmatpush1.bf16.msra.mxu0 0
        %7812 = vmatprep.subr.bf16.mxu0 0
        %7813 = vmatpush1.bf16.msra.mxu0 0
        %7814 = vmatprep.subr.bf16.mxu0 0
        %7815 = vmatpush1.bf16.msra.mxu0 0
        %7816 = vmatprep.subr.bf16.mxu0 0
        %7817 = vmatpush1.bf16.msra.mxu0 0
        %7818 = vmatprep.subr.bf16.mxu0 0
        %7819 = vmatpush1.bf16.msra.mxu0 0
        %7820 = vmatprep.mubr.bf16.mxu0 0
        %7821 = vmatmul.mubr.bf16.gmra.mrb[0].mxu0 %v7343
        %v7822 = vpop.f32.mrb[0].mxu0
        %v7823 = vadd.f32 %v7783, %v7822
        %v7824 = vpop.f32.mrb[0].mxu0
        %v7825 = vpop.f32.mrb[0].mxu0
        %v7826 = vpop.f32.mrb[0].mxu0
        %7827 = vdwg.mxu0
        %v7828 = vadd.f32 %v7747, %v7823
        %v7829 = vmax.f32 %v7425, %v7828
        %v7830 = vmax.f32 %v7019, %v7829
        %v7831 = vld [vmem:[%s10] sm:$0x1]
        %v7833 = vlaneseq
        %v7834 = vshrl.u32 %v7833, 7
        %v7835 = vsub.s32 0, %v7834
        %v7836 = vrot.slane %v7831, %v7835
        %v7838 = vadd.f32 %v7830, %v7836
        %v7839 = vmax.f32 %v7838, 0.0
        %v7840 = vpack.c.bf16 %v7839, %v7839
        %v7841 = vld [vmem:[%s4] sm:$0x1]
        %vm7842 = vcmask 39936
        %v7844 = vsel %vm7842, %v7841, 0
        %vm7846 = vcmask 1041408
        %vm7847 = vcmask 1042432
        %v7848 = vsel %vm7846, 4294967295, 65535
        %v7849 = vsel %vm7847, %v7848, 0
        %v7851 = vand.u32 %v7840, %v7849
        %7853 = vmatprep.subr.bf16.mxu0 0
        %7854 = vmatpush1.bf16.msra.mxu0 %v7851
        %7855 = vmatprep.subr.bf16.mxu0 0
        %7856 = vmatpush1.bf16.msra.mxu0 0
        %7857 = vmatprep.subr.bf16.mxu0 0
        %7858 = vmatpush1.bf16.msra.mxu0 0
        %7859 = vmatprep.subr.bf16.mxu0 0
        %7860 = vmatpush1.bf16.msra.mxu0 0
        %7861 = vmatprep.subr.bf16.mxu0 0
        %7862 = vmatpush1.bf16.msra.mxu0 0
        %7863 = vmatprep.subr.bf16.mxu0 0
        %7864 = vmatpush1.bf16.msra.mxu0 0
        %7865 = vmatprep.subr.bf16.mxu0 0
        %7866 = vmatpush1.bf16.msra.mxu0 0
        %7867 = vmatprep.subr.bf16.mxu0 0
        %7868 = vmatpush1.bf16.msra.mxu0 0
        %7869 = vmatprep.subr.bf16.mxu0 0
        %7870 = vmatpush1.bf16.msra.mxu0 0
        %7871 = vmatprep.subr.bf16.mxu0 0
        %7872 = vmatpush1.bf16.msra.mxu0 0
        %7873 = vmatprep.subr.bf16.mxu0 0
        %7874 = vmatpush1.bf16.msra.mxu0 0
        %7875 = vmatprep.subr.bf16.mxu0 0
        %7876 = vmatpush1.bf16.msra.mxu0 0
        %7877 = vmatprep.subr.bf16.mxu0 0
        %7878 = vmatpush1.bf16.msra.mxu0 0
        %7879 = vmatprep.subr.bf16.mxu0 0
        %7880 = vmatpush1.bf16.msra.mxu0 0
        %7881 = vmatprep.subr.bf16.mxu0 0
        %7882 = vmatpush1.bf16.msra.mxu0 0
        %7883 = vmatprep.subr.bf16.mxu0 0
        %7884 = vmatpush1.bf16.msra.mxu0 0
        %7885 = vmatprep.mubr.bf16.mxu0 0
        %7886 = vmatmul.mubr.bf16.gmra.mrb[0].mxu0 %v7844
        %v7887 = vpop.f32.mrb[0].mxu0
        %v7888 = vadd.f32 0.0, %v7887
        %v7889 = vpop.f32.mrb[0].mxu0
        %v7890 = vpop.f32.mrb[0].mxu0
        %v7891 = vpop.f32.mrb[0].mxu0
        %7892 = vdwg.mxu0
        %v7893 = vpack.c.bf16 %v7888, %v7888
        %v7894 = vld [vmem:[%s11] sm:$0xf]
        %v7895 = vld [vmem:[%s11 + $0x4] sm:$0xf]
        %v7896 = vld [vmem:[%s11 + $0x8] sm:$0xf]
        %v7897 = vld [vmem:[%s11 + $0xc] sm:$0xf]
        %v7898 = vld [vmem:[%s11 + $0x10] sm:$0xf]
        %v7899 = vld [vmem:[%s11 + $0x14] sm:$0xf]
        %v7900 = vld [vmem:[%s11 + $0x18] sm:$0xf]
        %v7901 = vld [vmem:[%s11 + $0x1c] sm:$0xf]
        %v7902 = vld [vmem:[%s11 + $0x20] sm:$0xf]
        %v7903 = vld [vmem:[%s11 + $0x24] sm:$0xf]
        %v7904 = vld [vmem:[%s11 + $0x28] sm:$0xf]
        %v7905 = vld [vmem:[%s11 + $0x2c] sm:$0xf]
        %v7906 = vld [vmem:[%s11 + $0x30] sm:$0x3]
        %s7907 = scalar_lea.vmem %s4, 1
        %v7908 = vld [vmem:[%s7907] sm:$0x1]
        %v7910 = vsel %vm7842, %v7908, 0
        %7912 = vmatprep.subr.bf16.mxu0 0
        %7913 = vmatpush1.bf16.msra.mxu0 %v7851
        %7914 = vmatprep.subr.bf16.mxu0 0
        %7915 = vmatpush1.bf16.msra.mxu0 0
        %7916 = vmatprep.subr.bf16.mxu0 0
        %7917 = vmatpush1.bf16.msra.mxu0 0
        %7918 = vmatprep.subr.bf16.mxu0 0
        %7919 = vmatpush1.bf16.msra.mxu0 0
        %7920 = vmatprep.subr.bf16.mxu0 0
        %7921 = vmatpush1.bf16.msra.mxu0 0
        %7922 = vmatprep.subr.bf16.mxu0 0
        %7923 = vmatpush1.bf16.msra.mxu0 0
        %7924 = vmatprep.subr.bf16.mxu0 0
        %7925 = vmatpush1.bf16.msra.mxu0 0
        %7926 = vmatprep.subr.bf16.mxu0 0
        %7927 = vmatpush1.bf16.msra.mxu0 0
        %7928 = vmatprep.subr.bf16.mxu0 0
        %7929 = vmatpush1.bf16.msra.mxu0 0
        %7930 = vmatprep.subr.bf16.mxu0 0
        %7931 = vmatpush1.bf16.msra.mxu0 0
        %7932 = vmatprep.subr.bf16.mxu0 0
        %7933 = vmatpush1.bf16.msra.mxu0 0
        %7934 = vmatprep.subr.bf16.mxu0 0
        %7935 = vmatpush1.bf16.msra.mxu0 0
        %7936 = vmatprep.subr.bf16.mxu0 0
        %7937 = vmatpush1.bf16.msra.mxu0 0
        %7938 = vmatprep.subr.bf16.mxu0 0
        %7939 = vmatpush1.bf16.msra.mxu0 0
        %7940 = vmatprep.subr.bf16.mxu0 0
        %7941 = vmatpush1.bf16.msra.mxu0 0
        %7942 = vmatprep.subr.bf16.mxu0 0
        %7943 = vmatpush1.bf16.msra.mxu0 0
        %7944 = vmatprep.mubr.bf16.mxu0 0
        %7945 = vmatmul.mubr.bf16.gmra.mrb[0].mxu0 %v7910
        %v7946 = vpop.f32.mrb[0].mxu0
        %v7947 = vadd.f32 0.0, %v7946
        %v7948 = vpop.f32.mrb[0].mxu0
        %v7949 = vpop.f32.mrb[0].mxu0
        %v7950 = vpop.f32.mrb[0].mxu0
        %7951 = vdwg.mxu0
        %v7952 = vpack.c.bf16 %v7947, %v7947
        %s7953 = scalar_lea.vmem %s11, 52
        %v7954 = vld [vmem:[%s7953] sm:$0xf]
        %v7955 = vld [vmem:[%s7953 + $0x4] sm:$0xf]
        %v7956 = vld [vmem:[%s7953 + $0x8] sm:$0xf]
        %v7957 = vld [vmem:[%s7953 + $0xc] sm:$0xf]
        %v7958 = vld [vmem:[%s7953 + $0x10] sm:$0xf]
        %v7959 = vld [vmem:[%s7953 + $0x14] sm:$0xf]
        %v7960 = vld [vmem:[%s7953 + $0x18] sm:$0xf]
        %v7961 = vld [vmem:[%s7953 + $0x1c] sm:$0xf]
        %v7962 = vld [vmem:[%s7953 + $0x20] sm:$0xf]
        %v7963 = vld [vmem:[%s7953 + $0x24] sm:$0xf]
        %v7964 = vld [vmem:[%s7953 + $0x28] sm:$0xf]
        %v7965 = vld [vmem:[%s7953 + $0x2c] sm:$0xf]
        %v7966 = vld [vmem:[%s7953 + $0x30] sm:$0x3]
        %v7980 = vunpack.c.l.b16 %v7954
        %v7981 = vunpack.c.l.b16 %v7955
        %v7982 = vunpack.c.l.b16 %v7956
        %v7983 = vunpack.c.l.b16 %v7957
        %v7984 = vunpack.c.l.b16 %v7958
        %v7985 = vunpack.c.l.b16 %v7959
        %v7986 = vunpack.c.l.b16 %v7960
        %v7987 = vunpack.c.l.b16 %v7961
        %v7988 = vunpack.c.l.b16 %v7962
        %v7989 = vunpack.c.l.b16 %v7963
        %v7990 = vunpack.c.l.b16 %v7964
        %v7991 = vunpack.c.l.b16 %v7965
        %v7992 = vunpack.c.l.b16 %v7966
        %v7993 = vpack.c.b16 %v7981, %v7980
        %v7994 = vpack.c.b16 %v7983, %v7982
        %v7995 = vpack.c.b16 %v7985, %v7984
        %v7996 = vpack.c.b16 %v7987, %v7986
        %v7997 = vpack.c.b16 %v7989, %v7988
        %v7998 = vpack.c.b16 %v7991, %v7990
        %v7999 = vpack.c.b16 %v7992, %v7992
        %vm8006 = vcmask 818176
        %v8008 = vsel %vm8006, %v7952, 0
        %v8011 = vsel %vm7846, %v7999, 0
        %8013 = vmatprep.subr.bf16.mxu0 0
        %8014 = vmatpush1.bf16.msra.mxu0 %v7993
        %8015 = vmatprep.subr.bf16.mxu0 0
        %8016 = vmatpush1.bf16.msra.mxu0 %v7994
        %8017 = vmatprep.subr.bf16.mxu0 0
        %8018 = vmatpush1.bf16.msra.mxu0 %v7995
        %8019 = vmatprep.subr.bf16.mxu0 0
        %8020 = vmatpush1.bf16.msra.mxu0 %v7996
        %8021 = vmatprep.subr.bf16.mxu0 0
        %8022 = vmatpush1.bf16.msra.mxu0 %v7997
        %8023 = vmatprep.subr.bf16.mxu0 0
        %8024 = vmatpush1.bf16.msra.mxu0 %v7998
        %8025 = vmatprep.subr.bf16.mxu0 0
        %8026 = vmatpush1.bf16.msra.mxu0 %v8011
        %8027 = vmatprep.subr.bf16.mxu0 0
        %8028 = vmatpush1.bf16.msra.mxu0 0
        %8029 = vmatprep.subr.bf16.mxu0 0
        %8030 = vmatpush1.bf16.msra.mxu0 0
        %8031 = vmatprep.subr.bf16.mxu0 0
        %8032 = vmatpush1.bf16.msra.mxu0 0
        %8033 = vmatprep.subr.bf16.mxu0 0
        %8034 = vmatpush1.bf16.msra.mxu0 0
        %8035 = vmatprep.subr.bf16.mxu0 0
        %8036 = vmatpush1.bf16.msra.mxu0 0
        %8037 = vmatprep.subr.bf16.mxu0 0
        %8038 = vmatpush1.bf16.msra.mxu0 0
        %8039 = vmatprep.subr.bf16.mxu0 0
        %8040 = vmatpush1.bf16.msra.mxu0 0
        %8041 = vmatprep.subr.bf16.mxu0 0
        %8042 = vmatpush1.bf16.msra.mxu0 0
        %8043 = vmatprep.subr.bf16.mxu0 0
        %8044 = vmatpush1.bf16.msra.mxu0 0
        %8045 = vmatprep.mubr.bf16.mxu0 0
        %8046 = vmatmul.mubr.bf16.gmra.mrb[0].mxu0 %v8008
        %v8047 = vpop.f32.mrb[0].mxu0
        %v8048 = vadd.f32 0.0, %v8047
        %v8049 = vpop.f32.mrb[0].mxu0
        %v8050 = vpop.f32.mrb[0].mxu0
        %v8051 = vpop.f32.mrb[0].mxu0
        %8052 = vdwg.mxu0
        %v8066 = vunpack.c.l.b16 %v7894
        %v8067 = vunpack.c.l.b16 %v7895
        %v8068 = vunpack.c.l.b16 %v7896
        %v8069 = vunpack.c.l.b16 %v7897
        %v8070 = vunpack.c.l.b16 %v7898
        %v8071 = vunpack.c.l.b16 %v7899
        %v8072 = vunpack.c.l.b16 %v7900
        %v8073 = vunpack.c.l.b16 %v7901
        %v8074 = vunpack.c.l.b16 %v7902
        %v8075 = vunpack.c.l.b16 %v7903
        %v8076 = vunpack.c.l.b16 %v7904
        %v8077 = vunpack.c.l.b16 %v7905
        %v8078 = vunpack.c.l.b16 %v7906
        %v8079 = vpack.c.b16 %v8067, %v8066
        %v8080 = vpack.c.b16 %v8069, %v8068
        %v8081 = vpack.c.b16 %v8071, %v8070
        %v8082 = vpack.c.b16 %v8073, %v8072
        %v8083 = vpack.c.b16 %v8075, %v8074
        %v8084 = vpack.c.b16 %v8077, %v8076
        %v8085 = vpack.c.b16 %v8078, %v8078
        %v8093 = vsel %vm8006, %v7893, 0
        %v8096 = vsel %vm7846, %v8085, 0
        %8098 = vmatprep.subr.bf16.mxu0 0
        %8099 = vmatpush1.bf16.msra.mxu0 %v8079
        %8100 = vmatprep.subr.bf16.mxu0 0
        %8101 = vmatpush1.bf16.msra.mxu0 %v8080
        %8102 = vmatprep.subr.bf16.mxu0 0
        %8103 = vmatpush1.bf16.msra.mxu0 %v8081
        %8104 = vmatprep.subr.bf16.mxu0 0
        %8105 = vmatpush1.bf16.msra.mxu0 %v8082
        %8106 = vmatprep.subr.bf16.mxu0 0
        %8107 = vmatpush1.bf16.msra.mxu0 %v8083
        %8108 = vmatprep.subr.bf16.mxu0 0
        %8109 = vmatpush1.bf16.msra.mxu0 %v8084
        %8110 = vmatprep.subr.bf16.mxu0 0
        %8111 = vmatpush1.bf16.msra.mxu0 %v8096
        %8112 = vmatprep.subr.bf16.mxu0 0
        %8113 = vmatpush1.bf16.msra.mxu0 0
        %8114 = vmatprep.subr.bf16.mxu0 0
        %8115 = vmatpush1.bf16.msra.mxu0 0
        %8116 = vmatprep.subr.bf16.mxu0 0
        %8117 = vmatpush1.bf16.msra.mxu0 0
        %8118 = vmatprep.subr.bf16.mxu0 0
        %8119 = vmatpush1.bf16.msra.mxu0 0
        %8120 = vmatprep.subr.bf16.mxu0 0
        %8121 = vmatpush1.bf16.msra.mxu0 0
        %8122 = vmatprep.subr.bf16.mxu0 0
        %8123 = vmatpush1.bf16.msra.mxu0 0
        %8124 = vmatprep.subr.bf16.mxu0 0
        %8125 = vmatpush1.bf16.msra.mxu0 0
        %8126 = vmatprep.subr.bf16.mxu0 0
        %8127 = vmatpush1.bf16.msra.mxu0 0
        %8128 = vmatprep.subr.bf16.mxu0 0
        %8129 = vmatpush1.bf16.msra.mxu0 0
        %8130 = vmatprep.mubr.bf16.mxu0 0
        %8131 = vmatmul.mubr.bf16.gmra.mrb[0].mxu0 %v8093
        %v8132 = vpop.f32.mrb[0].mxu0
        %v8133 = vadd.f32 %v8048, %v8132
        %v8134 = vpop.f32.mrb[0].mxu0
        %v8135 = vpop.f32.mrb[0].mxu0
        %v8136 = vpop.f32.mrb[0].mxu0
        %8137 = vdwg.mxu0
        %s8138 = scalar_lea.vmem %s4, 2
        %v8139 = vld [vmem:[%s8138] sm:$0x1]
        %v8141 = vsel %vm7842, %v8139, 0
        %8143 = vmatprep.subr.bf16.mxu0 0
        %8144 = vmatpush1.bf16.msra.mxu0 %v7851
        %8145 = vmatprep.subr.bf16.mxu0 0
        %8146 = vmatpush1.bf16.msra.mxu0 0
        %8147 = vmatprep.subr.bf16.mxu0 0
        %8148 = vmatpush1.bf16.msra.mxu0 0
        %8149 = vmatprep.subr.bf16.mxu0 0
        %8150 = vmatpush1.bf16.msra.mxu0 0
        %8151 = vmatprep.subr.bf16.mxu0 0
        %8152 = vmatpush1.bf16.msra.mxu0 0
        %8153 = vmatprep.subr.bf16.mxu0 0
        %8154 = vmatpush1.bf16.msra.mxu0 0
        %8155 = vmatprep.subr.bf16.mxu0 0
        %8156 = vmatpush1.bf16.msra.mxu0 0
        %8157 = vmatprep.subr.bf16.mxu0 0
        %8158 = vmatpush1.bf16.msra.mxu0 0
        %8159 = vmatprep.subr.bf16.mxu0 0
        %8160 = vmatpush1.bf16.msra.mxu0 0
        %8161 = vmatprep.subr.bf16.mxu0 0
        %8162 = vmatpush1.bf16.msra.mxu0 0
        %8163 = vmatprep.subr.bf16.mxu0 0
        %8164 = vmatpush1.bf16.msra.mxu0 0
        %8165 = vmatprep.subr.bf16.mxu0 0
        %8166 = vmatpush1.bf16.msra.mxu0 0
        %8167 = vmatprep.subr.bf16.mxu0 0
        %8168 = vmatpush1.bf16.msra.mxu0 0
        %8169 = vmatprep.subr.bf16.mxu0 0
        %8170 = vmatpush1.bf16.msra.mxu0 0
        %8171 = vmatprep.subr.bf16.mxu0 0
        %8172 = vmatpush1.bf16.msra.mxu0 0
        %8173 = vmatprep.subr.bf16.mxu0 0
        %8174 = vmatpush1.bf16.msra.mxu0 0
        %8175 = vmatprep.mubr.bf16.mxu0 0
        %8176 = vmatmul.mubr.bf16.gmra.mrb[0].mxu0 %v8141
        %v8177 = vpop.f32.mrb[0].mxu0
        %v8178 = vadd.f32 0.0, %v8177
        %v8179 = vpop.f32.mrb[0].mxu0
        %v8180 = vpop.f32.mrb[0].mxu0
        %v8181 = vpop.f32.mrb[0].mxu0
        %8182 = vdwg.mxu0
        %v8183 = vpack.c.bf16 %v8178, %v8178
        %s8184 = scalar_lea.vmem %s11, 104
        %v8185 = vld [vmem:[%s8184] sm:$0xf]
        %v8186 = vld [vmem:[%s8184 + $0x4] sm:$0xf]
        %v8187 = vld [vmem:[%s8184 + $0x8] sm:$0xf]
        %v8188 = vld [vmem:[%s8184 + $0xc] sm:$0xf]
        %v8189 = vld [vmem:[%s8184 + $0x10] sm:$0xf]
        %v8190 = vld [vmem:[%s8184 + $0x14] sm:$0xf]
        %v8191 = vld [vmem:[%s8184 + $0x18] sm:$0xf]
        %v8192 = vld [vmem:[%s8184 + $0x1c] sm:$0xf]
        %v8193 = vld [vmem:[%s8184 + $0x20] sm:$0xf]
        %v8194 = vld [vmem:[%s8184 + $0x24] sm:$0xf]
        %v8195 = vld [vmem:[%s8184 + $0x28] sm:$0xf]
        %v8196 = vld [vmem:[%s8184 + $0x2c] sm:$0xf]
        %v8197 = vld [vmem:[%s8184 + $0x30] sm:$0x3]
        %v8211 = vunpack.c.l.b16 %v8185
        %v8212 = vunpack.c.l.b16 %v8186
        %v8213 = vunpack.c.l.b16 %v8187
        %v8214 = vunpack.c.l.b16 %v8188
        %v8215 = vunpack.c.l.b16 %v8189
        %v8216 = vunpack.c.l.b16 %v8190
        %v8217 = vunpack.c.l.b16 %v8191
        %v8218 = vunpack.c.l.b16 %v8192
        %v8219 = vunpack.c.l.b16 %v8193
        %v8220 = vunpack.c.l.b16 %v8194
        %v8221 = vunpack.c.l.b16 %v8195
        %v8222 = vunpack.c.l.b16 %v8196
        %v8223 = vunpack.c.l.b16 %v8197
        %v8224 = vpack.c.b16 %v8212, %v8211
        %v8225 = vpack.c.b16 %v8214, %v8213
        %v8226 = vpack.c.b16 %v8216, %v8215
        %v8227 = vpack.c.b16 %v8218, %v8217
        %v8228 = vpack.c.b16 %v8220, %v8219
        %v8229 = vpack.c.b16 %v8222, %v8221
        %v8230 = vpack.c.b16 %v8223, %v8223
        %v8238 = vsel %vm8006, %v8183, 0
        %v8241 = vsel %vm7846, %v8230, 0
        %8243 = vmatprep.subr.bf16.mxu0 0
        %8244 = vmatpush1.bf16.msra.mxu0 %v8224
        %8245 = vmatprep.subr.bf16.mxu0 0
        %8246 = vmatpush1.bf16.msra.mxu0 %v8225
        %8247 = vmatprep.subr.bf16.mxu0 0
        %8248 = vmatpush1.bf16.msra.mxu0 %v8226
        %8249 = vmatprep.subr.bf16.mxu0 0
        %8250 = vmatpush1.bf16.msra.mxu0 %v8227
        %8251 = vmatprep.subr.bf16.mxu0 0
        %8252 = vmatpush1.bf16.msra.mxu0 %v8228
        %8253 = vmatprep.subr.bf16.mxu0 0
        %8254 = vmatpush1.bf16.msra.mxu0 %v8229
        %8255 = vmatprep.subr.bf16.mxu0 0
        %8256 = vmatpush1.bf16.msra.mxu0 %v8241
        %8257 = vmatprep.subr.bf16.mxu0 0
        %8258 = vmatpush1.bf16.msra.mxu0 0
        %8259 = vmatprep.subr.bf16.mxu0 0
        %8260 = vmatpush1.bf16.msra.mxu0 0
        %8261 = vmatprep.subr.bf16.mxu0 0
        %8262 = vmatpush1.bf16.msra.mxu0 0
        %8263 = vmatprep.subr.bf16.mxu0 0
        %8264 = vmatpush1.bf16.msra.mxu0 0
        %8265 = vmatprep.subr.bf16.mxu0 0
        %8266 = vmatpush1.bf16.msra.mxu0 0
        %8267 = vmatprep.subr.bf16.mxu0 0
        %8268 = vmatpush1.bf16.msra.mxu0 0
        %8269 = vmatprep.subr.bf16.mxu0 0
        %8270 = vmatpush1.bf16.msra.mxu0 0
        %8271 = vmatprep.subr.bf16.mxu0 0
        %8272 = vmatpush1.bf16.msra.mxu0 0
        %8273 = vmatprep.subr.bf16.mxu0 0
        %8274 = vmatpush1.bf16.msra.mxu0 0
        %8275 = vmatprep.mubr.bf16.mxu0 0
        %8276 = vmatmul.mubr.bf16.gmra.mrb[0].mxu0 %v8238
        %v8277 = vpop.f32.mrb[0].mxu0
        %v8278 = vadd.f32 0.0, %v8277
        %v8279 = vpop.f32.mrb[0].mxu0
        %v8280 = vpop.f32.mrb[0].mxu0
        %v8281 = vpop.f32.mrb[0].mxu0
        %8282 = vdwg.mxu0
        %v8283 = vadd.f32 %v8133, %v8278
        %s8284 = scalar_lea.vmem %s4, 3
        %v8285 = vld [vmem:[%s8284] sm:$0x1]
        %v8287 = vsel %vm7842, %v8285, 0
        %8289 = vmatprep.subr.bf16.mxu0 0
        %8290 = vmatpush1.bf16.msra.mxu0 %v7851
        %8291 = vmatprep.subr.bf16.mxu0 0
        %8292 = vmatpush1.bf16.msra.mxu0 0
        %8293 = vmatprep.subr.bf16.mxu0 0
        %8294 = vmatpush1.bf16.msra.mxu0 0
        %8295 = vmatprep.subr.bf16.mxu0 0
        %8296 = vmatpush1.bf16.msra.mxu0 0
        %8297 = vmatprep.subr.bf16.mxu0 0
        %8298 = vmatpush1.bf16.msra.mxu0 0
        %8299 = vmatprep.subr.bf16.mxu0 0
        %8300 = vmatpush1.bf16.msra.mxu0 0
        %8301 = vmatprep.subr.bf16.mxu0 0
        %8302 = vmatpush1.bf16.msra.mxu0 0
        %8303 = vmatprep.subr.bf16.mxu0 0
        %8304 = vmatpush1.bf16.msra.mxu0 0
        %8305 = vmatprep.subr.bf16.mxu0 0
        %8306 = vmatpush1.bf16.msra.mxu0 0
        %8307 = vmatprep.subr.bf16.mxu0 0
        %8308 = vmatpush1.bf16.msra.mxu0 0
        %8309 = vmatprep.subr.bf16.mxu0 0
        %8310 = vmatpush1.bf16.msra.mxu0 0
        %8311 = vmatprep.subr.bf16.mxu0 0
        %8312 = vmatpush1.bf16.msra.mxu0 0
        %8313 = vmatprep.subr.bf16.mxu0 0
        %8314 = vmatpush1.bf16.msra.mxu0 0
        %8315 = vmatprep.subr.bf16.mxu0 0
        %8316 = vmatpush1.bf16.msra.mxu0 0
        %8317 = vmatprep.subr.bf16.mxu0 0
        %8318 = vmatpush1.bf16.msra.mxu0 0
        %8319 = vmatprep.subr.bf16.mxu0 0
        %8320 = vmatpush1.bf16.msra.mxu0 0
        %8321 = vmatprep.mubr.bf16.mxu0 0
        %8322 = vmatmul.mubr.bf16.gmra.mrb[0].mxu0 %v8287
        %v8323 = vpop.f32.mrb[0].mxu0
        %v8324 = vadd.f32 0.0, %v8323
        %v8325 = vpop.f32.mrb[0].mxu0
        %v8326 = vpop.f32.mrb[0].mxu0
        %v8327 = vpop.f32.mrb[0].mxu0
        %8328 = vdwg.mxu0
        %v8329 = vpack.c.bf16 %v8324, %v8324
        %s8330 = scalar_lea.vmem %s11, 156
        %v8331 = vld [vmem:[%s8330] sm:$0xf]
        %v8332 = vld [vmem:[%s8330 + $0x4] sm:$0xf]
        %v8333 = vld [vmem:[%s8330 + $0x8] sm:$0xf]
        %v8334 = vld [vmem:[%s8330 + $0xc] sm:$0xf]
        %v8335 = vld [vmem:[%s8330 + $0x10] sm:$0xf]
        %v8336 = vld [vmem:[%s8330 + $0x14] sm:$0xf]
        %v8337 = vld [vmem:[%s8330 + $0x18] sm:$0xf]
        %v8338 = vld [vmem:[%s8330 + $0x1c] sm:$0xf]
        %v8339 = vld [vmem:[%s8330 + $0x20] sm:$0xf]
        %v8340 = vld [vmem:[%s8330 + $0x24] sm:$0xf]
        %v8341 = vld [vmem:[%s8330 + $0x28] sm:$0xf]
        %v8342 = vld [vmem:[%s8330 + $0x2c] sm:$0xf]
        %v8343 = vld [vmem:[%s8330 + $0x30] sm:$0x3]
        %v8357 = vunpack.c.l.b16 %v8331
        %v8358 = vunpack.c.l.b16 %v8332
        %v8359 = vunpack.c.l.b16 %v8333
        %v8360 = vunpack.c.l.b16 %v8334
        %v8361 = vunpack.c.l.b16 %v8335
        %v8362 = vunpack.c.l.b16 %v8336
        %v8363 = vunpack.c.l.b16 %v8337
        %v8364 = vunpack.c.l.b16 %v8338
        %v8365 = vunpack.c.l.b16 %v8339
        %v8366 = vunpack.c.l.b16 %v8340
        %v8367 = vunpack.c.l.b16 %v8341
        %v8368 = vunpack.c.l.b16 %v8342
        %v8369 = vunpack.c.l.b16 %v8343
        %v8370 = vpack.c.b16 %v8358, %v8357
        %v8371 = vpack.c.b16 %v8360, %v8359
        %v8372 = vpack.c.b16 %v8362, %v8361
        %v8373 = vpack.c.b16 %v8364, %v8363
        %v8374 = vpack.c.b16 %v8366, %v8365
        %v8375 = vpack.c.b16 %v8368, %v8367
        %v8376 = vpack.c.b16 %v8369, %v8369
        %v8384 = vsel %vm8006, %v8329, 0
        %v8387 = vsel %vm7846, %v8376, 0
        %8389 = vmatprep.subr.bf16.mxu0 0
        %8390 = vmatpush1.bf16.msra.mxu0 %v8370
        %8391 = vmatprep.subr.bf16.mxu0 0
        %8392 = vmatpush1.bf16.msra.mxu0 %v8371
        %8393 = vmatprep.subr.bf16.mxu0 0
        %8394 = vmatpush1.bf16.msra.mxu0 %v8372
        %8395 = vmatprep.subr.bf16.mxu0 0
        %8396 = vmatpush1.bf16.msra.mxu0 %v8373
        %8397 = vmatprep.subr.bf16.mxu0 0
        %8398 = vmatpush1.bf16.msra.mxu0 %v8374
        %8399 = vmatprep.subr.bf16.mxu0 0
        %8400 = vmatpush1.bf16.msra.mxu0 %v8375
        %8401 = vmatprep.subr.bf16.mxu0 0
        %8402 = vmatpush1.bf16.msra.mxu0 %v8387
        %8403 = vmatprep.subr.bf16.mxu0 0
        %8404 = vmatpush1.bf16.msra.mxu0 0
        %8405 = vmatprep.subr.bf16.mxu0 0
        %8406 = vmatpush1.bf16.msra.mxu0 0
        %8407 = vmatprep.subr.bf16.mxu0 0
        %8408 = vmatpush1.bf16.msra.mxu0 0
        %8409 = vmatprep.subr.bf16.mxu0 0
        %8410 = vmatpush1.bf16.msra.mxu0 0
        %8411 = vmatprep.subr.bf16.mxu0 0
        %8412 = vmatpush1.bf16.msra.mxu0 0
        %8413 = vmatprep.subr.bf16.mxu0 0
        %8414 = vmatpush1.bf16.msra.mxu0 0
        %8415 = vmatprep.subr.bf16.mxu0 0
        %8416 = vmatpush1.bf16.msra.mxu0 0
        %8417 = vmatprep.subr.bf16.mxu0 0
        %8418 = vmatpush1.bf16.msra.mxu0 0
        %8419 = vmatprep.subr.bf16.mxu0 0
        %8420 = vmatpush1.bf16.msra.mxu0 0
        %8421 = vmatprep.mubr.bf16.mxu0 0
        %8422 = vmatmul.mubr.bf16.gmra.mrb[0].mxu0 %v8384
        %v8423 = vpop.f32.mrb[0].mxu0
        %v8424 = vadd.f32 0.0, %v8423
        %v8425 = vpop.f32.mrb[0].mxu0
        %v8426 = vpop.f32.mrb[0].mxu0
        %v8427 = vpop.f32.mrb[0].mxu0
        %8428 = vdwg.mxu0
        %v8429 = vadd.f32 %v8283, %v8424
        %s8430 = scalar_lea.vmem %s4, 4
        %v8431 = vld [vmem:[%s8430] sm:$0x1]
        %v8433 = vsel %vm7842, %v8431, 0
        %8435 = vmatprep.subr.bf16.mxu0 0
        %8436 = vmatpush1.bf16.msra.mxu0 %v7851
        %8437 = vmatprep.subr.bf16.mxu0 0
        %8438 = vmatpush1.bf16.msra.mxu0 0
        %8439 = vmatprep.subr.bf16.mxu0 0
        %8440 = vmatpush1.bf16.msra.mxu0 0
        %8441 = vmatprep.subr.bf16.mxu0 0
        %8442 = vmatpush1.bf16.msra.mxu0 0
        %8443 = vmatprep.subr.bf16.mxu0 0
        %8444 = vmatpush1.bf16.msra.mxu0 0
        %8445 = vmatprep.subr.bf16.mxu0 0
        %8446 = vmatpush1.bf16.msra.mxu0 0
        %8447 = vmatprep.subr.bf16.mxu0 0
        %8448 = vmatpush1.bf16.msra.mxu0 0
        %8449 = vmatprep.subr.bf16.mxu0 0
        %8450 = vmatpush1.bf16.msra.mxu0 0
        %8451 = vmatprep.subr.bf16.mxu0 0
        %8452 = vmatpush1.bf16.msra.mxu0 0
        %8453 = vmatprep.subr.bf16.mxu0 0
        %8454 = vmatpush1.bf16.msra.mxu0 0
        %8455 = vmatprep.subr.bf16.mxu0 0
        %8456 = vmatpush1.bf16.msra.mxu0 0
        %8457 = vmatprep.subr.bf16.mxu0 0
        %8458 = vmatpush1.bf16.msra.mxu0 0
        %8459 = vmatprep.subr.bf16.mxu0 0
        %8460 = vmatpush1.bf16.msra.mxu0 0
        %8461 = vmatprep.subr.bf16.mxu0 0
        %8462 = vmatpush1.bf16.msra.mxu0 0
        %8463 = vmatprep.subr.bf16.mxu0 0
        %8464 = vmatpush1.bf16.msra.mxu0 0
        %8465 = vmatprep.subr.bf16.mxu0 0
        %8466 = vmatpush1.bf16.msra.mxu0 0
        %8467 = vmatprep.mubr.bf16.mxu0 0
        %8468 = vmatmul.mubr.bf16.gmra.mrb[0].mxu0 %v8433
        %v8469 = vpop.f32.mrb[0].mxu0
        %v8470 = vadd.f32 0.0, %v8469
        %v8471 = vpop.f32.mrb[0].mxu0
        %v8472 = vpop.f32.mrb[0].mxu0
        %v8473 = vpop.f32.mrb[0].mxu0
        %8474 = vdwg.mxu0
        %v8475 = vpack.c.bf16 %v8470, %v8470
        %s8476 = scalar_lea.vmem %s11, 208
        %v8477 = vld [vmem:[%s8476] sm:$0xf]
        %v8478 = vld [vmem:[%s8476 + $0x4] sm:$0xf]
        %v8479 = vld [vmem:[%s8476 + $0x8] sm:$0xf]
        %v8480 = vld [vmem:[%s8476 + $0xc] sm:$0xf]
        %v8481 = vld [vmem:[%s8476 + $0x10] sm:$0xf]
        %v8482 = vld [vmem:[%s8476 + $0x14] sm:$0xf]
        %v8483 = vld [vmem:[%s8476 + $0x18] sm:$0xf]
        %v8484 = vld [vmem:[%s8476 + $0x1c] sm:$0xf]
        %v8485 = vld [vmem:[%s8476 + $0x20] sm:$0xf]
        %v8486 = vld [vmem:[%s8476 + $0x24] sm:$0xf]
        %v8487 = vld [vmem:[%s8476 + $0x28] sm:$0xf]
        %v8488 = vld [vmem:[%s8476 + $0x2c] sm:$0xf]
        %v8489 = vld [vmem:[%s8476 + $0x30] sm:$0x3]
        %v8503 = vunpack.c.l.b16 %v8477
        %v8504 = vunpack.c.l.b16 %v8478
        %v8505 = vunpack.c.l.b16 %v8479
        %v8506 = vunpack.c.l.b16 %v8480
        %v8507 = vunpack.c.l.b16 %v8481
        %v8508 = vunpack.c.l.b16 %v8482
        %v8509 = vunpack.c.l.b16 %v8483
        %v8510 = vunpack.c.l.b16 %v8484
        %v8511 = vunpack.c.l.b16 %v8485
        %v8512 = vunpack.c.l.b16 %v8486
        %v8513 = vunpack.c.l.b16 %v8487
        %v8514 = vunpack.c.l.b16 %v8488
        %v8515 = vunpack.c.l.b16 %v8489
        %v8516 = vpack.c.b16 %v8504, %v8503
        %v8517 = vpack.c.b16 %v8506, %v8505
        %v8518 = vpack.c.b16 %v8508, %v8507
        %v8519 = vpack.c.b16 %v8510, %v8509
        %v8520 = vpack.c.b16 %v8512, %v8511
        %v8521 = vpack.c.b16 %v8514, %v8513
        %v8522 = vpack.c.b16 %v8515, %v8515
        %v8530 = vsel %vm8006, %v8475, 0
        %v8533 = vsel %vm7846, %v8522, 0
        %8535 = vmatprep.subr.bf16.mxu0 0
        %8536 = vmatpush1.bf16.msra.mxu0 %v8516
        %8537 = vmatprep.subr.bf16.mxu0 0
        %8538 = vmatpush1.bf16.msra.mxu0 %v8517
        %8539 = vmatprep.subr.bf16.mxu0 0
        %8540 = vmatpush1.bf16.msra.mxu0 %v8518
        %8541 = vmatprep.subr.bf16.mxu0 0
        %8542 = vmatpush1.bf16.msra.mxu0 %v8519
        %8543 = vmatprep.subr.bf16.mxu0 0
        %8544 = vmatpush1.bf16.msra.mxu0 %v8520
        %8545 = vmatprep.subr.bf16.mxu0 0
        %8546 = vmatpush1.bf16.msra.mxu0 %v8521
        %8547 = vmatprep.subr.bf16.mxu0 0
        %8548 = vmatpush1.bf16.msra.mxu0 %v8533
        %8549 = vmatprep.subr.bf16.mxu0 0
        %8550 = vmatpush1.bf16.msra.mxu0 0
        %8551 = vmatprep.subr.bf16.mxu0 0
        %8552 = vmatpush1.bf16.msra.mxu0 0
        %8553 = vmatprep.subr.bf16.mxu0 0
        %8554 = vmatpush1.bf16.msra.mxu0 0
        %8555 = vmatprep.subr.bf16.mxu0 0
        %8556 = vmatpush1.bf16.msra.mxu0 0
        %8557 = vmatprep.subr.bf16.mxu0 0
        %8558 = vmatpush1.bf16.msra.mxu0 0
        %8559 = vmatprep.subr.bf16.mxu0 0
        %8560 = vmatpush1.bf16.msra.mxu0 0
        %8561 = vmatprep.subr.bf16.mxu0 0
        %8562 = vmatpush1.bf16.msra.mxu0 0
        %8563 = vmatprep.subr.bf16.mxu0 0
        %8564 = vmatpush1.bf16.msra.mxu0 0
        %8565 = vmatprep.subr.bf16.mxu0 0
        %8566 = vmatpush1.bf16.msra.mxu0 0
        %8567 = vmatprep.mubr.bf16.mxu0 0
        %8568 = vmatmul.mubr.bf16.gmra.mrb[0].mxu0 %v8530
        %v8569 = vpop.f32.mrb[0].mxu0
        %v8570 = vadd.f32 0.0, %v8569
        %v8571 = vpop.f32.mrb[0].mxu0
        %v8572 = vpop.f32.mrb[0].mxu0
        %v8573 = vpop.f32.mrb[0].mxu0
        %8574 = vdwg.mxu0
        %v8575 = vadd.f32 %v8429, %v8570
        %v8576 = vld [vmem:[%s12] sm:$0x1]
        %v8577 = vadd.f32 %v8575, %v8576
        %v8578 = vmax.f32 %v8577, 0.0
        %v8579 = vpack.c.bf16 %v8578, %v8578
        %v8580 = vld [vmem:[%s13] sm:$0xf]
        %v8581 = vld [vmem:[%s13 + $0x4] sm:$0xf]
        %v8582 = vld [vmem:[%s13 + $0x8] sm:$0xf]
        %v8583 = vld [vmem:[%s13 + $0xc] sm:$0xf]
        %v8584 = vld [vmem:[%s13 + $0x10] sm:$0xf]
        %v8585 = vld [vmem:[%s13 + $0x14] sm:$0xf]
        %v8586 = vld [vmem:[%s13 + $0x18] sm:$0x1]
        %v8587 = vld [vmem:[%s14] sm:$0x1]
        %v8595 = vunpack.c.l.b16 %v8580
        %v8596 = vunpack.c.l.b16 %v8581
        %v8597 = vunpack.c.l.b16 %v8582
        %v8598 = vunpack.c.l.b16 %v8583
        %v8599 = vunpack.c.l.b16 %v8584
        %v8600 = vunpack.c.l.b16 %v8585
        %v8601 = vunpack.c.l.b16 %v8586
        %v8602 = vpack.c.b16 %v8596, %v8595
        %v8603 = vpack.c.b16 %v8598, %v8597
        %v8604 = vpack.c.b16 %v8600, %v8599
        %v8605 = vpack.c.b16 %v8601, %v8601
        %vm8609 = vcmask 408576
        %v8611 = vsel %vm8609, %v8579, 0
        %vm8613 = vcmask 1040384
        %v8615 = vsel %vm8613, %v8605, 0
        %8617 = vmatprep.subr.bf16.mxu0 0
        %8618 = vmatpush1.bf16.msra.mxu0 %v8602
        %8619 = vmatprep.subr.bf16.mxu0 0
        %8620 = vmatpush1.bf16.msra.mxu0 %v8603
        %8621 = vmatprep.subr.bf16.mxu0 0
        %8622 = vmatpush1.bf16.msra.mxu0 %v8604
        %8623 = vmatprep.subr.bf16.mxu0 0
        %8624 = vmatpush1.bf16.msra.mxu0 %v8615
        %8625 = vmatprep.subr.bf16.mxu0 0
        %8626 = vmatpush1.bf16.msra.mxu0 0
        %8627 = vmatprep.subr.bf16.mxu0 0
        %8628 = vmatpush1.bf16.msra.mxu0 0
        %8629 = vmatprep.subr.bf16.mxu0 0
        %8630 = vmatpush1.bf16.msra.mxu0 0
        %8631 = vmatprep.subr.bf16.mxu0 0
        %8632 = vmatpush1.bf16.msra.mxu0 0
        %8633 = vmatprep.subr.bf16.mxu0 0
        %8634 = vmatpush1.bf16.msra.mxu0 0
        %8635 = vmatprep.subr.bf16.mxu0 0
        %8636 = vmatpush1.bf16.msra.mxu0 0
        %8637 = vmatprep.subr.bf16.mxu0 0
        %8638 = vmatpush1.bf16.msra.mxu0 0
        %8639 = vmatprep.subr.bf16.mxu0 0
        %8640 = vmatpush1.bf16.msra.mxu0 0
        %8641 = vmatprep.subr.bf16.mxu0 0
        %8642 = vmatpush1.bf16.msra.mxu0 0
        %8643 = vmatprep.subr.bf16.mxu0 0
        %8644 = vmatpush1.bf16.msra.mxu0 0
        %8645 = vmatprep.subr.bf16.mxu0 0
        %8646 = vmatpush1.bf16.msra.mxu0 0
        %8647 = vmatprep.subr.bf16.mxu0 0
        %8648 = vmatpush1.bf16.msra.mxu0 0
        %8649 = vmatprep.mubr.bf16.mxu0 0
        %8650 = vmatmul.mubr.bf16.gmra.mrb[0].mxu0 %v8611
        %v8651 = vpop.f32.mrb[0].mxu0
        %v8652 = vadd.f32 %v8587, %v8651
        %v8653 = vpop.f32.mrb[0].mxu0
        %v8654 = vpop.f32.mrb[0].mxu0
        %v8655 = vpop.f32.mrb[0].mxu0
        %8656 = vdwg.mxu0
        %vm8657 = vcmask 73728
        %v8658 = vsel %vm8657, %v8652, -inf
        %8659 = vmax.xlane.f32.xlu0 %v8658
        %v8660 = vpop.xlane.xlu0 %8659
        %v8661 = vsub.f32 %v8652, %v8660
        %v8662 = vmul.f32 %v8661, 1.442695
        %v8663 = vpow.pop %v8662
        %v8664 = vsel %vm8657, %v8663, 0.0
        %8665 = vadd.xlane.f32.xlu0 %v8664
        %v8666 = vpop.xlane.xlu0 %8665
        %v8667 = vlog2.pop %v8666
        %v8668 = vmul.f32 %v8667, 0.6931472
        %v8669 = vsub.f32 %v8661, %v8668
        %8670 = vst.msk [vmem:[%s486] sm:$0x1] %vm8657, %v8669
        %s8671 = sand.u32 %s357, 1
        %s8672 = scalar_lea.sflag [#allocation3], %s8671
        %s8673 = sand.u32 %s357, 1
        %s8674 = scalar_lea.vmem [#allocation2], %s8673
        // Predicated region
        $region81: #{net2_forward.1} parent=79 // pred_check
          %p8675 = pneg %p367
        $region82: #{net2_forward.1} parent=79 // pred_check_branch
          %8677 = sbr.rel (%p8675) target = $region84
        $region83: #{net2_forward.1} parent=79 // pred_region
          %s8679 = ssub.s32 16, 16
          %8680 = vsyncadd %s8672, %s8679
          %s8681 = smul.addr %s29, 16
          %s8682 = scalar_lea.hbm %s15, %s8681
          %s8684 = sshll.u32 %s8674, 4
          %s8685 = int_to_ptr.vmem [resolvable:$true] %s8684
          %8687 = dma.vmem_to_hbm [thread:$0]  %s8685, 16, %s8682, %s8672
        $region84: #{net2_forward.1} parent=79 // pred_fallthru
          _
      $region80: #{net2_forward.1} parent=5 // pred_fallthru
        _
      %p8688 = scmp.le.s32.totalorder 2, %s24
      // Predicated region
      $region85: #{net2_forward.1} parent=5 // pred_check
        %p8689 = pneg %p8688
      $region86: #{net2_forward.1} parent=5 // pred_check_branch
        %8691 = sbr.rel (%p8689) target = $region88
      $region87: #{net2_forward.1} parent=5 // pred_region
        %s8692 = ssub.s32 %s24, 2
        // Predicated region
        $region89: #{net2_forward.1} parent=87 // pred_check
          %p8693 = pneg %p373
        $region90: #{net2_forward.1} parent=87 // pred_check_branch
          %8695 = sbr.rel (%p8693) target = $region92
        $region91: #{net2_forward.1} parent=87 // pred_region
          %s8696 = sand.u32 %s358, 1
          %s8697 = scalar_lea.sflag [#allocation3], %s8696
          %s8698 = sand.u32 %s358, 1
          %s8699 = scalar_lea.vmem [#allocation2], %s8698
          %8700 = dma.done %s8697, 16
        $region92: #{net2_forward.1} parent=87 // pred_fallthru
          _
      $region88: #{net2_forward.1} parent=5 // pred_fallthru
        _
    $region6: #{net2_forward.1} parent=1 // loop_footer
      %s28 = sadd.s32 1, %s24
    $region7: #{net2_forward.1} parent=1 // loop_footer_branch
      %23 = sbr.rel target = $region3
    $region8: #{net2_forward.1} parent=1 // loop_exit
      _
    %8701 = vsyncpa [#allocation3], 1
    %s8702 = scalar_lea.sflag [#allocation3], 1
    %8703 = vsyncpa %s8702, 1

</llo_original>
